<compile_context>
chip_gen: v7x
topology: tpu7x:2x2x1
jax: 0.10.0
libtpu: 0.0.40
codegen_flags: <defaults>
</compile_context>

<pallas_src>
import functools

import numpy as np

import jax
import jax.numpy as jnp
from jax.experimental import pallas as pl
from jax.experimental.pallas import tpu as pltpu

C1, C2 = 10, 20          # conv1 / conv2 output channels
F1, NOUT = 50, 10
F1PAD = 128              # fc1 width padded to a full lane vector
LANE_OUT = 128           # padded logit width -> lane-dense output stores
TB_MAX = 64              # batch-tile upper bound (tuning knob; 64-128 fits every gen)

K1 = 9 * 36              # conv1 merged contraction depth
W1L = 28 * C1            # conv1 output lane width (280) = w * C1 + c
K2 = 5 * W1L             # conv2 merged contraction depth (1400)
W2L = 10 * C2            # conv2 output lane width (200) = w * C2 + c
KF = 5 * W2L             # fc1 merged contraction depth (1000)


def _round_up(x, m):
    return -(-x // m) * m


def _cdiv(a, b):
    return -(-a // b)


def _pick_tb(batch, tb_max=TB_MAX):
    """Batch-tile size: multiple of 16 (bf16 sublane pack), capped, and >= 2 grid
    steps whenever the batch allows so v7x's two TensorCores both get work."""
    if batch <= 16:
        return 16
    tb = min(tb_max, _round_up(batch, 16))
    if _cdiv(batch, tb) < 2:
        tb = max(16, _round_up(_cdiv(batch, 2), 16))
    return tb


# ----------------------------------------------------------------------------
# Fused kernel
# ----------------------------------------------------------------------------
def _fused_kernel(x_ref, t1_ref, b1_ref, t2_ref, b2_ref, w3_ref, b3_ref,
                  w4_ref, b4_ref, out_ref,
                  lhs1_ref, a1_ref, p1_ref, lhs2_ref, a2_ref, p2_ref, lhsf_ref,
                  *, tb):
    # Activation packing: row = h*tb + b, lane = w*C + c.
    # Pooled maps keep the UNCOMPACTED w layout (valid data in even-w lane groups,
    # the selection is zero rows in the next layer's weight matrix).
    f32 = jnp.float32
    bf16 = jnp.bfloat16

    # ---- conv1 as ONE K=324 MXU dot -----------------------------------------
    xb = x_ref[...].astype(bf16)                           # cast once  (36*tb, 36)
    for di in range(9):                                    # im2col over kh only
        lhs1_ref[:, di * 36:(di + 1) * 36] = xb[di * tb:(di + 28) * tb, :]
    a1_ref[...] = jnp.dot(lhs1_ref[...], t1_ref[...],
                          preferred_element_type=f32)      # (28*tb, 280)

    # ---- 2x2 max-pool + bias + ReLU (relu(max(x)+b) == max(relu(x+b))) ------
    b1v = b1_ref[...]
    for hp in range(14):
        r = jnp.maximum(a1_ref[(2 * hp) * tb:(2 * hp + 1) * tb, :],
                        a1_ref[(2 * hp + 1) * tb:(2 * hp + 2) * tb, :])
        r = jnp.maximum(r + b1v, 0.0)
        m = jnp.maximum(r[:, :W1L - C1], r[:, C1:]).astype(bf16)
        p1_ref[hp * tb:(hp + 1) * tb, :W1L - C1] = m       # even-w groups = pooled
        p1_ref[hp * tb:(hp + 1) * tb, W1L - C1:] = r[:, W1L - C1:].astype(bf16)

    # ---- conv2 as ONE K=1400 MXU dot (w-selection folded into t2 zeros) -----
    for di in range(5):
        lhs2_ref[:, di * W1L:(di + 1) * W1L] = p1_ref[di * tb:(di + 10) * tb, :]
    a2_ref[...] = jnp.dot(lhs2_ref[...], t2_ref[...],
                          preferred_element_type=f32)      # (10*tb, 200)

    b2v = b2_ref[...]
    for hp in range(5):
        r = jnp.maximum(a2_ref[(2 * hp) * tb:(2 * hp + 1) * tb, :],
                        a2_ref[(2 * hp + 1) * tb:(2 * hp + 2) * tb, :])
        r = jnp.maximum(r + b2v, 0.0)
        m = jnp.maximum(r[:, :W2L - C2], r[:, C2:]).astype(bf16)
        p2_ref[hp * tb:(hp + 1) * tb, :W2L - C2] = m
        p2_ref[hp * tb:(hp + 1) * tb, W2L - C2:] = r[:, W2L - C2:].astype(bf16)

    # ---- fc1 as ONE K=1000 dot (PyTorch (C,H,W) flatten folded into w3) -----
    for h in range(5):
        lhsf_ref[:, h * W2L:(h + 1) * W2L] = p2_ref[h * tb:(h + 1) * tb, :]
    hid = jnp.dot(lhsf_ref[...], w3_ref[...],
                  preferred_element_type=f32)              # (tb, 128)
    hid = jnp.maximum(hid + b3_ref[...], 0.0).astype(bf16)

    # ---- fc2 (single shared head in the reference module) -------------------
    out_ref[...] = jnp.dot(hid, w4_ref[...],
                           preferred_element_type=f32) + b4_ref[...]


# ----------------------------------------------------------------------------
# One-time host-side weight repacking (pure re-indexing of the PyTorch params)
# ----------------------------------------------------------------------------
def pack_params(params):
    w1 = np.asarray(params["w1"], np.float32)   # (10, 1, 9, 9)
    b1 = np.asarray(params["b1"], np.float32)
    w2 = np.asarray(params["w2"], np.float32)   # (20, 10, 5, 5)
    b2 = np.asarray(params["b2"], np.float32)
    w3 = np.asarray(params["w3"], np.float32)   # (50, 500)
    b3 = np.asarray(params["b3"], np.float32)
    w4 = np.asarray(params["w4"], np.float32)   # (10, 50)
    b4 = np.asarray(params["b4"], np.float32)

    # conv1 merged-K Toeplitz: t1[di*36 + j, ow*C1 + co] = w1[co, 0, di, j-ow]
    t1 = np.zeros((K1, W1L), np.float32)
    for di in range(9):
        for ow in range(28):
            for dj in range(9):
                t1[di * 36 + ow + dj, ow * C1:(ow + 1) * C1] = w1[:, 0, di, dj]
    b1r = np.tile(b1, 28)[None, :]                                # (1, 280)

    # conv2 merged-K Toeplitz over the UNCOMPACTED pooled layout:
    # input pooled position wp lives at lane 20*wp + ci of p1.
    t2 = np.zeros((K2, W2L), np.float32)
    for di in range(5):
        for ow in range(10):
            for dj in range(5):
                for ci in range(C1):
                    t2[di * W1L + 20 * (ow + dj) + ci,
                       ow * C2:(ow + 1) * C2] = w2[:, ci, di, dj]
    b2r = np.tile(b2, 10)[None, :]                                # (1, 200)

    # fc1 over the uncompacted p2 layout (pooled w at lane 40*wp + c), padded to 128.
    w3p = np.zeros((KF, F1PAD), np.float32)
    for h in range(5):
        for wp in range(5):
            for c in range(C2):
                w3p[h * W2L + 40 * wp + c, :F1] = w3[:, c * 25 + h * 5 + wp]
    b3r = np.zeros((1, F1PAD), np.float32)
    b3r[0, :F1] = b3

    # fc2: transpose, pad K to 128, pad output dim to 128 lanes.
    w4p = np.zeros((F1PAD, LANE_OUT), np.float32)
    w4p[:F1, :NOUT] = w4.T
    b4r = np.zeros((1, LANE_OUT), np.float32)
    b4r[0, :NOUT] = b4

    return dict(
        t1=jnp.asarray(t1, dtype=jnp.bfloat16), b1=jnp.asarray(b1r),
        t2=jnp.asarray(t2, dtype=jnp.bfloat16), b2=jnp.asarray(b2r),
        w3=jnp.asarray(w3p, dtype=jnp.bfloat16), b3=jnp.asarray(b3r),
        w4=jnp.asarray(w4p, dtype=jnp.bfloat16), b4=jnp.asarray(b4r),
    )


# ----------------------------------------------------------------------------
# Forward pass
# ----------------------------------------------------------------------------
@functools.partial(jax.jit, static_argnames=("n_tasks", "tb"))
def multi_lenet_forward(packed, x, n_tasks=2, tb=None):
    """x: NCHW float32 [B, 1, 36, 36] -> list of n_tasks arrays [B, 10]."""
    B = x.shape[0]
    if tb is None:
        tb = _pick_tb(B)
    g = _cdiv(B, tb)
    bp = g * tb

    xs = x[:, 0, :, :]                                          # (B, 36, 36)
    if bp != B:
        xs = jnp.pad(xs, ((0, bp - B), (0, 0), (0, 0)))
    # h-major / image-minor, tile-contiguous row layout: row = (tile*36 + h)*tb + b
    x2 = xs.reshape(g, tb, 36, 36).transpose(0, 2, 1, 3).reshape(g * 36 * tb, 36)

    out = pl.pallas_call(
        functools.partial(_fused_kernel, tb=tb),
        out_shape=jax.ShapeDtypeStruct((g * tb, LANE_OUT), jnp.float32),
        grid=(g,),
        in_specs=[
            pl.BlockSpec((36 * tb, 36), lambda i: (i, 0)),       # image tile
            pl.BlockSpec((K1, W1L), lambda i: (0, 0)),           # weights:
            pl.BlockSpec((1, W1L), lambda i: (0, 0)),            #  constant
            pl.BlockSpec((K2, W2L), lambda i: (0, 0)),           #  index_map
            pl.BlockSpec((1, W2L), lambda i: (0, 0)),            #  => fetched once,
            pl.BlockSpec((KF, F1PAD), lambda i: (0, 0)),         #  VMEM resident
            pl.BlockSpec((1, F1PAD), lambda i: (0, 0)),
            pl.BlockSpec((F1PAD, LANE_OUT), lambda i: (0, 0)),
            pl.BlockSpec((1, LANE_OUT), lambda i: (0, 0)),
        ],
        out_specs=pl.BlockSpec((tb, LANE_OUT), lambda i: (i, 0)),
        scratch_shapes=[
            pltpu.VMEM((28 * tb, K1), jnp.bfloat16),   # conv1 lhs (im2col over kh)
            pltpu.VMEM((28 * tb, W1L), jnp.float32),   # conv1 output
            pltpu.VMEM((14 * tb, W1L), jnp.bfloat16),  # pooled conv1 (uncompacted w)
            pltpu.VMEM((10 * tb, K2), jnp.bfloat16),   # conv2 lhs
            pltpu.VMEM((10 * tb, W2L), jnp.float32),   # conv2 output
            pltpu.VMEM((5 * tb, W2L), jnp.bfloat16),   # pooled conv2
            pltpu.VMEM((tb, KF), jnp.bfloat16),        # fc1 lhs
        ],
        compiler_params=pltpu.CompilerParams(
            dimension_semantics=("parallel",),
            vmem_limit_bytes=32 * 1024 * 1024),
    )(x2, packed["t1"], packed["b1"], packed["t2"], packed["b2"],
      packed["w3"], packed["b3"], packed["w4"], packed["b4"])

    logits = out[:B, :NOUT]
    # The reference module applies the SAME fc2 head per task (task1 = task2 = fc2(x)),
    # so compute once and return it n_tasks times.
    return [logits for _ in range(n_tasks)]


# ----------------------------------------------------------------------------
# Params + pure-JAX reference (numerical self-check)
# ----------------------------------------------------------------------------
def init_params(key):
    ks = jax.random.split(key, 8)
    return {
        "w1": jax.random.normal(ks[0], (10, 1, 9, 9), jnp.float32) * 0.05,
        "b1": jax.random.normal(ks[1], (10,), jnp.float32) * 0.05,
        "w2": jax.random.normal(ks[2], (20, 10, 5, 5), jnp.float32) * 0.05,
        "b2": jax.random.normal(ks[3], (20,), jnp.float32) * 0.05,
        "w3": jax.random.normal(ks[4], (50, 500), jnp.float32) * 0.05,
        "b3": jax.random.normal(ks[5], (50,), jnp.float32) * 0.05,
        "w4": jax.random.normal(ks[6], (10, 50), jnp.float32) * 0.05,
        "b4": jax.random.normal(ks[7], (10,), jnp.float32) * 0.05,
    }


def reference_forward(params, x):
    hp = jax.lax.Precision.HIGHEST
    y = jax.lax.conv_general_dilated(
        x, params["w1"], (1, 1), "VALID",
        dimension_numbers=("NCHW", "OIHW", "NCHW"), precision=hp)
    y = jax.nn.relu(y + params["b1"][None, :, None, None])
    y = jax.lax.reduce_window(y, -jnp.inf, jax.lax.max,
                              (1, 1, 2, 2), (1, 1, 2, 2), "VALID")
    y = jax.lax.conv_general_dilated(
        y, params["w2"], (1, 1), "VALID",
        dimension_numbers=("NCHW", "OIHW", "NCHW"), precision=hp)
    y = jax.nn.relu(y + params["b2"][None, :, None, None])
    y = jax.lax.reduce_window(y, -jnp.inf, jax.lax.max,
                              (1, 1, 2, 2), (1, 1, 2, 2), "VALID")
    y = y.reshape(y.shape[0], -1)                       # PyTorch (C,H,W) flatten
    h = jax.nn.relu(jnp.dot(y, params["w3"].T, precision=hp) + params["b3"])
    return jnp.dot(h, params["w4"].T, precision=hp) + params["b4"]


# ----------------------------------------------------------------------------
if __name__ == "__main__":
    key = jax.random.PRNGKey(0)
    pkey, xkey, xkey2 = jax.random.split(key, 3)

    params = init_params(pkey)
    packed = pack_params(params)

    # MultiMNIST-style input: batch=2, 1 channel, 36x36 (so the flatten is 5*5*20=500).
    x = jax.random.normal(xkey, (2, 1, 36, 36), jnp.float32)
    tasks = multi_lenet_forward(packed, x, n_tasks=2)
    jax.block_until_ready(tasks[0])
    jax.block_until_ready(tasks[1])
    assert tasks[0].shape == (2, 10) and tasks[1].shape == (2, 10)

    # Numerical check against a pure-JAX f32 reference (kernel uses bf16 MXU
    # inputs with f32 accumulation, so allow a loose tolerance).
    ref = reference_forward(params, x)
    np.testing.assert_allclose(np.asarray(tasks[0]), np.asarray(ref),
                               rtol=5e-2, atol=3e-2)
    np.testing.assert_allclose(np.asarray(tasks[1]), np.asarray(ref),
                               rtol=5e-2, atol=3e-2)

    # Multi-tile path: batch 40 -> 2 grid steps of tb=32 with padding.
    x_big = jax.random.normal(xkey2, (40, 1, 36, 36), jnp.float32)
    out_big = multi_lenet_forward(packed, x_big, n_tasks=2)[0]
    jax.block_until_ready(out_big)
    ref_big = reference_forward(params, x_big)
    np.testing.assert_allclose(np.asarray(out_big), np.asarray(ref_big),
                               rtol=5e-2, atol=3e-2)

    print("KERNEL_OK")
</pallas_src>

<mosaic_0001>
module attributes {stable_mosaic.version = 11 : i64} {
  func.func @_fused_kernel(%arg0: i32, %arg1: memref<576x36xf32, #tpu.memory_space<vmem>>, %arg2: memref<324x280xbf16, #tpu.memory_space<vmem>>, %arg3: memref<1x280xf32, #tpu.memory_space<vmem>>, %arg4: memref<1400x200xbf16, #tpu.memory_space<vmem>>, %arg5: memref<1x200xf32, #tpu.memory_space<vmem>>, %arg6: memref<1000x128xbf16, #tpu.memory_space<vmem>>, %arg7: memref<1x128xf32, #tpu.memory_space<vmem>>, %arg8: memref<128x128xbf16, #tpu.memory_space<vmem>>, %arg9: memref<1x128xf32, #tpu.memory_space<vmem>>, %arg10: memref<16x128xf32, #tpu.memory_space<vmem>>, %arg11: memref<448x324xbf16, #tpu.memory_space<vmem>>, %arg12: memref<448x280xf32, #tpu.memory_space<vmem>>, %arg13: memref<224x280xbf16, #tpu.memory_space<vmem>>, %arg14: memref<160x1400xbf16, #tpu.memory_space<vmem>>, %arg15: memref<160x200xf32, #tpu.memory_space<vmem>>, %arg16: memref<80x200xbf16, #tpu.memory_space<vmem>>, %arg17: memref<16x1000xbf16, #tpu.memory_space<vmem>>) attributes {dimension_semantics = [#tpu.dimension_semantics<parallel>], iteration_bounds = array<i64: 1>, scalar_prefetch = 0 : i64, scratch_operands = 7 : i64, tpu.core_type = #tpu.core_type<tc>, window_params = [{transform_indices = @transform_0, window_bounds = array<i64: 576, 36>}, {pipeline_mode = #tpu.pipeline_mode<synchronous>, transform_indices = @transform_1, window_bounds = array<i64: 324, 280>}, {pipeline_mode = #tpu.pipeline_mode<synchronous>, transform_indices = @transform_2, window_bounds = array<i64: 1, 280>}, {pipeline_mode = #tpu.pipeline_mode<synchronous>, transform_indices = @transform_3, window_bounds = array<i64: 1400, 200>}, {pipeline_mode = #tpu.pipeline_mode<synchronous>, transform_indices = @transform_4, window_bounds = array<i64: 1, 200>}, {pipeline_mode = #tpu.pipeline_mode<synchronous>, transform_indices = @transform_5, window_bounds = array<i64: 1000, 128>}, {pipeline_mode = #tpu.pipeline_mode<synchronous>, transform_indices = @transform_6, window_bounds = array<i64: 1, 128>}, {pipeline_mode = #tpu.pipeline_mode<synchronous>, transform_indices = @transform_7, window_bounds = array<i64: 128, 128>}, {pipeline_mode = #tpu.pipeline_mode<synchronous>, transform_indices = @transform_8, window_bounds = array<i64: 1, 128>}, {transform_indices = @transform_9, window_bounds = array<i64: 16, 128>}]} {
    %c0 = arith.constant 0 : index
    %c0_0 = arith.constant 0 : index
    %0 = vector.load %arg1[%c0, %c0_0] : memref<576x36xf32, #tpu.memory_space<vmem>>, vector<576x36xf32>
    %1 = arith.truncf %0 : vector<576x36xf32> to vector<576x36xbf16>
    %2 = vector.extract_strided_slice %1 {offsets = [0, 0], sizes = [448, 36], strides = [1, 1]} : vector<576x36xbf16> to vector<448x36xbf16>
    %c0_1 = arith.constant 0 : index
    %c0_2 = arith.constant 0 : index
    %3 = vector.load %arg11[%c0_1, %c0_2] : memref<448x324xbf16, #tpu.memory_space<vmem>>, vector<448x36xbf16>
    tpu.vector_store %arg11[%c0_1, %c0_2], %2 {strides = array<i32>} : memref<448x324xbf16, #tpu.memory_space<vmem>>, vector<448x36xbf16>,
    %4 = vector.extract_strided_slice %1 {offsets = [16, 0], sizes = [448, 36], strides = [1, 1]} : vector<576x36xbf16> to vector<448x36xbf16>
    %c0_3 = arith.constant 0 : index
    %c36 = arith.constant 36 : index
    %5 = vector.load %arg11[%c0_3, %c36] : memref<448x324xbf16, #tpu.memory_space<vmem>>, vector<448x36xbf16>
    tpu.vector_store %arg11[%c0_3, %c36], %4 {strides = array<i32>} : memref<448x324xbf16, #tpu.memory_space<vmem>>, vector<448x36xbf16>,
    %6 = vector.extract_strided_slice %1 {offsets = [32, 0], sizes = [448, 36], strides = [1, 1]} : vector<576x36xbf16> to vector<448x36xbf16>
    %c0_4 = arith.constant 0 : index
    %c72 = arith.constant 72 : index
    %7 = vector.load %arg11[%c0_4, %c72] : memref<448x324xbf16, #tpu.memory_space<vmem>>, vector<448x36xbf16>
    tpu.vector_store %arg11[%c0_4, %c72], %6 {strides = array<i32>} : memref<448x324xbf16, #tpu.memory_space<vmem>>, vector<448x36xbf16>,
    %8 = vector.extract_strided_slice %1 {offsets = [48, 0], sizes = [448, 36], strides = [1, 1]} : vector<576x36xbf16> to vector<448x36xbf16>
    %c0_5 = arith.constant 0 : index
    %c108 = arith.constant 108 : index
    %9 = vector.load %arg11[%c0_5, %c108] : memref<448x324xbf16, #tpu.memory_space<vmem>>, vector<448x36xbf16>
    tpu.vector_store %arg11[%c0_5, %c108], %8 {strides = array<i32>} : memref<448x324xbf16, #tpu.memory_space<vmem>>, vector<448x36xbf16>,
    %10 = vector.extract_strided_slice %1 {offsets = [64, 0], sizes = [448, 36], strides = [1, 1]} : vector<576x36xbf16> to vector<448x36xbf16>
    %c0_6 = arith.constant 0 : index
    %c144 = arith.constant 144 : index
    %11 = vector.load %arg11[%c0_6, %c144] : memref<448x324xbf16, #tpu.memory_space<vmem>>, vector<448x36xbf16>
    tpu.vector_store %arg11[%c0_6, %c144], %10 {strides = array<i32>} : memref<448x324xbf16, #tpu.memory_space<vmem>>, vector<448x36xbf16>,
    %12 = vector.extract_strided_slice %1 {offsets = [80, 0], sizes = [448, 36], strides = [1, 1]} : vector<576x36xbf16> to vector<448x36xbf16>
    %c0_7 = arith.constant 0 : index
    %c180 = arith.constant 180 : index
    %13 = vector.load %arg11[%c0_7, %c180] : memref<448x324xbf16, #tpu.memory_space<vmem>>, vector<448x36xbf16>
    tpu.vector_store %arg11[%c0_7, %c180], %12 {strides = array<i32>} : memref<448x324xbf16, #tpu.memory_space<vmem>>, vector<448x36xbf16>,
    %14 = vector.extract_strided_slice %1 {offsets = [96, 0], sizes = [448, 36], strides = [1, 1]} : vector<576x36xbf16> to vector<448x36xbf16>
    %c0_8 = arith.constant 0 : index
    %c216 = arith.constant 216 : index
    %15 = vector.load %arg11[%c0_8, %c216] : memref<448x324xbf16, #tpu.memory_space<vmem>>, vector<448x36xbf16>
    tpu.vector_store %arg11[%c0_8, %c216], %14 {strides = array<i32>} : memref<448x324xbf16, #tpu.memory_space<vmem>>, vector<448x36xbf16>,
    %16 = vector.extract_strided_slice %1 {offsets = [112, 0], sizes = [448, 36], strides = [1, 1]} : vector<576x36xbf16> to vector<448x36xbf16>
    %c0_9 = arith.constant 0 : index
    %c252 = arith.constant 252 : index
    %17 = vector.load %arg11[%c0_9, %c252] : memref<448x324xbf16, #tpu.memory_space<vmem>>, vector<448x36xbf16>
    tpu.vector_store %arg11[%c0_9, %c252], %16 {strides = array<i32>} : memref<448x324xbf16, #tpu.memory_space<vmem>>, vector<448x36xbf16>,
    %18 = vector.extract_strided_slice %1 {offsets = [128, 0], sizes = [448, 36], strides = [1, 1]} : vector<576x36xbf16> to vector<448x36xbf16>
    %c0_10 = arith.constant 0 : index
    %c288 = arith.constant 288 : index
    %19 = vector.load %arg11[%c0_10, %c288] : memref<448x324xbf16, #tpu.memory_space<vmem>>, vector<448x36xbf16>
    tpu.vector_store %arg11[%c0_10, %c288], %18 {strides = array<i32>} : memref<448x324xbf16, #tpu.memory_space<vmem>>, vector<448x36xbf16>,
    %c0_11 = arith.constant 0 : index
    %c0_12 = arith.constant 0 : index
    %20 = vector.load %arg11[%c0_11, %c0_12] : memref<448x324xbf16, #tpu.memory_space<vmem>>, vector<448x324xbf16>
    %c0_13 = arith.constant 0 : index
    %c0_14 = arith.constant 0 : index
    %21 = vector.load %arg2[%c0_13, %c0_14] : memref<324x280xbf16, #tpu.memory_space<vmem>>, vector<324x280xbf16>
    %cst = arith.constant dense<0.000000e+00> : vector<448x280xf32>
    %22 = tpu.matmul %20, %21, %cst {dimension_numbers = #tpu.dot_dimension_numbers<[1], [0], [0], [1], [0, 0, 1, 1], [], []>} : vector<448x324xbf16>, vector<324x280xbf16>, vector<448x280xf32> -> vector<448x280xf32>
    %c0_15 = arith.constant 0 : index
    %c0_16 = arith.constant 0 : index
    %23 = vector.load %arg12[%c0_15, %c0_16] : memref<448x280xf32, #tpu.memory_space<vmem>>, vector<448x280xf32>
    tpu.vector_store %arg12[%c0_15, %c0_16], %22 {strides = array<i32>} : memref<448x280xf32, #tpu.memory_space<vmem>>, vector<448x280xf32>,
    %c0_17 = arith.constant 0 : index
    %c0_18 = arith.constant 0 : index
    %24 = vector.load %arg3[%c0_17, %c0_18] : memref<1x280xf32, #tpu.memory_space<vmem>>, vector<1x280xf32>
    %c0_19 = arith.constant 0 : index
    %c0_20 = arith.constant 0 : index
    %25 = vector.load %arg12[%c0_19, %c0_20] : memref<448x280xf32, #tpu.memory_space<vmem>>, vector<16x280xf32>
    %c16 = arith.constant 16 : index
    %c0_21 = arith.constant 0 : index
    %26 = vector.load %arg12[%c16, %c0_21] : memref<448x280xf32, #tpu.memory_space<vmem>>, vector<16x280xf32>
    %27 = arith.maximumf %25, %26 : vector<16x280xf32>
    %28 = vector.broadcast %24 : vector<1x280xf32> to vector<16x280xf32>
    %29 = arith.addf %27, %28 : vector<16x280xf32>
    %cst_22 = arith.constant 0.000000e+00 : f32
    %30 = vector.broadcast %cst_22 : f32 to vector<16x280xf32>
    %31 = arith.maximumf %29, %30 : vector<16x280xf32>
    %32 = vector.extract_strided_slice %31 {offsets = [0, 0], sizes = [16, 270], strides = [1, 1]} : vector<16x280xf32> to vector<16x270xf32>
    %33 = vector.extract_strided_slice %31 {offsets = [0, 10], sizes = [16, 270], strides = [1, 1]} : vector<16x280xf32> to vector<16x270xf32>
    %34 = arith.maximumf %32, %33 : vector<16x270xf32>
    %35 = arith.truncf %34 : vector<16x270xf32> to vector<16x270xbf16>
    %c0_23 = arith.constant 0 : index
    %c0_24 = arith.constant 0 : index
    %36 = vector.load %arg13[%c0_23, %c0_24] : memref<224x280xbf16, #tpu.memory_space<vmem>>, vector<16x270xbf16>
    tpu.vector_store %arg13[%c0_23, %c0_24], %35 {strides = array<i32>} : memref<224x280xbf16, #tpu.memory_space<vmem>>, vector<16x270xbf16>,
    %37 = vector.extract_strided_slice %31 {offsets = [0, 270], sizes = [16, 10], strides = [1, 1]} : vector<16x280xf32> to vector<16x10xf32>
    %38 = arith.truncf %37 : vector<16x10xf32> to vector<16x10xbf16>
    %c0_25 = arith.constant 0 : index
    %c270 = arith.constant 270 : index
    %39 = vector.load %arg13[%c0_25, %c270] : memref<224x280xbf16, #tpu.memory_space<vmem>>, vector<16x10xbf16>
    tpu.vector_store %arg13[%c0_25, %c270], %38 {strides = array<i32>} : memref<224x280xbf16, #tpu.memory_space<vmem>>, vector<16x10xbf16>,
    %c32 = arith.constant 32 : index
    %c0_26 = arith.constant 0 : index
    %40 = vector.load %arg12[%c32, %c0_26] : memref<448x280xf32, #tpu.memory_space<vmem>>, vector<16x280xf32>
    %c48 = arith.constant 48 : index
    %c0_27 = arith.constant 0 : index
    %41 = vector.load %arg12[%c48, %c0_27] : memref<448x280xf32, #tpu.memory_space<vmem>>, vector<16x280xf32>
    %42 = arith.maximumf %40, %41 : vector<16x280xf32>
    %43 = vector.broadcast %24 : vector<1x280xf32> to vector<16x280xf32>
    %44 = arith.addf %42, %43 : vector<16x280xf32>
    %cst_28 = arith.constant 0.000000e+00 : f32
    %45 = vector.broadcast %cst_28 : f32 to vector<16x280xf32>
    %46 = arith.maximumf %44, %45 : vector<16x280xf32>
    %47 = vector.extract_strided_slice %46 {offsets = [0, 0], sizes = [16, 270], strides = [1, 1]} : vector<16x280xf32> to vector<16x270xf32>
    %48 = vector.extract_strided_slice %46 {offsets = [0, 10], sizes = [16, 270], strides = [1, 1]} : vector<16x280xf32> to vector<16x270xf32>
    %49 = arith.maximumf %47, %48 : vector<16x270xf32>
    %50 = arith.truncf %49 : vector<16x270xf32> to vector<16x270xbf16>
    %c16_29 = arith.constant 16 : index
    %c0_30 = arith.constant 0 : index
    %51 = vector.load %arg13[%c16_29, %c0_30] : memref<224x280xbf16, #tpu.memory_space<vmem>>, vector<16x270xbf16>
    tpu.vector_store %arg13[%c16_29, %c0_30], %50 {strides = array<i32>} : memref<224x280xbf16, #tpu.memory_space<vmem>>, vector<16x270xbf16>,
    %52 = vector.extract_strided_slice %46 {offsets = [0, 270], sizes = [16, 10], strides = [1, 1]} : vector<16x280xf32> to vector<16x10xf32>
    %53 = arith.truncf %52 : vector<16x10xf32> to vector<16x10xbf16>
    %c16_31 = arith.constant 16 : index
    %c270_32 = arith.constant 270 : index
    %54 = vector.load %arg13[%c16_31, %c270_32] : memref<224x280xbf16, #tpu.memory_space<vmem>>, vector<16x10xbf16>
    tpu.vector_store %arg13[%c16_31, %c270_32], %53 {strides = array<i32>} : memref<224x280xbf16, #tpu.memory_space<vmem>>, vector<16x10xbf16>,
    %c64 = arith.constant 64 : index
    %c0_33 = arith.constant 0 : index
    %55 = vector.load %arg12[%c64, %c0_33] : memref<448x280xf32, #tpu.memory_space<vmem>>, vector<16x280xf32>
    %c80 = arith.constant 80 : index
    %c0_34 = arith.constant 0 : index
    %56 = vector.load %arg12[%c80, %c0_34] : memref<448x280xf32, #tpu.memory_space<vmem>>, vector<16x280xf32>
    %57 = arith.maximumf %55, %56 : vector<16x280xf32>
    %58 = vector.broadcast %24 : vector<1x280xf32> to vector<16x280xf32>
    %59 = arith.addf %57, %58 : vector<16x280xf32>
    %cst_35 = arith.constant 0.000000e+00 : f32
    %60 = vector.broadcast %cst_35 : f32 to vector<16x280xf32>
    %61 = arith.maximumf %59, %60 : vector<16x280xf32>
    %62 = vector.extract_strided_slice %61 {offsets = [0, 0], sizes = [16, 270], strides = [1, 1]} : vector<16x280xf32> to vector<16x270xf32>
    %63 = vector.extract_strided_slice %61 {offsets = [0, 10], sizes = [16, 270], strides = [1, 1]} : vector<16x280xf32> to vector<16x270xf32>
    %64 = arith.maximumf %62, %63 : vector<16x270xf32>
    %65 = arith.truncf %64 : vector<16x270xf32> to vector<16x270xbf16>
    %c32_36 = arith.constant 32 : index
    %c0_37 = arith.constant 0 : index
    %66 = vector.load %arg13[%c32_36, %c0_37] : memref<224x280xbf16, #tpu.memory_space<vmem>>, vector<16x270xbf16>
    tpu.vector_store %arg13[%c32_36, %c0_37], %65 {strides = array<i32>} : memref<224x280xbf16, #tpu.memory_space<vmem>>, vector<16x270xbf16>,
    %67 = vector.extract_strided_slice %61 {offsets = [0, 270], sizes = [16, 10], strides = [1, 1]} : vector<16x280xf32> to vector<16x10xf32>
    %68 = arith.truncf %67 : vector<16x10xf32> to vector<16x10xbf16>
    %c32_38 = arith.constant 32 : index
    %c270_39 = arith.constant 270 : index
    %69 = vector.load %arg13[%c32_38, %c270_39] : memref<224x280xbf16, #tpu.memory_space<vmem>>, vector<16x10xbf16>
    tpu.vector_store %arg13[%c32_38, %c270_39], %68 {strides = array<i32>} : memref<224x280xbf16, #tpu.memory_space<vmem>>, vector<16x10xbf16>,
    %c96 = arith.constant 96 : index
    %c0_40 = arith.constant 0 : index
    %70 = vector.load %arg12[%c96, %c0_40] : memref<448x280xf32, #tpu.memory_space<vmem>>, vector<16x280xf32>
    %c112 = arith.constant 112 : index
    %c0_41 = arith.constant 0 : index
    %71 = vector.load %arg12[%c112, %c0_41] : memref<448x280xf32, #tpu.memory_space<vmem>>, vector<16x280xf32>
    %72 = arith.maximumf %70, %71 : vector<16x280xf32>
    %73 = vector.broadcast %24 : vector<1x280xf32> to vector<16x280xf32>
    %74 = arith.addf %72, %73 : vector<16x280xf32>
    %cst_42 = arith.constant 0.000000e+00 : f32
    %75 = vector.broadcast %cst_42 : f32 to vector<16x280xf32>
    %76 = arith.maximumf %74, %75 : vector<16x280xf32>
    %77 = vector.extract_strided_slice %76 {offsets = [0, 0], sizes = [16, 270], strides = [1, 1]} : vector<16x280xf32> to vector<16x270xf32>
    %78 = vector.extract_strided_slice %76 {offsets = [0, 10], sizes = [16, 270], strides = [1, 1]} : vector<16x280xf32> to vector<16x270xf32>
    %79 = arith.maximumf %77, %78 : vector<16x270xf32>
    %80 = arith.truncf %79 : vector<16x270xf32> to vector<16x270xbf16>
    %c48_43 = arith.constant 48 : index
    %c0_44 = arith.constant 0 : index
    %81 = vector.load %arg13[%c48_43, %c0_44] : memref<224x280xbf16, #tpu.memory_space<vmem>>, vector<16x270xbf16>
    tpu.vector_store %arg13[%c48_43, %c0_44], %80 {strides = array<i32>} : memref<224x280xbf16, #tpu.memory_space<vmem>>, vector<16x270xbf16>,
    %82 = vector.extract_strided_slice %76 {offsets = [0, 270], sizes = [16, 10], strides = [1, 1]} : vector<16x280xf32> to vector<16x10xf32>
    %83 = arith.truncf %82 : vector<16x10xf32> to vector<16x10xbf16>
    %c48_45 = arith.constant 48 : index
    %c270_46 = arith.constant 270 : index
    %84 = vector.load %arg13[%c48_45, %c270_46] : memref<224x280xbf16, #tpu.memory_space<vmem>>, vector<16x10xbf16>
    tpu.vector_store %arg13[%c48_45, %c270_46], %83 {strides = array<i32>} : memref<224x280xbf16, #tpu.memory_space<vmem>>, vector<16x10xbf16>,
    %c128 = arith.constant 128 : index
    %c0_47 = arith.constant 0 : index
    %85 = vector.load %arg12[%c128, %c0_47] : memref<448x280xf32, #tpu.memory_space<vmem>>, vector<16x280xf32>
    %c144_48 = arith.constant 144 : index
    %c0_49 = arith.constant 0 : index
    %86 = vector.load %arg12[%c144_48, %c0_49] : memref<448x280xf32, #tpu.memory_space<vmem>>, vector<16x280xf32>
    %87 = arith.maximumf %85, %86 : vector<16x280xf32>
    %88 = vector.broadcast %24 : vector<1x280xf32> to vector<16x280xf32>
    %89 = arith.addf %87, %88 : vector<16x280xf32>
    %cst_50 = arith.constant 0.000000e+00 : f32
    %90 = vector.broadcast %cst_50 : f32 to vector<16x280xf32>
    %91 = arith.maximumf %89, %90 : vector<16x280xf32>
    %92 = vector.extract_strided_slice %91 {offsets = [0, 0], sizes = [16, 270], strides = [1, 1]} : vector<16x280xf32> to vector<16x270xf32>
    %93 = vector.extract_strided_slice %91 {offsets = [0, 10], sizes = [16, 270], strides = [1, 1]} : vector<16x280xf32> to vector<16x270xf32>
    %94 = arith.maximumf %92, %93 : vector<16x270xf32>
    %95 = arith.truncf %94 : vector<16x270xf32> to vector<16x270xbf16>
    %c64_51 = arith.constant 64 : index
    %c0_52 = arith.constant 0 : index
    %96 = vector.load %arg13[%c64_51, %c0_52] : memref<224x280xbf16, #tpu.memory_space<vmem>>, vector<16x270xbf16>
    tpu.vector_store %arg13[%c64_51, %c0_52], %95 {strides = array<i32>} : memref<224x280xbf16, #tpu.memory_space<vmem>>, vector<16x270xbf16>,
    %97 = vector.extract_strided_slice %91 {offsets = [0, 270], sizes = [16, 10], strides = [1, 1]} : vector<16x280xf32> to vector<16x10xf32>
    %98 = arith.truncf %97 : vector<16x10xf32> to vector<16x10xbf16>
    %c64_53 = arith.constant 64 : index
    %c270_54 = arith.constant 270 : index
    %99 = vector.load %arg13[%c64_53, %c270_54] : memref<224x280xbf16, #tpu.memory_space<vmem>>, vector<16x10xbf16>
    tpu.vector_store %arg13[%c64_53, %c270_54], %98 {strides = array<i32>} : memref<224x280xbf16, #tpu.memory_space<vmem>>, vector<16x10xbf16>,
    %c160 = arith.constant 160 : index
    %c0_55 = arith.constant 0 : index
    %100 = vector.load %arg12[%c160, %c0_55] : memref<448x280xf32, #tpu.memory_space<vmem>>, vector<16x280xf32>
    %c176 = arith.constant 176 : index
    %c0_56 = arith.constant 0 : index
    %101 = vector.load %arg12[%c176, %c0_56] : memref<448x280xf32, #tpu.memory_space<vmem>>, vector<16x280xf32>
    %102 = arith.maximumf %100, %101 : vector<16x280xf32>
    %103 = vector.broadcast %24 : vector<1x280xf32> to vector<16x280xf32>
    %104 = arith.addf %102, %103 : vector<16x280xf32>
    %cst_57 = arith.constant 0.000000e+00 : f32
    %105 = vector.broadcast %cst_57 : f32 to vector<16x280xf32>
    %106 = arith.maximumf %104, %105 : vector<16x280xf32>
    %107 = vector.extract_strided_slice %106 {offsets = [0, 0], sizes = [16, 270], strides = [1, 1]} : vector<16x280xf32> to vector<16x270xf32>
    %108 = vector.extract_strided_slice %106 {offsets = [0, 10], sizes = [16, 270], strides = [1, 1]} : vector<16x280xf32> to vector<16x270xf32>
    %109 = arith.maximumf %107, %108 : vector<16x270xf32>
    %110 = arith.truncf %109 : vector<16x270xf32> to vector<16x270xbf16>
    %c80_58 = arith.constant 80 : index
    %c0_59 = arith.constant 0 : index
    %111 = vector.load %arg13[%c80_58, %c0_59] : memref<224x280xbf16, #tpu.memory_space<vmem>>, vector<16x270xbf16>
    tpu.vector_store %arg13[%c80_58, %c0_59], %110 {strides = array<i32>} : memref<224x280xbf16, #tpu.memory_space<vmem>>, vector<16x270xbf16>,
    %112 = vector.extract_strided_slice %106 {offsets = [0, 270], sizes = [16, 10], strides = [1, 1]} : vector<16x280xf32> to vector<16x10xf32>
    %113 = arith.truncf %112 : vector<16x10xf32> to vector<16x10xbf16>
    %c80_60 = arith.constant 80 : index
    %c270_61 = arith.constant 270 : index
    %114 = vector.load %arg13[%c80_60, %c270_61] : memref<224x280xbf16, #tpu.memory_space<vmem>>, vector<16x10xbf16>
    tpu.vector_store %arg13[%c80_60, %c270_61], %113 {strides = array<i32>} : memref<224x280xbf16, #tpu.memory_space<vmem>>, vector<16x10xbf16>,
    %c192 = arith.constant 192 : index
    %c0_62 = arith.constant 0 : index
    %115 = vector.load %arg12[%c192, %c0_62] : memref<448x280xf32, #tpu.memory_space<vmem>>, vector<16x280xf32>
    %c208 = arith.constant 208 : index
    %c0_63 = arith.constant 0 : index
    %116 = vector.load %arg12[%c208, %c0_63] : memref<448x280xf32, #tpu.memory_space<vmem>>, vector<16x280xf32>
    %117 = arith.maximumf %115, %116 : vector<16x280xf32>
    %118 = vector.broadcast %24 : vector<1x280xf32> to vector<16x280xf32>
    %119 = arith.addf %117, %118 : vector<16x280xf32>
    %cst_64 = arith.constant 0.000000e+00 : f32
    %120 = vector.broadcast %cst_64 : f32 to vector<16x280xf32>
    %121 = arith.maximumf %119, %120 : vector<16x280xf32>
    %122 = vector.extract_strided_slice %121 {offsets = [0, 0], sizes = [16, 270], strides = [1, 1]} : vector<16x280xf32> to vector<16x270xf32>
    %123 = vector.extract_strided_slice %121 {offsets = [0, 10], sizes = [16, 270], strides = [1, 1]} : vector<16x280xf32> to vector<16x270xf32>
    %124 = arith.maximumf %122, %123 : vector<16x270xf32>
    %125 = arith.truncf %124 : vector<16x270xf32> to vector<16x270xbf16>
    %c96_65 = arith.constant 96 : index
    %c0_66 = arith.constant 0 : index
    %126 = vector.load %arg13[%c96_65, %c0_66] : memref<224x280xbf16, #tpu.memory_space<vmem>>, vector<16x270xbf16>
    tpu.vector_store %arg13[%c96_65, %c0_66], %125 {strides = array<i32>} : memref<224x280xbf16, #tpu.memory_space<vmem>>, vector<16x270xbf16>,
    %127 = vector.extract_strided_slice %121 {offsets = [0, 270], sizes = [16, 10], strides = [1, 1]} : vector<16x280xf32> to vector<16x10xf32>
    %128 = arith.truncf %127 : vector<16x10xf32> to vector<16x10xbf16>
    %c96_67 = arith.constant 96 : index
    %c270_68 = arith.constant 270 : index
    %129 = vector.load %arg13[%c96_67, %c270_68] : memref<224x280xbf16, #tpu.memory_space<vmem>>, vector<16x10xbf16>
    tpu.vector_store %arg13[%c96_67, %c270_68], %128 {strides = array<i32>} : memref<224x280xbf16, #tpu.memory_space<vmem>>, vector<16x10xbf16>,
    %c224 = arith.constant 224 : index
    %c0_69 = arith.constant 0 : index
    %130 = vector.load %arg12[%c224, %c0_69] : memref<448x280xf32, #tpu.memory_space<vmem>>, vector<16x280xf32>
    %c240 = arith.constant 240 : index
    %c0_70 = arith.constant 0 : index
    %131 = vector.load %arg12[%c240, %c0_70] : memref<448x280xf32, #tpu.memory_space<vmem>>, vector<16x280xf32>
    %132 = arith.maximumf %130, %131 : vector<16x280xf32>
    %133 = vector.broadcast %24 : vector<1x280xf32> to vector<16x280xf32>
    %134 = arith.addf %132, %133 : vector<16x280xf32>
    %cst_71 = arith.constant 0.000000e+00 : f32
    %135 = vector.broadcast %cst_71 : f32 to vector<16x280xf32>
    %136 = arith.maximumf %134, %135 : vector<16x280xf32>
    %137 = vector.extract_strided_slice %136 {offsets = [0, 0], sizes = [16, 270], strides = [1, 1]} : vector<16x280xf32> to vector<16x270xf32>
    %138 = vector.extract_strided_slice %136 {offsets = [0, 10], sizes = [16, 270], strides = [1, 1]} : vector<16x280xf32> to vector<16x270xf32>
    %139 = arith.maximumf %137, %138 : vector<16x270xf32>
    %140 = arith.truncf %139 : vector<16x270xf32> to vector<16x270xbf16>
    %c112_72 = arith.constant 112 : index
    %c0_73 = arith.constant 0 : index
    %141 = vector.load %arg13[%c112_72, %c0_73] : memref<224x280xbf16, #tpu.memory_space<vmem>>, vector<16x270xbf16>
    tpu.vector_store %arg13[%c112_72, %c0_73], %140 {strides = array<i32>} : memref<224x280xbf16, #tpu.memory_space<vmem>>, vector<16x270xbf16>,
    %142 = vector.extract_strided_slice %136 {offsets = [0, 270], sizes = [16, 10], strides = [1, 1]} : vector<16x280xf32> to vector<16x10xf32>
    %143 = arith.truncf %142 : vector<16x10xf32> to vector<16x10xbf16>
    %c112_74 = arith.constant 112 : index
    %c270_75 = arith.constant 270 : index
    %144 = vector.load %arg13[%c112_74, %c270_75] : memref<224x280xbf16, #tpu.memory_space<vmem>>, vector<16x10xbf16>
    tpu.vector_store %arg13[%c112_74, %c270_75], %143 {strides = array<i32>} : memref<224x280xbf16, #tpu.memory_space<vmem>>, vector<16x10xbf16>,
    %c256 = arith.constant 256 : index
    %c0_76 = arith.constant 0 : index
    %145 = vector.load %arg12[%c256, %c0_76] : memref<448x280xf32, #tpu.memory_space<vmem>>, vector<16x280xf32>
    %c272 = arith.constant 272 : index
    %c0_77 = arith.constant 0 : index
    %146 = vector.load %arg12[%c272, %c0_77] : memref<448x280xf32, #tpu.memory_space<vmem>>, vector<16x280xf32>
    %147 = arith.maximumf %145, %146 : vector<16x280xf32>
    %148 = vector.broadcast %24 : vector<1x280xf32> to vector<16x280xf32>
    %149 = arith.addf %147, %148 : vector<16x280xf32>
    %cst_78 = arith.constant 0.000000e+00 : f32
    %150 = vector.broadcast %cst_78 : f32 to vector<16x280xf32>
    %151 = arith.maximumf %149, %150 : vector<16x280xf32>
    %152 = vector.extract_strided_slice %151 {offsets = [0, 0], sizes = [16, 270], strides = [1, 1]} : vector<16x280xf32> to vector<16x270xf32>
    %153 = vector.extract_strided_slice %151 {offsets = [0, 10], sizes = [16, 270], strides = [1, 1]} : vector<16x280xf32> to vector<16x270xf32>
    %154 = arith.maximumf %152, %153 : vector<16x270xf32>
    %155 = arith.truncf %154 : vector<16x270xf32> to vector<16x270xbf16>
    %c128_79 = arith.constant 128 : index
    %c0_80 = arith.constant 0 : index
    %156 = vector.load %arg13[%c128_79, %c0_80] : memref<224x280xbf16, #tpu.memory_space<vmem>>, vector<16x270xbf16>
    tpu.vector_store %arg13[%c128_79, %c0_80], %155 {strides = array<i32>} : memref<224x280xbf16, #tpu.memory_space<vmem>>, vector<16x270xbf16>,
    %157 = vector.extract_strided_slice %151 {offsets = [0, 270], sizes = [16, 10], strides = [1, 1]} : vector<16x280xf32> to vector<16x10xf32>
    %158 = arith.truncf %157 : vector<16x10xf32> to vector<16x10xbf16>
    %c128_81 = arith.constant 128 : index
    %c270_82 = arith.constant 270 : index
    %159 = vector.load %arg13[%c128_81, %c270_82] : memref<224x280xbf16, #tpu.memory_space<vmem>>, vector<16x10xbf16>
    tpu.vector_store %arg13[%c128_81, %c270_82], %158 {strides = array<i32>} : memref<224x280xbf16, #tpu.memory_space<vmem>>, vector<16x10xbf16>,
    %c288_83 = arith.constant 288 : index
    %c0_84 = arith.constant 0 : index
    %160 = vector.load %arg12[%c288_83, %c0_84] : memref<448x280xf32, #tpu.memory_space<vmem>>, vector<16x280xf32>
    %c304 = arith.constant 304 : index
    %c0_85 = arith.constant 0 : index
    %161 = vector.load %arg12[%c304, %c0_85] : memref<448x280xf32, #tpu.memory_space<vmem>>, vector<16x280xf32>
    %162 = arith.maximumf %160, %161 : vector<16x280xf32>
    %163 = vector.broadcast %24 : vector<1x280xf32> to vector<16x280xf32>
    %164 = arith.addf %162, %163 : vector<16x280xf32>
    %cst_86 = arith.constant 0.000000e+00 : f32
    %165 = vector.broadcast %cst_86 : f32 to vector<16x280xf32>
    %166 = arith.maximumf %164, %165 : vector<16x280xf32>
    %167 = vector.extract_strided_slice %166 {offsets = [0, 0], sizes = [16, 270], strides = [1, 1]} : vector<16x280xf32> to vector<16x270xf32>
    %168 = vector.extract_strided_slice %166 {offsets = [0, 10], sizes = [16, 270], strides = [1, 1]} : vector<16x280xf32> to vector<16x270xf32>
    %169 = arith.maximumf %167, %168 : vector<16x270xf32>
    %170 = arith.truncf %169 : vector<16x270xf32> to vector<16x270xbf16>
    %c144_87 = arith.constant 144 : index
    %c0_88 = arith.constant 0 : index
    %171 = vector.load %arg13[%c144_87, %c0_88] : memref<224x280xbf16, #tpu.memory_space<vmem>>, vector<16x270xbf16>
    tpu.vector_store %arg13[%c144_87, %c0_88], %170 {strides = array<i32>} : memref<224x280xbf16, #tpu.memory_space<vmem>>, vector<16x270xbf16>,
    %172 = vector.extract_strided_slice %166 {offsets = [0, 270], sizes = [16, 10], strides = [1, 1]} : vector<16x280xf32> to vector<16x10xf32>
    %173 = arith.truncf %172 : vector<16x10xf32> to vector<16x10xbf16>
    %c144_89 = arith.constant 144 : index
    %c270_90 = arith.constant 270 : index
    %174 = vector.load %arg13[%c144_89, %c270_90] : memref<224x280xbf16, #tpu.memory_space<vmem>>, vector<16x10xbf16>
    tpu.vector_store %arg13[%c144_89, %c270_90], %173 {strides = array<i32>} : memref<224x280xbf16, #tpu.memory_space<vmem>>, vector<16x10xbf16>,
    %c320 = arith.constant 320 : index
    %c0_91 = arith.constant 0 : index
    %175 = vector.load %arg12[%c320, %c0_91] : memref<448x280xf32, #tpu.memory_space<vmem>>, vector<16x280xf32>
    %c336 = arith.constant 336 : index
    %c0_92 = arith.constant 0 : index
    %176 = vector.load %arg12[%c336, %c0_92] : memref<448x280xf32, #tpu.memory_space<vmem>>, vector<16x280xf32>
    %177 = arith.maximumf %175, %176 : vector<16x280xf32>
    %178 = vector.broadcast %24 : vector<1x280xf32> to vector<16x280xf32>
    %179 = arith.addf %177, %178 : vector<16x280xf32>
    %cst_93 = arith.constant 0.000000e+00 : f32
    %180 = vector.broadcast %cst_93 : f32 to vector<16x280xf32>
    %181 = arith.maximumf %179, %180 : vector<16x280xf32>
    %182 = vector.extract_strided_slice %181 {offsets = [0, 0], sizes = [16, 270], strides = [1, 1]} : vector<16x280xf32> to vector<16x270xf32>
    %183 = vector.extract_strided_slice %181 {offsets = [0, 10], sizes = [16, 270], strides = [1, 1]} : vector<16x280xf32> to vector<16x270xf32>
    %184 = arith.maximumf %182, %183 : vector<16x270xf32>
    %185 = arith.truncf %184 : vector<16x270xf32> to vector<16x270xbf16>
    %c160_94 = arith.constant 160 : index
    %c0_95 = arith.constant 0 : index
    %186 = vector.load %arg13[%c160_94, %c0_95] : memref<224x280xbf16, #tpu.memory_space<vmem>>, vector<16x270xbf16>
    tpu.vector_store %arg13[%c160_94, %c0_95], %185 {strides = array<i32>} : memref<224x280xbf16, #tpu.memory_space<vmem>>, vector<16x270xbf16>,
    %187 = vector.extract_strided_slice %181 {offsets = [0, 270], sizes = [16, 10], strides = [1, 1]} : vector<16x280xf32> to vector<16x10xf32>
    %188 = arith.truncf %187 : vector<16x10xf32> to vector<16x10xbf16>
    %c160_96 = arith.constant 160 : index
    %c270_97 = arith.constant 270 : index
    %189 = vector.load %arg13[%c160_96, %c270_97] : memref<224x280xbf16, #tpu.memory_space<vmem>>, vector<16x10xbf16>
    tpu.vector_store %arg13[%c160_96, %c270_97], %188 {strides = array<i32>} : memref<224x280xbf16, #tpu.memory_space<vmem>>, vector<16x10xbf16>,
    %c352 = arith.constant 352 : index
    %c0_98 = arith.constant 0 : index
    %190 = vector.load %arg12[%c352, %c0_98] : memref<448x280xf32, #tpu.memory_space<vmem>>, vector<16x280xf32>
    %c368 = arith.constant 368 : index
    %c0_99 = arith.constant 0 : index
    %191 = vector.load %arg12[%c368, %c0_99] : memref<448x280xf32, #tpu.memory_space<vmem>>, vector<16x280xf32>
    %192 = arith.maximumf %190, %191 : vector<16x280xf32>
    %193 = vector.broadcast %24 : vector<1x280xf32> to vector<16x280xf32>
    %194 = arith.addf %192, %193 : vector<16x280xf32>
    %cst_100 = arith.constant 0.000000e+00 : f32
    %195 = vector.broadcast %cst_100 : f32 to vector<16x280xf32>
    %196 = arith.maximumf %194, %195 : vector<16x280xf32>
    %197 = vector.extract_strided_slice %196 {offsets = [0, 0], sizes = [16, 270], strides = [1, 1]} : vector<16x280xf32> to vector<16x270xf32>
    %198 = vector.extract_strided_slice %196 {offsets = [0, 10], sizes = [16, 270], strides = [1, 1]} : vector<16x280xf32> to vector<16x270xf32>
    %199 = arith.maximumf %197, %198 : vector<16x270xf32>
    %200 = arith.truncf %199 : vector<16x270xf32> to vector<16x270xbf16>
    %c176_101 = arith.constant 176 : index
    %c0_102 = arith.constant 0 : index
    %201 = vector.load %arg13[%c176_101, %c0_102] : memref<224x280xbf16, #tpu.memory_space<vmem>>, vector<16x270xbf16>
    tpu.vector_store %arg13[%c176_101, %c0_102], %200 {strides = array<i32>} : memref<224x280xbf16, #tpu.memory_space<vmem>>, vector<16x270xbf16>,
    %202 = vector.extract_strided_slice %196 {offsets = [0, 270], sizes = [16, 10], strides = [1, 1]} : vector<16x280xf32> to vector<16x10xf32>
    %203 = arith.truncf %202 : vector<16x10xf32> to vector<16x10xbf16>
    %c176_103 = arith.constant 176 : index
    %c270_104 = arith.constant 270 : index
    %204 = vector.load %arg13[%c176_103, %c270_104] : memref<224x280xbf16, #tpu.memory_space<vmem>>, vector<16x10xbf16>
    tpu.vector_store %arg13[%c176_103, %c270_104], %203 {strides = array<i32>} : memref<224x280xbf16, #tpu.memory_space<vmem>>, vector<16x10xbf16>,
    %c384 = arith.constant 384 : index
    %c0_105 = arith.constant 0 : index
    %205 = vector.load %arg12[%c384, %c0_105] : memref<448x280xf32, #tpu.memory_space<vmem>>, vector<16x280xf32>
    %c400 = arith.constant 400 : index
    %c0_106 = arith.constant 0 : index
    %206 = vector.load %arg12[%c400, %c0_106] : memref<448x280xf32, #tpu.memory_space<vmem>>, vector<16x280xf32>
    %207 = arith.maximumf %205, %206 : vector<16x280xf32>
    %208 = vector.broadcast %24 : vector<1x280xf32> to vector<16x280xf32>
    %209 = arith.addf %207, %208 : vector<16x280xf32>
    %cst_107 = arith.constant 0.000000e+00 : f32
    %210 = vector.broadcast %cst_107 : f32 to vector<16x280xf32>
    %211 = arith.maximumf %209, %210 : vector<16x280xf32>
    %212 = vector.extract_strided_slice %211 {offsets = [0, 0], sizes = [16, 270], strides = [1, 1]} : vector<16x280xf32> to vector<16x270xf32>
    %213 = vector.extract_strided_slice %211 {offsets = [0, 10], sizes = [16, 270], strides = [1, 1]} : vector<16x280xf32> to vector<16x270xf32>
    %214 = arith.maximumf %212, %213 : vector<16x270xf32>
    %215 = arith.truncf %214 : vector<16x270xf32> to vector<16x270xbf16>
    %c192_108 = arith.constant 192 : index
    %c0_109 = arith.constant 0 : index
    %216 = vector.load %arg13[%c192_108, %c0_109] : memref<224x280xbf16, #tpu.memory_space<vmem>>, vector<16x270xbf16>
    tpu.vector_store %arg13[%c192_108, %c0_109], %215 {strides = array<i32>} : memref<224x280xbf16, #tpu.memory_space<vmem>>, vector<16x270xbf16>,
    %217 = vector.extract_strided_slice %211 {offsets = [0, 270], sizes = [16, 10], strides = [1, 1]} : vector<16x280xf32> to vector<16x10xf32>
    %218 = arith.truncf %217 : vector<16x10xf32> to vector<16x10xbf16>
    %c192_110 = arith.constant 192 : index
    %c270_111 = arith.constant 270 : index
    %219 = vector.load %arg13[%c192_110, %c270_111] : memref<224x280xbf16, #tpu.memory_space<vmem>>, vector<16x10xbf16>
    tpu.vector_store %arg13[%c192_110, %c270_111], %218 {strides = array<i32>} : memref<224x280xbf16, #tpu.memory_space<vmem>>, vector<16x10xbf16>,
    %c416 = arith.constant 416 : index
    %c0_112 = arith.constant 0 : index
    %220 = vector.load %arg12[%c416, %c0_112] : memref<448x280xf32, #tpu.memory_space<vmem>>, vector<16x280xf32>
    %c432 = arith.constant 432 : index
    %c0_113 = arith.constant 0 : index
    %221 = vector.load %arg12[%c432, %c0_113] : memref<448x280xf32, #tpu.memory_space<vmem>>, vector<16x280xf32>
    %222 = arith.maximumf %220, %221 : vector<16x280xf32>
    %223 = vector.broadcast %24 : vector<1x280xf32> to vector<16x280xf32>
    %224 = arith.addf %222, %223 : vector<16x280xf32>
    %cst_114 = arith.constant 0.000000e+00 : f32
    %225 = vector.broadcast %cst_114 : f32 to vector<16x280xf32>
    %226 = arith.maximumf %224, %225 : vector<16x280xf32>
    %227 = vector.extract_strided_slice %226 {offsets = [0, 0], sizes = [16, 270], strides = [1, 1]} : vector<16x280xf32> to vector<16x270xf32>
    %228 = vector.extract_strided_slice %226 {offsets = [0, 10], sizes = [16, 270], strides = [1, 1]} : vector<16x280xf32> to vector<16x270xf32>
    %229 = arith.maximumf %227, %228 : vector<16x270xf32>
    %230 = arith.truncf %229 : vector<16x270xf32> to vector<16x270xbf16>
    %c208_115 = arith.constant 208 : index
    %c0_116 = arith.constant 0 : index
    %231 = vector.load %arg13[%c208_115, %c0_116] : memref<224x280xbf16, #tpu.memory_space<vmem>>, vector<16x270xbf16>
    tpu.vector_store %arg13[%c208_115, %c0_116], %230 {strides = array<i32>} : memref<224x280xbf16, #tpu.memory_space<vmem>>, vector<16x270xbf16>,
    %232 = vector.extract_strided_slice %226 {offsets = [0, 270], sizes = [16, 10], strides = [1, 1]} : vector<16x280xf32> to vector<16x10xf32>
    %233 = arith.truncf %232 : vector<16x10xf32> to vector<16x10xbf16>
    %c208_117 = arith.constant 208 : index
    %c270_118 = arith.constant 270 : index
    %234 = vector.load %arg13[%c208_117, %c270_118] : memref<224x280xbf16, #tpu.memory_space<vmem>>, vector<16x10xbf16>
    tpu.vector_store %arg13[%c208_117, %c270_118], %233 {strides = array<i32>} : memref<224x280xbf16, #tpu.memory_space<vmem>>, vector<16x10xbf16>,
    %c0_119 = arith.constant 0 : index
    %c0_120 = arith.constant 0 : index
    %235 = vector.load %arg13[%c0_119, %c0_120] : memref<224x280xbf16, #tpu.memory_space<vmem>>, vector<160x280xbf16>
    %c0_121 = arith.constant 0 : index
    %c0_122 = arith.constant 0 : index
    %236 = vector.load %arg14[%c0_121, %c0_122] : memref<160x1400xbf16, #tpu.memory_space<vmem>>, vector<160x280xbf16>
    tpu.vector_store %arg14[%c0_121, %c0_122], %235 {strides = array<i32>} : memref<160x1400xbf16, #tpu.memory_space<vmem>>, vector<160x280xbf16>,
    %c16_123 = arith.constant 16 : index
    %c0_124 = arith.constant 0 : index
    %237 = vector.load %arg13[%c16_123, %c0_124] : memref<224x280xbf16, #tpu.memory_space<vmem>>, vector<160x280xbf16>
    %c0_125 = arith.constant 0 : index
    %c280 = arith.constant 280 : index
    %238 = vector.load %arg14[%c0_125, %c280] : memref<160x1400xbf16, #tpu.memory_space<vmem>>, vector<160x280xbf16>
    tpu.vector_store %arg14[%c0_125, %c280], %237 {strides = array<i32>} : memref<160x1400xbf16, #tpu.memory_space<vmem>>, vector<160x280xbf16>,
    %c32_126 = arith.constant 32 : index
    %c0_127 = arith.constant 0 : index
    %239 = vector.load %arg13[%c32_126, %c0_127] : memref<224x280xbf16, #tpu.memory_space<vmem>>, vector<160x280xbf16>
    %c0_128 = arith.constant 0 : index
    %c560 = arith.constant 560 : index
    %240 = vector.load %arg14[%c0_128, %c560] : memref<160x1400xbf16, #tpu.memory_space<vmem>>, vector<160x280xbf16>
    tpu.vector_store %arg14[%c0_128, %c560], %239 {strides = array<i32>} : memref<160x1400xbf16, #tpu.memory_space<vmem>>, vector<160x280xbf16>,
    %c48_129 = arith.constant 48 : index
    %c0_130 = arith.constant 0 : index
    %241 = vector.load %arg13[%c48_129, %c0_130] : memref<224x280xbf16, #tpu.memory_space<vmem>>, vector<160x280xbf16>
    %c0_131 = arith.constant 0 : index
    %c840 = arith.constant 840 : index
    %242 = vector.load %arg14[%c0_131, %c840] : memref<160x1400xbf16, #tpu.memory_space<vmem>>, vector<160x280xbf16>
    tpu.vector_store %arg14[%c0_131, %c840], %241 {strides = array<i32>} : memref<160x1400xbf16, #tpu.memory_space<vmem>>, vector<160x280xbf16>,
    %c64_132 = arith.constant 64 : index
    %c0_133 = arith.constant 0 : index
    %243 = vector.load %arg13[%c64_132, %c0_133] : memref<224x280xbf16, #tpu.memory_space<vmem>>, vector<160x280xbf16>
    %c0_134 = arith.constant 0 : index
    %c1120 = arith.constant 1120 : index
    %244 = vector.load %arg14[%c0_134, %c1120] : memref<160x1400xbf16, #tpu.memory_space<vmem>>, vector<160x280xbf16>
    tpu.vector_store %arg14[%c0_134, %c1120], %243 {strides = array<i32>} : memref<160x1400xbf16, #tpu.memory_space<vmem>>, vector<160x280xbf16>,
    %c0_135 = arith.constant 0 : index
    %c0_136 = arith.constant 0 : index
    %245 = vector.load %arg14[%c0_135, %c0_136] : memref<160x1400xbf16, #tpu.memory_space<vmem>>, vector<160x1400xbf16>
    %c0_137 = arith.constant 0 : index
    %c0_138 = arith.constant 0 : index
    %246 = vector.load %arg4[%c0_137, %c0_138] : memref<1400x200xbf16, #tpu.memory_space<vmem>>, vector<1400x200xbf16>
    %cst_139 = arith.constant dense<0.000000e+00> : vector<160x200xf32>
    %247 = tpu.matmul %245, %246, %cst_139 {dimension_numbers = #tpu.dot_dimension_numbers<[1], [0], [0], [1], [0, 0, 1, 1], [], []>} : vector<160x1400xbf16>, vector<1400x200xbf16>, vector<160x200xf32> -> vector<160x200xf32>
    %c0_140 = arith.constant 0 : index
    %c0_141 = arith.constant 0 : index
    %248 = vector.load %arg15[%c0_140, %c0_141] : memref<160x200xf32, #tpu.memory_space<vmem>>, vector<160x200xf32>
    tpu.vector_store %arg15[%c0_140, %c0_141], %247 {strides = array<i32>} : memref<160x200xf32, #tpu.memory_space<vmem>>, vector<160x200xf32>,
    %c0_142 = arith.constant 0 : index
    %c0_143 = arith.constant 0 : index
    %249 = vector.load %arg5[%c0_142, %c0_143] : memref<1x200xf32, #tpu.memory_space<vmem>>, vector<1x200xf32>
    %c0_144 = arith.constant 0 : index
    %c0_145 = arith.constant 0 : index
    %250 = vector.load %arg15[%c0_144, %c0_145] : memref<160x200xf32, #tpu.memory_space<vmem>>, vector<16x200xf32>
    %c16_146 = arith.constant 16 : index
    %c0_147 = arith.constant 0 : index
    %251 = vector.load %arg15[%c16_146, %c0_147] : memref<160x200xf32, #tpu.memory_space<vmem>>, vector<16x200xf32>
    %252 = arith.maximumf %250, %251 : vector<16x200xf32>
    %253 = vector.broadcast %249 : vector<1x200xf32> to vector<16x200xf32>
    %254 = arith.addf %252, %253 : vector<16x200xf32>
    %cst_148 = arith.constant 0.000000e+00 : f32
    %255 = vector.broadcast %cst_148 : f32 to vector<16x200xf32>
    %256 = arith.maximumf %254, %255 : vector<16x200xf32>
    %257 = vector.extract_strided_slice %256 {offsets = [0, 0], sizes = [16, 180], strides = [1, 1]} : vector<16x200xf32> to vector<16x180xf32>
    %258 = vector.extract_strided_slice %256 {offsets = [0, 20], sizes = [16, 180], strides = [1, 1]} : vector<16x200xf32> to vector<16x180xf32>
    %259 = arith.maximumf %257, %258 : vector<16x180xf32>
    %260 = arith.truncf %259 : vector<16x180xf32> to vector<16x180xbf16>
    %c0_149 = arith.constant 0 : index
    %c0_150 = arith.constant 0 : index
    %261 = vector.load %arg16[%c0_149, %c0_150] : memref<80x200xbf16, #tpu.memory_space<vmem>>, vector<16x180xbf16>
    tpu.vector_store %arg16[%c0_149, %c0_150], %260 {strides = array<i32>} : memref<80x200xbf16, #tpu.memory_space<vmem>>, vector<16x180xbf16>,
    %262 = vector.extract_strided_slice %256 {offsets = [0, 180], sizes = [16, 20], strides = [1, 1]} : vector<16x200xf32> to vector<16x20xf32>
    %263 = arith.truncf %262 : vector<16x20xf32> to vector<16x20xbf16>
    %c0_151 = arith.constant 0 : index
    %c180_152 = arith.constant 180 : index
    %264 = vector.load %arg16[%c0_151, %c180_152] : memref<80x200xbf16, #tpu.memory_space<vmem>>, vector<16x20xbf16>
    tpu.vector_store %arg16[%c0_151, %c180_152], %263 {strides = array<i32>} : memref<80x200xbf16, #tpu.memory_space<vmem>>, vector<16x20xbf16>,
    %c32_153 = arith.constant 32 : index
    %c0_154 = arith.constant 0 : index
    %265 = vector.load %arg15[%c32_153, %c0_154] : memref<160x200xf32, #tpu.memory_space<vmem>>, vector<16x200xf32>
    %c48_155 = arith.constant 48 : index
    %c0_156 = arith.constant 0 : index
    %266 = vector.load %arg15[%c48_155, %c0_156] : memref<160x200xf32, #tpu.memory_space<vmem>>, vector<16x200xf32>
    %267 = arith.maximumf %265, %266 : vector<16x200xf32>
    %268 = vector.broadcast %249 : vector<1x200xf32> to vector<16x200xf32>
    %269 = arith.addf %267, %268 : vector<16x200xf32>
    %cst_157 = arith.constant 0.000000e+00 : f32
    %270 = vector.broadcast %cst_157 : f32 to vector<16x200xf32>
    %271 = arith.maximumf %269, %270 : vector<16x200xf32>
    %272 = vector.extract_strided_slice %271 {offsets = [0, 0], sizes = [16, 180], strides = [1, 1]} : vector<16x200xf32> to vector<16x180xf32>
    %273 = vector.extract_strided_slice %271 {offsets = [0, 20], sizes = [16, 180], strides = [1, 1]} : vector<16x200xf32> to vector<16x180xf32>
    %274 = arith.maximumf %272, %273 : vector<16x180xf32>
    %275 = arith.truncf %274 : vector<16x180xf32> to vector<16x180xbf16>
    %c16_158 = arith.constant 16 : index
    %c0_159 = arith.constant 0 : index
    %276 = vector.load %arg16[%c16_158, %c0_159] : memref<80x200xbf16, #tpu.memory_space<vmem>>, vector<16x180xbf16>
    tpu.vector_store %arg16[%c16_158, %c0_159], %275 {strides = array<i32>} : memref<80x200xbf16, #tpu.memory_space<vmem>>, vector<16x180xbf16>,
    %277 = vector.extract_strided_slice %271 {offsets = [0, 180], sizes = [16, 20], strides = [1, 1]} : vector<16x200xf32> to vector<16x20xf32>
    %278 = arith.truncf %277 : vector<16x20xf32> to vector<16x20xbf16>
    %c16_160 = arith.constant 16 : index
    %c180_161 = arith.constant 180 : index
    %279 = vector.load %arg16[%c16_160, %c180_161] : memref<80x200xbf16, #tpu.memory_space<vmem>>, vector<16x20xbf16>
    tpu.vector_store %arg16[%c16_160, %c180_161], %278 {strides = array<i32>} : memref<80x200xbf16, #tpu.memory_space<vmem>>, vector<16x20xbf16>,
    %c64_162 = arith.constant 64 : index
    %c0_163 = arith.constant 0 : index
    %280 = vector.load %arg15[%c64_162, %c0_163] : memref<160x200xf32, #tpu.memory_space<vmem>>, vector<16x200xf32>
    %c80_164 = arith.constant 80 : index
    %c0_165 = arith.constant 0 : index
    %281 = vector.load %arg15[%c80_164, %c0_165] : memref<160x200xf32, #tpu.memory_space<vmem>>, vector<16x200xf32>
    %282 = arith.maximumf %280, %281 : vector<16x200xf32>
    %283 = vector.broadcast %249 : vector<1x200xf32> to vector<16x200xf32>
    %284 = arith.addf %282, %283 : vector<16x200xf32>
    %cst_166 = arith.constant 0.000000e+00 : f32
    %285 = vector.broadcast %cst_166 : f32 to vector<16x200xf32>
    %286 = arith.maximumf %284, %285 : vector<16x200xf32>
    %287 = vector.extract_strided_slice %286 {offsets = [0, 0], sizes = [16, 180], strides = [1, 1]} : vector<16x200xf32> to vector<16x180xf32>
    %288 = vector.extract_strided_slice %286 {offsets = [0, 20], sizes = [16, 180], strides = [1, 1]} : vector<16x200xf32> to vector<16x180xf32>
    %289 = arith.maximumf %287, %288 : vector<16x180xf32>
    %290 = arith.truncf %289 : vector<16x180xf32> to vector<16x180xbf16>
    %c32_167 = arith.constant 32 : index
    %c0_168 = arith.constant 0 : index
    %291 = vector.load %arg16[%c32_167, %c0_168] : memref<80x200xbf16, #tpu.memory_space<vmem>>, vector<16x180xbf16>
    tpu.vector_store %arg16[%c32_167, %c0_168], %290 {strides = array<i32>} : memref<80x200xbf16, #tpu.memory_space<vmem>>, vector<16x180xbf16>,
    %292 = vector.extract_strided_slice %286 {offsets = [0, 180], sizes = [16, 20], strides = [1, 1]} : vector<16x200xf32> to vector<16x20xf32>
    %293 = arith.truncf %292 : vector<16x20xf32> to vector<16x20xbf16>
    %c32_169 = arith.constant 32 : index
    %c180_170 = arith.constant 180 : index
    %294 = vector.load %arg16[%c32_169, %c180_170] : memref<80x200xbf16, #tpu.memory_space<vmem>>, vector<16x20xbf16>
    tpu.vector_store %arg16[%c32_169, %c180_170], %293 {strides = array<i32>} : memref<80x200xbf16, #tpu.memory_space<vmem>>, vector<16x20xbf16>,
    %c96_171 = arith.constant 96 : index
    %c0_172 = arith.constant 0 : index
    %295 = vector.load %arg15[%c96_171, %c0_172] : memref<160x200xf32, #tpu.memory_space<vmem>>, vector<16x200xf32>
    %c112_173 = arith.constant 112 : index
    %c0_174 = arith.constant 0 : index
    %296 = vector.load %arg15[%c112_173, %c0_174] : memref<160x200xf32, #tpu.memory_space<vmem>>, vector<16x200xf32>
    %297 = arith.maximumf %295, %296 : vector<16x200xf32>
    %298 = vector.broadcast %249 : vector<1x200xf32> to vector<16x200xf32>
    %299 = arith.addf %297, %298 : vector<16x200xf32>
    %cst_175 = arith.constant 0.000000e+00 : f32
    %300 = vector.broadcast %cst_175 : f32 to vector<16x200xf32>
    %301 = arith.maximumf %299, %300 : vector<16x200xf32>
    %302 = vector.extract_strided_slice %301 {offsets = [0, 0], sizes = [16, 180], strides = [1, 1]} : vector<16x200xf32> to vector<16x180xf32>
    %303 = vector.extract_strided_slice %301 {offsets = [0, 20], sizes = [16, 180], strides = [1, 1]} : vector<16x200xf32> to vector<16x180xf32>
    %304 = arith.maximumf %302, %303 : vector<16x180xf32>
    %305 = arith.truncf %304 : vector<16x180xf32> to vector<16x180xbf16>
    %c48_176 = arith.constant 48 : index
    %c0_177 = arith.constant 0 : index
    %306 = vector.load %arg16[%c48_176, %c0_177] : memref<80x200xbf16, #tpu.memory_space<vmem>>, vector<16x180xbf16>
    tpu.vector_store %arg16[%c48_176, %c0_177], %305 {strides = array<i32>} : memref<80x200xbf16, #tpu.memory_space<vmem>>, vector<16x180xbf16>,
    %307 = vector.extract_strided_slice %301 {offsets = [0, 180], sizes = [16, 20], strides = [1, 1]} : vector<16x200xf32> to vector<16x20xf32>
    %308 = arith.truncf %307 : vector<16x20xf32> to vector<16x20xbf16>
    %c48_178 = arith.constant 48 : index
    %c180_179 = arith.constant 180 : index
    %309 = vector.load %arg16[%c48_178, %c180_179] : memref<80x200xbf16, #tpu.memory_space<vmem>>, vector<16x20xbf16>
    tpu.vector_store %arg16[%c48_178, %c180_179], %308 {strides = array<i32>} : memref<80x200xbf16, #tpu.memory_space<vmem>>, vector<16x20xbf16>,
    %c128_180 = arith.constant 128 : index
    %c0_181 = arith.constant 0 : index
    %310 = vector.load %arg15[%c128_180, %c0_181] : memref<160x200xf32, #tpu.memory_space<vmem>>, vector<16x200xf32>
    %c144_182 = arith.constant 144 : index
    %c0_183 = arith.constant 0 : index
    %311 = vector.load %arg15[%c144_182, %c0_183] : memref<160x200xf32, #tpu.memory_space<vmem>>, vector<16x200xf32>
    %312 = arith.maximumf %310, %311 : vector<16x200xf32>
    %313 = vector.broadcast %249 : vector<1x200xf32> to vector<16x200xf32>
    %314 = arith.addf %312, %313 : vector<16x200xf32>
    %cst_184 = arith.constant 0.000000e+00 : f32
    %315 = vector.broadcast %cst_184 : f32 to vector<16x200xf32>
    %316 = arith.maximumf %314, %315 : vector<16x200xf32>
    %317 = vector.extract_strided_slice %316 {offsets = [0, 0], sizes = [16, 180], strides = [1, 1]} : vector<16x200xf32> to vector<16x180xf32>
    %318 = vector.extract_strided_slice %316 {offsets = [0, 20], sizes = [16, 180], strides = [1, 1]} : vector<16x200xf32> to vector<16x180xf32>
    %319 = arith.maximumf %317, %318 : vector<16x180xf32>
    %320 = arith.truncf %319 : vector<16x180xf32> to vector<16x180xbf16>
    %c64_185 = arith.constant 64 : index
    %c0_186 = arith.constant 0 : index
    %321 = vector.load %arg16[%c64_185, %c0_186] : memref<80x200xbf16, #tpu.memory_space<vmem>>, vector<16x180xbf16>
    tpu.vector_store %arg16[%c64_185, %c0_186], %320 {strides = array<i32>} : memref<80x200xbf16, #tpu.memory_space<vmem>>, vector<16x180xbf16>,
    %322 = vector.extract_strided_slice %316 {offsets = [0, 180], sizes = [16, 20], strides = [1, 1]} : vector<16x200xf32> to vector<16x20xf32>
    %323 = arith.truncf %322 : vector<16x20xf32> to vector<16x20xbf16>
    %c64_187 = arith.constant 64 : index
    %c180_188 = arith.constant 180 : index
    %324 = vector.load %arg16[%c64_187, %c180_188] : memref<80x200xbf16, #tpu.memory_space<vmem>>, vector<16x20xbf16>
    tpu.vector_store %arg16[%c64_187, %c180_188], %323 {strides = array<i32>} : memref<80x200xbf16, #tpu.memory_space<vmem>>, vector<16x20xbf16>,
    %c0_189 = arith.constant 0 : index
    %c0_190 = arith.constant 0 : index
    %325 = vector.load %arg16[%c0_189, %c0_190] : memref<80x200xbf16, #tpu.memory_space<vmem>>, vector<16x200xbf16>
    %c0_191 = arith.constant 0 : index
    %c0_192 = arith.constant 0 : index
    %326 = vector.load %arg17[%c0_191, %c0_192] : memref<16x1000xbf16, #tpu.memory_space<vmem>>, vector<16x200xbf16>
    tpu.vector_store %arg17[%c0_191, %c0_192], %325 {strides = array<i32>} : memref<16x1000xbf16, #tpu.memory_space<vmem>>, vector<16x200xbf16>,
    %c16_193 = arith.constant 16 : index
    %c0_194 = arith.constant 0 : index
    %327 = vector.load %arg16[%c16_193, %c0_194] : memref<80x200xbf16, #tpu.memory_space<vmem>>, vector<16x200xbf16>
    %c0_195 = arith.constant 0 : index
    %c200 = arith.constant 200 : index
    %328 = vector.load %arg17[%c0_195, %c200] : memref<16x1000xbf16, #tpu.memory_space<vmem>>, vector<16x200xbf16>
    tpu.vector_store %arg17[%c0_195, %c200], %327 {strides = array<i32>} : memref<16x1000xbf16, #tpu.memory_space<vmem>>, vector<16x200xbf16>,
    %c32_196 = arith.constant 32 : index
    %c0_197 = arith.constant 0 : index
    %329 = vector.load %arg16[%c32_196, %c0_197] : memref<80x200xbf16, #tpu.memory_space<vmem>>, vector<16x200xbf16>
    %c0_198 = arith.constant 0 : index
    %c400_199 = arith.constant 400 : index
    %330 = vector.load %arg17[%c0_198, %c400_199] : memref<16x1000xbf16, #tpu.memory_space<vmem>>, vector<16x200xbf16>
    tpu.vector_store %arg17[%c0_198, %c400_199], %329 {strides = array<i32>} : memref<16x1000xbf16, #tpu.memory_space<vmem>>, vector<16x200xbf16>,
    %c48_200 = arith.constant 48 : index
    %c0_201 = arith.constant 0 : index
    %331 = vector.load %arg16[%c48_200, %c0_201] : memref<80x200xbf16, #tpu.memory_space<vmem>>, vector<16x200xbf16>
    %c0_202 = arith.constant 0 : index
    %c600 = arith.constant 600 : index
    %332 = vector.load %arg17[%c0_202, %c600] : memref<16x1000xbf16, #tpu.memory_space<vmem>>, vector<16x200xbf16>
    tpu.vector_store %arg17[%c0_202, %c600], %331 {strides = array<i32>} : memref<16x1000xbf16, #tpu.memory_space<vmem>>, vector<16x200xbf16>,
    %c64_203 = arith.constant 64 : index
    %c0_204 = arith.constant 0 : index
    %333 = vector.load %arg16[%c64_203, %c0_204] : memref<80x200xbf16, #tpu.memory_space<vmem>>, vector<16x200xbf16>
    %c0_205 = arith.constant 0 : index
    %c800 = arith.constant 800 : index
    %334 = vector.load %arg17[%c0_205, %c800] : memref<16x1000xbf16, #tpu.memory_space<vmem>>, vector<16x200xbf16>
    tpu.vector_store %arg17[%c0_205, %c800], %333 {strides = array<i32>} : memref<16x1000xbf16, #tpu.memory_space<vmem>>, vector<16x200xbf16>,
    %c0_206 = arith.constant 0 : index
    %c0_207 = arith.constant 0 : index
    %335 = vector.load %arg17[%c0_206, %c0_207] : memref<16x1000xbf16, #tpu.memory_space<vmem>>, vector<16x1000xbf16>
    %c0_208 = arith.constant 0 : index
    %c0_209 = arith.constant 0 : index
    %336 = vector.load %arg6[%c0_208, %c0_209] : memref<1000x128xbf16, #tpu.memory_space<vmem>>, vector<1000x128xbf16>
    %cst_210 = arith.constant dense<0.000000e+00> : vector<16x128xf32>
    %337 = tpu.matmul %335, %336, %cst_210 {dimension_numbers = #tpu.dot_dimension_numbers<[1], [0], [0], [1], [0, 0, 1, 1], [], []>} : vector<16x1000xbf16>, vector<1000x128xbf16>, vector<16x128xf32> -> vector<16x128xf32>
    %c0_211 = arith.constant 0 : index
    %c0_212 = arith.constant 0 : index
    %338 = vector.load %arg7[%c0_211, %c0_212] : memref<1x128xf32, #tpu.memory_space<vmem>>, vector<1x128xf32>
    %339 = vector.broadcast %338 : vector<1x128xf32> to vector<16x128xf32>
    %340 = arith.addf %337, %339 : vector<16x128xf32>
    %cst_213 = arith.constant 0.000000e+00 : f32
    %341 = vector.broadcast %cst_213 : f32 to vector<16x128xf32>
    %342 = arith.maximumf %340, %341 : vector<16x128xf32>
    %343 = arith.truncf %342 : vector<16x128xf32> to vector<16x128xbf16>
    %c0_214 = arith.constant 0 : index
    %c0_215 = arith.constant 0 : index
    %344 = vector.load %arg8[%c0_214, %c0_215] : memref<128x128xbf16, #tpu.memory_space<vmem>>, vector<128x128xbf16>
    %cst_216 = arith.constant dense<0.000000e+00> : vector<16x128xf32>
    %345 = tpu.matmul %343, %344, %cst_216 {dimension_numbers = #tpu.dot_dimension_numbers<[1], [0], [0], [1], [0, 0, 1, 1], [], []>} : vector<16x128xbf16>, vector<128x128xbf16>, vector<16x128xf32> -> vector<16x128xf32>
    %c0_217 = arith.constant 0 : index
    %c0_218 = arith.constant 0 : index
    %346 = vector.load %arg9[%c0_217, %c0_218] : memref<1x128xf32, #tpu.memory_space<vmem>>, vector<1x128xf32>
    %347 = vector.broadcast %346 : vector<1x128xf32> to vector<16x128xf32>
    %348 = arith.addf %345, %347 : vector<16x128xf32>
    %c0_219 = arith.constant 0 : index
    %c0_220 = arith.constant 0 : index
    %349 = vector.load %arg10[%c0_219, %c0_220] : memref<16x128xf32, #tpu.memory_space<vmem>>, vector<16x128xf32>
    tpu.vector_store %arg10[%c0_219, %c0_220], %348 {strides = array<i32>} : memref<16x128xf32, #tpu.memory_space<vmem>>, vector<16x128xf32>,
    return
  }
  func.func @transform_0(%arg0: i32) -> (i32, i32) {
    %c0_i32 = arith.constant 0 : i32
    %c0_i32_0 = arith.constant 0 : i32
    return %arg0, %c0_i32 : i32, i32
  }
  func.func @transform_1(%arg0: i32) -> (i32, i32) {
    %c0_i32 = arith.constant 0 : i32
    %c0_i32_0 = arith.constant 0 : i32
    %c0_i32_1 = arith.constant 0 : i32
    return %c0_i32, %c0_i32_0 : i32, i32
  }
  func.func @transform_2(%arg0: i32) -> (i32, i32) {
    %c0_i32 = arith.constant 0 : i32
    %c0_i32_0 = arith.constant 0 : i32
    %c0_i32_1 = arith.constant 0 : i32
    return %c0_i32, %c0_i32_0 : i32, i32
  }
  func.func @transform_3(%arg0: i32) -> (i32, i32) {
    %c0_i32 = arith.constant 0 : i32
    %c0_i32_0 = arith.constant 0 : i32
    %c0_i32_1 = arith.constant 0 : i32
    return %c0_i32, %c0_i32_0 : i32, i32
  }
  func.func @transform_4(%arg0: i32) -> (i32, i32) {
    %c0_i32 = arith.constant 0 : i32
    %c0_i32_0 = arith.constant 0 : i32
    %c0_i32_1 = arith.constant 0 : i32
    return %c0_i32, %c0_i32_0 : i32, i32
  }
  func.func @transform_5(%arg0: i32) -> (i32, i32) {
    %c0_i32 = arith.constant 0 : i32
    %c0_i32_0 = arith.constant 0 : i32
    %c0_i32_1 = arith.constant 0 : i32
    return %c0_i32, %c0_i32_0 : i32, i32
  }
  func.func @transform_6(%arg0: i32) -> (i32, i32) {
    %c0_i32 = arith.constant 0 : i32
    %c0_i32_0 = arith.constant 0 : i32
    %c0_i32_1 = arith.constant 0 : i32
    return %c0_i32, %c0_i32_0 : i32, i32
  }
  func.func @transform_7(%arg0: i32) -> (i32, i32) {
    %c0_i32 = arith.constant 0 : i32
    %c0_i32_0 = arith.constant 0 : i32
    %c0_i32_1 = arith.constant 0 : i32
    return %c0_i32, %c0_i32_0 : i32, i32
  }
  func.func @transform_8(%arg0: i32) -> (i32, i32) {
    %c0_i32 = arith.constant 0 : i32
    %c0_i32_0 = arith.constant 0 : i32
    %c0_i32_1 = arith.constant 0 : i32
    return %c0_i32, %c0_i32_0 : i32, i32
  }
  func.func @transform_9(%arg0: i32) -> (i32, i32) {
    %c0_i32 = arith.constant 0 : i32
    %c0_i32_0 = arith.constant 0 : i32
    return %arg0, %c0_i32 : i32, i32
  }
}

</mosaic_0001>

<llo_original>
// kernel: multi_lenet_forward.1
$region0: #{multi_lenet_forward.1}
  #allocation0 [shape = 'u32[]', space=smem, size = 0x4, offset = 0x4, fixed_abs, tag = 'smem constant byte address 0x4 - core index']
  #allocation1 [shape = 'u32[144,128]{1,0:T(1,128)}', space=vmem, size = 0x12000, scoped, tag = 'internal scratch']
  #allocation2 [shape = 'bf16[448,324]{1,0:T(16,128)(2,1)}', space=vmem, size = 0x54000, scoped, tag = 'scratch operand']
  #allocation3 [shape = 'f32[448,280]{1,0:T(8,128)}', space=vmem, size = 0xa8000, scoped, tag = 'scratch operand']
  #allocation4 [shape = 'bf16[224,280]{1,0:T(16,128)(2,1)}', space=vmem, size = 0x2a000, scoped, tag = 'scratch operand']
  #allocation5 [shape = 'bf16[160,1400]{1,0:T(16,128)(2,1)}', space=vmem, size = 0x6e000, scoped, tag = 'scratch operand']
  #allocation6 [shape = 'f32[160,200]{1,0:T(8,128)}', space=vmem, size = 0x28000, scoped, tag = 'scratch operand']
  #allocation7 [shape = 'bf16[80,200]{1,0:T(16,128)(2,1)}', space=vmem, size = 0xa000, scoped, tag = 'scratch operand']
  #allocation8 [shape = 'bf16[16,1000]{1,0:T(16,128)(2,1)}', space=vmem, size = 0x8000, scoped, tag = 'scratch operand']
  %s0 = inlined_call_operand.vmem [shape: f32[576,36], index: 0, kind: input, shape index: {}]
  %s1 = inlined_call_operand.vmem [shape: bf16[324,280], index: 1, kind: input, shape index: {}]
  %s2 = inlined_call_operand.vmem [shape: f32[1,280], index: 2, kind: input, shape index: {}]
  %s3 = inlined_call_operand.vmem [shape: bf16[1400,200], index: 3, kind: input, shape index: {}]
  %s4 = inlined_call_operand.vmem [shape: f32[1,200], index: 4, kind: input, shape index: {}]
  %s5 = inlined_call_operand.vmem [shape: bf16[1000,128], index: 5, kind: input, shape index: {}]
  %s6 = inlined_call_operand.vmem [shape: f32[1,128], index: 6, kind: input, shape index: {}]
  %s7 = inlined_call_operand.vmem [shape: bf16[128,128], index: 7, kind: input, shape index: {}]
  %s8 = inlined_call_operand.vmem [shape: f32[1,128], index: 8, kind: input, shape index: {}]
  %s9 = inlined_call_operand.vmem [shape: f32[16,128], index: 9, kind: output, shape index: {}]
  %s10 = sld [smem:[#allocation0]]
  $region46: #{multi_lenet_forward.1} parent=0
    _
  %s12 = ssub.s32 1, %s10
  %s13 = scalar_select 0, %s12, %s10
  // Predicated region
  $region2: #{multi_lenet_forward.1} parent=0 // pred_check
    _
  $region3: #{multi_lenet_forward.1} parent=0 // pred_check_branch
    %15 = sbr.rel (0) target = $region5
  $region4: #{multi_lenet_forward.1} parent=0 // pred_region
    _
  $region5: #{multi_lenet_forward.1} parent=0 // pred_fallthru
    _
  // Predicated region
  $region6: #{multi_lenet_forward.1} parent=0 // pred_check
    _
  $region7: #{multi_lenet_forward.1} parent=0 // pred_check_branch
    %17 = sbr.rel (0) target = $region9
  $region8: #{multi_lenet_forward.1} parent=0 // pred_region
    _
  $region9: #{multi_lenet_forward.1} parent=0 // pred_fallthru
    _
  // Predicated region
  $region10: #{multi_lenet_forward.1} parent=0 // pred_check
    _
  $region11: #{multi_lenet_forward.1} parent=0 // pred_check_branch
    %19 = sbr.rel (0) target = $region13
  $region12: #{multi_lenet_forward.1} parent=0 // pred_region
    _
  $region13: #{multi_lenet_forward.1} parent=0 // pred_fallthru
    _
  // Predicated region
  $region14: #{multi_lenet_forward.1} parent=0 // pred_check
    _
  $region15: #{multi_lenet_forward.1} parent=0 // pred_check_branch
    %21 = sbr.rel (0) target = $region17
  $region16: #{multi_lenet_forward.1} parent=0 // pred_region
    _
  $region17: #{multi_lenet_forward.1} parent=0 // pred_fallthru
    _
  // Predicated region
  $region18: #{multi_lenet_forward.1} parent=0 // pred_check
    _
  $region19: #{multi_lenet_forward.1} parent=0 // pred_check_branch
    %23 = sbr.rel (0) target = $region21
  $region20: #{multi_lenet_forward.1} parent=0 // pred_region
    _
  $region21: #{multi_lenet_forward.1} parent=0 // pred_fallthru
    _
  // Predicated region
  $region22: #{multi_lenet_forward.1} parent=0 // pred_check
    _
  $region23: #{multi_lenet_forward.1} parent=0 // pred_check_branch
    %25 = sbr.rel (0) target = $region25
  $region24: #{multi_lenet_forward.1} parent=0 // pred_region
    _
  $region25: #{multi_lenet_forward.1} parent=0 // pred_fallthru
    _
  // Predicated region
  $region26: #{multi_lenet_forward.1} parent=0 // pred_check
    _
  $region27: #{multi_lenet_forward.1} parent=0 // pred_check_branch
    %27 = sbr.rel (0) target = $region29
  $region28: #{multi_lenet_forward.1} parent=0 // pred_region
    _
  $region29: #{multi_lenet_forward.1} parent=0 // pred_fallthru
    _
  // Predicated region
  $region30: #{multi_lenet_forward.1} parent=0 // pred_check
    _
  $region31: #{multi_lenet_forward.1} parent=0 // pred_check_branch
    %29 = sbr.rel (0) target = $region33
  $region32: #{multi_lenet_forward.1} parent=0 // pred_region
    _
  $region33: #{multi_lenet_forward.1} parent=0 // pred_fallthru
    _
  // Predicated region
  $region34: #{multi_lenet_forward.1} parent=0 // pred_check
    _
  $region35: #{multi_lenet_forward.1} parent=0 // pred_check_branch
    %31 = sbr.rel (0) target = $region37
  $region36: #{multi_lenet_forward.1} parent=0 // pred_region
    _
  $region37: #{multi_lenet_forward.1} parent=0 // pred_fallthru
    _
  %v33 = vld [vmem:[%s0] sm:$0xff]
  %v34 = vld [vmem:[%s0 + $0x8] sm:$0xff]
  %v35 = vld [vmem:[%s0 + $0x10] sm:$0xff]
  %v36 = vld [vmem:[%s0 + $0x18] sm:$0xff]
  %v37 = vld [vmem:[%s0 + $0x20] sm:$0xff]
  %v38 = vld [vmem:[%s0 + $0x28] sm:$0xff]
  %v39 = vld [vmem:[%s0 + $0x30] sm:$0xff]
  %v40 = vld [vmem:[%s0 + $0x38] sm:$0xff]
  %v41 = vld [vmem:[%s0 + $0x40] sm:$0xff]
  %v42 = vld [vmem:[%s0 + $0x48] sm:$0xff]
  %v43 = vld [vmem:[%s0 + $0x50] sm:$0xff]
  %v44 = vld [vmem:[%s0 + $0x58] sm:$0xff]
  %v45 = vld [vmem:[%s0 + $0x60] sm:$0xff]
  %v46 = vld [vmem:[%s0 + $0x68] sm:$0xff]
  %v47 = vld [vmem:[%s0 + $0x70] sm:$0xff]
  %v48 = vld [vmem:[%s0 + $0x78] sm:$0xff]
  %v49 = vld [vmem:[%s0 + $0x80] sm:$0xff]
  %v50 = vld [vmem:[%s0 + $0x88] sm:$0xff]
  %v51 = vld [vmem:[%s0 + $0x90] sm:$0xff]
  %v52 = vld [vmem:[%s0 + $0x98] sm:$0xff]
  %v53 = vld [vmem:[%s0 + $0xa0] sm:$0xff]
  %v54 = vld [vmem:[%s0 + $0xa8] sm:$0xff]
  %v55 = vld [vmem:[%s0 + $0xb0] sm:$0xff]
  %v56 = vld [vmem:[%s0 + $0xb8] sm:$0xff]
  %v57 = vld [vmem:[%s0 + $0xc0] sm:$0xff]
  %v58 = vld [vmem:[%s0 + $0xc8] sm:$0xff]
  %v59 = vld [vmem:[%s0 + $0xd0] sm:$0xff]
  %v60 = vld [vmem:[%s0 + $0xd8] sm:$0xff]
  %v61 = vld [vmem:[%s0 + $0xe0] sm:$0xff]
  %v62 = vld [vmem:[%s0 + $0xe8] sm:$0xff]
  %v63 = vld [vmem:[%s0 + $0xf0] sm:$0xff]
  %v64 = vld [vmem:[%s0 + $0xf8] sm:$0xff]
  %v65 = vld [vmem:[%s0 + $0x100] sm:$0xff]
  %v66 = vld [vmem:[%s0 + $0x108] sm:$0xff]
  %v67 = vld [vmem:[%s0 + $0x110] sm:$0xff]
  %v68 = vld [vmem:[%s0 + $0x118] sm:$0xff]
  %v69 = vld [vmem:[%s0 + $0x120] sm:$0xff]
  %v70 = vld [vmem:[%s0 + $0x128] sm:$0xff]
  %v71 = vld [vmem:[%s0 + $0x130] sm:$0xff]
  %v72 = vld [vmem:[%s0 + $0x138] sm:$0xff]
  %v73 = vld [vmem:[%s0 + $0x140] sm:$0xff]
  %v74 = vld [vmem:[%s0 + $0x148] sm:$0xff]
  %v75 = vld [vmem:[%s0 + $0x150] sm:$0xff]
  %v76 = vld [vmem:[%s0 + $0x158] sm:$0xff]
  %v77 = vld [vmem:[%s0 + $0x160] sm:$0xff]
  %v78 = vld [vmem:[%s0 + $0x168] sm:$0xff]
  %v79 = vld [vmem:[%s0 + $0x170] sm:$0xff]
  %v80 = vld [vmem:[%s0 + $0x178] sm:$0xff]
  %v81 = vld [vmem:[%s0 + $0x180] sm:$0xff]
  %v82 = vld [vmem:[%s0 + $0x188] sm:$0xff]
  %v83 = vld [vmem:[%s0 + $0x190] sm:$0xff]
  %v84 = vld [vmem:[%s0 + $0x198] sm:$0xff]
  %v85 = vld [vmem:[%s0 + $0x1a0] sm:$0xff]
  %v86 = vld [vmem:[%s0 + $0x1a8] sm:$0xff]
  %v87 = vld [vmem:[%s0 + $0x1b0] sm:$0xff]
  %v88 = vld [vmem:[%s0 + $0x1b8] sm:$0xff]
  %v89 = vld [vmem:[%s0 + $0x1c0] sm:$0xff]
  %v90 = vld [vmem:[%s0 + $0x1c8] sm:$0xff]
  %v91 = vld [vmem:[%s0 + $0x1d0] sm:$0xff]
  %v92 = vld [vmem:[%s0 + $0x1d8] sm:$0xff]
  %v93 = vld [vmem:[%s0 + $0x1e0] sm:$0xff]
  %v94 = vld [vmem:[%s0 + $0x1e8] sm:$0xff]
  %v95 = vld [vmem:[%s0 + $0x1f0] sm:$0xff]
  %v96 = vld [vmem:[%s0 + $0x1f8] sm:$0xff]
  %v97 = vld [vmem:[%s0 + $0x200] sm:$0xff]
  %v98 = vld [vmem:[%s0 + $0x208] sm:$0xff]
  %v99 = vld [vmem:[%s0 + $0x210] sm:$0xff]
  %v100 = vld [vmem:[%s0 + $0x218] sm:$0xff]
  %v101 = vld [vmem:[%s0 + $0x220] sm:$0xff]
  %v102 = vld [vmem:[%s0 + $0x228] sm:$0xff]
  %v103 = vld [vmem:[%s0 + $0x230] sm:$0xff]
  %v104 = vld [vmem:[%s0 + $0x238] sm:$0xff]
  %v105 = vpack.c.bf16 %v34, %v33
  %v106 = vpack.c.bf16 %v36, %v35
  %v107 = vpack.c.bf16 %v38, %v37
  %v108 = vpack.c.bf16 %v40, %v39
  %v109 = vpack.c.bf16 %v42, %v41
  %v110 = vpack.c.bf16 %v44, %v43
  %v111 = vpack.c.bf16 %v46, %v45
  %v112 = vpack.c.bf16 %v48, %v47
  %v113 = vpack.c.bf16 %v50, %v49
  %v114 = vpack.c.bf16 %v52, %v51
  %v115 = vpack.c.bf16 %v54, %v53
  %v116 = vpack.c.bf16 %v56, %v55
  %v117 = vpack.c.bf16 %v58, %v57
  %v118 = vpack.c.bf16 %v60, %v59
  %v119 = vpack.c.bf16 %v62, %v61
  %v120 = vpack.c.bf16 %v64, %v63
  %v121 = vpack.c.bf16 %v66, %v65
  %v122 = vpack.c.bf16 %v68, %v67
  %v123 = vpack.c.bf16 %v70, %v69
  %v124 = vpack.c.bf16 %v72, %v71
  %v125 = vpack.c.bf16 %v74, %v73
  %v126 = vpack.c.bf16 %v76, %v75
  %v127 = vpack.c.bf16 %v78, %v77
  %v128 = vpack.c.bf16 %v80, %v79
  %v129 = vpack.c.bf16 %v82, %v81
  %v130 = vpack.c.bf16 %v84, %v83
  %v131 = vpack.c.bf16 %v86, %v85
  %v132 = vpack.c.bf16 %v88, %v87
  %v133 = vpack.c.bf16 %v90, %v89
  %v134 = vpack.c.bf16 %v92, %v91
  %v135 = vpack.c.bf16 %v94, %v93
  %v136 = vpack.c.bf16 %v96, %v95
  %v137 = vpack.c.bf16 %v98, %v97
  %v138 = vpack.c.bf16 %v100, %v99
  %v139 = vpack.c.bf16 %v102, %v101
  %v140 = vpack.c.bf16 %v104, %v103
  %vm141 = vcmask 293888
  %142 = vst.msk [vmem:[#allocation2] sm:$0xff] %vm141, %v105
  %143 = vst.msk [vmem:[#allocation2 + $0x18] sm:$0xff] %vm141, %v106
  %144 = vst.msk [vmem:[#allocation2 + $0x30] sm:$0xff] %vm141, %v107
  %145 = vst.msk [vmem:[#allocation2 + $0x48] sm:$0xff] %vm141, %v108
  %146 = vst.msk [vmem:[#allocation2 + $0x60] sm:$0xff] %vm141, %v109
  %147 = vst.msk [vmem:[#allocation2 + $0x78] sm:$0xff] %vm141, %v110
  %148 = vst.msk [vmem:[#allocation2 + $0x90] sm:$0xff] %vm141, %v111
  %149 = vst.msk [vmem:[#allocation2 + $0xa8] sm:$0xff] %vm141, %v112
  %150 = vst.msk [vmem:[#allocation2 + $0xc0] sm:$0xff] %vm141, %v113
  %151 = vst.msk [vmem:[#allocation2 + $0xd8] sm:$0xff] %vm141, %v114
  %152 = vst.msk [vmem:[#allocation2 + $0xf0] sm:$0xff] %vm141, %v115
  %153 = vst.msk [vmem:[#allocation2 + $0x108] sm:$0xff] %vm141, %v116
  %154 = vst.msk [vmem:[#allocation2 + $0x120] sm:$0xff] %vm141, %v117
  %155 = vst.msk [vmem:[#allocation2 + $0x138] sm:$0xff] %vm141, %v118
  %156 = vst.msk [vmem:[#allocation2 + $0x150] sm:$0xff] %vm141, %v119
  %157 = vst.msk [vmem:[#allocation2 + $0x168] sm:$0xff] %vm141, %v120
  %158 = vst.msk [vmem:[#allocation2 + $0x180] sm:$0xff] %vm141, %v121
  %159 = vst.msk [vmem:[#allocation2 + $0x198] sm:$0xff] %vm141, %v122
  %160 = vst.msk [vmem:[#allocation2 + $0x1b0] sm:$0xff] %vm141, %v123
  %161 = vst.msk [vmem:[#allocation2 + $0x1c8] sm:$0xff] %vm141, %v124
  %162 = vst.msk [vmem:[#allocation2 + $0x1e0] sm:$0xff] %vm141, %v125
  %163 = vst.msk [vmem:[#allocation2 + $0x1f8] sm:$0xff] %vm141, %v126
  %164 = vst.msk [vmem:[#allocation2 + $0x210] sm:$0xff] %vm141, %v127
  %165 = vst.msk [vmem:[#allocation2 + $0x228] sm:$0xff] %vm141, %v128
  %166 = vst.msk [vmem:[#allocation2 + $0x240] sm:$0xff] %vm141, %v129
  %167 = vst.msk [vmem:[#allocation2 + $0x258] sm:$0xff] %vm141, %v130
  %168 = vst.msk [vmem:[#allocation2 + $0x270] sm:$0xff] %vm141, %v131
  %169 = vst.msk [vmem:[#allocation2 + $0x288] sm:$0xff] %vm141, %v132
  %198 = vrot.lane.b32.xlu0 %v106, 36
  %v199 = vpop.permute.xlu0 %198
  %200 = vrot.lane.b32.xlu0 %v107, 36
  %v201 = vpop.permute.xlu0 %200
  %202 = vrot.lane.b32.xlu0 %v108, 36
  %v203 = vpop.permute.xlu0 %202
  %204 = vrot.lane.b32.xlu0 %v109, 36
  %v205 = vpop.permute.xlu0 %204
  %206 = vrot.lane.b32.xlu0 %v110, 36
  %v207 = vpop.permute.xlu0 %206
  %208 = vrot.lane.b32.xlu0 %v111, 36
  %v209 = vpop.permute.xlu0 %208
  %210 = vrot.lane.b32.xlu0 %v112, 36
  %v211 = vpop.permute.xlu0 %210
  %212 = vrot.lane.b32.xlu0 %v113, 36
  %v213 = vpop.permute.xlu0 %212
  %214 = vrot.lane.b32.xlu0 %v114, 36
  %v215 = vpop.permute.xlu0 %214
  %216 = vrot.lane.b32.xlu0 %v115, 36
  %v217 = vpop.permute.xlu0 %216
  %218 = vrot.lane.b32.xlu0 %v116, 36
  %v219 = vpop.permute.xlu0 %218
  %220 = vrot.lane.b32.xlu0 %v117, 36
  %v221 = vpop.permute.xlu0 %220
  %222 = vrot.lane.b32.xlu0 %v118, 36
  %v223 = vpop.permute.xlu0 %222
  %224 = vrot.lane.b32.xlu0 %v119, 36
  %v225 = vpop.permute.xlu0 %224
  %226 = vrot.lane.b32.xlu0 %v120, 36
  %v227 = vpop.permute.xlu0 %226
  %228 = vrot.lane.b32.xlu0 %v121, 36
  %v229 = vpop.permute.xlu0 %228
  %230 = vrot.lane.b32.xlu0 %v122, 36
  %v231 = vpop.permute.xlu0 %230
  %232 = vrot.lane.b32.xlu0 %v123, 36
  %v233 = vpop.permute.xlu0 %232
  %234 = vrot.lane.b32.xlu0 %v124, 36
  %v235 = vpop.permute.xlu0 %234
  %236 = vrot.lane.b32.xlu0 %v125, 36
  %v237 = vpop.permute.xlu0 %236
  %238 = vrot.lane.b32.xlu0 %v126, 36
  %v239 = vpop.permute.xlu0 %238
  %240 = vrot.lane.b32.xlu0 %v127, 36
  %v241 = vpop.permute.xlu0 %240
  %242 = vrot.lane.b32.xlu0 %v128, 36
  %v243 = vpop.permute.xlu0 %242
  %244 = vrot.lane.b32.xlu0 %v129, 36
  %v245 = vpop.permute.xlu0 %244
  %246 = vrot.lane.b32.xlu0 %v130, 36
  %v247 = vpop.permute.xlu0 %246
  %248 = vrot.lane.b32.xlu0 %v131, 36
  %v249 = vpop.permute.xlu0 %248
  %250 = vrot.lane.b32.xlu0 %v132, 36
  %v251 = vpop.permute.xlu0 %250
  %252 = vrot.lane.b32.xlu0 %v133, 36
  %v253 = vpop.permute.xlu0 %252
  %vm282 = vcmask 589088
  %283 = vst.msk [vmem:[#allocation2] sm:$0xff] %vm282, %v199
  %284 = vst.msk [vmem:[#allocation2 + $0x18] sm:$0xff] %vm282, %v201
  %285 = vst.msk [vmem:[#allocation2 + $0x30] sm:$0xff] %vm282, %v203
  %286 = vst.msk [vmem:[#allocation2 + $0x48] sm:$0xff] %vm282, %v205
  %287 = vst.msk [vmem:[#allocation2 + $0x60] sm:$0xff] %vm282, %v207
  %288 = vst.msk [vmem:[#allocation2 + $0x78] sm:$0xff] %vm282, %v209
  %289 = vst.msk [vmem:[#allocation2 + $0x90] sm:$0xff] %vm282, %v211
  %290 = vst.msk [vmem:[#allocation2 + $0xa8] sm:$0xff] %vm282, %v213
  %291 = vst.msk [vmem:[#allocation2 + $0xc0] sm:$0xff] %vm282, %v215
  %292 = vst.msk [vmem:[#allocation2 + $0xd8] sm:$0xff] %vm282, %v217
  %293 = vst.msk [vmem:[#allocation2 + $0xf0] sm:$0xff] %vm282, %v219
  %294 = vst.msk [vmem:[#allocation2 + $0x108] sm:$0xff] %vm282, %v221
  %295 = vst.msk [vmem:[#allocation2 + $0x120] sm:$0xff] %vm282, %v223
  %296 = vst.msk [vmem:[#allocation2 + $0x138] sm:$0xff] %vm282, %v225
  %297 = vst.msk [vmem:[#allocation2 + $0x150] sm:$0xff] %vm282, %v227
  %298 = vst.msk [vmem:[#allocation2 + $0x168] sm:$0xff] %vm282, %v229
  %299 = vst.msk [vmem:[#allocation2 + $0x180] sm:$0xff] %vm282, %v231
  %300 = vst.msk [vmem:[#allocation2 + $0x198] sm:$0xff] %vm282, %v233
  %301 = vst.msk [vmem:[#allocation2 + $0x1b0] sm:$0xff] %vm282, %v235
  %302 = vst.msk [vmem:[#allocation2 + $0x1c8] sm:$0xff] %vm282, %v237
  %303 = vst.msk [vmem:[#allocation2 + $0x1e0] sm:$0xff] %vm282, %v239
  %304 = vst.msk [vmem:[#allocation2 + $0x1f8] sm:$0xff] %vm282, %v241
  %305 = vst.msk [vmem:[#allocation2 + $0x210] sm:$0xff] %vm282, %v243
  %306 = vst.msk [vmem:[#allocation2 + $0x228] sm:$0xff] %vm282, %v245
  %307 = vst.msk [vmem:[#allocation2 + $0x240] sm:$0xff] %vm282, %v247
  %308 = vst.msk [vmem:[#allocation2 + $0x258] sm:$0xff] %vm282, %v249
  %309 = vst.msk [vmem:[#allocation2 + $0x270] sm:$0xff] %vm282, %v251
  %310 = vst.msk [vmem:[#allocation2 + $0x288] sm:$0xff] %vm282, %v253
  %312 = vrot.lane.b32.xlu0 %v107, 72
  %v313 = vpop.permute.xlu0 %312
  %314 = vrot.lane.b32.xlu0 %v108, 72
  %v315 = vpop.permute.xlu0 %314
  %316 = vrot.lane.b32.xlu0 %v109, 72
  %v317 = vpop.permute.xlu0 %316
  %318 = vrot.lane.b32.xlu0 %v110, 72
  %v319 = vpop.permute.xlu0 %318
  %320 = vrot.lane.b32.xlu0 %v111, 72
  %v321 = vpop.permute.xlu0 %320
  %322 = vrot.lane.b32.xlu0 %v112, 72
  %v323 = vpop.permute.xlu0 %322
  %324 = vrot.lane.b32.xlu0 %v113, 72
  %v325 = vpop.permute.xlu0 %324
  %326 = vrot.lane.b32.xlu0 %v114, 72
  %v327 = vpop.permute.xlu0 %326
  %328 = vrot.lane.b32.xlu0 %v115, 72
  %v329 = vpop.permute.xlu0 %328
  %330 = vrot.lane.b32.xlu0 %v116, 72
  %v331 = vpop.permute.xlu0 %330
  %332 = vrot.lane.b32.xlu0 %v117, 72
  %v333 = vpop.permute.xlu0 %332
  %334 = vrot.lane.b32.xlu0 %v118, 72
  %v335 = vpop.permute.xlu0 %334
  %336 = vrot.lane.b32.xlu0 %v119, 72
  %v337 = vpop.permute.xlu0 %336
  %338 = vrot.lane.b32.xlu0 %v120, 72
  %v339 = vpop.permute.xlu0 %338
  %340 = vrot.lane.b32.xlu0 %v121, 72
  %v341 = vpop.permute.xlu0 %340
  %342 = vrot.lane.b32.xlu0 %v122, 72
  %v343 = vpop.permute.xlu0 %342
  %344 = vrot.lane.b32.xlu0 %v123, 72
  %v345 = vpop.permute.xlu0 %344
  %346 = vrot.lane.b32.xlu0 %v124, 72
  %v347 = vpop.permute.xlu0 %346
  %348 = vrot.lane.b32.xlu0 %v125, 72
  %v349 = vpop.permute.xlu0 %348
  %350 = vrot.lane.b32.xlu0 %v126, 72
  %v351 = vpop.permute.xlu0 %350
  %352 = vrot.lane.b32.xlu0 %v127, 72
  %v353 = vpop.permute.xlu0 %352
  %354 = vrot.lane.b32.xlu0 %v128, 72
  %v355 = vpop.permute.xlu0 %354
  %356 = vrot.lane.b32.xlu0 %v129, 72
  %v357 = vpop.permute.xlu0 %356
  %358 = vrot.lane.b32.xlu0 %v130, 72
  %v359 = vpop.permute.xlu0 %358
  %360 = vrot.lane.b32.xlu0 %v131, 72
  %v361 = vpop.permute.xlu0 %360
  %362 = vrot.lane.b32.xlu0 %v132, 72
  %v363 = vpop.permute.xlu0 %362
  %364 = vrot.lane.b32.xlu0 %v133, 72
  %v365 = vpop.permute.xlu0 %364
  %366 = vrot.lane.b32.xlu0 %v134, 72
  %v367 = vpop.permute.xlu0 %366
  %vm396 = vcmask 884288
  %397 = vst.msk [vmem:[#allocation2] sm:$0xff] %vm396, %v313
  %398 = vst.msk [vmem:[#allocation2 + $0x18] sm:$0xff] %vm396, %v315
  %399 = vst.msk [vmem:[#allocation2 + $0x30] sm:$0xff] %vm396, %v317
  %400 = vst.msk [vmem:[#allocation2 + $0x48] sm:$0xff] %vm396, %v319
  %401 = vst.msk [vmem:[#allocation2 + $0x60] sm:$0xff] %vm396, %v321
  %402 = vst.msk [vmem:[#allocation2 + $0x78] sm:$0xff] %vm396, %v323
  %403 = vst.msk [vmem:[#allocation2 + $0x90] sm:$0xff] %vm396, %v325
  %404 = vst.msk [vmem:[#allocation2 + $0xa8] sm:$0xff] %vm396, %v327
  %405 = vst.msk [vmem:[#allocation2 + $0xc0] sm:$0xff] %vm396, %v329
  %406 = vst.msk [vmem:[#allocation2 + $0xd8] sm:$0xff] %vm396, %v331
  %407 = vst.msk [vmem:[#allocation2 + $0xf0] sm:$0xff] %vm396, %v333
  %408 = vst.msk [vmem:[#allocation2 + $0x108] sm:$0xff] %vm396, %v335
  %409 = vst.msk [vmem:[#allocation2 + $0x120] sm:$0xff] %vm396, %v337
  %410 = vst.msk [vmem:[#allocation2 + $0x138] sm:$0xff] %vm396, %v339
  %411 = vst.msk [vmem:[#allocation2 + $0x150] sm:$0xff] %vm396, %v341
  %412 = vst.msk [vmem:[#allocation2 + $0x168] sm:$0xff] %vm396, %v343
  %413 = vst.msk [vmem:[#allocation2 + $0x180] sm:$0xff] %vm396, %v345
  %414 = vst.msk [vmem:[#allocation2 + $0x198] sm:$0xff] %vm396, %v347
  %415 = vst.msk [vmem:[#allocation2 + $0x1b0] sm:$0xff] %vm396, %v349
  %416 = vst.msk [vmem:[#allocation2 + $0x1c8] sm:$0xff] %vm396, %v351
  %417 = vst.msk [vmem:[#allocation2 + $0x1e0] sm:$0xff] %vm396, %v353
  %418 = vst.msk [vmem:[#allocation2 + $0x1f8] sm:$0xff] %vm396, %v355
  %419 = vst.msk [vmem:[#allocation2 + $0x210] sm:$0xff] %vm396, %v357
  %420 = vst.msk [vmem:[#allocation2 + $0x228] sm:$0xff] %vm396, %v359
  %421 = vst.msk [vmem:[#allocation2 + $0x240] sm:$0xff] %vm396, %v361
  %422 = vst.msk [vmem:[#allocation2 + $0x258] sm:$0xff] %vm396, %v363
  %423 = vst.msk [vmem:[#allocation2 + $0x270] sm:$0xff] %vm396, %v365
  %424 = vst.msk [vmem:[#allocation2 + $0x288] sm:$0xff] %vm396, %v367
  %426 = vrot.lane.b32.xlu0 %v108, 108
  %v427 = vpop.permute.xlu0 %426
  %428 = vrot.lane.b32.xlu0 %v109, 108
  %v429 = vpop.permute.xlu0 %428
  %430 = vrot.lane.b32.xlu0 %v110, 108
  %v431 = vpop.permute.xlu0 %430
  %432 = vrot.lane.b32.xlu0 %v111, 108
  %v433 = vpop.permute.xlu0 %432
  %434 = vrot.lane.b32.xlu0 %v112, 108
  %v435 = vpop.permute.xlu0 %434
  %436 = vrot.lane.b32.xlu0 %v113, 108
  %v437 = vpop.permute.xlu0 %436
  %438 = vrot.lane.b32.xlu0 %v114, 108
  %v439 = vpop.permute.xlu0 %438
  %440 = vrot.lane.b32.xlu0 %v115, 108
  %v441 = vpop.permute.xlu0 %440
  %442 = vrot.lane.b32.xlu0 %v116, 108
  %v443 = vpop.permute.xlu0 %442
  %444 = vrot.lane.b32.xlu0 %v117, 108
  %v445 = vpop.permute.xlu0 %444
  %446 = vrot.lane.b32.xlu0 %v118, 108
  %v447 = vpop.permute.xlu0 %446
  %448 = vrot.lane.b32.xlu0 %v119, 108
  %v449 = vpop.permute.xlu0 %448
  %450 = vrot.lane.b32.xlu0 %v120, 108
  %v451 = vpop.permute.xlu0 %450
  %452 = vrot.lane.b32.xlu0 %v121, 108
  %v453 = vpop.permute.xlu0 %452
  %454 = vrot.lane.b32.xlu0 %v122, 108
  %v455 = vpop.permute.xlu0 %454
  %456 = vrot.lane.b32.xlu0 %v123, 108
  %v457 = vpop.permute.xlu0 %456
  %458 = vrot.lane.b32.xlu0 %v124, 108
  %v459 = vpop.permute.xlu0 %458
  %460 = vrot.lane.b32.xlu0 %v125, 108
  %v461 = vpop.permute.xlu0 %460
  %462 = vrot.lane.b32.xlu0 %v126, 108
  %v463 = vpop.permute.xlu0 %462
  %464 = vrot.lane.b32.xlu0 %v127, 108
  %v465 = vpop.permute.xlu0 %464
  %466 = vrot.lane.b32.xlu0 %v128, 108
  %v467 = vpop.permute.xlu0 %466
  %468 = vrot.lane.b32.xlu0 %v129, 108
  %v469 = vpop.permute.xlu0 %468
  %470 = vrot.lane.b32.xlu0 %v130, 108
  %v471 = vpop.permute.xlu0 %470
  %472 = vrot.lane.b32.xlu0 %v131, 108
  %v473 = vpop.permute.xlu0 %472
  %474 = vrot.lane.b32.xlu0 %v132, 108
  %v475 = vpop.permute.xlu0 %474
  %476 = vrot.lane.b32.xlu0 %v133, 108
  %v477 = vpop.permute.xlu0 %476
  %478 = vrot.lane.b32.xlu0 %v134, 108
  %v479 = vpop.permute.xlu0 %478
  %480 = vrot.lane.b32.xlu0 %v135, 108
  %v481 = vpop.permute.xlu0 %480
  %vm510 = vcmask 1048416
  %511 = vst.msk [vmem:[#allocation2] sm:$0xff] %vm510, %v427
  %vm512 = vcmask 130048
  %513 = vst.msk [vmem:[#allocation2 + $0x8] sm:$0xff] %vm512, %v427
  %514 = vst.msk [vmem:[#allocation2 + $0x18] sm:$0xff] %vm510, %v429
  %515 = vst.msk [vmem:[#allocation2 + $0x20] sm:$0xff] %vm512, %v429
  %516 = vst.msk [vmem:[#allocation2 + $0x30] sm:$0xff] %vm510, %v431
  %517 = vst.msk [vmem:[#allocation2 + $0x38] sm:$0xff] %vm512, %v431
  %518 = vst.msk [vmem:[#allocation2 + $0x48] sm:$0xff] %vm510, %v433
  %519 = vst.msk [vmem:[#allocation2 + $0x50] sm:$0xff] %vm512, %v433
  %520 = vst.msk [vmem:[#allocation2 + $0x60] sm:$0xff] %vm510, %v435
  %521 = vst.msk [vmem:[#allocation2 + $0x68] sm:$0xff] %vm512, %v435
  %522 = vst.msk [vmem:[#allocation2 + $0x78] sm:$0xff] %vm510, %v437
  %523 = vst.msk [vmem:[#allocation2 + $0x80] sm:$0xff] %vm512, %v437
  %524 = vst.msk [vmem:[#allocation2 + $0x90] sm:$0xff] %vm510, %v439
  %525 = vst.msk [vmem:[#allocation2 + $0x98] sm:$0xff] %vm512, %v439
  %526 = vst.msk [vmem:[#allocation2 + $0xa8] sm:$0xff] %vm510, %v441
  %527 = vst.msk [vmem:[#allocation2 + $0xb0] sm:$0xff] %vm512, %v441
  %528 = vst.msk [vmem:[#allocation2 + $0xc0] sm:$0xff] %vm510, %v443
  %529 = vst.msk [vmem:[#allocation2 + $0xc8] sm:$0xff] %vm512, %v443
  %530 = vst.msk [vmem:[#allocation2 + $0xd8] sm:$0xff] %vm510, %v445
  %531 = vst.msk [vmem:[#allocation2 + $0xe0] sm:$0xff] %vm512, %v445
  %532 = vst.msk [vmem:[#allocation2 + $0xf0] sm:$0xff] %vm510, %v447
  %533 = vst.msk [vmem:[#allocation2 + $0xf8] sm:$0xff] %vm512, %v447
  %534 = vst.msk [vmem:[#allocation2 + $0x108] sm:$0xff] %vm510, %v449
  %535 = vst.msk [vmem:[#allocation2 + $0x110] sm:$0xff] %vm512, %v449
  %536 = vst.msk [vmem:[#allocation2 + $0x120] sm:$0xff] %vm510, %v451
  %537 = vst.msk [vmem:[#allocation2 + $0x128] sm:$0xff] %vm512, %v451
  %538 = vst.msk [vmem:[#allocation2 + $0x138] sm:$0xff] %vm510, %v453
  %539 = vst.msk [vmem:[#allocation2 + $0x140] sm:$0xff] %vm512, %v453
  %540 = vst.msk [vmem:[#allocation2 + $0x150] sm:$0xff] %vm510, %v455
  %541 = vst.msk [vmem:[#allocation2 + $0x158] sm:$0xff] %vm512, %v455
  %542 = vst.msk [vmem:[#allocation2 + $0x168] sm:$0xff] %vm510, %v457
  %543 = vst.msk [vmem:[#allocation2 + $0x170] sm:$0xff] %vm512, %v457
  %544 = vst.msk [vmem:[#allocation2 + $0x180] sm:$0xff] %vm510, %v459
  %545 = vst.msk [vmem:[#allocation2 + $0x188] sm:$0xff] %vm512, %v459
  %546 = vst.msk [vmem:[#allocation2 + $0x198] sm:$0xff] %vm510, %v461
  %547 = vst.msk [vmem:[#allocation2 + $0x1a0] sm:$0xff] %vm512, %v461
  %548 = vst.msk [vmem:[#allocation2 + $0x1b0] sm:$0xff] %vm510, %v463
  %549 = vst.msk [vmem:[#allocation2 + $0x1b8] sm:$0xff] %vm512, %v463
  %550 = vst.msk [vmem:[#allocation2 + $0x1c8] sm:$0xff] %vm510, %v465
  %551 = vst.msk [vmem:[#allocation2 + $0x1d0] sm:$0xff] %vm512, %v465
  %552 = vst.msk [vmem:[#allocation2 + $0x1e0] sm:$0xff] %vm510, %v467
  %553 = vst.msk [vmem:[#allocation2 + $0x1e8] sm:$0xff] %vm512, %v467
  %554 = vst.msk [vmem:[#allocation2 + $0x1f8] sm:$0xff] %vm510, %v469
  %555 = vst.msk [vmem:[#allocation2 + $0x200] sm:$0xff] %vm512, %v469
  %556 = vst.msk [vmem:[#allocation2 + $0x210] sm:$0xff] %vm510, %v471
  %557 = vst.msk [vmem:[#allocation2 + $0x218] sm:$0xff] %vm512, %v471
  %558 = vst.msk [vmem:[#allocation2 + $0x228] sm:$0xff] %vm510, %v473
  %559 = vst.msk [vmem:[#allocation2 + $0x230] sm:$0xff] %vm512, %v473
  %560 = vst.msk [vmem:[#allocation2 + $0x240] sm:$0xff] %vm510, %v475
  %561 = vst.msk [vmem:[#allocation2 + $0x248] sm:$0xff] %vm512, %v475
  %562 = vst.msk [vmem:[#allocation2 + $0x258] sm:$0xff] %vm510, %v477
  %563 = vst.msk [vmem:[#allocation2 + $0x260] sm:$0xff] %vm512, %v477
  %564 = vst.msk [vmem:[#allocation2 + $0x270] sm:$0xff] %vm510, %v479
  %565 = vst.msk [vmem:[#allocation2 + $0x278] sm:$0xff] %vm512, %v479
  %566 = vst.msk [vmem:[#allocation2 + $0x288] sm:$0xff] %vm510, %v481
  %567 = vst.msk [vmem:[#allocation2 + $0x290] sm:$0xff] %vm512, %v481
  %569 = vrot.lane.b32.xlu0 %v109, 16
  %v570 = vpop.permute.xlu0 %569
  %571 = vrot.lane.b32.xlu0 %v110, 16
  %v572 = vpop.permute.xlu0 %571
  %573 = vrot.lane.b32.xlu0 %v111, 16
  %v574 = vpop.permute.xlu0 %573
  %575 = vrot.lane.b32.xlu0 %v112, 16
  %v576 = vpop.permute.xlu0 %575
  %577 = vrot.lane.b32.xlu0 %v113, 16
  %v578 = vpop.permute.xlu0 %577
  %579 = vrot.lane.b32.xlu0 %v114, 16
  %v580 = vpop.permute.xlu0 %579
  %581 = vrot.lane.b32.xlu0 %v115, 16
  %v582 = vpop.permute.xlu0 %581
  %583 = vrot.lane.b32.xlu0 %v116, 16
  %v584 = vpop.permute.xlu0 %583
  %585 = vrot.lane.b32.xlu0 %v117, 16
  %v586 = vpop.permute.xlu0 %585
  %587 = vrot.lane.b32.xlu0 %v118, 16
  %v588 = vpop.permute.xlu0 %587
  %589 = vrot.lane.b32.xlu0 %v119, 16
  %v590 = vpop.permute.xlu0 %589
  %591 = vrot.lane.b32.xlu0 %v120, 16
  %v592 = vpop.permute.xlu0 %591
  %593 = vrot.lane.b32.xlu0 %v121, 16
  %v594 = vpop.permute.xlu0 %593
  %595 = vrot.lane.b32.xlu0 %v122, 16
  %v596 = vpop.permute.xlu0 %595
  %597 = vrot.lane.b32.xlu0 %v123, 16
  %v598 = vpop.permute.xlu0 %597
  %599 = vrot.lane.b32.xlu0 %v124, 16
  %v600 = vpop.permute.xlu0 %599
  %601 = vrot.lane.b32.xlu0 %v125, 16
  %v602 = vpop.permute.xlu0 %601
  %603 = vrot.lane.b32.xlu0 %v126, 16
  %v604 = vpop.permute.xlu0 %603
  %605 = vrot.lane.b32.xlu0 %v127, 16
  %v606 = vpop.permute.xlu0 %605
  %607 = vrot.lane.b32.xlu0 %v128, 16
  %v608 = vpop.permute.xlu0 %607
  %609 = vrot.lane.b32.xlu0 %v129, 16
  %v610 = vpop.permute.xlu0 %609
  %611 = vrot.lane.b32.xlu0 %v130, 16
  %v612 = vpop.permute.xlu0 %611
  %613 = vrot.lane.b32.xlu0 %v131, 16
  %v614 = vpop.permute.xlu0 %613
  %615 = vrot.lane.b32.xlu0 %v132, 16
  %v616 = vpop.permute.xlu0 %615
  %617 = vrot.lane.b32.xlu0 %v133, 16
  %v618 = vpop.permute.xlu0 %617
  %619 = vrot.lane.b32.xlu0 %v134, 16
  %v620 = vpop.permute.xlu0 %619
  %621 = vrot.lane.b32.xlu0 %v135, 16
  %v622 = vpop.permute.xlu0 %621
  %623 = vrot.lane.b32.xlu0 %v136, 16
  %v624 = vpop.permute.xlu0 %623
  %vm653 = vcmask 425088
  %654 = vst.msk [vmem:[#allocation2 + $0x8] sm:$0xff] %vm653, %v570
  %655 = vst.msk [vmem:[#allocation2 + $0x20] sm:$0xff] %vm653, %v572
  %656 = vst.msk [vmem:[#allocation2 + $0x38] sm:$0xff] %vm653, %v574
  %657 = vst.msk [vmem:[#allocation2 + $0x50] sm:$0xff] %vm653, %v576
  %658 = vst.msk [vmem:[#allocation2 + $0x68] sm:$0xff] %vm653, %v578
  %659 = vst.msk [vmem:[#allocation2 + $0x80] sm:$0xff] %vm653, %v580
  %660 = vst.msk [vmem:[#allocation2 + $0x98] sm:$0xff] %vm653, %v582
  %661 = vst.msk [vmem:[#allocation2 + $0xb0] sm:$0xff] %vm653, %v584
  %662 = vst.msk [vmem:[#allocation2 + $0xc8] sm:$0xff] %vm653, %v586
  %663 = vst.msk [vmem:[#allocation2 + $0xe0] sm:$0xff] %vm653, %v588
  %664 = vst.msk [vmem:[#allocation2 + $0xf8] sm:$0xff] %vm653, %v590
  %665 = vst.msk [vmem:[#allocation2 + $0x110] sm:$0xff] %vm653, %v592
  %666 = vst.msk [vmem:[#allocation2 + $0x128] sm:$0xff] %vm653, %v594
  %667 = vst.msk [vmem:[#allocation2 + $0x140] sm:$0xff] %vm653, %v596
  %668 = vst.msk [vmem:[#allocation2 + $0x158] sm:$0xff] %vm653, %v598
  %669 = vst.msk [vmem:[#allocation2 + $0x170] sm:$0xff] %vm653, %v600
  %670 = vst.msk [vmem:[#allocation2 + $0x188] sm:$0xff] %vm653, %v602
  %671 = vst.msk [vmem:[#allocation2 + $0x1a0] sm:$0xff] %vm653, %v604
  %672 = vst.msk [vmem:[#allocation2 + $0x1b8] sm:$0xff] %vm653, %v606
  %673 = vst.msk [vmem:[#allocation2 + $0x1d0] sm:$0xff] %vm653, %v608
  %674 = vst.msk [vmem:[#allocation2 + $0x1e8] sm:$0xff] %vm653, %v610
  %675 = vst.msk [vmem:[#allocation2 + $0x200] sm:$0xff] %vm653, %v612
  %676 = vst.msk [vmem:[#allocation2 + $0x218] sm:$0xff] %vm653, %v614
  %677 = vst.msk [vmem:[#allocation2 + $0x230] sm:$0xff] %vm653, %v616
  %678 = vst.msk [vmem:[#allocation2 + $0x248] sm:$0xff] %vm653, %v618
  %679 = vst.msk [vmem:[#allocation2 + $0x260] sm:$0xff] %vm653, %v620
  %680 = vst.msk [vmem:[#allocation2 + $0x278] sm:$0xff] %vm653, %v622
  %681 = vst.msk [vmem:[#allocation2 + $0x290] sm:$0xff] %vm653, %v624
  %683 = vrot.lane.b32.xlu0 %v110, 52
  %v684 = vpop.permute.xlu0 %683
  %685 = vrot.lane.b32.xlu0 %v111, 52
  %v686 = vpop.permute.xlu0 %685
  %687 = vrot.lane.b32.xlu0 %v112, 52
  %v688 = vpop.permute.xlu0 %687
  %689 = vrot.lane.b32.xlu0 %v113, 52
  %v690 = vpop.permute.xlu0 %689
  %691 = vrot.lane.b32.xlu0 %v114, 52
  %v692 = vpop.permute.xlu0 %691
  %693 = vrot.lane.b32.xlu0 %v115, 52
  %v694 = vpop.permute.xlu0 %693
  %695 = vrot.lane.b32.xlu0 %v116, 52
  %v696 = vpop.permute.xlu0 %695
  %697 = vrot.lane.b32.xlu0 %v117, 52
  %v698 = vpop.permute.xlu0 %697
  %699 = vrot.lane.b32.xlu0 %v118, 52
  %v700 = vpop.permute.xlu0 %699
  %701 = vrot.lane.b32.xlu0 %v119, 52
  %v702 = vpop.permute.xlu0 %701
  %703 = vrot.lane.b32.xlu0 %v120, 52
  %v704 = vpop.permute.xlu0 %703
  %705 = vrot.lane.b32.xlu0 %v121, 52
  %v706 = vpop.permute.xlu0 %705
  %707 = vrot.lane.b32.xlu0 %v122, 52
  %v708 = vpop.permute.xlu0 %707
  %709 = vrot.lane.b32.xlu0 %v123, 52
  %v710 = vpop.permute.xlu0 %709
  %711 = vrot.lane.b32.xlu0 %v124, 52
  %v712 = vpop.permute.xlu0 %711
  %713 = vrot.lane.b32.xlu0 %v125, 52
  %v714 = vpop.permute.xlu0 %713
  %715 = vrot.lane.b32.xlu0 %v126, 52
  %v716 = vpop.permute.xlu0 %715
  %717 = vrot.lane.b32.xlu0 %v127, 52
  %v718 = vpop.permute.xlu0 %717
  %719 = vrot.lane.b32.xlu0 %v128, 52
  %v720 = vpop.permute.xlu0 %719
  %721 = vrot.lane.b32.xlu0 %v129, 52
  %v722 = vpop.permute.xlu0 %721
  %723 = vrot.lane.b32.xlu0 %v130, 52
  %v724 = vpop.permute.xlu0 %723
  %725 = vrot.lane.b32.xlu0 %v131, 52
  %v726 = vpop.permute.xlu0 %725
  %727 = vrot.lane.b32.xlu0 %v132, 52
  %v728 = vpop.permute.xlu0 %727
  %729 = vrot.lane.b32.xlu0 %v133, 52
  %v730 = vpop.permute.xlu0 %729
  %731 = vrot.lane.b32.xlu0 %v134, 52
  %v732 = vpop.permute.xlu0 %731
  %733 = vrot.lane.b32.xlu0 %v135, 52
  %v734 = vpop.permute.xlu0 %733
  %735 = vrot.lane.b32.xlu0 %v136, 52
  %v736 = vpop.permute.xlu0 %735
  %737 = vrot.lane.b32.xlu0 %v137, 52
  %v738 = vpop.permute.xlu0 %737
  %vm767 = vcmask 720288
  %768 = vst.msk [vmem:[#allocation2 + $0x8] sm:$0xff] %vm767, %v684
  %769 = vst.msk [vmem:[#allocation2 + $0x20] sm:$0xff] %vm767, %v686
  %770 = vst.msk [vmem:[#allocation2 + $0x38] sm:$0xff] %vm767, %v688
  %771 = vst.msk [vmem:[#allocation2 + $0x50] sm:$0xff] %vm767, %v690
  %772 = vst.msk [vmem:[#allocation2 + $0x68] sm:$0xff] %vm767, %v692
  %773 = vst.msk [vmem:[#allocation2 + $0x80] sm:$0xff] %vm767, %v694
  %774 = vst.msk [vmem:[#allocation2 + $0x98] sm:$0xff] %vm767, %v696
  %775 = vst.msk [vmem:[#allocation2 + $0xb0] sm:$0xff] %vm767, %v698
  %776 = vst.msk [vmem:[#allocation2 + $0xc8] sm:$0xff] %vm767, %v700
  %777 = vst.msk [vmem:[#allocation2 + $0xe0] sm:$0xff] %vm767, %v702
  %778 = vst.msk [vmem:[#allocation2 + $0xf8] sm:$0xff] %vm767, %v704
  %779 = vst.msk [vmem:[#allocation2 + $0x110] sm:$0xff] %vm767, %v706
  %780 = vst.msk [vmem:[#allocation2 + $0x128] sm:$0xff] %vm767, %v708
  %781 = vst.msk [vmem:[#allocation2 + $0x140] sm:$0xff] %vm767, %v710
  %782 = vst.msk [vmem:[#allocation2 + $0x158] sm:$0xff] %vm767, %v712
  %783 = vst.msk [vmem:[#allocation2 + $0x170] sm:$0xff] %vm767, %v714
  %784 = vst.msk [vmem:[#allocation2 + $0x188] sm:$0xff] %vm767, %v716
  %785 = vst.msk [vmem:[#allocation2 + $0x1a0] sm:$0xff] %vm767, %v718
  %786 = vst.msk [vmem:[#allocation2 + $0x1b8] sm:$0xff] %vm767, %v720
  %787 = vst.msk [vmem:[#allocation2 + $0x1d0] sm:$0xff] %vm767, %v722
  %788 = vst.msk [vmem:[#allocation2 + $0x1e8] sm:$0xff] %vm767, %v724
  %789 = vst.msk [vmem:[#allocation2 + $0x200] sm:$0xff] %vm767, %v726
  %790 = vst.msk [vmem:[#allocation2 + $0x218] sm:$0xff] %vm767, %v728
  %791 = vst.msk [vmem:[#allocation2 + $0x230] sm:$0xff] %vm767, %v730
  %792 = vst.msk [vmem:[#allocation2 + $0x248] sm:$0xff] %vm767, %v732
  %793 = vst.msk [vmem:[#allocation2 + $0x260] sm:$0xff] %vm767, %v734
  %794 = vst.msk [vmem:[#allocation2 + $0x278] sm:$0xff] %vm767, %v736
  %795 = vst.msk [vmem:[#allocation2 + $0x290] sm:$0xff] %vm767, %v738
  %797 = vrot.lane.b32.xlu0 %v111, 88
  %v798 = vpop.permute.xlu0 %797
  %799 = vrot.lane.b32.xlu0 %v112, 88
  %v800 = vpop.permute.xlu0 %799
  %801 = vrot.lane.b32.xlu0 %v113, 88
  %v802 = vpop.permute.xlu0 %801
  %803 = vrot.lane.b32.xlu0 %v114, 88
  %v804 = vpop.permute.xlu0 %803
  %805 = vrot.lane.b32.xlu0 %v115, 88
  %v806 = vpop.permute.xlu0 %805
  %807 = vrot.lane.b32.xlu0 %v116, 88
  %v808 = vpop.permute.xlu0 %807
  %809 = vrot.lane.b32.xlu0 %v117, 88
  %v810 = vpop.permute.xlu0 %809
  %811 = vrot.lane.b32.xlu0 %v118, 88
  %v812 = vpop.permute.xlu0 %811
  %813 = vrot.lane.b32.xlu0 %v119, 88
  %v814 = vpop.permute.xlu0 %813
  %815 = vrot.lane.b32.xlu0 %v120, 88
  %v816 = vpop.permute.xlu0 %815
  %817 = vrot.lane.b32.xlu0 %v121, 88
  %v818 = vpop.permute.xlu0 %817
  %819 = vrot.lane.b32.xlu0 %v122, 88
  %v820 = vpop.permute.xlu0 %819
  %821 = vrot.lane.b32.xlu0 %v123, 88
  %v822 = vpop.permute.xlu0 %821
  %823 = vrot.lane.b32.xlu0 %v124, 88
  %v824 = vpop.permute.xlu0 %823
  %825 = vrot.lane.b32.xlu0 %v125, 88
  %v826 = vpop.permute.xlu0 %825
  %827 = vrot.lane.b32.xlu0 %v126, 88
  %v828 = vpop.permute.xlu0 %827
  %829 = vrot.lane.b32.xlu0 %v127, 88
  %v830 = vpop.permute.xlu0 %829
  %831 = vrot.lane.b32.xlu0 %v128, 88
  %v832 = vpop.permute.xlu0 %831
  %833 = vrot.lane.b32.xlu0 %v129, 88
  %v834 = vpop.permute.xlu0 %833
  %835 = vrot.lane.b32.xlu0 %v130, 88
  %v836 = vpop.permute.xlu0 %835
  %837 = vrot.lane.b32.xlu0 %v131, 88
  %v838 = vpop.permute.xlu0 %837
  %839 = vrot.lane.b32.xlu0 %v132, 88
  %v840 = vpop.permute.xlu0 %839
  %841 = vrot.lane.b32.xlu0 %v133, 88
  %v842 = vpop.permute.xlu0 %841
  %843 = vrot.lane.b32.xlu0 %v134, 88
  %v844 = vpop.permute.xlu0 %843
  %845 = vrot.lane.b32.xlu0 %v135, 88
  %v846 = vpop.permute.xlu0 %845
  %847 = vrot.lane.b32.xlu0 %v136, 88
  %v848 = vpop.permute.xlu0 %847
  %849 = vrot.lane.b32.xlu0 %v137, 88
  %v850 = vpop.permute.xlu0 %849
  %851 = vrot.lane.b32.xlu0 %v138, 88
  %v852 = vpop.permute.xlu0 %851
  %vm881 = vcmask 1015488
  %882 = vst.msk [vmem:[#allocation2 + $0x8] sm:$0xff] %vm881, %v798
  %883 = vst.msk [vmem:[#allocation2 + $0x20] sm:$0xff] %vm881, %v800
  %884 = vst.msk [vmem:[#allocation2 + $0x38] sm:$0xff] %vm881, %v802
  %885 = vst.msk [vmem:[#allocation2 + $0x50] sm:$0xff] %vm881, %v804
  %886 = vst.msk [vmem:[#allocation2 + $0x68] sm:$0xff] %vm881, %v806
  %887 = vst.msk [vmem:[#allocation2 + $0x80] sm:$0xff] %vm881, %v808
  %888 = vst.msk [vmem:[#allocation2 + $0x98] sm:$0xff] %vm881, %v810
  %889 = vst.msk [vmem:[#allocation2 + $0xb0] sm:$0xff] %vm881, %v812
  %890 = vst.msk [vmem:[#allocation2 + $0xc8] sm:$0xff] %vm881, %v814
  %891 = vst.msk [vmem:[#allocation2 + $0xe0] sm:$0xff] %vm881, %v816
  %892 = vst.msk [vmem:[#allocation2 + $0xf8] sm:$0xff] %vm881, %v818
  %893 = vst.msk [vmem:[#allocation2 + $0x110] sm:$0xff] %vm881, %v820
  %894 = vst.msk [vmem:[#allocation2 + $0x128] sm:$0xff] %vm881, %v822
  %895 = vst.msk [vmem:[#allocation2 + $0x140] sm:$0xff] %vm881, %v824
  %896 = vst.msk [vmem:[#allocation2 + $0x158] sm:$0xff] %vm881, %v826
  %897 = vst.msk [vmem:[#allocation2 + $0x170] sm:$0xff] %vm881, %v828
  %898 = vst.msk [vmem:[#allocation2 + $0x188] sm:$0xff] %vm881, %v830
  %899 = vst.msk [vmem:[#allocation2 + $0x1a0] sm:$0xff] %vm881, %v832
  %900 = vst.msk [vmem:[#allocation2 + $0x1b8] sm:$0xff] %vm881, %v834
  %901 = vst.msk [vmem:[#allocation2 + $0x1d0] sm:$0xff] %vm881, %v836
  %902 = vst.msk [vmem:[#allocation2 + $0x1e8] sm:$0xff] %vm881, %v838
  %903 = vst.msk [vmem:[#allocation2 + $0x200] sm:$0xff] %vm881, %v840
  %904 = vst.msk [vmem:[#allocation2 + $0x218] sm:$0xff] %vm881, %v842
  %905 = vst.msk [vmem:[#allocation2 + $0x230] sm:$0xff] %vm881, %v844
  %906 = vst.msk [vmem:[#allocation2 + $0x248] sm:$0xff] %vm881, %v846
  %907 = vst.msk [vmem:[#allocation2 + $0x260] sm:$0xff] %vm881, %v848
  %908 = vst.msk [vmem:[#allocation2 + $0x278] sm:$0xff] %vm881, %v850
  %909 = vst.msk [vmem:[#allocation2 + $0x290] sm:$0xff] %vm881, %v852
  %911 = vrot.lane.b32.xlu0 %v112, 124
  %v912 = vpop.permute.xlu0 %911
  %913 = vrot.lane.b32.xlu0 %v113, 124
  %v914 = vpop.permute.xlu0 %913
  %915 = vrot.lane.b32.xlu0 %v114, 124
  %v916 = vpop.permute.xlu0 %915
  %917 = vrot.lane.b32.xlu0 %v115, 124
  %v918 = vpop.permute.xlu0 %917
  %919 = vrot.lane.b32.xlu0 %v116, 124
  %v920 = vpop.permute.xlu0 %919
  %921 = vrot.lane.b32.xlu0 %v117, 124
  %v922 = vpop.permute.xlu0 %921
  %923 = vrot.lane.b32.xlu0 %v118, 124
  %v924 = vpop.permute.xlu0 %923
  %925 = vrot.lane.b32.xlu0 %v119, 124
  %v926 = vpop.permute.xlu0 %925
  %927 = vrot.lane.b32.xlu0 %v120, 124
  %v928 = vpop.permute.xlu0 %927
  %929 = vrot.lane.b32.xlu0 %v121, 124
  %v930 = vpop.permute.xlu0 %929
  %931 = vrot.lane.b32.xlu0 %v122, 124
  %v932 = vpop.permute.xlu0 %931
  %933 = vrot.lane.b32.xlu0 %v123, 124
  %v934 = vpop.permute.xlu0 %933
  %935 = vrot.lane.b32.xlu0 %v124, 124
  %v936 = vpop.permute.xlu0 %935
  %937 = vrot.lane.b32.xlu0 %v125, 124
  %v938 = vpop.permute.xlu0 %937
  %939 = vrot.lane.b32.xlu0 %v126, 124
  %v940 = vpop.permute.xlu0 %939
  %941 = vrot.lane.b32.xlu0 %v127, 124
  %v942 = vpop.permute.xlu0 %941
  %943 = vrot.lane.b32.xlu0 %v128, 124
  %v944 = vpop.permute.xlu0 %943
  %945 = vrot.lane.b32.xlu0 %v129, 124
  %v946 = vpop.permute.xlu0 %945
  %947 = vrot.lane.b32.xlu0 %v130, 124
  %v948 = vpop.permute.xlu0 %947
  %949 = vrot.lane.b32.xlu0 %v131, 124
  %v950 = vpop.permute.xlu0 %949
  %951 = vrot.lane.b32.xlu0 %v132, 124
  %v952 = vpop.permute.xlu0 %951
  %953 = vrot.lane.b32.xlu0 %v133, 124
  %v954 = vpop.permute.xlu0 %953
  %955 = vrot.lane.b32.xlu0 %v134, 124
  %v956 = vpop.permute.xlu0 %955
  %957 = vrot.lane.b32.xlu0 %v135, 124
  %v958 = vpop.permute.xlu0 %957
  %959 = vrot.lane.b32.xlu0 %v136, 124
  %v960 = vpop.permute.xlu0 %959
  %961 = vrot.lane.b32.xlu0 %v137, 124
  %v962 = vpop.permute.xlu0 %961
  %963 = vrot.lane.b32.xlu0 %v138, 124
  %v964 = vpop.permute.xlu0 %963
  %965 = vrot.lane.b32.xlu0 %v139, 124
  %v966 = vpop.permute.xlu0 %965
  %vm995 = vcmask 1048544
  %996 = vst.msk [vmem:[#allocation2 + $0x8] sm:$0xff] %vm995, %v912
  %vm997 = vcmask 261120
  %998 = vst.msk [vmem:[#allocation2 + $0x10] sm:$0xff] %vm997, %v912
  %999 = vst.msk [vmem:[#allocation2 + $0x20] sm:$0xff] %vm995, %v914
  %1000 = vst.msk [vmem:[#allocation2 + $0x28] sm:$0xff] %vm997, %v914
  %1001 = vst.msk [vmem:[#allocation2 + $0x38] sm:$0xff] %vm995, %v916
  %1002 = vst.msk [vmem:[#allocation2 + $0x40] sm:$0xff] %vm997, %v916
  %1003 = vst.msk [vmem:[#allocation2 + $0x50] sm:$0xff] %vm995, %v918
  %1004 = vst.msk [vmem:[#allocation2 + $0x58] sm:$0xff] %vm997, %v918
  %1005 = vst.msk [vmem:[#allocation2 + $0x68] sm:$0xff] %vm995, %v920
  %1006 = vst.msk [vmem:[#allocation2 + $0x70] sm:$0xff] %vm997, %v920
  %1007 = vst.msk [vmem:[#allocation2 + $0x80] sm:$0xff] %vm995, %v922
  %1008 = vst.msk [vmem:[#allocation2 + $0x88] sm:$0xff] %vm997, %v922
  %1009 = vst.msk [vmem:[#allocation2 + $0x98] sm:$0xff] %vm995, %v924
  %1010 = vst.msk [vmem:[#allocation2 + $0xa0] sm:$0xff] %vm997, %v924
  %1011 = vst.msk [vmem:[#allocation2 + $0xb0] sm:$0xff] %vm995, %v926
  %1012 = vst.msk [vmem:[#allocation2 + $0xb8] sm:$0xff] %vm997, %v926
  %1013 = vst.msk [vmem:[#allocation2 + $0xc8] sm:$0xff] %vm995, %v928
  %1014 = vst.msk [vmem:[#allocation2 + $0xd0] sm:$0xff] %vm997, %v928
  %1015 = vst.msk [vmem:[#allocation2 + $0xe0] sm:$0xff] %vm995, %v930
  %1016 = vst.msk [vmem:[#allocation2 + $0xe8] sm:$0xff] %vm997, %v930
  %1017 = vst.msk [vmem:[#allocation2 + $0xf8] sm:$0xff] %vm995, %v932
  %1018 = vst.msk [vmem:[#allocation2 + $0x100] sm:$0xff] %vm997, %v932
  %1019 = vst.msk [vmem:[#allocation2 + $0x110] sm:$0xff] %vm995, %v934
  %1020 = vst.msk [vmem:[#allocation2 + $0x118] sm:$0xff] %vm997, %v934
  %1021 = vst.msk [vmem:[#allocation2 + $0x128] sm:$0xff] %vm995, %v936
  %1022 = vst.msk [vmem:[#allocation2 + $0x130] sm:$0xff] %vm997, %v936
  %1023 = vst.msk [vmem:[#allocation2 + $0x140] sm:$0xff] %vm995, %v938
  %1024 = vst.msk [vmem:[#allocation2 + $0x148] sm:$0xff] %vm997, %v938
  %1025 = vst.msk [vmem:[#allocation2 + $0x158] sm:$0xff] %vm995, %v940
  %1026 = vst.msk [vmem:[#allocation2 + $0x160] sm:$0xff] %vm997, %v940
  %1027 = vst.msk [vmem:[#allocation2 + $0x170] sm:$0xff] %vm995, %v942
  %1028 = vst.msk [vmem:[#allocation2 + $0x178] sm:$0xff] %vm997, %v942
  %1029 = vst.msk [vmem:[#allocation2 + $0x188] sm:$0xff] %vm995, %v944
  %1030 = vst.msk [vmem:[#allocation2 + $0x190] sm:$0xff] %vm997, %v944
  %1031 = vst.msk [vmem:[#allocation2 + $0x1a0] sm:$0xff] %vm995, %v946
  %1032 = vst.msk [vmem:[#allocation2 + $0x1a8] sm:$0xff] %vm997, %v946
  %1033 = vst.msk [vmem:[#allocation2 + $0x1b8] sm:$0xff] %vm995, %v948
  %1034 = vst.msk [vmem:[#allocation2 + $0x1c0] sm:$0xff] %vm997, %v948
  %1035 = vst.msk [vmem:[#allocation2 + $0x1d0] sm:$0xff] %vm995, %v950
  %1036 = vst.msk [vmem:[#allocation2 + $0x1d8] sm:$0xff] %vm997, %v950
  %1037 = vst.msk [vmem:[#allocation2 + $0x1e8] sm:$0xff] %vm995, %v952
  %1038 = vst.msk [vmem:[#allocation2 + $0x1f0] sm:$0xff] %vm997, %v952
  %1039 = vst.msk [vmem:[#allocation2 + $0x200] sm:$0xff] %vm995, %v954
  %1040 = vst.msk [vmem:[#allocation2 + $0x208] sm:$0xff] %vm997, %v954
  %1041 = vst.msk [vmem:[#allocation2 + $0x218] sm:$0xff] %vm995, %v956
  %1042 = vst.msk [vmem:[#allocation2 + $0x220] sm:$0xff] %vm997, %v956
  %1043 = vst.msk [vmem:[#allocation2 + $0x230] sm:$0xff] %vm995, %v958
  %1044 = vst.msk [vmem:[#allocation2 + $0x238] sm:$0xff] %vm997, %v958
  %1045 = vst.msk [vmem:[#allocation2 + $0x248] sm:$0xff] %vm995, %v960
  %1046 = vst.msk [vmem:[#allocation2 + $0x250] sm:$0xff] %vm997, %v960
  %1047 = vst.msk [vmem:[#allocation2 + $0x260] sm:$0xff] %vm995, %v962
  %1048 = vst.msk [vmem:[#allocation2 + $0x268] sm:$0xff] %vm997, %v962
  %1049 = vst.msk [vmem:[#allocation2 + $0x278] sm:$0xff] %vm995, %v964
  %1050 = vst.msk [vmem:[#allocation2 + $0x280] sm:$0xff] %vm997, %v964
  %1051 = vst.msk [vmem:[#allocation2 + $0x290] sm:$0xff] %vm995, %v966
  %1052 = vst.msk [vmem:[#allocation2 + $0x298] sm:$0xff] %vm997, %v966
  %1054 = vrot.lane.b32.xlu0 %v113, 32
  %v1055 = vpop.permute.xlu0 %1054
  %1056 = vrot.lane.b32.xlu0 %v114, 32
  %v1057 = vpop.permute.xlu0 %1056
  %1058 = vrot.lane.b32.xlu0 %v115, 32
  %v1059 = vpop.permute.xlu0 %1058
  %1060 = vrot.lane.b32.xlu0 %v116, 32
  %v1061 = vpop.permute.xlu0 %1060
  %1062 = vrot.lane.b32.xlu0 %v117, 32
  %v1063 = vpop.permute.xlu0 %1062
  %1064 = vrot.lane.b32.xlu0 %v118, 32
  %v1065 = vpop.permute.xlu0 %1064
  %1066 = vrot.lane.b32.xlu0 %v119, 32
  %v1067 = vpop.permute.xlu0 %1066
  %1068 = vrot.lane.b32.xlu0 %v120, 32
  %v1069 = vpop.permute.xlu0 %1068
  %1070 = vrot.lane.b32.xlu0 %v121, 32
  %v1071 = vpop.permute.xlu0 %1070
  %1072 = vrot.lane.b32.xlu0 %v122, 32
  %v1073 = vpop.permute.xlu0 %1072
  %1074 = vrot.lane.b32.xlu0 %v123, 32
  %v1075 = vpop.permute.xlu0 %1074
  %1076 = vrot.lane.b32.xlu0 %v124, 32
  %v1077 = vpop.permute.xlu0 %1076
  %1078 = vrot.lane.b32.xlu0 %v125, 32
  %v1079 = vpop.permute.xlu0 %1078
  %1080 = vrot.lane.b32.xlu0 %v126, 32
  %v1081 = vpop.permute.xlu0 %1080
  %1082 = vrot.lane.b32.xlu0 %v127, 32
  %v1083 = vpop.permute.xlu0 %1082
  %1084 = vrot.lane.b32.xlu0 %v128, 32
  %v1085 = vpop.permute.xlu0 %1084
  %1086 = vrot.lane.b32.xlu0 %v129, 32
  %v1087 = vpop.permute.xlu0 %1086
  %1088 = vrot.lane.b32.xlu0 %v130, 32
  %v1089 = vpop.permute.xlu0 %1088
  %1090 = vrot.lane.b32.xlu0 %v131, 32
  %v1091 = vpop.permute.xlu0 %1090
  %1092 = vrot.lane.b32.xlu0 %v132, 32
  %v1093 = vpop.permute.xlu0 %1092
  %1094 = vrot.lane.b32.xlu0 %v133, 32
  %v1095 = vpop.permute.xlu0 %1094
  %1096 = vrot.lane.b32.xlu0 %v134, 32
  %v1097 = vpop.permute.xlu0 %1096
  %1098 = vrot.lane.b32.xlu0 %v135, 32
  %v1099 = vpop.permute.xlu0 %1098
  %1100 = vrot.lane.b32.xlu0 %v136, 32
  %v1101 = vpop.permute.xlu0 %1100
  %1102 = vrot.lane.b32.xlu0 %v137, 32
  %v1103 = vpop.permute.xlu0 %1102
  %1104 = vrot.lane.b32.xlu0 %v138, 32
  %v1105 = vpop.permute.xlu0 %1104
  %1106 = vrot.lane.b32.xlu0 %v139, 32
  %v1107 = vpop.permute.xlu0 %1106
  %1108 = vrot.lane.b32.xlu0 %v140, 32
  %v1109 = vpop.permute.xlu0 %1108
  %vm1138 = vcmask 556288
  %1139 = vst.msk [vmem:[#allocation2 + $0x10] sm:$0xff] %vm1138, %v1055
  %1140 = vst.msk [vmem:[#allocation2 + $0x28] sm:$0xff] %vm1138, %v1057
  %1141 = vst.msk [vmem:[#allocation2 + $0x40] sm:$0xff] %vm1138, %v1059
  %1142 = vst.msk [vmem:[#allocation2 + $0x58] sm:$0xff] %vm1138, %v1061
  %1143 = vst.msk [vmem:[#allocation2 + $0x70] sm:$0xff] %vm1138, %v1063
  %1144 = vst.msk [vmem:[#allocation2 + $0x88] sm:$0xff] %vm1138, %v1065
  %1145 = vst.msk [vmem:[#allocation2 + $0xa0] sm:$0xff] %vm1138, %v1067
  %1146 = vst.msk [vmem:[#allocation2 + $0xb8] sm:$0xff] %vm1138, %v1069
  %1147 = vst.msk [vmem:[#allocation2 + $0xd0] sm:$0xff] %vm1138, %v1071
  %1148 = vst.msk [vmem:[#allocation2 + $0xe8] sm:$0xff] %vm1138, %v1073
  %1149 = vst.msk [vmem:[#allocation2 + $0x100] sm:$0xff] %vm1138, %v1075
  %1150 = vst.msk [vmem:[#allocation2 + $0x118] sm:$0xff] %vm1138, %v1077
  %1151 = vst.msk [vmem:[#allocation2 + $0x130] sm:$0xff] %vm1138, %v1079
  %1152 = vst.msk [vmem:[#allocation2 + $0x148] sm:$0xff] %vm1138, %v1081
  %1153 = vst.msk [vmem:[#allocation2 + $0x160] sm:$0xff] %vm1138, %v1083
  %1154 = vst.msk [vmem:[#allocation2 + $0x178] sm:$0xff] %vm1138, %v1085
  %1155 = vst.msk [vmem:[#allocation2 + $0x190] sm:$0xff] %vm1138, %v1087
  %1156 = vst.msk [vmem:[#allocation2 + $0x1a8] sm:$0xff] %vm1138, %v1089
  %1157 = vst.msk [vmem:[#allocation2 + $0x1c0] sm:$0xff] %vm1138, %v1091
  %1158 = vst.msk [vmem:[#allocation2 + $0x1d8] sm:$0xff] %vm1138, %v1093
  %1159 = vst.msk [vmem:[#allocation2 + $0x1f0] sm:$0xff] %vm1138, %v1095
  %1160 = vst.msk [vmem:[#allocation2 + $0x208] sm:$0xff] %vm1138, %v1097
  %1161 = vst.msk [vmem:[#allocation2 + $0x220] sm:$0xff] %vm1138, %v1099
  %1162 = vst.msk [vmem:[#allocation2 + $0x238] sm:$0xff] %vm1138, %v1101
  %1163 = vst.msk [vmem:[#allocation2 + $0x250] sm:$0xff] %vm1138, %v1103
  %1164 = vst.msk [vmem:[#allocation2 + $0x268] sm:$0xff] %vm1138, %v1105
  %1165 = vst.msk [vmem:[#allocation2 + $0x280] sm:$0xff] %vm1138, %v1107
  %1166 = vst.msk [vmem:[#allocation2 + $0x298] sm:$0xff] %vm1138, %v1109
  %v1167 = vld [vmem:[#allocation2] sm:$0xff]
  %v1168 = vld [vmem:[#allocation2 + $0x8] sm:$0xff]
  %v1169 = vld [vmem:[#allocation2 + $0x10] sm:$0xff]
  %v1170 = vld [vmem:[#allocation2 + $0x18] sm:$0xff]
  %v1171 = vld [vmem:[#allocation2 + $0x20] sm:$0xff]
  %v1172 = vld [vmem:[#allocation2 + $0x28] sm:$0xff]
  %v1173 = vld [vmem:[#allocation2 + $0x30] sm:$0xff]
  %v1174 = vld [vmem:[#allocation2 + $0x38] sm:$0xff]
  %v1175 = vld [vmem:[#allocation2 + $0x40] sm:$0xff]
  %v1176 = vld [vmem:[#allocation2 + $0x48] sm:$0xff]
  %v1177 = vld [vmem:[#allocation2 + $0x50] sm:$0xff]
  %v1178 = vld [vmem:[#allocation2 + $0x58] sm:$0xff]
  %v1179 = vld [vmem:[#allocation2 + $0x60] sm:$0xff]
  %v1180 = vld [vmem:[#allocation2 + $0x68] sm:$0xff]
  %v1181 = vld [vmem:[#allocation2 + $0x70] sm:$0xff]
  %v1182 = vld [vmem:[#allocation2 + $0x78] sm:$0xff]
  %v1183 = vld [vmem:[#allocation2 + $0x80] sm:$0xff]
  %v1184 = vld [vmem:[#allocation2 + $0x88] sm:$0xff]
  %v1185 = vld [vmem:[#allocation2 + $0x90] sm:$0xff]
  %v1186 = vld [vmem:[#allocation2 + $0x98] sm:$0xff]
  %v1187 = vld [vmem:[#allocation2 + $0xa0] sm:$0xff]
  %v1188 = vld [vmem:[#allocation2 + $0xa8] sm:$0xff]
  %v1189 = vld [vmem:[#allocation2 + $0xb0] sm:$0xff]
  %v1190 = vld [vmem:[#allocation2 + $0xb8] sm:$0xff]
  %v1191 = vld [vmem:[#allocation2 + $0xc0] sm:$0xff]
  %v1192 = vld [vmem:[#allocation2 + $0xc8] sm:$0xff]
  %v1193 = vld [vmem:[#allocation2 + $0xd0] sm:$0xff]
  %v1194 = vld [vmem:[#allocation2 + $0xd8] sm:$0xff]
  %v1195 = vld [vmem:[#allocation2 + $0xe0] sm:$0xff]
  %v1196 = vld [vmem:[#allocation2 + $0xe8] sm:$0xff]
  %v1197 = vld [vmem:[#allocation2 + $0xf0] sm:$0xff]
  %v1198 = vld [vmem:[#allocation2 + $0xf8] sm:$0xff]
  %v1199 = vld [vmem:[#allocation2 + $0x100] sm:$0xff]
  %v1200 = vld [vmem:[#allocation2 + $0x108] sm:$0xff]
  %v1201 = vld [vmem:[#allocation2 + $0x110] sm:$0xff]
  %v1202 = vld [vmem:[#allocation2 + $0x118] sm:$0xff]
  %v1203 = vld [vmem:[#allocation2 + $0x120] sm:$0xff]
  %v1204 = vld [vmem:[#allocation2 + $0x128] sm:$0xff]
  %v1205 = vld [vmem:[#allocation2 + $0x130] sm:$0xff]
  %v1206 = vld [vmem:[#allocation2 + $0x138] sm:$0xff]
  %v1207 = vld [vmem:[#allocation2 + $0x140] sm:$0xff]
  %v1208 = vld [vmem:[#allocation2 + $0x148] sm:$0xff]
  %v1209 = vld [vmem:[#allocation2 + $0x150] sm:$0xff]
  %v1210 = vld [vmem:[#allocation2 + $0x158] sm:$0xff]
  %v1211 = vld [vmem:[#allocation2 + $0x160] sm:$0xff]
  %v1212 = vld [vmem:[#allocation2 + $0x168] sm:$0xff]
  %v1213 = vld [vmem:[#allocation2 + $0x170] sm:$0xff]
  %v1214 = vld [vmem:[#allocation2 + $0x178] sm:$0xff]
  %v1215 = vld [vmem:[#allocation2 + $0x180] sm:$0xff]
  %v1216 = vld [vmem:[#allocation2 + $0x188] sm:$0xff]
  %v1217 = vld [vmem:[#allocation2 + $0x190] sm:$0xff]
  %v1218 = vld [vmem:[#allocation2 + $0x198] sm:$0xff]
  %v1219 = vld [vmem:[#allocation2 + $0x1a0] sm:$0xff]
  %v1220 = vld [vmem:[#allocation2 + $0x1a8] sm:$0xff]
  %v1221 = vld [vmem:[#allocation2 + $0x1b0] sm:$0xff]
  %v1222 = vld [vmem:[#allocation2 + $0x1b8] sm:$0xff]
  %v1223 = vld [vmem:[#allocation2 + $0x1c0] sm:$0xff]
  %v1224 = vld [vmem:[#allocation2 + $0x1c8] sm:$0xff]
  %v1225 = vld [vmem:[#allocation2 + $0x1d0] sm:$0xff]
  %v1226 = vld [vmem:[#allocation2 + $0x1d8] sm:$0xff]
  %v1227 = vld [vmem:[#allocation2 + $0x1e0] sm:$0xff]
  %v1228 = vld [vmem:[#allocation2 + $0x1e8] sm:$0xff]
  %v1229 = vld [vmem:[#allocation2 + $0x1f0] sm:$0xff]
  %v1230 = vld [vmem:[#allocation2 + $0x1f8] sm:$0xff]
  %v1231 = vld [vmem:[#allocation2 + $0x200] sm:$0xff]
  %v1232 = vld [vmem:[#allocation2 + $0x208] sm:$0xff]
  %v1233 = vld [vmem:[#allocation2 + $0x210] sm:$0xff]
  %v1234 = vld [vmem:[#allocation2 + $0x218] sm:$0xff]
  %v1235 = vld [vmem:[#allocation2 + $0x220] sm:$0xff]
  %v1236 = vld [vmem:[#allocation2 + $0x228] sm:$0xff]
  %v1237 = vld [vmem:[#allocation2 + $0x230] sm:$0xff]
  %v1238 = vld [vmem:[#allocation2 + $0x238] sm:$0xff]
  %v1239 = vld [vmem:[#allocation2 + $0x240] sm:$0xff]
  %v1240 = vld [vmem:[#allocation2 + $0x248] sm:$0xff]
  %v1241 = vld [vmem:[#allocation2 + $0x250] sm:$0xff]
  %v1242 = vld [vmem:[#allocation2 + $0x258] sm:$0xff]
  %v1243 = vld [vmem:[#allocation2 + $0x260] sm:$0xff]
  %v1244 = vld [vmem:[#allocation2 + $0x268] sm:$0xff]
  %v1245 = vld [vmem:[#allocation2 + $0x270] sm:$0xff]
  %v1246 = vld [vmem:[#allocation2 + $0x278] sm:$0xff]
  %v1247 = vld [vmem:[#allocation2 + $0x280] sm:$0xff]
  %v1248 = vld [vmem:[#allocation2 + $0x288] sm:$0xff]
  %v1249 = vld [vmem:[#allocation2 + $0x290] sm:$0xff]
  %v1250 = vld [vmem:[#allocation2 + $0x298] sm:$0xff]
  %v1251 = vld [vmem:[%s1] sm:$0xff]
  %v1252 = vld [vmem:[%s1 + $0x8] sm:$0xf]
  %v1253 = vld [vmem:[%s1 + $0xc] sm:$0xff]
  %v1254 = vld [vmem:[%s1 + $0x14] sm:$0xf]
  %v1255 = vld [vmem:[%s1 + $0x18] sm:$0xff]
  %v1256 = vld [vmem:[%s1 + $0x20] sm:$0xf]
  %v1257 = vld [vmem:[%s1 + $0x24] sm:$0xff]
  %v1258 = vld [vmem:[%s1 + $0x2c] sm:$0xf]
  %v1259 = vld [vmem:[%s1 + $0x30] sm:$0xff]
  %v1260 = vld [vmem:[%s1 + $0x38] sm:$0xf]
  %v1261 = vld [vmem:[%s1 + $0x3c] sm:$0xff]
  %v1262 = vld [vmem:[%s1 + $0x44] sm:$0xf]
  %v1263 = vld [vmem:[%s1 + $0x48] sm:$0xff]
  %v1264 = vld [vmem:[%s1 + $0x50] sm:$0xf]
  %v1265 = vld [vmem:[%s1 + $0x54] sm:$0xff]
  %v1266 = vld [vmem:[%s1 + $0x5c] sm:$0xf]
  %v1267 = vld [vmem:[%s1 + $0x60] sm:$0xff]
  %v1268 = vld [vmem:[%s1 + $0x68] sm:$0xf]
  %v1269 = vld [vmem:[%s1 + $0x6c] sm:$0xff]
  %v1270 = vld [vmem:[%s1 + $0x74] sm:$0xf]
  %v1271 = vld [vmem:[%s1 + $0x78] sm:$0xff]
  %v1272 = vld [vmem:[%s1 + $0x80] sm:$0xf]
  %v1273 = vld [vmem:[%s1 + $0x84] sm:$0xff]
  %v1274 = vld [vmem:[%s1 + $0x8c] sm:$0xf]
  %v1275 = vld [vmem:[%s1 + $0x90] sm:$0xff]
  %v1276 = vld [vmem:[%s1 + $0x98] sm:$0xf]
  %v1277 = vld [vmem:[%s1 + $0x9c] sm:$0xff]
  %v1278 = vld [vmem:[%s1 + $0xa4] sm:$0xf]
  %v1279 = vld [vmem:[%s1 + $0xa8] sm:$0xff]
  %v1280 = vld [vmem:[%s1 + $0xb0] sm:$0xf]
  %v1281 = vld [vmem:[%s1 + $0xb4] sm:$0xff]
  %v1282 = vld [vmem:[%s1 + $0xbc] sm:$0xf]
  %v1283 = vld [vmem:[%s1 + $0xc0] sm:$0xff]
  %v1284 = vld [vmem:[%s1 + $0xc8] sm:$0xf]
  %v1285 = vld [vmem:[%s1 + $0xcc] sm:$0xff]
  %v1286 = vld [vmem:[%s1 + $0xd4] sm:$0xf]
  %v1287 = vld [vmem:[%s1 + $0xd8] sm:$0xff]
  %v1288 = vld [vmem:[%s1 + $0xe0] sm:$0xf]
  %v1289 = vld [vmem:[%s1 + $0xe4] sm:$0xff]
  %v1290 = vld [vmem:[%s1 + $0xec] sm:$0xf]
  %v1291 = vld [vmem:[%s1 + $0xf0] sm:$0xff]
  %v1292 = vld [vmem:[%s1 + $0xf8] sm:$0xf]
  %v1293 = vld [vmem:[%s1 + $0xfc] sm:$0xff]
  %v1294 = vld [vmem:[%s1 + $0x104] sm:$0xf]
  %v1295 = vld [vmem:[%s1 + $0x108] sm:$0xff]
  %v1296 = vld [vmem:[%s1 + $0x110] sm:$0xf]
  %v1297 = vld [vmem:[%s1 + $0x114] sm:$0xff]
  %v1298 = vld [vmem:[%s1 + $0x11c] sm:$0xf]
  %v1299 = vld [vmem:[%s1 + $0x120] sm:$0xff]
  %v1300 = vld [vmem:[%s1 + $0x128] sm:$0xf]
  %v1301 = vld [vmem:[%s1 + $0x12c] sm:$0xff]
  %v1302 = vld [vmem:[%s1 + $0x134] sm:$0xf]
  %v1303 = vld [vmem:[%s1 + $0x138] sm:$0xff]
  %v1304 = vld [vmem:[%s1 + $0x140] sm:$0xf]
  %v1305 = vld [vmem:[%s1 + $0x144] sm:$0xff]
  %v1306 = vld [vmem:[%s1 + $0x14c] sm:$0xf]
  %v1307 = vld [vmem:[%s1 + $0x150] sm:$0xff]
  %v1308 = vld [vmem:[%s1 + $0x158] sm:$0xf]
  %v1309 = vld [vmem:[%s1 + $0x15c] sm:$0xff]
  %v1310 = vld [vmem:[%s1 + $0x164] sm:$0xf]
  %v1311 = vld [vmem:[%s1 + $0x168] sm:$0xff]
  %v1312 = vld [vmem:[%s1 + $0x170] sm:$0xf]
  %v1313 = vld [vmem:[%s1 + $0x174] sm:$0xff]
  %v1314 = vld [vmem:[%s1 + $0x17c] sm:$0xf]
  %v1315 = vld [vmem:[%s1 + $0x180] sm:$0xff]
  %v1316 = vld [vmem:[%s1 + $0x188] sm:$0xf]
  %v1317 = vld [vmem:[%s1 + $0x18c] sm:$0xff]
  %v1318 = vld [vmem:[%s1 + $0x194] sm:$0xf]
  %v1319 = vld [vmem:[%s1 + $0x198] sm:$0xff]
  %v1320 = vld [vmem:[%s1 + $0x1a0] sm:$0xf]
  %v1321 = vld [vmem:[%s1 + $0x1a4] sm:$0xff]
  %v1322 = vld [vmem:[%s1 + $0x1ac] sm:$0xf]
  %v1323 = vld [vmem:[%s1 + $0x1b0] sm:$0xff]
  %v1324 = vld [vmem:[%s1 + $0x1b8] sm:$0xf]
  %v1325 = vld [vmem:[%s1 + $0x1bc] sm:$0xff]
  %v1326 = vld [vmem:[%s1 + $0x1c4] sm:$0xf]
  %v1327 = vld [vmem:[%s1 + $0x1c8] sm:$0xff]
  %v1328 = vld [vmem:[%s1 + $0x1d0] sm:$0xf]
  %v1329 = vld [vmem:[%s1 + $0x1d4] sm:$0xff]
  %v1330 = vld [vmem:[%s1 + $0x1dc] sm:$0xf]
  %v1331 = vld [vmem:[%s1 + $0x1e0] sm:$0x33]
  %v1332 = vld [vmem:[%s1 + $0x1e8] sm:$0x3]
  %v1415 = vunpack.c.l.b16 %v1251
  %v1416 = vunpack.c.h.b16 %v1251
  %v1417 = vunpack.c.l.b16 %v1252
  %v1418 = vunpack.c.l.b16 %v1253
  %v1419 = vunpack.c.h.b16 %v1253
  %v1420 = vunpack.c.l.b16 %v1254
  %v1421 = vunpack.c.l.b16 %v1255
  %v1422 = vunpack.c.h.b16 %v1255
  %v1423 = vunpack.c.l.b16 %v1256
  %v1424 = vunpack.c.l.b16 %v1257
  %v1425 = vunpack.c.h.b16 %v1257
  %v1426 = vunpack.c.l.b16 %v1258
  %v1427 = vunpack.c.l.b16 %v1259
  %v1428 = vunpack.c.h.b16 %v1259
  %v1429 = vunpack.c.l.b16 %v1260
  %v1430 = vunpack.c.l.b16 %v1261
  %v1431 = vunpack.c.h.b16 %v1261
  %v1432 = vunpack.c.l.b16 %v1262
  %v1433 = vunpack.c.l.b16 %v1263
  %v1434 = vunpack.c.h.b16 %v1263
  %v1435 = vunpack.c.l.b16 %v1264
  %v1436 = vunpack.c.l.b16 %v1265
  %v1437 = vunpack.c.h.b16 %v1265
  %v1438 = vunpack.c.l.b16 %v1266
  %v1439 = vunpack.c.l.b16 %v1267
  %v1440 = vunpack.c.h.b16 %v1267
  %v1441 = vunpack.c.l.b16 %v1268
  %v1442 = vunpack.c.l.b16 %v1269
  %v1443 = vunpack.c.h.b16 %v1269
  %v1444 = vunpack.c.l.b16 %v1270
  %v1445 = vunpack.c.l.b16 %v1271
  %v1446 = vunpack.c.h.b16 %v1271
  %v1447 = vunpack.c.l.b16 %v1272
  %v1448 = vunpack.c.l.b16 %v1273
  %v1449 = vunpack.c.h.b16 %v1273
  %v1450 = vunpack.c.l.b16 %v1274
  %v1451 = vunpack.c.l.b16 %v1275
  %v1452 = vunpack.c.h.b16 %v1275
  %v1453 = vunpack.c.l.b16 %v1276
  %v1454 = vunpack.c.l.b16 %v1277
  %v1455 = vunpack.c.h.b16 %v1277
  %v1456 = vunpack.c.l.b16 %v1278
  %v1457 = vunpack.c.l.b16 %v1279
  %v1458 = vunpack.c.h.b16 %v1279
  %v1459 = vunpack.c.l.b16 %v1280
  %v1460 = vunpack.c.l.b16 %v1281
  %v1461 = vunpack.c.h.b16 %v1281
  %v1462 = vunpack.c.l.b16 %v1282
  %v1463 = vunpack.c.l.b16 %v1283
  %v1464 = vunpack.c.h.b16 %v1283
  %v1465 = vunpack.c.l.b16 %v1284
  %v1466 = vunpack.c.l.b16 %v1285
  %v1467 = vunpack.c.h.b16 %v1285
  %v1468 = vunpack.c.l.b16 %v1286
  %v1469 = vunpack.c.l.b16 %v1287
  %v1470 = vunpack.c.h.b16 %v1287
  %v1471 = vunpack.c.l.b16 %v1288
  %v1472 = vunpack.c.l.b16 %v1289
  %v1473 = vunpack.c.h.b16 %v1289
  %v1474 = vunpack.c.l.b16 %v1290
  %v1475 = vunpack.c.l.b16 %v1291
  %v1476 = vunpack.c.h.b16 %v1291
  %v1477 = vunpack.c.l.b16 %v1292
  %v1478 = vunpack.c.l.b16 %v1293
  %v1479 = vunpack.c.h.b16 %v1293
  %v1480 = vunpack.c.l.b16 %v1294
  %v1481 = vunpack.c.l.b16 %v1295
  %v1482 = vunpack.c.h.b16 %v1295
  %v1483 = vunpack.c.l.b16 %v1296
  %v1484 = vunpack.c.l.b16 %v1297
  %v1485 = vunpack.c.h.b16 %v1297
  %v1486 = vunpack.c.l.b16 %v1298
  %v1487 = vunpack.c.l.b16 %v1299
  %v1488 = vunpack.c.h.b16 %v1299
  %v1489 = vunpack.c.l.b16 %v1300
  %v1490 = vunpack.c.l.b16 %v1301
  %v1491 = vunpack.c.h.b16 %v1301
  %v1492 = vunpack.c.l.b16 %v1302
  %v1493 = vunpack.c.l.b16 %v1303
  %v1494 = vunpack.c.h.b16 %v1303
  %v1495 = vunpack.c.l.b16 %v1304
  %v1496 = vunpack.c.l.b16 %v1305
  %v1497 = vunpack.c.h.b16 %v1305
  %v1498 = vunpack.c.l.b16 %v1306
  %v1499 = vunpack.c.l.b16 %v1307
  %v1500 = vunpack.c.h.b16 %v1307
  %v1501 = vunpack.c.l.b16 %v1308
  %v1502 = vunpack.c.l.b16 %v1309
  %v1503 = vunpack.c.h.b16 %v1309
  %v1504 = vunpack.c.l.b16 %v1310
  %v1505 = vunpack.c.l.b16 %v1311
  %v1506 = vunpack.c.h.b16 %v1311
  %v1507 = vunpack.c.l.b16 %v1312
  %v1508 = vunpack.c.l.b16 %v1313
  %v1509 = vunpack.c.h.b16 %v1313
  %v1510 = vunpack.c.l.b16 %v1314
  %v1511 = vunpack.c.l.b16 %v1315
  %v1512 = vunpack.c.h.b16 %v1315
  %v1513 = vunpack.c.l.b16 %v1316
  %v1514 = vunpack.c.l.b16 %v1317
  %v1515 = vunpack.c.h.b16 %v1317
  %v1516 = vunpack.c.l.b16 %v1318
  %v1517 = vunpack.c.l.b16 %v1319
  %v1518 = vunpack.c.h.b16 %v1319
  %v1519 = vunpack.c.l.b16 %v1320
  %v1520 = vunpack.c.l.b16 %v1321
  %v1521 = vunpack.c.h.b16 %v1321
  %v1522 = vunpack.c.l.b16 %v1322
  %v1523 = vunpack.c.l.b16 %v1323
  %v1524 = vunpack.c.h.b16 %v1323
  %v1525 = vunpack.c.l.b16 %v1324
  %v1526 = vunpack.c.l.b16 %v1325
  %v1527 = vunpack.c.h.b16 %v1325
  %v1528 = vunpack.c.l.b16 %v1326
  %v1529 = vunpack.c.l.b16 %v1327
  %v1530 = vunpack.c.h.b16 %v1327
  %v1531 = vunpack.c.l.b16 %v1328
  %v1532 = vunpack.c.l.b16 %v1329
  %v1533 = vunpack.c.h.b16 %v1329
  %v1534 = vunpack.c.l.b16 %v1330
  %v1535 = vunpack.c.l.b16 %v1331
  %v1536 = vunpack.c.h.b16 %v1331
  %v1537 = vunpack.c.l.b16 %v1332
  %v1538 = vpack.c.b16 %v1418, %v1415
  %v1539 = vpack.c.b16 %v1419, %v1416
  %v1540 = vpack.c.b16 %v1420, %v1417
  %v1541 = vpack.c.b16 %v1424, %v1421
  %v1542 = vpack.c.b16 %v1425, %v1422
  %v1543 = vpack.c.b16 %v1426, %v1423
  %v1544 = vpack.c.b16 %v1430, %v1427
  %v1545 = vpack.c.b16 %v1431, %v1428
  %v1546 = vpack.c.b16 %v1432, %v1429
  %v1547 = vpack.c.b16 %v1436, %v1433
  %v1548 = vpack.c.b16 %v1437, %v1434
  %v1549 = vpack.c.b16 %v1438, %v1435
  %v1550 = vpack.c.b16 %v1442, %v1439
  %v1551 = vpack.c.b16 %v1443, %v1440
  %v1552 = vpack.c.b16 %v1444, %v1441
  %v1553 = vpack.c.b16 %v1448, %v1445
  %v1554 = vpack.c.b16 %v1449, %v1446
  %v1555 = vpack.c.b16 %v1450, %v1447
  %v1556 = vpack.c.b16 %v1454, %v1451
  %v1557 = vpack.c.b16 %v1455, %v1452
  %v1558 = vpack.c.b16 %v1456, %v1453
  %v1559 = vpack.c.b16 %v1460, %v1457
  %v1560 = vpack.c.b16 %v1461, %v1458
  %v1561 = vpack.c.b16 %v1462, %v1459
  %v1562 = vpack.c.b16 %v1466, %v1463
  %v1563 = vpack.c.b16 %v1467, %v1464
  %v1564 = vpack.c.b16 %v1468, %v1465
  %v1565 = vpack.c.b16 %v1472, %v1469
  %v1566 = vpack.c.b16 %v1473, %v1470
  %v1567 = vpack.c.b16 %v1474, %v1471
  %v1568 = vpack.c.b16 %v1478, %v1475
  %v1569 = vpack.c.b16 %v1479, %v1476
  %v1570 = vpack.c.b16 %v1480, %v1477
  %v1571 = vpack.c.b16 %v1484, %v1481
  %v1572 = vpack.c.b16 %v1485, %v1482
  %v1573 = vpack.c.b16 %v1486, %v1483
  %v1574 = vpack.c.b16 %v1490, %v1487
  %v1575 = vpack.c.b16 %v1491, %v1488
  %v1576 = vpack.c.b16 %v1492, %v1489
  %v1577 = vpack.c.b16 %v1496, %v1493
  %v1578 = vpack.c.b16 %v1497, %v1494
  %v1579 = vpack.c.b16 %v1498, %v1495
  %v1580 = vpack.c.b16 %v1502, %v1499
  %v1581 = vpack.c.b16 %v1503, %v1500
  %v1582 = vpack.c.b16 %v1504, %v1501
  %v1583 = vpack.c.b16 %v1508, %v1505
  %v1584 = vpack.c.b16 %v1509, %v1506
  %v1585 = vpack.c.b16 %v1510, %v1507
  %v1586 = vpack.c.b16 %v1514, %v1511
  %v1587 = vpack.c.b16 %v1515, %v1512
  %v1588 = vpack.c.b16 %v1516, %v1513
  %v1589 = vpack.c.b16 %v1520, %v1517
  %v1590 = vpack.c.b16 %v1521, %v1518
  %v1591 = vpack.c.b16 %v1522, %v1519
  %v1592 = vpack.c.b16 %v1526, %v1523
  %v1593 = vpack.c.b16 %v1527, %v1524
  %v1594 = vpack.c.b16 %v1528, %v1525
  %v1595 = vpack.c.b16 %v1532, %v1529
  %v1596 = vpack.c.b16 %v1533, %v1530
  %v1597 = vpack.c.b16 %v1534, %v1531
  %v1598 = vpack.c.b16 %v1535, %v1535
  %v1599 = vpack.c.b16 %v1536, %v1536
  %v1600 = vpack.c.b16 %v1537, %v1537
  %vm1661 = vcmask 556032
  %v1663 = vsel %vm1661, %v1169, 0
  %v1666 = vsel %vm1661, %v1172, 0
  %v1669 = vsel %vm1661, %v1175, 0
  %v1672 = vsel %vm1661, %v1178, 0
  %v1675 = vsel %vm1661, %v1181, 0
  %v1678 = vsel %vm1661, %v1184, 0
  %v1681 = vsel %vm1661, %v1187, 0
  %v1684 = vsel %vm1661, %v1190, 0
  %v1687 = vsel %vm1661, %v1193, 0
  %v1690 = vsel %vm1661, %v1196, 0
  %v1693 = vsel %vm1661, %v1199, 0
  %v1696 = vsel %vm1661, %v1202, 0
  %v1699 = vsel %vm1661, %v1205, 0
  %v1702 = vsel %vm1661, %v1208, 0
  %v1705 = vsel %vm1661, %v1211, 0
  %v1708 = vsel %vm1661, %v1214, 0
  %v1711 = vsel %vm1661, %v1217, 0
  %v1714 = vsel %vm1661, %v1220, 0
  %v1717 = vsel %vm1661, %v1223, 0
  %v1720 = vsel %vm1661, %v1226, 0
  %v1723 = vsel %vm1661, %v1229, 0
  %v1726 = vsel %vm1661, %v1232, 0
  %v1729 = vsel %vm1661, %v1235, 0
  %v1732 = vsel %vm1661, %v1238, 0
  %v1735 = vsel %vm1661, %v1241, 0
  %v1738 = vsel %vm1661, %v1244, 0
  %v1741 = vsel %vm1661, %v1247, 0
  %v1744 = vsel %vm1661, %v1250, 0
  %vm1746 = vcmask 1041408
  %v1748 = vsel %vm1746, %v1598, 0
  %v1751 = vsel %vm1746, %v1599, 0
  %v1754 = vsel %vm1746, %v1600, 0
  %1756 = vmatprep.subr.bf16.mxu0 %v1539
  %1757 = vmatpush1.bf16.msra.mxu0 %v1538
  %1758 = vmatprep.subr.bf16.mxu0 %v1542
  %1759 = vmatpush1.bf16.msra.mxu0 %v1541
  %1760 = vmatprep.subr.bf16.mxu0 %v1545
  %1761 = vmatpush1.bf16.msra.mxu0 %v1544
  %1762 = vmatprep.subr.bf16.mxu0 %v1548
  %1763 = vmatpush1.bf16.msra.mxu0 %v1547
  %1764 = vmatprep.subr.bf16.mxu0 %v1551
  %1765 = vmatpush1.bf16.msra.mxu0 %v1550
  %1766 = vmatprep.subr.bf16.mxu0 %v1554
  %1767 = vmatpush1.bf16.msra.mxu0 %v1553
  %1768 = vmatprep.subr.bf16.mxu0 %v1557
  %1769 = vmatpush1.bf16.msra.mxu0 %v1556
  %1770 = vmatprep.subr.bf16.mxu0 %v1560
  %1771 = vmatpush1.bf16.msra.mxu0 %v1559
  %1772 = vmatprep.subr.bf16.mxu0 %v1563
  %1773 = vmatpush1.bf16.msra.mxu0 %v1562
  %1774 = vmatprep.subr.bf16.mxu0 %v1566
  %1775 = vmatpush1.bf16.msra.mxu0 %v1565
  %1776 = vmatprep.subr.bf16.mxu0 %v1569
  %1777 = vmatpush1.bf16.msra.mxu0 %v1568
  %1778 = vmatprep.subr.bf16.mxu0 %v1572
  %1779 = vmatpush1.bf16.msra.mxu0 %v1571
  %1780 = vmatprep.subr.bf16.mxu0 %v1575
  %1781 = vmatpush1.bf16.msra.mxu0 %v1574
  %1782 = vmatprep.subr.bf16.mxu0 %v1578
  %1783 = vmatpush1.bf16.msra.mxu0 %v1577
  %1784 = vmatprep.subr.bf16.mxu0 %v1581
  %1785 = vmatpush1.bf16.msra.mxu0 %v1580
  %1786 = vmatprep.subr.bf16.mxu0 %v1584
  %1787 = vmatpush1.bf16.msra.mxu0 %v1583
  %1788 = vmatprep.mubr.bf16.mxu0 %v1168
  %1789 = vmatmul.mubr.bf16.gmra.mrb[0].mxu0 %v1167
  %v1790 = vpop.f32.mrb[0].mxu0
  %v1791 = vadd.f32 0.0, %v1790
  %v1792 = vpop.f32.mrb[0].mxu0
  %v1793 = vadd.f32 0.0, %v1792
  %v1794 = vpop.f32.mrb[0].mxu0
  %v1795 = vadd.f32 0.0, %v1794
  %v1796 = vpop.f32.mrb[0].mxu0
  %v1797 = vadd.f32 0.0, %v1796
  %1798 = vmatprep.mubr.bf16.mxu0 %v1171
  %1799 = vmatmul.mubr.bf16.gmra.mrb[0].mxu0 %v1170
  %v1800 = vpop.f32.mrb[0].mxu0
  %v1801 = vadd.f32 0.0, %v1800
  %v1802 = vpop.f32.mrb[0].mxu0
  %v1803 = vadd.f32 0.0, %v1802
  %v1804 = vpop.f32.mrb[0].mxu0
  %v1805 = vadd.f32 0.0, %v1804
  %v1806 = vpop.f32.mrb[0].mxu0
  %v1807 = vadd.f32 0.0, %v1806
  %1808 = vmatprep.mubr.bf16.mxu0 %v1174
  %1809 = vmatmul.mubr.bf16.gmra.mrb[0].mxu0 %v1173
  %v1810 = vpop.f32.mrb[0].mxu0
  %v1811 = vadd.f32 0.0, %v1810
  %v1812 = vpop.f32.mrb[0].mxu0
  %v1813 = vadd.f32 0.0, %v1812
  %v1814 = vpop.f32.mrb[0].mxu0
  %v1815 = vadd.f32 0.0, %v1814
  %v1816 = vpop.f32.mrb[0].mxu0
  %v1817 = vadd.f32 0.0, %v1816
  %1818 = vmatprep.mubr.bf16.mxu0 %v1177
  %1819 = vmatmul.mubr.bf16.gmra.mrb[0].mxu0 %v1176
  %v1820 = vpop.f32.mrb[0].mxu0
  %v1821 = vadd.f32 0.0, %v1820
  %v1822 = vpop.f32.mrb[0].mxu0
  %v1823 = vadd.f32 0.0, %v1822
  %v1824 = vpop.f32.mrb[0].mxu0
  %v1825 = vadd.f32 0.0, %v1824
  %v1826 = vpop.f32.mrb[0].mxu0
  %v1827 = vadd.f32 0.0, %v1826
  %1828 = vmatprep.mubr.bf16.mxu0 %v1180
  %1829 = vmatmul.mubr.bf16.gmra.mrb[0].mxu0 %v1179
  %v1830 = vpop.f32.mrb[0].mxu0
  %v1831 = vadd.f32 0.0, %v1830
  %v1832 = vpop.f32.mrb[0].mxu0
  %v1833 = vadd.f32 0.0, %v1832
  %v1834 = vpop.f32.mrb[0].mxu0
  %v1835 = vadd.f32 0.0, %v1834
  %v1836 = vpop.f32.mrb[0].mxu0
  %v1837 = vadd.f32 0.0, %v1836
  %1838 = vmatprep.mubr.bf16.mxu0 %v1183
  %1839 = vmatmul.mubr.bf16.gmra.mrb[0].mxu0 %v1182
  %v1840 = vpop.f32.mrb[0].mxu0
  %v1841 = vadd.f32 0.0, %v1840
  %v1842 = vpop.f32.mrb[0].mxu0
  %v1843 = vadd.f32 0.0, %v1842
  %v1844 = vpop.f32.mrb[0].mxu0
  %v1845 = vadd.f32 0.0, %v1844
  %v1846 = vpop.f32.mrb[0].mxu0
  %v1847 = vadd.f32 0.0, %v1846
  %1848 = vmatprep.mubr.bf16.mxu0 %v1186
  %1849 = vmatmul.mubr.bf16.gmra.mrb[0].mxu0 %v1185
  %v1850 = vpop.f32.mrb[0].mxu0
  %v1851 = vadd.f32 0.0, %v1850
  %v1852 = vpop.f32.mrb[0].mxu0
  %v1853 = vadd.f32 0.0, %v1852
  %v1854 = vpop.f32.mrb[0].mxu0
  %v1855 = vadd.f32 0.0, %v1854
  %v1856 = vpop.f32.mrb[0].mxu0
  %v1857 = vadd.f32 0.0, %v1856
  %1858 = vmatprep.mubr.bf16.mxu0 %v1189
  %1859 = vmatmul.mubr.bf16.gmra.mrb[0].mxu0 %v1188
  %v1860 = vpop.f32.mrb[0].mxu0
  %v1861 = vadd.f32 0.0, %v1860
  %v1862 = vpop.f32.mrb[0].mxu0
  %v1863 = vadd.f32 0.0, %v1862
  %v1864 = vpop.f32.mrb[0].mxu0
  %v1865 = vadd.f32 0.0, %v1864
  %v1866 = vpop.f32.mrb[0].mxu0
  %v1867 = vadd.f32 0.0, %v1866
  %1868 = vmatprep.mubr.bf16.mxu0 %v1192
  %1869 = vmatmul.mubr.bf16.gmra.mrb[0].mxu0 %v1191
  %v1870 = vpop.f32.mrb[0].mxu0
  %v1871 = vadd.f32 0.0, %v1870
  %v1872 = vpop.f32.mrb[0].mxu0
  %v1873 = vadd.f32 0.0, %v1872
  %v1874 = vpop.f32.mrb[0].mxu0
  %v1875 = vadd.f32 0.0, %v1874
  %v1876 = vpop.f32.mrb[0].mxu0
  %v1877 = vadd.f32 0.0, %v1876
  %1878 = vmatprep.mubr.bf16.mxu0 %v1195
  %1879 = vmatmul.mubr.bf16.gmra.mrb[0].mxu0 %v1194
  %v1880 = vpop.f32.mrb[0].mxu0
  %v1881 = vadd.f32 0.0, %v1880
  %v1882 = vpop.f32.mrb[0].mxu0
  %v1883 = vadd.f32 0.0, %v1882
  %v1884 = vpop.f32.mrb[0].mxu0
  %v1885 = vadd.f32 0.0, %v1884
  %v1886 = vpop.f32.mrb[0].mxu0
  %v1887 = vadd.f32 0.0, %v1886
  %1888 = vmatprep.mubr.bf16.mxu0 %v1198
  %1889 = vmatmul.mubr.bf16.gmra.mrb[0].mxu0 %v1197
  %v1890 = vpop.f32.mrb[0].mxu0
  %v1891 = vadd.f32 0.0, %v1890
  %v1892 = vpop.f32.mrb[0].mxu0
  %v1893 = vadd.f32 0.0, %v1892
  %v1894 = vpop.f32.mrb[0].mxu0
  %v1895 = vadd.f32 0.0, %v1894
  %v1896 = vpop.f32.mrb[0].mxu0
  %v1897 = vadd.f32 0.0, %v1896
  %1898 = vmatprep.mubr.bf16.mxu0 %v1201
  %1899 = vmatmul.mubr.bf16.gmra.mrb[0].mxu0 %v1200
  %v1900 = vpop.f32.mrb[0].mxu0
  %v1901 = vadd.f32 0.0, %v1900
  %v1902 = vpop.f32.mrb[0].mxu0
  %v1903 = vadd.f32 0.0, %v1902
  %v1904 = vpop.f32.mrb[0].mxu0
  %v1905 = vadd.f32 0.0, %v1904
  %v1906 = vpop.f32.mrb[0].mxu0
  %v1907 = vadd.f32 0.0, %v1906
  %1908 = vmatprep.mubr.bf16.mxu0 %v1204
  %1909 = vmatmul.mubr.bf16.gmra.mrb[0].mxu0 %v1203
  %v1910 = vpop.f32.mrb[0].mxu0
  %v1911 = vadd.f32 0.0, %v1910
  %v1912 = vpop.f32.mrb[0].mxu0
  %v1913 = vadd.f32 0.0, %v1912
  %v1914 = vpop.f32.mrb[0].mxu0
  %v1915 = vadd.f32 0.0, %v1914
  %v1916 = vpop.f32.mrb[0].mxu0
  %v1917 = vadd.f32 0.0, %v1916
  %1918 = vmatprep.mubr.bf16.mxu0 %v1207
  %1919 = vmatmul.mubr.bf16.gmra.mrb[0].mxu0 %v1206
  %v1920 = vpop.f32.mrb[0].mxu0
  %v1921 = vadd.f32 0.0, %v1920
  %v1922 = vpop.f32.mrb[0].mxu0
  %v1923 = vadd.f32 0.0, %v1922
  %v1924 = vpop.f32.mrb[0].mxu0
  %v1925 = vadd.f32 0.0, %v1924
  %v1926 = vpop.f32.mrb[0].mxu0
  %v1927 = vadd.f32 0.0, %v1926
  %1928 = vmatprep.mubr.bf16.mxu0 %v1210
  %1929 = vmatmul.mubr.bf16.gmra.mrb[0].mxu0 %v1209
  %v1930 = vpop.f32.mrb[0].mxu0
  %v1931 = vadd.f32 0.0, %v1930
  %v1932 = vpop.f32.mrb[0].mxu0
  %v1933 = vadd.f32 0.0, %v1932
  %v1934 = vpop.f32.mrb[0].mxu0
  %v1935 = vadd.f32 0.0, %v1934
  %v1936 = vpop.f32.mrb[0].mxu0
  %v1937 = vadd.f32 0.0, %v1936
  %1938 = vmatprep.mubr.bf16.mxu0 %v1213
  %1939 = vmatmul.mubr.bf16.gmra.mrb[0].mxu0 %v1212
  %v1940 = vpop.f32.mrb[0].mxu0
  %v1941 = vadd.f32 0.0, %v1940
  %v1942 = vpop.f32.mrb[0].mxu0
  %v1943 = vadd.f32 0.0, %v1942
  %v1944 = vpop.f32.mrb[0].mxu0
  %v1945 = vadd.f32 0.0, %v1944
  %v1946 = vpop.f32.mrb[0].mxu0
  %v1947 = vadd.f32 0.0, %v1946
  %1948 = vmatprep.mubr.bf16.mxu0 %v1216
  %1949 = vmatmul.mubr.bf16.gmra.mrb[0].mxu0 %v1215
  %v1950 = vpop.f32.mrb[0].mxu0
  %v1951 = vadd.f32 0.0, %v1950
  %v1952 = vpop.f32.mrb[0].mxu0
  %v1953 = vadd.f32 0.0, %v1952
  %v1954 = vpop.f32.mrb[0].mxu0
  %v1955 = vadd.f32 0.0, %v1954
  %v1956 = vpop.f32.mrb[0].mxu0
  %v1957 = vadd.f32 0.0, %v1956
  %1958 = vmatprep.mubr.bf16.mxu0 %v1219
  %1959 = vmatmul.mubr.bf16.gmra.mrb[0].mxu0 %v1218
  %v1960 = vpop.f32.mrb[0].mxu0
  %v1961 = vadd.f32 0.0, %v1960
  %v1962 = vpop.f32.mrb[0].mxu0
  %v1963 = vadd.f32 0.0, %v1962
  %v1964 = vpop.f32.mrb[0].mxu0
  %v1965 = vadd.f32 0.0, %v1964
  %v1966 = vpop.f32.mrb[0].mxu0
  %v1967 = vadd.f32 0.0, %v1966
  %1968 = vmatprep.mubr.bf16.mxu0 %v1222
  %1969 = vmatmul.mubr.bf16.gmra.mrb[0].mxu0 %v1221
  %v1970 = vpop.f32.mrb[0].mxu0
  %v1971 = vadd.f32 0.0, %v1970
  %v1972 = vpop.f32.mrb[0].mxu0
  %v1973 = vadd.f32 0.0, %v1972
  %v1974 = vpop.f32.mrb[0].mxu0
  %v1975 = vadd.f32 0.0, %v1974
  %v1976 = vpop.f32.mrb[0].mxu0
  %v1977 = vadd.f32 0.0, %v1976
  %1978 = vmatprep.mubr.bf16.mxu0 %v1225
  %1979 = vmatmul.mubr.bf16.gmra.mrb[0].mxu0 %v1224
  %v1980 = vpop.f32.mrb[0].mxu0
  %v1981 = vadd.f32 0.0, %v1980
  %v1982 = vpop.f32.mrb[0].mxu0
  %v1983 = vadd.f32 0.0, %v1982
  %v1984 = vpop.f32.mrb[0].mxu0
  %v1985 = vadd.f32 0.0, %v1984
  %v1986 = vpop.f32.mrb[0].mxu0
  %v1987 = vadd.f32 0.0, %v1986
  %1988 = vmatprep.mubr.bf16.mxu0 %v1228
  %1989 = vmatmul.mubr.bf16.gmra.mrb[0].mxu0 %v1227
  %v1990 = vpop.f32.mrb[0].mxu0
  %v1991 = vadd.f32 0.0, %v1990
  %v1992 = vpop.f32.mrb[0].mxu0
  %v1993 = vadd.f32 0.0, %v1992
  %v1994 = vpop.f32.mrb[0].mxu0
  %v1995 = vadd.f32 0.0, %v1994
  %v1996 = vpop.f32.mrb[0].mxu0
  %v1997 = vadd.f32 0.0, %v1996
  %1998 = vmatprep.mubr.bf16.mxu0 %v1231
  %1999 = vmatmul.mubr.bf16.gmra.mrb[0].mxu0 %v1230
  %v2000 = vpop.f32.mrb[0].mxu0
  %v2001 = vadd.f32 0.0, %v2000
  %v2002 = vpop.f32.mrb[0].mxu0
  %v2003 = vadd.f32 0.0, %v2002
  %v2004 = vpop.f32.mrb[0].mxu0
  %v2005 = vadd.f32 0.0, %v2004
  %v2006 = vpop.f32.mrb[0].mxu0
  %v2007 = vadd.f32 0.0, %v2006
  %2008 = vmatprep.mubr.bf16.mxu0 %v1234
  %2009 = vmatmul.mubr.bf16.gmra.mrb[0].mxu0 %v1233
  %v2010 = vpop.f32.mrb[0].mxu0
  %v2011 = vadd.f32 0.0, %v2010
  %v2012 = vpop.f32.mrb[0].mxu0
  %v2013 = vadd.f32 0.0, %v2012
  %v2014 = vpop.f32.mrb[0].mxu0
  %v2015 = vadd.f32 0.0, %v2014
  %v2016 = vpop.f32.mrb[0].mxu0
  %v2017 = vadd.f32 0.0, %v2016
  %2018 = vmatprep.mubr.bf16.mxu0 %v1237
  %2019 = vmatmul.mubr.bf16.gmra.mrb[0].mxu0 %v1236
  %v2020 = vpop.f32.mrb[0].mxu0
  %v2021 = vadd.f32 0.0, %v2020
  %v2022 = vpop.f32.mrb[0].mxu0
  %v2023 = vadd.f32 0.0, %v2022
  %v2024 = vpop.f32.mrb[0].mxu0
  %v2025 = vadd.f32 0.0, %v2024
  %v2026 = vpop.f32.mrb[0].mxu0
  %v2027 = vadd.f32 0.0, %v2026
  %2028 = vmatprep.mubr.bf16.mxu0 %v1240
  %2029 = vmatmul.mubr.bf16.gmra.mrb[0].mxu0 %v1239
  %v2030 = vpop.f32.mrb[0].mxu0
  %v2031 = vadd.f32 0.0, %v2030
  %v2032 = vpop.f32.mrb[0].mxu0
  %v2033 = vadd.f32 0.0, %v2032
  %v2034 = vpop.f32.mrb[0].mxu0
  %v2035 = vadd.f32 0.0, %v2034
  %v2036 = vpop.f32.mrb[0].mxu0
  %v2037 = vadd.f32 0.0, %v2036
  %2038 = vmatprep.mubr.bf16.mxu0 %v1243
  %2039 = vmatmul.mubr.bf16.gmra.mrb[0].mxu0 %v1242
  %v2040 = vpop.f32.mrb[0].mxu0
  %v2041 = vadd.f32 0.0, %v2040
  %v2042 = vpop.f32.mrb[0].mxu0
  %v2043 = vadd.f32 0.0, %v2042
  %v2044 = vpop.f32.mrb[0].mxu0
  %v2045 = vadd.f32 0.0, %v2044
  %v2046 = vpop.f32.mrb[0].mxu0
  %v2047 = vadd.f32 0.0, %v2046
  %2048 = vmatprep.mubr.bf16.mxu0 %v1246
  %2049 = vmatmul.mubr.bf16.gmra.mrb[0].mxu0 %v1245
  %v2050 = vpop.f32.mrb[0].mxu0
  %v2051 = vadd.f32 0.0, %v2050
  %v2052 = vpop.f32.mrb[0].mxu0
  %v2053 = vadd.f32 0.0, %v2052
  %v2054 = vpop.f32.mrb[0].mxu0
  %v2055 = vadd.f32 0.0, %v2054
  %v2056 = vpop.f32.mrb[0].mxu0
  %v2057 = vadd.f32 0.0, %v2056
  %2058 = vmatprep.mubr.bf16.mxu0 %v1249
  %2059 = vmatmul.mubr.bf16.gmra.mrb[0].mxu0 %v1248
  %v2060 = vpop.f32.mrb[0].mxu0
  %v2061 = vadd.f32 0.0, %v2060
  %v2062 = vpop.f32.mrb[0].mxu0
  %v2063 = vadd.f32 0.0, %v2062
  %v2064 = vpop.f32.mrb[0].mxu0
  %v2065 = vadd.f32 0.0, %v2064
  %v2066 = vpop.f32.mrb[0].mxu0
  %v2067 = vadd.f32 0.0, %v2066
  %2068 = vdwg.mxu0
  %2069 = vmatprep.subr.bf16.mxu0 %v1587
  %2070 = vmatpush1.bf16.msra.mxu0 %v1586
  %2071 = vmatprep.subr.bf16.mxu0 %v1590
  %2072 = vmatpush1.bf16.msra.mxu0 %v1589
  %2073 = vmatprep.subr.bf16.mxu0 %v1593
  %2074 = vmatpush1.bf16.msra.mxu0 %v1592
  %2075 = vmatprep.subr.bf16.mxu0 %v1596
  %2076 = vmatpush1.bf16.msra.mxu0 %v1595
  %2077 = vmatprep.subr.bf16.mxu0 %v1751
  %2078 = vmatpush1.bf16.msra.mxu0 %v1748
  %2079 = vmatprep.subr.bf16.mxu0 0
  %2080 = vmatpush1.bf16.msra.mxu0 0
  %2081 = vmatprep.subr.bf16.mxu0 0
  %2082 = vmatpush1.bf16.msra.mxu0 0
  %2083 = vmatprep.subr.bf16.mxu0 0
  %2084 = vmatpush1.bf16.msra.mxu0 0
  %2085 = vmatprep.subr.bf16.mxu0 0
  %2086 = vmatpush1.bf16.msra.mxu0 0
  %2087 = vmatprep.subr.bf16.mxu0 0
  %2088 = vmatpush1.bf16.msra.mxu0 0
  %2089 = vmatprep.subr.bf16.mxu0 0
  %2090 = vmatpush1.bf16.msra.mxu0 0
  %2091 = vmatprep.subr.bf16.mxu0 0
  %2092 = vmatpush1.bf16.msra.mxu0 0
  %2093 = vmatprep.subr.bf16.mxu0 0
  %2094 = vmatpush1.bf16.msra.mxu0 0
  %2095 = vmatprep.subr.bf16.mxu0 0
  %2096 = vmatpush1.bf16.msra.mxu0 0
  %2097 = vmatprep.subr.bf16.mxu0 0
  %2098 = vmatpush1.bf16.msra.mxu0 0
  %2099 = vmatprep.subr.bf16.mxu0 0
  %2100 = vmatpush1.bf16.msra.mxu0 0
  %2101 = vmatprep.mubr.bf16.mxu0 0
  %2102 = vmatmul.mubr.bf16.gmra.mrb[0].mxu0 %v1663
  %v2103 = vpop.f32.mrb[0].mxu0
  %v2104 = vadd.f32 %v1791, %v2103
  %v2105 = vpop.f32.mrb[0].mxu0
  %v2106 = vadd.f32 %v1793, %v2105
  %v2107 = vpop.f32.mrb[0].mxu0
  %v2108 = vadd.f32 %v1795, %v2107
  %v2109 = vpop.f32.mrb[0].mxu0
  %v2110 = vadd.f32 %v1797, %v2109
  %2111 = vmatprep.mubr.bf16.mxu0 0
  %2112 = vmatmul.mubr.bf16.gmra.mrb[0].mxu0 %v1666
  %v2113 = vpop.f32.mrb[0].mxu0
  %v2114 = vadd.f32 %v1801, %v2113
  %v2115 = vpop.f32.mrb[0].mxu0
  %v2116 = vadd.f32 %v1803, %v2115
  %v2117 = vpop.f32.mrb[0].mxu0
  %v2118 = vadd.f32 %v1805, %v2117
  %v2119 = vpop.f32.mrb[0].mxu0
  %v2120 = vadd.f32 %v1807, %v2119
  %2121 = vmatprep.mubr.bf16.mxu0 0
  %2122 = vmatmul.mubr.bf16.gmra.mrb[0].mxu0 %v1669
  %v2123 = vpop.f32.mrb[0].mxu0
  %v2124 = vadd.f32 %v1811, %v2123
  %v2125 = vpop.f32.mrb[0].mxu0
  %v2126 = vadd.f32 %v1813, %v2125
  %v2127 = vpop.f32.mrb[0].mxu0
  %v2128 = vadd.f32 %v1815, %v2127
  %v2129 = vpop.f32.mrb[0].mxu0
  %v2130 = vadd.f32 %v1817, %v2129
  %2131 = vmatprep.mubr.bf16.mxu0 0
  %2132 = vmatmul.mubr.bf16.gmra.mrb[0].mxu0 %v1672
  %v2133 = vpop.f32.mrb[0].mxu0
  %v2134 = vadd.f32 %v1821, %v2133
  %v2135 = vpop.f32.mrb[0].mxu0
  %v2136 = vadd.f32 %v1823, %v2135
  %v2137 = vpop.f32.mrb[0].mxu0
  %v2138 = vadd.f32 %v1825, %v2137
  %v2139 = vpop.f32.mrb[0].mxu0
  %v2140 = vadd.f32 %v1827, %v2139
  %2141 = vmatprep.mubr.bf16.mxu0 0
  %2142 = vmatmul.mubr.bf16.gmra.mrb[0].mxu0 %v1675
  %v2143 = vpop.f32.mrb[0].mxu0
  %v2144 = vadd.f32 %v1831, %v2143
  %v2145 = vpop.f32.mrb[0].mxu0
  %v2146 = vadd.f32 %v1833, %v2145
  %v2147 = vpop.f32.mrb[0].mxu0
  %v2148 = vadd.f32 %v1835, %v2147
  %v2149 = vpop.f32.mrb[0].mxu0
  %v2150 = vadd.f32 %v1837, %v2149
  %2151 = vmatprep.mubr.bf16.mxu0 0
  %2152 = vmatmul.mubr.bf16.gmra.mrb[0].mxu0 %v1678
  %v2153 = vpop.f32.mrb[0].mxu0
  %v2154 = vadd.f32 %v1841, %v2153
  %v2155 = vpop.f32.mrb[0].mxu0
  %v2156 = vadd.f32 %v1843, %v2155
  %v2157 = vpop.f32.mrb[0].mxu0
  %v2158 = vadd.f32 %v1845, %v2157
  %v2159 = vpop.f32.mrb[0].mxu0
  %v2160 = vadd.f32 %v1847, %v2159
  %2161 = vmatprep.mubr.bf16.mxu0 0
  %2162 = vmatmul.mubr.bf16.gmra.mrb[0].mxu0 %v1681
  %v2163 = vpop.f32.mrb[0].mxu0
  %v2164 = vadd.f32 %v1851, %v2163
  %v2165 = vpop.f32.mrb[0].mxu0
  %v2166 = vadd.f32 %v1853, %v2165
  %v2167 = vpop.f32.mrb[0].mxu0
  %v2168 = vadd.f32 %v1855, %v2167
  %v2169 = vpop.f32.mrb[0].mxu0
  %v2170 = vadd.f32 %v1857, %v2169
  %2171 = vmatprep.mubr.bf16.mxu0 0
  %2172 = vmatmul.mubr.bf16.gmra.mrb[0].mxu0 %v1684
  %v2173 = vpop.f32.mrb[0].mxu0
  %v2174 = vadd.f32 %v1861, %v2173
  %v2175 = vpop.f32.mrb[0].mxu0
  %v2176 = vadd.f32 %v1863, %v2175
  %v2177 = vpop.f32.mrb[0].mxu0
  %v2178 = vadd.f32 %v1865, %v2177
  %v2179 = vpop.f32.mrb[0].mxu0
  %v2180 = vadd.f32 %v1867, %v2179
  %2181 = vmatprep.mubr.bf16.mxu0 0
  %2182 = vmatmul.mubr.bf16.gmra.mrb[0].mxu0 %v1687
  %v2183 = vpop.f32.mrb[0].mxu0
  %v2184 = vadd.f32 %v1871, %v2183
  %v2185 = vpop.f32.mrb[0].mxu0
  %v2186 = vadd.f32 %v1873, %v2185
  %v2187 = vpop.f32.mrb[0].mxu0
  %v2188 = vadd.f32 %v1875, %v2187
  %v2189 = vpop.f32.mrb[0].mxu0
  %v2190 = vadd.f32 %v1877, %v2189
  %2191 = vmatprep.mubr.bf16.mxu0 0
  %2192 = vmatmul.mubr.bf16.gmra.mrb[0].mxu0 %v1690
  %v2193 = vpop.f32.mrb[0].mxu0
  %v2194 = vadd.f32 %v1881, %v2193
  %v2195 = vpop.f32.mrb[0].mxu0
  %v2196 = vadd.f32 %v1883, %v2195
  %v2197 = vpop.f32.mrb[0].mxu0
  %v2198 = vadd.f32 %v1885, %v2197
  %v2199 = vpop.f32.mrb[0].mxu0
  %v2200 = vadd.f32 %v1887, %v2199
  %2201 = vmatprep.mubr.bf16.mxu0 0
  %2202 = vmatmul.mubr.bf16.gmra.mrb[0].mxu0 %v1693
  %v2203 = vpop.f32.mrb[0].mxu0
  %v2204 = vadd.f32 %v1891, %v2203
  %v2205 = vpop.f32.mrb[0].mxu0
  %v2206 = vadd.f32 %v1893, %v2205
  %v2207 = vpop.f32.mrb[0].mxu0
  %v2208 = vadd.f32 %v1895, %v2207
  %v2209 = vpop.f32.mrb[0].mxu0
  %v2210 = vadd.f32 %v1897, %v2209
  %2211 = vmatprep.mubr.bf16.mxu0 0
  %2212 = vmatmul.mubr.bf16.gmra.mrb[0].mxu0 %v1696
  %v2213 = vpop.f32.mrb[0].mxu0
  %v2214 = vadd.f32 %v1901, %v2213
  %v2215 = vpop.f32.mrb[0].mxu0
  %v2216 = vadd.f32 %v1903, %v2215
  %v2217 = vpop.f32.mrb[0].mxu0
  %v2218 = vadd.f32 %v1905, %v2217
  %v2219 = vpop.f32.mrb[0].mxu0
  %v2220 = vadd.f32 %v1907, %v2219
  %2221 = vmatprep.mubr.bf16.mxu0 0
  %2222 = vmatmul.mubr.bf16.gmra.mrb[0].mxu0 %v1699
  %v2223 = vpop.f32.mrb[0].mxu0
  %v2224 = vadd.f32 %v1911, %v2223
  %v2225 = vpop.f32.mrb[0].mxu0
  %v2226 = vadd.f32 %v1913, %v2225
  %v2227 = vpop.f32.mrb[0].mxu0
  %v2228 = vadd.f32 %v1915, %v2227
  %v2229 = vpop.f32.mrb[0].mxu0
  %v2230 = vadd.f32 %v1917, %v2229
  %2231 = vmatprep.mubr.bf16.mxu0 0
  %2232 = vmatmul.mubr.bf16.gmra.mrb[0].mxu0 %v1702
  %v2233 = vpop.f32.mrb[0].mxu0
  %v2234 = vadd.f32 %v1921, %v2233
  %v2235 = vpop.f32.mrb[0].mxu0
  %v2236 = vadd.f32 %v1923, %v2235
  %v2237 = vpop.f32.mrb[0].mxu0
  %v2238 = vadd.f32 %v1925, %v2237
  %v2239 = vpop.f32.mrb[0].mxu0
  %v2240 = vadd.f32 %v1927, %v2239
  %2241 = vmatprep.mubr.bf16.mxu0 0
  %2242 = vmatmul.mubr.bf16.gmra.mrb[0].mxu0 %v1705
  %v2243 = vpop.f32.mrb[0].mxu0
  %v2244 = vadd.f32 %v1931, %v2243
  %v2245 = vpop.f32.mrb[0].mxu0
  %v2246 = vadd.f32 %v1933, %v2245
  %v2247 = vpop.f32.mrb[0].mxu0
  %v2248 = vadd.f32 %v1935, %v2247
  %v2249 = vpop.f32.mrb[0].mxu0
  %v2250 = vadd.f32 %v1937, %v2249
  %2251 = vmatprep.mubr.bf16.mxu0 0
  %2252 = vmatmul.mubr.bf16.gmra.mrb[0].mxu0 %v1708
  %v2253 = vpop.f32.mrb[0].mxu0
  %v2254 = vadd.f32 %v1941, %v2253
  %v2255 = vpop.f32.mrb[0].mxu0
  %v2256 = vadd.f32 %v1943, %v2255
  %v2257 = vpop.f32.mrb[0].mxu0
  %v2258 = vadd.f32 %v1945, %v2257
  %v2259 = vpop.f32.mrb[0].mxu0
  %v2260 = vadd.f32 %v1947, %v2259
  %2261 = vmatprep.mubr.bf16.mxu0 0
  %2262 = vmatmul.mubr.bf16.gmra.mrb[0].mxu0 %v1711
  %v2263 = vpop.f32.mrb[0].mxu0
  %v2264 = vadd.f32 %v1951, %v2263
  %v2265 = vpop.f32.mrb[0].mxu0
  %v2266 = vadd.f32 %v1953, %v2265
  %v2267 = vpop.f32.mrb[0].mxu0
  %v2268 = vadd.f32 %v1955, %v2267
  %v2269 = vpop.f32.mrb[0].mxu0
  %v2270 = vadd.f32 %v1957, %v2269
  %2271 = vmatprep.mubr.bf16.mxu0 0
  %2272 = vmatmul.mubr.bf16.gmra.mrb[0].mxu0 %v1714
  %v2273 = vpop.f32.mrb[0].mxu0
  %v2274 = vadd.f32 %v1961, %v2273
  %v2275 = vpop.f32.mrb[0].mxu0
  %v2276 = vadd.f32 %v1963, %v2275
  %v2277 = vpop.f32.mrb[0].mxu0
  %v2278 = vadd.f32 %v1965, %v2277
  %v2279 = vpop.f32.mrb[0].mxu0
  %v2280 = vadd.f32 %v1967, %v2279
  %2281 = vmatprep.mubr.bf16.mxu0 0
  %2282 = vmatmul.mubr.bf16.gmra.mrb[0].mxu0 %v1717
  %v2283 = vpop.f32.mrb[0].mxu0
  %v2284 = vadd.f32 %v1971, %v2283
  %v2285 = vpop.f32.mrb[0].mxu0
  %v2286 = vadd.f32 %v1973, %v2285
  %v2287 = vpop.f32.mrb[0].mxu0
  %v2288 = vadd.f32 %v1975, %v2287
  %v2289 = vpop.f32.mrb[0].mxu0
  %v2290 = vadd.f32 %v1977, %v2289
  %2291 = vmatprep.mubr.bf16.mxu0 0
  %2292 = vmatmul.mubr.bf16.gmra.mrb[0].mxu0 %v1720
  %v2293 = vpop.f32.mrb[0].mxu0
  %v2294 = vadd.f32 %v1981, %v2293
  %v2295 = vpop.f32.mrb[0].mxu0
  %v2296 = vadd.f32 %v1983, %v2295
  %v2297 = vpop.f32.mrb[0].mxu0
  %v2298 = vadd.f32 %v1985, %v2297
  %v2299 = vpop.f32.mrb[0].mxu0
  %v2300 = vadd.f32 %v1987, %v2299
  %2301 = vmatprep.mubr.bf16.mxu0 0
  %2302 = vmatmul.mubr.bf16.gmra.mrb[0].mxu0 %v1723
  %v2303 = vpop.f32.mrb[0].mxu0
  %v2304 = vadd.f32 %v1991, %v2303
  %v2305 = vpop.f32.mrb[0].mxu0
  %v2306 = vadd.f32 %v1993, %v2305
  %v2307 = vpop.f32.mrb[0].mxu0
  %v2308 = vadd.f32 %v1995, %v2307
  %v2309 = vpop.f32.mrb[0].mxu0
  %v2310 = vadd.f32 %v1997, %v2309
  %2311 = vmatprep.mubr.bf16.mxu0 0
  %2312 = vmatmul.mubr.bf16.gmra.mrb[0].mxu0 %v1726
  %v2313 = vpop.f32.mrb[0].mxu0
  %v2314 = vadd.f32 %v2001, %v2313
  %v2315 = vpop.f32.mrb[0].mxu0
  %v2316 = vadd.f32 %v2003, %v2315
  %v2317 = vpop.f32.mrb[0].mxu0
  %v2318 = vadd.f32 %v2005, %v2317
  %v2319 = vpop.f32.mrb[0].mxu0
  %v2320 = vadd.f32 %v2007, %v2319
  %2321 = vmatprep.mubr.bf16.mxu0 0
  %2322 = vmatmul.mubr.bf16.gmra.mrb[0].mxu0 %v1729
  %v2323 = vpop.f32.mrb[0].mxu0
  %v2324 = vadd.f32 %v2011, %v2323
  %v2325 = vpop.f32.mrb[0].mxu0
  %v2326 = vadd.f32 %v2013, %v2325
  %v2327 = vpop.f32.mrb[0].mxu0
  %v2328 = vadd.f32 %v2015, %v2327
  %v2329 = vpop.f32.mrb[0].mxu0
  %v2330 = vadd.f32 %v2017, %v2329
  %2331 = vmatprep.mubr.bf16.mxu0 0
  %2332 = vmatmul.mubr.bf16.gmra.mrb[0].mxu0 %v1732
  %v2333 = vpop.f32.mrb[0].mxu0
  %v2334 = vadd.f32 %v2021, %v2333
  %v2335 = vpop.f32.mrb[0].mxu0
  %v2336 = vadd.f32 %v2023, %v2335
  %v2337 = vpop.f32.mrb[0].mxu0
  %v2338 = vadd.f32 %v2025, %v2337
  %v2339 = vpop.f32.mrb[0].mxu0
  %v2340 = vadd.f32 %v2027, %v2339
  %2341 = vmatprep.mubr.bf16.mxu0 0
  %2342 = vmatmul.mubr.bf16.gmra.mrb[0].mxu0 %v1735
  %v2343 = vpop.f32.mrb[0].mxu0
  %v2344 = vadd.f32 %v2031, %v2343
  %v2345 = vpop.f32.mrb[0].mxu0
  %v2346 = vadd.f32 %v2033, %v2345
  %v2347 = vpop.f32.mrb[0].mxu0
  %v2348 = vadd.f32 %v2035, %v2347
  %v2349 = vpop.f32.mrb[0].mxu0
  %v2350 = vadd.f32 %v2037, %v2349
  %2351 = vmatprep.mubr.bf16.mxu0 0
  %2352 = vmatmul.mubr.bf16.gmra.mrb[0].mxu0 %v1738
  %v2353 = vpop.f32.mrb[0].mxu0
  %v2354 = vadd.f32 %v2041, %v2353
  %v2355 = vpop.f32.mrb[0].mxu0
  %v2356 = vadd.f32 %v2043, %v2355
  %v2357 = vpop.f32.mrb[0].mxu0
  %v2358 = vadd.f32 %v2045, %v2357
  %v2359 = vpop.f32.mrb[0].mxu0
  %v2360 = vadd.f32 %v2047, %v2359
  %2361 = vmatprep.mubr.bf16.mxu0 0
  %2362 = vmatmul.mubr.bf16.gmra.mrb[0].mxu0 %v1741
  %v2363 = vpop.f32.mrb[0].mxu0
  %v2364 = vadd.f32 %v2051, %v2363
  %v2365 = vpop.f32.mrb[0].mxu0
  %v2366 = vadd.f32 %v2053, %v2365
  %v2367 = vpop.f32.mrb[0].mxu0
  %v2368 = vadd.f32 %v2055, %v2367
  %v2369 = vpop.f32.mrb[0].mxu0
  %v2370 = vadd.f32 %v2057, %v2369
  %2371 = vmatprep.mubr.bf16.mxu0 0
  %2372 = vmatmul.mubr.bf16.gmra.mrb[0].mxu0 %v1744
  %v2373 = vpop.f32.mrb[0].mxu0
  %v2374 = vadd.f32 %v2061, %v2373
  %v2375 = vpop.f32.mrb[0].mxu0
  %v2376 = vadd.f32 %v2063, %v2375
  %v2377 = vpop.f32.mrb[0].mxu0
  %v2378 = vadd.f32 %v2065, %v2377
  %v2379 = vpop.f32.mrb[0].mxu0
  %v2380 = vadd.f32 %v2067, %v2379
  %2381 = vdwg.mxu0
  %2382 = vmatprep.subr.bf16.mxu0 0
  %2383 = vmatpush1.bf16.msra.mxu0 %v1540
  %2384 = vmatprep.subr.bf16.mxu0 0
  %2385 = vmatpush1.bf16.msra.mxu0 %v1543
  %2386 = vmatprep.subr.bf16.mxu0 0
  %2387 = vmatpush1.bf16.msra.mxu0 %v1546
  %2388 = vmatprep.subr.bf16.mxu0 0
  %2389 = vmatpush1.bf16.msra.mxu0 %v1549
  %2390 = vmatprep.subr.bf16.mxu0 0
  %2391 = vmatpush1.bf16.msra.mxu0 %v1552
  %2392 = vmatprep.subr.bf16.mxu0 0
  %2393 = vmatpush1.bf16.msra.mxu0 %v1555
  %2394 = vmatprep.subr.bf16.mxu0 0
  %2395 = vmatpush1.bf16.msra.mxu0 %v1558
  %2396 = vmatprep.subr.bf16.mxu0 0
  %2397 = vmatpush1.bf16.msra.mxu0 %v1561
  %2398 = vmatprep.subr.bf16.mxu0 0
  %2399 = vmatpush1.bf16.msra.mxu0 %v1564
  %2400 = vmatprep.subr.bf16.mxu0 0
  %2401 = vmatpush1.bf16.msra.mxu0 %v1567
  %2402 = vmatprep.subr.bf16.mxu0 0
  %2403 = vmatpush1.bf16.msra.mxu0 %v1570
  %2404 = vmatprep.subr.bf16.mxu0 0
  %2405 = vmatpush1.bf16.msra.mxu0 %v1573
  %2406 = vmatprep.subr.bf16.mxu0 0
  %2407 = vmatpush1.bf16.msra.mxu0 %v1576
  %2408 = vmatprep.subr.bf16.mxu0 0
  %2409 = vmatpush1.bf16.msra.mxu0 %v1579
  %2410 = vmatprep.subr.bf16.mxu0 0
  %2411 = vmatpush1.bf16.msra.mxu0 %v1582
  %2412 = vmatprep.subr.bf16.mxu0 0
  %2413 = vmatpush1.bf16.msra.mxu0 %v1585
  %2414 = vmatprep.mubr.bf16.mxu0 %v1168
  %2415 = vmatmul.mubr.bf16.gmra.mrb[0].mxu0 %v1167
  %v2416 = vpop.f32.mrb[0].mxu0
  %v2417 = vadd.f32 0.0, %v2416
  %v2418 = vpop.f32.mrb[0].mxu0
  %v2419 = vpop.f32.mrb[0].mxu0
  %v2420 = vadd.f32 0.0, %v2419
  %v2421 = vpop.f32.mrb[0].mxu0
  %2422 = vmatprep.mubr.bf16.mxu0 %v1171
  %2423 = vmatmul.mubr.bf16.gmra.mrb[0].mxu0 %v1170
  %v2424 = vpop.f32.mrb[0].mxu0
  %v2425 = vadd.f32 0.0, %v2424
  %v2426 = vpop.f32.mrb[0].mxu0
  %v2427 = vpop.f32.mrb[0].mxu0
  %v2428 = vadd.f32 0.0, %v2427
  %v2429 = vpop.f32.mrb[0].mxu0
  %2430 = vmatprep.mubr.bf16.mxu0 %v1174
  %2431 = vmatmul.mubr.bf16.gmra.mrb[0].mxu0 %v1173
  %v2432 = vpop.f32.mrb[0].mxu0
  %v2433 = vadd.f32 0.0, %v2432
  %v2434 = vpop.f32.mrb[0].mxu0
  %v2435 = vpop.f32.mrb[0].mxu0
  %v2436 = vadd.f32 0.0, %v2435
  %v2437 = vpop.f32.mrb[0].mxu0
  %2438 = vmatprep.mubr.bf16.mxu0 %v1177
  %2439 = vmatmul.mubr.bf16.gmra.mrb[0].mxu0 %v1176
  %v2440 = vpop.f32.mrb[0].mxu0
  %v2441 = vadd.f32 0.0, %v2440
  %v2442 = vpop.f32.mrb[0].mxu0
  %v2443 = vpop.f32.mrb[0].mxu0
  %v2444 = vadd.f32 0.0, %v2443
  %v2445 = vpop.f32.mrb[0].mxu0
  %2446 = vmatprep.mubr.bf16.mxu0 %v1180
  %2447 = vmatmul.mubr.bf16.gmra.mrb[0].mxu0 %v1179
  %v2448 = vpop.f32.mrb[0].mxu0
  %v2449 = vadd.f32 0.0, %v2448
  %v2450 = vpop.f32.mrb[0].mxu0
  %v2451 = vpop.f32.mrb[0].mxu0
  %v2452 = vadd.f32 0.0, %v2451
  %v2453 = vpop.f32.mrb[0].mxu0
  %2454 = vmatprep.mubr.bf16.mxu0 %v1183
  %2455 = vmatmul.mubr.bf16.gmra.mrb[0].mxu0 %v1182
  %v2456 = vpop.f32.mrb[0].mxu0
  %v2457 = vadd.f32 0.0, %v2456
  %v2458 = vpop.f32.mrb[0].mxu0
  %v2459 = vpop.f32.mrb[0].mxu0
  %v2460 = vadd.f32 0.0, %v2459
  %v2461 = vpop.f32.mrb[0].mxu0
  %2462 = vmatprep.mubr.bf16.mxu0 %v1186
  %2463 = vmatmul.mubr.bf16.gmra.mrb[0].mxu0 %v1185
  %v2464 = vpop.f32.mrb[0].mxu0
  %v2465 = vadd.f32 0.0, %v2464
  %v2466 = vpop.f32.mrb[0].mxu0
  %v2467 = vpop.f32.mrb[0].mxu0
  %v2468 = vadd.f32 0.0, %v2467
  %v2469 = vpop.f32.mrb[0].mxu0
  %2470 = vmatprep.mubr.bf16.mxu0 %v1189
  %2471 = vmatmul.mubr.bf16.gmra.mrb[0].mxu0 %v1188
  %v2472 = vpop.f32.mrb[0].mxu0
  %v2473 = vadd.f32 0.0, %v2472
  %v2474 = vpop.f32.mrb[0].mxu0
  %v2475 = vpop.f32.mrb[0].mxu0
  %v2476 = vadd.f32 0.0, %v2475
  %v2477 = vpop.f32.mrb[0].mxu0
  %2478 = vmatprep.mubr.bf16.mxu0 %v1192
  %2479 = vmatmul.mubr.bf16.gmra.mrb[0].mxu0 %v1191
  %v2480 = vpop.f32.mrb[0].mxu0
  %v2481 = vadd.f32 0.0, %v2480
  %v2482 = vpop.f32.mrb[0].mxu0
  %v2483 = vpop.f32.mrb[0].mxu0
  %v2484 = vadd.f32 0.0, %v2483
  %v2485 = vpop.f32.mrb[0].mxu0
  %2486 = vmatprep.mubr.bf16.mxu0 %v1195
  %2487 = vmatmul.mubr.bf16.gmra.mrb[0].mxu0 %v1194
  %v2488 = vpop.f32.mrb[0].mxu0
  %v2489 = vadd.f32 0.0, %v2488
  %v2490 = vpop.f32.mrb[0].mxu0
  %v2491 = vpop.f32.mrb[0].mxu0
  %v2492 = vadd.f32 0.0, %v2491
  %v2493 = vpop.f32.mrb[0].mxu0
  %2494 = vmatprep.mubr.bf16.mxu0 %v1198
  %2495 = vmatmul.mubr.bf16.gmra.mrb[0].mxu0 %v1197
  %v2496 = vpop.f32.mrb[0].mxu0
  %v2497 = vadd.f32 0.0, %v2496
  %v2498 = vpop.f32.mrb[0].mxu0
  %v2499 = vpop.f32.mrb[0].mxu0
  %v2500 = vadd.f32 0.0, %v2499
  %v2501 = vpop.f32.mrb[0].mxu0
  %2502 = vmatprep.mubr.bf16.mxu0 %v1201
  %2503 = vmatmul.mubr.bf16.gmra.mrb[0].mxu0 %v1200
  %v2504 = vpop.f32.mrb[0].mxu0
  %v2505 = vadd.f32 0.0, %v2504
  %v2506 = vpop.f32.mrb[0].mxu0
  %v2507 = vpop.f32.mrb[0].mxu0
  %v2508 = vadd.f32 0.0, %v2507
  %v2509 = vpop.f32.mrb[0].mxu0
  %2510 = vmatprep.mubr.bf16.mxu0 %v1204
  %2511 = vmatmul.mubr.bf16.gmra.mrb[0].mxu0 %v1203
  %v2512 = vpop.f32.mrb[0].mxu0
  %v2513 = vadd.f32 0.0, %v2512
  %v2514 = vpop.f32.mrb[0].mxu0
  %v2515 = vpop.f32.mrb[0].mxu0
  %v2516 = vadd.f32 0.0, %v2515
  %v2517 = vpop.f32.mrb[0].mxu0
  %2518 = vmatprep.mubr.bf16.mxu0 %v1207
  %2519 = vmatmul.mubr.bf16.gmra.mrb[0].mxu0 %v1206
  %v2520 = vpop.f32.mrb[0].mxu0
  %v2521 = vadd.f32 0.0, %v2520
  %v2522 = vpop.f32.mrb[0].mxu0
  %v2523 = vpop.f32.mrb[0].mxu0
  %v2524 = vadd.f32 0.0, %v2523
  %v2525 = vpop.f32.mrb[0].mxu0
  %2526 = vmatprep.mubr.bf16.mxu0 %v1210
  %2527 = vmatmul.mubr.bf16.gmra.mrb[0].mxu0 %v1209
  %v2528 = vpop.f32.mrb[0].mxu0
  %v2529 = vadd.f32 0.0, %v2528
  %v2530 = vpop.f32.mrb[0].mxu0
  %v2531 = vpop.f32.mrb[0].mxu0
  %v2532 = vadd.f32 0.0, %v2531
  %v2533 = vpop.f32.mrb[0].mxu0
  %2534 = vmatprep.mubr.bf16.mxu0 %v1213
  %2535 = vmatmul.mubr.bf16.gmra.mrb[0].mxu0 %v1212
  %v2536 = vpop.f32.mrb[0].mxu0
  %v2537 = vadd.f32 0.0, %v2536
  %v2538 = vpop.f32.mrb[0].mxu0
  %v2539 = vpop.f32.mrb[0].mxu0
  %v2540 = vadd.f32 0.0, %v2539
  %v2541 = vpop.f32.mrb[0].mxu0
  %2542 = vmatprep.mubr.bf16.mxu0 %v1216
  %2543 = vmatmul.mubr.bf16.gmra.mrb[0].mxu0 %v1215
  %v2544 = vpop.f32.mrb[0].mxu0
  %v2545 = vadd.f32 0.0, %v2544
  %v2546 = vpop.f32.mrb[0].mxu0
  %v2547 = vpop.f32.mrb[0].mxu0
  %v2548 = vadd.f32 0.0, %v2547
  %v2549 = vpop.f32.mrb[0].mxu0
  %2550 = vmatprep.mubr.bf16.mxu0 %v1219
  %2551 = vmatmul.mubr.bf16.gmra.mrb[0].mxu0 %v1218
  %v2552 = vpop.f32.mrb[0].mxu0
  %v2553 = vadd.f32 0.0, %v2552
  %v2554 = vpop.f32.mrb[0].mxu0
  %v2555 = vpop.f32.mrb[0].mxu0
  %v2556 = vadd.f32 0.0, %v2555
  %v2557 = vpop.f32.mrb[0].mxu0
  %2558 = vmatprep.mubr.bf16.mxu0 %v1222
  %2559 = vmatmul.mubr.bf16.gmra.mrb[0].mxu0 %v1221
  %v2560 = vpop.f32.mrb[0].mxu0
  %v2561 = vadd.f32 0.0, %v2560
  %v2562 = vpop.f32.mrb[0].mxu0
  %v2563 = vpop.f32.mrb[0].mxu0
  %v2564 = vadd.f32 0.0, %v2563
  %v2565 = vpop.f32.mrb[0].mxu0
  %2566 = vmatprep.mubr.bf16.mxu0 %v1225
  %2567 = vmatmul.mubr.bf16.gmra.mrb[0].mxu0 %v1224
  %v2568 = vpop.f32.mrb[0].mxu0
  %v2569 = vadd.f32 0.0, %v2568
  %v2570 = vpop.f32.mrb[0].mxu0
  %v2571 = vpop.f32.mrb[0].mxu0
  %v2572 = vadd.f32 0.0, %v2571
  %v2573 = vpop.f32.mrb[0].mxu0
  %2574 = vmatprep.mubr.bf16.mxu0 %v1228
  %2575 = vmatmul.mubr.bf16.gmra.mrb[0].mxu0 %v1227
  %v2576 = vpop.f32.mrb[0].mxu0
  %v2577 = vadd.f32 0.0, %v2576
  %v2578 = vpop.f32.mrb[0].mxu0
  %v2579 = vpop.f32.mrb[0].mxu0
  %v2580 = vadd.f32 0.0, %v2579
  %v2581 = vpop.f32.mrb[0].mxu0
  %2582 = vmatprep.mubr.bf16.mxu0 %v1231
  %2583 = vmatmul.mubr.bf16.gmra.mrb[0].mxu0 %v1230
  %v2584 = vpop.f32.mrb[0].mxu0
  %v2585 = vadd.f32 0.0, %v2584
  %v2586 = vpop.f32.mrb[0].mxu0
  %v2587 = vpop.f32.mrb[0].mxu0
  %v2588 = vadd.f32 0.0, %v2587
  %v2589 = vpop.f32.mrb[0].mxu0
  %2590 = vmatprep.mubr.bf16.mxu0 %v1234
  %2591 = vmatmul.mubr.bf16.gmra.mrb[0].mxu0 %v1233
  %v2592 = vpop.f32.mrb[0].mxu0
  %v2593 = vadd.f32 0.0, %v2592
  %v2594 = vpop.f32.mrb[0].mxu0
  %v2595 = vpop.f32.mrb[0].mxu0
  %v2596 = vadd.f32 0.0, %v2595
  %v2597 = vpop.f32.mrb[0].mxu0
  %2598 = vmatprep.mubr.bf16.mxu0 %v1237
  %2599 = vmatmul.mubr.bf16.gmra.mrb[0].mxu0 %v1236
  %v2600 = vpop.f32.mrb[0].mxu0
  %v2601 = vadd.f32 0.0, %v2600
  %v2602 = vpop.f32.mrb[0].mxu0
  %v2603 = vpop.f32.mrb[0].mxu0
  %v2604 = vadd.f32 0.0, %v2603
  %v2605 = vpop.f32.mrb[0].mxu0
  %2606 = vmatprep.mubr.bf16.mxu0 %v1240
  %2607 = vmatmul.mubr.bf16.gmra.mrb[0].mxu0 %v1239
  %v2608 = vpop.f32.mrb[0].mxu0
  %v2609 = vadd.f32 0.0, %v2608
  %v2610 = vpop.f32.mrb[0].mxu0
  %v2611 = vpop.f32.mrb[0].mxu0
  %v2612 = vadd.f32 0.0, %v2611
  %v2613 = vpop.f32.mrb[0].mxu0
  %2614 = vmatprep.mubr.bf16.mxu0 %v1243
  %2615 = vmatmul.mubr.bf16.gmra.mrb[0].mxu0 %v1242
  %v2616 = vpop.f32.mrb[0].mxu0
  %v2617 = vadd.f32 0.0, %v2616
  %v2618 = vpop.f32.mrb[0].mxu0
  %v2619 = vpop.f32.mrb[0].mxu0
  %v2620 = vadd.f32 0.0, %v2619
  %v2621 = vpop.f32.mrb[0].mxu0
  %2622 = vmatprep.mubr.bf16.mxu0 %v1246
  %2623 = vmatmul.mubr.bf16.gmra.mrb[0].mxu0 %v1245
  %v2624 = vpop.f32.mrb[0].mxu0
  %v2625 = vadd.f32 0.0, %v2624
  %v2626 = vpop.f32.mrb[0].mxu0
  %v2627 = vpop.f32.mrb[0].mxu0
  %v2628 = vadd.f32 0.0, %v2627
  %v2629 = vpop.f32.mrb[0].mxu0
  %2630 = vmatprep.mubr.bf16.mxu0 %v1249
  %2631 = vmatmul.mubr.bf16.gmra.mrb[0].mxu0 %v1248
  %v2632 = vpop.f32.mrb[0].mxu0
  %v2633 = vadd.f32 0.0, %v2632
  %v2634 = vpop.f32.mrb[0].mxu0
  %v2635 = vpop.f32.mrb[0].mxu0
  %v2636 = vadd.f32 0.0, %v2635
  %v2637 = vpop.f32.mrb[0].mxu0
  %2638 = vdwg.mxu0
  %2639 = vmatprep.subr.bf16.mxu0 0
  %2640 = vmatpush1.bf16.msra.mxu0 %v1588
  %2641 = vmatprep.subr.bf16.mxu0 0
  %2642 = vmatpush1.bf16.msra.mxu0 %v1591
  %2643 = vmatprep.subr.bf16.mxu0 0
  %2644 = vmatpush1.bf16.msra.mxu0 %v1594
  %2645 = vmatprep.subr.bf16.mxu0 0
  %2646 = vmatpush1.bf16.msra.mxu0 %v1597
  %2647 = vmatprep.subr.bf16.mxu0 0
  %2648 = vmatpush1.bf16.msra.mxu0 %v1754
  %2649 = vmatprep.subr.bf16.mxu0 0
  %2650 = vmatpush1.bf16.msra.mxu0 0
  %2651 = vmatprep.subr.bf16.mxu0 0
  %2652 = vmatpush1.bf16.msra.mxu0 0
  %2653 = vmatprep.subr.bf16.mxu0 0
  %2654 = vmatpush1.bf16.msra.mxu0 0
  %2655 = vmatprep.subr.bf16.mxu0 0
  %2656 = vmatpush1.bf16.msra.mxu0 0
  %2657 = vmatprep.subr.bf16.mxu0 0
  %2658 = vmatpush1.bf16.msra.mxu0 0
  %2659 = vmatprep.subr.bf16.mxu0 0
  %2660 = vmatpush1.bf16.msra.mxu0 0
  %2661 = vmatprep.subr.bf16.mxu0 0
  %2662 = vmatpush1.bf16.msra.mxu0 0
  %2663 = vmatprep.subr.bf16.mxu0 0
  %2664 = vmatpush1.bf16.msra.mxu0 0
  %2665 = vmatprep.subr.bf16.mxu0 0
  %2666 = vmatpush1.bf16.msra.mxu0 0
  %2667 = vmatprep.subr.bf16.mxu0 0
  %2668 = vmatpush1.bf16.msra.mxu0 0
  %2669 = vmatprep.subr.bf16.mxu0 0
  %2670 = vmatpush1.bf16.msra.mxu0 0
  %2671 = vmatprep.mubr.bf16.mxu0 0
  %2672 = vmatmul.mubr.bf16.gmra.mrb[0].mxu0 %v1663
  %v2673 = vpop.f32.mrb[0].mxu0
  %v2674 = vadd.f32 %v2417, %v2673
  %v2675 = vpop.f32.mrb[0].mxu0
  %v2676 = vpop.f32.mrb[0].mxu0
  %v2677 = vadd.f32 %v2420, %v2676
  %v2678 = vpop.f32.mrb[0].mxu0
  %2679 = vmatprep.mubr.bf16.mxu0 0
  %2680 = vmatmul.mubr.bf16.gmra.mrb[0].mxu0 %v1666
  %v2681 = vpop.f32.mrb[0].mxu0
  %v2682 = vadd.f32 %v2425, %v2681
  %v2683 = vpop.f32.mrb[0].mxu0
  %v2684 = vpop.f32.mrb[0].mxu0
  %v2685 = vadd.f32 %v2428, %v2684
  %v2686 = vpop.f32.mrb[0].mxu0
  %2687 = vmatprep.mubr.bf16.mxu0 0
  %2688 = vmatmul.mubr.bf16.gmra.mrb[0].mxu0 %v1669
  %v2689 = vpop.f32.mrb[0].mxu0
  %v2690 = vadd.f32 %v2433, %v2689
  %v2691 = vpop.f32.mrb[0].mxu0
  %v2692 = vpop.f32.mrb[0].mxu0
  %v2693 = vadd.f32 %v2436, %v2692
  %v2694 = vpop.f32.mrb[0].mxu0
  %2695 = vmatprep.mubr.bf16.mxu0 0
  %2696 = vmatmul.mubr.bf16.gmra.mrb[0].mxu0 %v1672
  %v2697 = vpop.f32.mrb[0].mxu0
  %v2698 = vadd.f32 %v2441, %v2697
  %v2699 = vpop.f32.mrb[0].mxu0
  %v2700 = vpop.f32.mrb[0].mxu0
  %v2701 = vadd.f32 %v2444, %v2700
  %v2702 = vpop.f32.mrb[0].mxu0
  %2703 = vmatprep.mubr.bf16.mxu0 0
  %2704 = vmatmul.mubr.bf16.gmra.mrb[0].mxu0 %v1675
  %v2705 = vpop.f32.mrb[0].mxu0
  %v2706 = vadd.f32 %v2449, %v2705
  %v2707 = vpop.f32.mrb[0].mxu0
  %v2708 = vpop.f32.mrb[0].mxu0
  %v2709 = vadd.f32 %v2452, %v2708
  %v2710 = vpop.f32.mrb[0].mxu0
  %2711 = vmatprep.mubr.bf16.mxu0 0
  %2712 = vmatmul.mubr.bf16.gmra.mrb[0].mxu0 %v1678
  %v2713 = vpop.f32.mrb[0].mxu0
  %v2714 = vadd.f32 %v2457, %v2713
  %v2715 = vpop.f32.mrb[0].mxu0
  %v2716 = vpop.f32.mrb[0].mxu0
  %v2717 = vadd.f32 %v2460, %v2716
  %v2718 = vpop.f32.mrb[0].mxu0
  %2719 = vmatprep.mubr.bf16.mxu0 0
  %2720 = vmatmul.mubr.bf16.gmra.mrb[0].mxu0 %v1681
  %v2721 = vpop.f32.mrb[0].mxu0
  %v2722 = vadd.f32 %v2465, %v2721
  %v2723 = vpop.f32.mrb[0].mxu0
  %v2724 = vpop.f32.mrb[0].mxu0
  %v2725 = vadd.f32 %v2468, %v2724
  %v2726 = vpop.f32.mrb[0].mxu0
  %2727 = vmatprep.mubr.bf16.mxu0 0
  %2728 = vmatmul.mubr.bf16.gmra.mrb[0].mxu0 %v1684
  %v2729 = vpop.f32.mrb[0].mxu0
  %v2730 = vadd.f32 %v2473, %v2729
  %v2731 = vpop.f32.mrb[0].mxu0
  %v2732 = vpop.f32.mrb[0].mxu0
  %v2733 = vadd.f32 %v2476, %v2732
  %v2734 = vpop.f32.mrb[0].mxu0
  %2735 = vmatprep.mubr.bf16.mxu0 0
  %2736 = vmatmul.mubr.bf16.gmra.mrb[0].mxu0 %v1687
  %v2737 = vpop.f32.mrb[0].mxu0
  %v2738 = vadd.f32 %v2481, %v2737
  %v2739 = vpop.f32.mrb[0].mxu0
  %v2740 = vpop.f32.mrb[0].mxu0
  %v2741 = vadd.f32 %v2484, %v2740
  %v2742 = vpop.f32.mrb[0].mxu0
  %2743 = vmatprep.mubr.bf16.mxu0 0
  %2744 = vmatmul.mubr.bf16.gmra.mrb[0].mxu0 %v1690
  %v2745 = vpop.f32.mrb[0].mxu0
  %v2746 = vadd.f32 %v2489, %v2745
  %v2747 = vpop.f32.mrb[0].mxu0
  %v2748 = vpop.f32.mrb[0].mxu0
  %v2749 = vadd.f32 %v2492, %v2748
  %v2750 = vpop.f32.mrb[0].mxu0
  %2751 = vmatprep.mubr.bf16.mxu0 0
  %2752 = vmatmul.mubr.bf16.gmra.mrb[0].mxu0 %v1693
  %v2753 = vpop.f32.mrb[0].mxu0
  %v2754 = vadd.f32 %v2497, %v2753
  %v2755 = vpop.f32.mrb[0].mxu0
  %v2756 = vpop.f32.mrb[0].mxu0
  %v2757 = vadd.f32 %v2500, %v2756
  %v2758 = vpop.f32.mrb[0].mxu0
  %2759 = vmatprep.mubr.bf16.mxu0 0
  %2760 = vmatmul.mubr.bf16.gmra.mrb[0].mxu0 %v1696
  %v2761 = vpop.f32.mrb[0].mxu0
  %v2762 = vadd.f32 %v2505, %v2761
  %v2763 = vpop.f32.mrb[0].mxu0
  %v2764 = vpop.f32.mrb[0].mxu0
  %v2765 = vadd.f32 %v2508, %v2764
  %v2766 = vpop.f32.mrb[0].mxu0
  %2767 = vmatprep.mubr.bf16.mxu0 0
  %2768 = vmatmul.mubr.bf16.gmra.mrb[0].mxu0 %v1699
  %v2769 = vpop.f32.mrb[0].mxu0
  %v2770 = vadd.f32 %v2513, %v2769
  %v2771 = vpop.f32.mrb[0].mxu0
  %v2772 = vpop.f32.mrb[0].mxu0
  %v2773 = vadd.f32 %v2516, %v2772
  %v2774 = vpop.f32.mrb[0].mxu0
  %2775 = vmatprep.mubr.bf16.mxu0 0
  %2776 = vmatmul.mubr.bf16.gmra.mrb[0].mxu0 %v1702
  %v2777 = vpop.f32.mrb[0].mxu0
  %v2778 = vadd.f32 %v2521, %v2777
  %v2779 = vpop.f32.mrb[0].mxu0
  %v2780 = vpop.f32.mrb[0].mxu0
  %v2781 = vadd.f32 %v2524, %v2780
  %v2782 = vpop.f32.mrb[0].mxu0
  %2783 = vmatprep.mubr.bf16.mxu0 0
  %2784 = vmatmul.mubr.bf16.gmra.mrb[0].mxu0 %v1705
  %v2785 = vpop.f32.mrb[0].mxu0
  %v2786 = vadd.f32 %v2529, %v2785
  %v2787 = vpop.f32.mrb[0].mxu0
  %v2788 = vpop.f32.mrb[0].mxu0
  %v2789 = vadd.f32 %v2532, %v2788
  %v2790 = vpop.f32.mrb[0].mxu0
  %2791 = vmatprep.mubr.bf16.mxu0 0
  %2792 = vmatmul.mubr.bf16.gmra.mrb[0].mxu0 %v1708
  %v2793 = vpop.f32.mrb[0].mxu0
  %v2794 = vadd.f32 %v2537, %v2793
  %v2795 = vpop.f32.mrb[0].mxu0
  %v2796 = vpop.f32.mrb[0].mxu0
  %v2797 = vadd.f32 %v2540, %v2796
  %v2798 = vpop.f32.mrb[0].mxu0
  %2799 = vmatprep.mubr.bf16.mxu0 0
  %2800 = vmatmul.mubr.bf16.gmra.mrb[0].mxu0 %v1711
  %v2801 = vpop.f32.mrb[0].mxu0
  %v2802 = vadd.f32 %v2545, %v2801
  %v2803 = vpop.f32.mrb[0].mxu0
  %v2804 = vpop.f32.mrb[0].mxu0
  %v2805 = vadd.f32 %v2548, %v2804
  %v2806 = vpop.f32.mrb[0].mxu0
  %2807 = vmatprep.mubr.bf16.mxu0 0
  %2808 = vmatmul.mubr.bf16.gmra.mrb[0].mxu0 %v1714
  %v2809 = vpop.f32.mrb[0].mxu0
  %v2810 = vadd.f32 %v2553, %v2809
  %v2811 = vpop.f32.mrb[0].mxu0
  %v2812 = vpop.f32.mrb[0].mxu0
  %v2813 = vadd.f32 %v2556, %v2812
  %v2814 = vpop.f32.mrb[0].mxu0
  %2815 = vmatprep.mubr.bf16.mxu0 0
  %2816 = vmatmul.mubr.bf16.gmra.mrb[0].mxu0 %v1717
  %v2817 = vpop.f32.mrb[0].mxu0
  %v2818 = vadd.f32 %v2561, %v2817
  %v2819 = vpop.f32.mrb[0].mxu0
  %v2820 = vpop.f32.mrb[0].mxu0
  %v2821 = vadd.f32 %v2564, %v2820
  %v2822 = vpop.f32.mrb[0].mxu0
  %2823 = vmatprep.mubr.bf16.mxu0 0
  %2824 = vmatmul.mubr.bf16.gmra.mrb[0].mxu0 %v1720
  %v2825 = vpop.f32.mrb[0].mxu0
  %v2826 = vadd.f32 %v2569, %v2825
  %v2827 = vpop.f32.mrb[0].mxu0
  %v2828 = vpop.f32.mrb[0].mxu0
  %v2829 = vadd.f32 %v2572, %v2828
  %v2830 = vpop.f32.mrb[0].mxu0
  %2831 = vmatprep.mubr.bf16.mxu0 0
  %2832 = vmatmul.mubr.bf16.gmra.mrb[0].mxu0 %v1723
  %v2833 = vpop.f32.mrb[0].mxu0
  %v2834 = vadd.f32 %v2577, %v2833
  %v2835 = vpop.f32.mrb[0].mxu0
  %v2836 = vpop.f32.mrb[0].mxu0
  %v2837 = vadd.f32 %v2580, %v2836
  %v2838 = vpop.f32.mrb[0].mxu0
  %2839 = vmatprep.mubr.bf16.mxu0 0
  %2840 = vmatmul.mubr.bf16.gmra.mrb[0].mxu0 %v1726
  %v2841 = vpop.f32.mrb[0].mxu0
  %v2842 = vadd.f32 %v2585, %v2841
  %v2843 = vpop.f32.mrb[0].mxu0
  %v2844 = vpop.f32.mrb[0].mxu0
  %v2845 = vadd.f32 %v2588, %v2844
  %v2846 = vpop.f32.mrb[0].mxu0
  %2847 = vmatprep.mubr.bf16.mxu0 0
  %2848 = vmatmul.mubr.bf16.gmra.mrb[0].mxu0 %v1729
  %v2849 = vpop.f32.mrb[0].mxu0
  %v2850 = vadd.f32 %v2593, %v2849
  %v2851 = vpop.f32.mrb[0].mxu0
  %v2852 = vpop.f32.mrb[0].mxu0
  %v2853 = vadd.f32 %v2596, %v2852
  %v2854 = vpop.f32.mrb[0].mxu0
  %2855 = vmatprep.mubr.bf16.mxu0 0
  %2856 = vmatmul.mubr.bf16.gmra.mrb[0].mxu0 %v1732
  %v2857 = vpop.f32.mrb[0].mxu0
  %v2858 = vadd.f32 %v2601, %v2857
  %v2859 = vpop.f32.mrb[0].mxu0
  %v2860 = vpop.f32.mrb[0].mxu0
  %v2861 = vadd.f32 %v2604, %v2860
  %v2862 = vpop.f32.mrb[0].mxu0
  %2863 = vmatprep.mubr.bf16.mxu0 0
  %2864 = vmatmul.mubr.bf16.gmra.mrb[0].mxu0 %v1735
  %v2865 = vpop.f32.mrb[0].mxu0
  %v2866 = vadd.f32 %v2609, %v2865
  %v2867 = vpop.f32.mrb[0].mxu0
  %v2868 = vpop.f32.mrb[0].mxu0
  %v2869 = vadd.f32 %v2612, %v2868
  %v2870 = vpop.f32.mrb[0].mxu0
  %2871 = vmatprep.mubr.bf16.mxu0 0
  %2872 = vmatmul.mubr.bf16.gmra.mrb[0].mxu0 %v1738
  %v2873 = vpop.f32.mrb[0].mxu0
  %v2874 = vadd.f32 %v2617, %v2873
  %v2875 = vpop.f32.mrb[0].mxu0
  %v2876 = vpop.f32.mrb[0].mxu0
  %v2877 = vadd.f32 %v2620, %v2876
  %v2878 = vpop.f32.mrb[0].mxu0
  %2879 = vmatprep.mubr.bf16.mxu0 0
  %2880 = vmatmul.mubr.bf16.gmra.mrb[0].mxu0 %v1741
  %v2881 = vpop.f32.mrb[0].mxu0
  %v2882 = vadd.f32 %v2625, %v2881
  %v2883 = vpop.f32.mrb[0].mxu0
  %v2884 = vpop.f32.mrb[0].mxu0
  %v2885 = vadd.f32 %v2628, %v2884
  %v2886 = vpop.f32.mrb[0].mxu0
  %2887 = vmatprep.mubr.bf16.mxu0 0
  %2888 = vmatmul.mubr.bf16.gmra.mrb[0].mxu0 %v1744
  %v2889 = vpop.f32.mrb[0].mxu0
  %v2890 = vadd.f32 %v2633, %v2889
  %v2891 = vpop.f32.mrb[0].mxu0
  %v2892 = vpop.f32.mrb[0].mxu0
  %v2893 = vadd.f32 %v2636, %v2892
  %v2894 = vpop.f32.mrb[0].mxu0
  %2895 = vdwg.mxu0
  %2896 = vst [vmem:[#allocation3] sm:$0xff] %v2104
  %2897 = vst [vmem:[#allocation3 + $0x8] sm:$0xff] %v2106
  %vm2898 = vcmask 195584
  %2899 = vst.msk [vmem:[#allocation3 + $0x10] sm:$0xff] %vm2898, %v2674
  %2900 = vst [vmem:[#allocation3 + $0x18] sm:$0xff] %v2108
  %2901 = vst [vmem:[#allocation3 + $0x20] sm:$0xff] %v2110
  %2902 = vst.msk [vmem:[#allocation3 + $0x28] sm:$0xff] %vm2898, %v2677
  %2903 = vst [vmem:[#allocation3 + $0x30] sm:$0xff] %v2114
  %2904 = vst [vmem:[#allocation3 + $0x38] sm:$0xff] %v2116
  %2905 = vst.msk [vmem:[#allocation3 + $0x40] sm:$0xff] %vm2898, %v2682
  %2906 = vst [vmem:[#allocation3 + $0x48] sm:$0xff] %v2118
  %2907 = vst [vmem:[#allocation3 + $0x50] sm:$0xff] %v2120
  %2908 = vst.msk [vmem:[#allocation3 + $0x58] sm:$0xff] %vm2898, %v2685
  %2909 = vst [vmem:[#allocation3 + $0x60] sm:$0xff] %v2124
  %2910 = vst [vmem:[#allocation3 + $0x68] sm:$0xff] %v2126
  %2911 = vst.msk [vmem:[#allocation3 + $0x70] sm:$0xff] %vm2898, %v2690
  %2912 = vst [vmem:[#allocation3 + $0x78] sm:$0xff] %v2128
  %2913 = vst [vmem:[#allocation3 + $0x80] sm:$0xff] %v2130
  %2914 = vst.msk [vmem:[#allocation3 + $0x88] sm:$0xff] %vm2898, %v2693
  %2915 = vst [vmem:[#allocation3 + $0x90] sm:$0xff] %v2134
  %2916 = vst [vmem:[#allocation3 + $0x98] sm:$0xff] %v2136
  %2917 = vst.msk [vmem:[#allocation3 + $0xa0] sm:$0xff] %vm2898, %v2698
  %2918 = vst [vmem:[#allocation3 + $0xa8] sm:$0xff] %v2138
  %2919 = vst [vmem:[#allocation3 + $0xb0] sm:$0xff] %v2140
  %2920 = vst.msk [vmem:[#allocation3 + $0xb8] sm:$0xff] %vm2898, %v2701
  %2921 = vst [vmem:[#allocation3 + $0xc0] sm:$0xff] %v2144
  %2922 = vst [vmem:[#allocation3 + $0xc8] sm:$0xff] %v2146
  %2923 = vst.msk [vmem:[#allocation3 + $0xd0] sm:$0xff] %vm2898, %v2706
  %2924 = vst [vmem:[#allocation3 + $0xd8] sm:$0xff] %v2148
  %2925 = vst [vmem:[#allocation3 + $0xe0] sm:$0xff] %v2150
  %2926 = vst.msk [vmem:[#allocation3 + $0xe8] sm:$0xff] %vm2898, %v2709
  %2927 = vst [vmem:[#allocation3 + $0xf0] sm:$0xff] %v2154
  %2928 = vst [vmem:[#allocation3 + $0xf8] sm:$0xff] %v2156
  %2929 = vst.msk [vmem:[#allocation3 + $0x100] sm:$0xff] %vm2898, %v2714
  %2930 = vst [vmem:[#allocation3 + $0x108] sm:$0xff] %v2158
  %2931 = vst [vmem:[#allocation3 + $0x110] sm:$0xff] %v2160
  %2932 = vst.msk [vmem:[#allocation3 + $0x118] sm:$0xff] %vm2898, %v2717
  %2933 = vst [vmem:[#allocation3 + $0x120] sm:$0xff] %v2164
  %2934 = vst [vmem:[#allocation3 + $0x128] sm:$0xff] %v2166
  %2935 = vst.msk [vmem:[#allocation3 + $0x130] sm:$0xff] %vm2898, %v2722
  %2936 = vst [vmem:[#allocation3 + $0x138] sm:$0xff] %v2168
  %2937 = vst [vmem:[#allocation3 + $0x140] sm:$0xff] %v2170
  %2938 = vst.msk [vmem:[#allocation3 + $0x148] sm:$0xff] %vm2898, %v2725
  %2939 = vst [vmem:[#allocation3 + $0x150] sm:$0xff] %v2174
  %2940 = vst [vmem:[#allocation3 + $0x158] sm:$0xff] %v2176
  %2941 = vst.msk [vmem:[#allocation3 + $0x160] sm:$0xff] %vm2898, %v2730
  %2942 = vst [vmem:[#allocation3 + $0x168] sm:$0xff] %v2178
  %2943 = vst [vmem:[#allocation3 + $0x170] sm:$0xff] %v2180
  %2944 = vst.msk [vmem:[#allocation3 + $0x178] sm:$0xff] %vm2898, %v2733
  %2945 = vst [vmem:[#allocation3 + $0x180] sm:$0xff] %v2184
  %2946 = vst [vmem:[#allocation3 + $0x188] sm:$0xff] %v2186
  %2947 = vst.msk [vmem:[#allocation3 + $0x190] sm:$0xff] %vm2898, %v2738
  %2948 = vst [vmem:[#allocation3 + $0x198] sm:$0xff] %v2188
  %2949 = vst [vmem:[#allocation3 + $0x1a0] sm:$0xff] %v2190
  %2950 = vst.msk [vmem:[#allocation3 + $0x1a8] sm:$0xff] %vm2898, %v2741
  %2951 = vst [vmem:[#allocation3 + $0x1b0] sm:$0xff] %v2194
  %2952 = vst [vmem:[#allocation3 + $0x1b8] sm:$0xff] %v2196
  %2953 = vst.msk [vmem:[#allocation3 + $0x1c0] sm:$0xff] %vm2898, %v2746
  %2954 = vst [vmem:[#allocation3 + $0x1c8] sm:$0xff] %v2198
  %2955 = vst [vmem:[#allocation3 + $0x1d0] sm:$0xff] %v2200
  %2956 = vst.msk [vmem:[#allocation3 + $0x1d8] sm:$0xff] %vm2898, %v2749
  %2957 = vst [vmem:[#allocation3 + $0x1e0] sm:$0xff] %v2204
  %2958 = vst [vmem:[#allocation3 + $0x1e8] sm:$0xff] %v2206
  %2959 = vst.msk [vmem:[#allocation3 + $0x1f0] sm:$0xff] %vm2898, %v2754
  %2960 = vst [vmem:[#allocation3 + $0x1f8] sm:$0xff] %v2208
  %2961 = vst [vmem:[#allocation3 + $0x200] sm:$0xff] %v2210
  %2962 = vst.msk [vmem:[#allocation3 + $0x208] sm:$0xff] %vm2898, %v2757
  %2963 = vst [vmem:[#allocation3 + $0x210] sm:$0xff] %v2214
  %2964 = vst [vmem:[#allocation3 + $0x218] sm:$0xff] %v2216
  %2965 = vst.msk [vmem:[#allocation3 + $0x220] sm:$0xff] %vm2898, %v2762
  %2966 = vst [vmem:[#allocation3 + $0x228] sm:$0xff] %v2218
  %2967 = vst [vmem:[#allocation3 + $0x230] sm:$0xff] %v2220
  %2968 = vst.msk [vmem:[#allocation3 + $0x238] sm:$0xff] %vm2898, %v2765
  %2969 = vst [vmem:[#allocation3 + $0x240] sm:$0xff] %v2224
  %2970 = vst [vmem:[#allocation3 + $0x248] sm:$0xff] %v2226
  %2971 = vst.msk [vmem:[#allocation3 + $0x250] sm:$0xff] %vm2898, %v2770
  %2972 = vst [vmem:[#allocation3 + $0x258] sm:$0xff] %v2228
  %2973 = vst [vmem:[#allocation3 + $0x260] sm:$0xff] %v2230
  %2974 = vst.msk [vmem:[#allocation3 + $0x268] sm:$0xff] %vm2898, %v2773
  %2975 = vst [vmem:[#allocation3 + $0x270] sm:$0xff] %v2234
  %2976 = vst [vmem:[#allocation3 + $0x278] sm:$0xff] %v2236
  %2977 = vst.msk [vmem:[#allocation3 + $0x280] sm:$0xff] %vm2898, %v2778
  %2978 = vst [vmem:[#allocation3 + $0x288] sm:$0xff] %v2238
  %2979 = vst [vmem:[#allocation3 + $0x290] sm:$0xff] %v2240
  %2980 = vst.msk [vmem:[#allocation3 + $0x298] sm:$0xff] %vm2898, %v2781
  %2981 = vst [vmem:[#allocation3 + $0x2a0] sm:$0xff] %v2244
  %2982 = vst [vmem:[#allocation3 + $0x2a8] sm:$0xff] %v2246
  %2983 = vst.msk [vmem:[#allocation3 + $0x2b0] sm:$0xff] %vm2898, %v2786
  %2984 = vst [vmem:[#allocation3 + $0x2b8] sm:$0xff] %v2248
  %2985 = vst [vmem:[#allocation3 + $0x2c0] sm:$0xff] %v2250
  %2986 = vst.msk [vmem:[#allocation3 + $0x2c8] sm:$0xff] %vm2898, %v2789
  %2987 = vst [vmem:[#allocation3 + $0x2d0] sm:$0xff] %v2254
  %2988 = vst [vmem:[#allocation3 + $0x2d8] sm:$0xff] %v2256
  %2989 = vst.msk [vmem:[#allocation3 + $0x2e0] sm:$0xff] %vm2898, %v2794
  %2990 = vst [vmem:[#allocation3 + $0x2e8] sm:$0xff] %v2258
  %2991 = vst [vmem:[#allocation3 + $0x2f0] sm:$0xff] %v2260
  %2992 = vst.msk [vmem:[#allocation3 + $0x2f8] sm:$0xff] %vm2898, %v2797
  %2993 = vst [vmem:[#allocation3 + $0x300] sm:$0xff] %v2264
  %2994 = vst [vmem:[#allocation3 + $0x308] sm:$0xff] %v2266
  %2995 = vst.msk [vmem:[#allocation3 + $0x310] sm:$0xff] %vm2898, %v2802
  %2996 = vst [vmem:[#allocation3 + $0x318] sm:$0xff] %v2268
  %2997 = vst [vmem:[#allocation3 + $0x320] sm:$0xff] %v2270
  %2998 = vst.msk [vmem:[#allocation3 + $0x328] sm:$0xff] %vm2898, %v2805
  %2999 = vst [vmem:[#allocation3 + $0x330] sm:$0xff] %v2274
  %3000 = vst [vmem:[#allocation3 + $0x338] sm:$0xff] %v2276
  %3001 = vst.msk [vmem:[#allocation3 + $0x340] sm:$0xff] %vm2898, %v2810
  %3002 = vst [vmem:[#allocation3 + $0x348] sm:$0xff] %v2278
  %3003 = vst [vmem:[#allocation3 + $0x350] sm:$0xff] %v2280
  %3004 = vst.msk [vmem:[#allocation3 + $0x358] sm:$0xff] %vm2898, %v2813
  %3005 = vst [vmem:[#allocation3 + $0x360] sm:$0xff] %v2284
  %3006 = vst [vmem:[#allocation3 + $0x368] sm:$0xff] %v2286
  %3007 = vst.msk [vmem:[#allocation3 + $0x370] sm:$0xff] %vm2898, %v2818
  %3008 = vst [vmem:[#allocation3 + $0x378] sm:$0xff] %v2288
  %3009 = vst [vmem:[#allocation3 + $0x380] sm:$0xff] %v2290
  %3010 = vst.msk [vmem:[#allocation3 + $0x388] sm:$0xff] %vm2898, %v2821
  %3011 = vst [vmem:[#allocation3 + $0x390] sm:$0xff] %v2294
  %3012 = vst [vmem:[#allocation3 + $0x398] sm:$0xff] %v2296
  %3013 = vst.msk [vmem:[#allocation3 + $0x3a0] sm:$0xff] %vm2898, %v2826
  %3014 = vst [vmem:[#allocation3 + $0x3a8] sm:$0xff] %v2298
  %3015 = vst [vmem:[#allocation3 + $0x3b0] sm:$0xff] %v2300
  %3016 = vst.msk [vmem:[#allocation3 + $0x3b8] sm:$0xff] %vm2898, %v2829
  %3017 = vst [vmem:[#allocation3 + $0x3c0] sm:$0xff] %v2304
  %3018 = vst [vmem:[#allocation3 + $0x3c8] sm:$0xff] %v2306
  %3019 = vst.msk [vmem:[#allocation3 + $0x3d0] sm:$0xff] %vm2898, %v2834
  %3020 = vst [vmem:[#allocation3 + $0x3d8] sm:$0xff] %v2308
  %3021 = vst [vmem:[#allocation3 + $0x3e0] sm:$0xff] %v2310
  %3022 = vst.msk [vmem:[#allocation3 + $0x3e8] sm:$0xff] %vm2898, %v2837
  %3023 = vst [vmem:[#allocation3 + $0x3f0] sm:$0xff] %v2314
  %3024 = vst [vmem:[#allocation3 + $0x3f8] sm:$0xff] %v2316
  %3025 = vst.msk [vmem:[#allocation3 + $0x400] sm:$0xff] %vm2898, %v2842
  %3026 = vst [vmem:[#allocation3 + $0x408] sm:$0xff] %v2318
  %3027 = vst [vmem:[#allocation3 + $0x410] sm:$0xff] %v2320
  %3028 = vst.msk [vmem:[#allocation3 + $0x418] sm:$0xff] %vm2898, %v2845
  %3029 = vst [vmem:[#allocation3 + $0x420] sm:$0xff] %v2324
  %3030 = vst [vmem:[#allocation3 + $0x428] sm:$0xff] %v2326
  %3031 = vst.msk [vmem:[#allocation3 + $0x430] sm:$0xff] %vm2898, %v2850
  %3032 = vst [vmem:[#allocation3 + $0x438] sm:$0xff] %v2328
  %3033 = vst [vmem:[#allocation3 + $0x440] sm:$0xff] %v2330
  %3034 = vst.msk [vmem:[#allocation3 + $0x448] sm:$0xff] %vm2898, %v2853
  %3035 = vst [vmem:[#allocation3 + $0x450] sm:$0xff] %v2334
  %3036 = vst [vmem:[#allocation3 + $0x458] sm:$0xff] %v2336
  %3037 = vst.msk [vmem:[#allocation3 + $0x460] sm:$0xff] %vm2898, %v2858
  %3038 = vst [vmem:[#allocation3 + $0x468] sm:$0xff] %v2338
  %3039 = vst [vmem:[#allocation3 + $0x470] sm:$0xff] %v2340
  %3040 = vst.msk [vmem:[#allocation3 + $0x478] sm:$0xff] %vm2898, %v2861
  %3041 = vst [vmem:[#allocation3 + $0x480] sm:$0xff] %v2344
  %3042 = vst [vmem:[#allocation3 + $0x488] sm:$0xff] %v2346
  %3043 = vst.msk [vmem:[#allocation3 + $0x490] sm:$0xff] %vm2898, %v2866
  %3044 = vst [vmem:[#allocation3 + $0x498] sm:$0xff] %v2348
  %3045 = vst [vmem:[#allocation3 + $0x4a0] sm:$0xff] %v2350
  %3046 = vst.msk [vmem:[#allocation3 + $0x4a8] sm:$0xff] %vm2898, %v2869
  %3047 = vst [vmem:[#allocation3 + $0x4b0] sm:$0xff] %v2354
  %3048 = vst [vmem:[#allocation3 + $0x4b8] sm:$0xff] %v2356
  %3049 = vst.msk [vmem:[#allocation3 + $0x4c0] sm:$0xff] %vm2898, %v2874
  %3050 = vst [vmem:[#allocation3 + $0x4c8] sm:$0xff] %v2358
  %3051 = vst [vmem:[#allocation3 + $0x4d0] sm:$0xff] %v2360
  %3052 = vst.msk [vmem:[#allocation3 + $0x4d8] sm:$0xff] %vm2898, %v2877
  %3053 = vst [vmem:[#allocation3 + $0x4e0] sm:$0xff] %v2364
  %3054 = vst [vmem:[#allocation3 + $0x4e8] sm:$0xff] %v2366
  %3055 = vst.msk [vmem:[#allocation3 + $0x4f0] sm:$0xff] %vm2898, %v2882
  %3056 = vst [vmem:[#allocation3 + $0x4f8] sm:$0xff] %v2368
  %3057 = vst [vmem:[#allocation3 + $0x500] sm:$0xff] %v2370
  %3058 = vst.msk [vmem:[#allocation3 + $0x508] sm:$0xff] %vm2898, %v2885
  %3059 = vst [vmem:[#allocation3 + $0x510] sm:$0xff] %v2374
  %3060 = vst [vmem:[#allocation3 + $0x518] sm:$0xff] %v2376
  %3061 = vst.msk [vmem:[#allocation3 + $0x520] sm:$0xff] %vm2898, %v2890
  %3062 = vst [vmem:[#allocation3 + $0x528] sm:$0xff] %v2378
  %3063 = vst [vmem:[#allocation3 + $0x530] sm:$0xff] %v2380
  %3064 = vst.msk [vmem:[#allocation3 + $0x538] sm:$0xff] %vm2898, %v2893
  %v3065 = vld [vmem:[%s2] sm:$0x7]
  %v3066 = vld [vmem:[#allocation3] sm:$0xff]
  %v3067 = vld [vmem:[#allocation3 + $0x8] sm:$0xff]
  %v3068 = vld [vmem:[#allocation3 + $0x10] sm:$0xff]
  %v3069 = vld [vmem:[#allocation3 + $0x18] sm:$0xff]
  %v3070 = vld [vmem:[#allocation3 + $0x20] sm:$0xff]
  %v3071 = vld [vmem:[#allocation3 + $0x28] sm:$0xff]
  %v3072 = vld [vmem:[#allocation3 + $0x30] sm:$0xff]
  %v3073 = vld [vmem:[#allocation3 + $0x38] sm:$0xff]
  %v3074 = vld [vmem:[#allocation3 + $0x40] sm:$0xff]
  %v3075 = vld [vmem:[#allocation3 + $0x48] sm:$0xff]
  %v3076 = vld [vmem:[#allocation3 + $0x50] sm:$0xff]
  %v3077 = vld [vmem:[#allocation3 + $0x58] sm:$0xff]
  %v3078 = vmax.f32 %v3066, %v3072
  %v3079 = vmax.f32 %v3067, %v3073
  %v3080 = vmax.f32 %v3068, %v3074
  %v3081 = vmax.f32 %v3069, %v3075
  %v3082 = vmax.f32 %v3070, %v3076
  %v3083 = vmax.f32 %v3071, %v3077
  %v3085 = vlaneseq
  %v3086 = vshrl.u32 %v3085, 7
  %v3087 = vsub.s32 0, %v3086
  %v3088 = vrot.slane %v3065, %v3087
  %v3089 = vlaneseq
  %v3090 = vshrl.u32 %v3089, 7
  %v3091 = vsub.s32 1, %v3090
  %v3092 = vrot.slane %v3065, %v3091
  %v3093 = vlaneseq
  %v3094 = vshrl.u32 %v3093, 7
  %v3095 = vsub.s32 2, %v3094
  %v3096 = vrot.slane %v3065, %v3095
  %v3100 = vadd.f32 %v3078, %v3088
  %v3101 = vadd.f32 %v3079, %v3092
  %v3102 = vadd.f32 %v3080, %v3096
  %v3103 = vadd.f32 %v3081, %v3088
  %v3104 = vadd.f32 %v3082, %v3092
  %v3105 = vadd.f32 %v3083, %v3096
  %v3106 = vmax.f32 %v3100, 0.0
  %v3107 = vmax.f32 %v3101, 0.0
  %v3108 = vmax.f32 %v3102, 0.0
  %v3109 = vmax.f32 %v3103, 0.0
  %v3110 = vmax.f32 %v3104, 0.0
  %v3111 = vmax.f32 %v3105, 0.0
  %3118 = vrot.lane.b32.xlu0 %v3106, 118
  %v3119 = vpop.permute.xlu0 %3118
  %3120 = vrot.lane.b32.xlu0 %v3107, 118
  %v3121 = vpop.permute.xlu0 %3120
  %3122 = vrot.lane.b32.xlu0 %v3108, 118
  %v3123 = vpop.permute.xlu0 %3122
  %3124 = vrot.lane.b32.xlu0 %v3109, 118
  %v3125 = vpop.permute.xlu0 %3124
  %3126 = vrot.lane.b32.xlu0 %v3110, 118
  %v3127 = vpop.permute.xlu0 %3126
  %3128 = vrot.lane.b32.xlu0 %v3111, 118
  %v3129 = vpop.permute.xlu0 %3128
  %vm3130 = vcmask 965632
  %v3131 = vsel %vm3130, %v3119, %v3121
  %v3132 = vsel %vm3130, %v3121, %v3123
  %v3133 = vsel %vm3130, %v3125, %v3127
  %v3134 = vsel %vm3130, %v3127, %v3129
  %v3141 = vmax.f32 %v3106, %v3131
  %v3142 = vmax.f32 %v3107, %v3132
  %v3143 = vmax.f32 %v3108, %v3123
  %v3144 = vmax.f32 %v3109, %v3133
  %v3145 = vmax.f32 %v3110, %v3134
  %v3146 = vmax.f32 %v3111, %v3129
  %v3147 = vpack.c.bf16 %v3144, %v3141
  %v3148 = vpack.c.bf16 %v3145, %v3142
  %v3149 = vpack.c.bf16 %v3146, %v3143
  %3150 = vst [vmem:[#allocation4] sm:$0xff] %v3147
  %3151 = vst [vmem:[#allocation4 + $0x8] sm:$0xff] %v3148
  %vm3152 = vcmask 113664
  %3153 = vst.msk [vmem:[#allocation4 + $0x10] sm:$0xff] %vm3152, %v3149
  %v3154 = vpack.c.bf16 %v3111, %v3108
  %vm3155 = vcmask 195696
  %3156 = vst.msk [vmem:[#allocation4 + $0x10] sm:$0xff] %vm3155, %v3154
  %v3157 = vld [vmem:[#allocation3 + $0x60] sm:$0xff]
  %v3158 = vld [vmem:[#allocation3 + $0x68] sm:$0xff]
  %v3159 = vld [vmem:[#allocation3 + $0x70] sm:$0xff]
  %v3160 = vld [vmem:[#allocation3 + $0x78] sm:$0xff]
  %v3161 = vld [vmem:[#allocation3 + $0x80] sm:$0xff]
  %v3162 = vld [vmem:[#allocation3 + $0x88] sm:$0xff]
  %v3163 = vld [vmem:[#allocation3 + $0x90] sm:$0xff]
  %v3164 = vld [vmem:[#allocation3 + $0x98] sm:$0xff]
  %v3165 = vld [vmem:[#allocation3 + $0xa0] sm:$0xff]
  %v3166 = vld [vmem:[#allocation3 + $0xa8] sm:$0xff]
  %v3167 = vld [vmem:[#allocation3 + $0xb0] sm:$0xff]
  %v3168 = vld [vmem:[#allocation3 + $0xb8] sm:$0xff]
  %v3169 = vmax.f32 %v3157, %v3163
  %v3170 = vmax.f32 %v3158, %v3164
  %v3171 = vmax.f32 %v3159, %v3165
  %v3172 = vmax.f32 %v3160, %v3166
  %v3173 = vmax.f32 %v3161, %v3167
  %v3174 = vmax.f32 %v3162, %v3168
  %v3175 = vadd.f32 %v3169, %v3088
  %v3176 = vadd.f32 %v3170, %v3092
  %v3177 = vadd.f32 %v3171, %v3096
  %v3178 = vadd.f32 %v3172, %v3088
  %v3179 = vadd.f32 %v3173, %v3092
  %v3180 = vadd.f32 %v3174, %v3096
  %v3181 = vmax.f32 %v3175, 0.0
  %v3182 = vmax.f32 %v3176, 0.0
  %v3183 = vmax.f32 %v3177, 0.0
  %v3184 = vmax.f32 %v3178, 0.0
  %v3185 = vmax.f32 %v3179, 0.0
  %v3186 = vmax.f32 %v3180, 0.0
  %3193 = vrot.lane.b32.xlu0 %v3181, 118
  %v3194 = vpop.permute.xlu0 %3193
  %3195 = vrot.lane.b32.xlu0 %v3182, 118
  %v3196 = vpop.permute.xlu0 %3195
  %3197 = vrot.lane.b32.xlu0 %v3183, 118
  %v3198 = vpop.permute.xlu0 %3197
  %3199 = vrot.lane.b32.xlu0 %v3184, 118
  %v3200 = vpop.permute.xlu0 %3199
  %3201 = vrot.lane.b32.xlu0 %v3185, 118
  %v3202 = vpop.permute.xlu0 %3201
  %3203 = vrot.lane.b32.xlu0 %v3186, 118
  %v3204 = vpop.permute.xlu0 %3203
  %v3205 = vsel %vm3130, %v3194, %v3196
  %v3206 = vsel %vm3130, %v3196, %v3198
  %v3207 = vsel %vm3130, %v3200, %v3202
  %v3208 = vsel %vm3130, %v3202, %v3204
  %v3215 = vmax.f32 %v3181, %v3205
  %v3216 = vmax.f32 %v3182, %v3206
  %v3217 = vmax.f32 %v3183, %v3198
  %v3218 = vmax.f32 %v3184, %v3207
  %v3219 = vmax.f32 %v3185, %v3208
  %v3220 = vmax.f32 %v3186, %v3204
  %v3221 = vpack.c.bf16 %v3218, %v3215
  %v3222 = vpack.c.bf16 %v3219, %v3216
  %v3223 = vpack.c.bf16 %v3220, %v3217
  %3224 = vst [vmem:[#allocation4 + $0x18] sm:$0xff] %v3221
  %3225 = vst [vmem:[#allocation4 + $0x20] sm:$0xff] %v3222
  %3226 = vst.msk [vmem:[#allocation4 + $0x28] sm:$0xff] %vm3152, %v3223
  %v3227 = vpack.c.bf16 %v3186, %v3183
  %3228 = vst.msk [vmem:[#allocation4 + $0x28] sm:$0xff] %vm3155, %v3227
  %v3229 = vld [vmem:[#allocation3 + $0xc0] sm:$0xff]
  %v3230 = vld [vmem:[#allocation3 + $0xc8] sm:$0xff]
  %v3231 = vld [vmem:[#allocation3 + $0xd0] sm:$0xff]
  %v3232 = vld [vmem:[#allocation3 + $0xd8] sm:$0xff]
  %v3233 = vld [vmem:[#allocation3 + $0xe0] sm:$0xff]
  %v3234 = vld [vmem:[#allocation3 + $0xe8] sm:$0xff]
  %v3235 = vld [vmem:[#allocation3 + $0xf0] sm:$0xff]
  %v3236 = vld [vmem:[#allocation3 + $0xf8] sm:$0xff]
  %v3237 = vld [vmem:[#allocation3 + $0x100] sm:$0xff]
  %v3238 = vld [vmem:[#allocation3 + $0x108] sm:$0xff]
  %v3239 = vld [vmem:[#allocation3 + $0x110] sm:$0xff]
  %v3240 = vld [vmem:[#allocation3 + $0x118] sm:$0xff]
  %v3241 = vmax.f32 %v3229, %v3235
  %v3242 = vmax.f32 %v3230, %v3236
  %v3243 = vmax.f32 %v3231, %v3237
  %v3244 = vmax.f32 %v3232, %v3238
  %v3245 = vmax.f32 %v3233, %v3239
  %v3246 = vmax.f32 %v3234, %v3240
  %v3247 = vadd.f32 %v3241, %v3088
  %v3248 = vadd.f32 %v3242, %v3092
  %v3249 = vadd.f32 %v3243, %v3096
  %v3250 = vadd.f32 %v3244, %v3088
  %v3251 = vadd.f32 %v3245, %v3092
  %v3252 = vadd.f32 %v3246, %v3096
  %v3253 = vmax.f32 %v3247, 0.0
  %v3254 = vmax.f32 %v3248, 0.0
  %v3255 = vmax.f32 %v3249, 0.0
  %v3256 = vmax.f32 %v3250, 0.0
  %v3257 = vmax.f32 %v3251, 0.0
  %v3258 = vmax.f32 %v3252, 0.0
  %3265 = vrot.lane.b32.xlu0 %v3253, 118
  %v3266 = vpop.permute.xlu0 %3265
  %3267 = vrot.lane.b32.xlu0 %v3254, 118
  %v3268 = vpop.permute.xlu0 %3267
  %3269 = vrot.lane.b32.xlu0 %v3255, 118
  %v3270 = vpop.permute.xlu0 %3269
  %3271 = vrot.lane.b32.xlu0 %v3256, 118
  %v3272 = vpop.permute.xlu0 %3271
  %3273 = vrot.lane.b32.xlu0 %v3257, 118
  %v3274 = vpop.permute.xlu0 %3273
  %3275 = vrot.lane.b32.xlu0 %v3258, 118
  %v3276 = vpop.permute.xlu0 %3275
  %v3277 = vsel %vm3130, %v3266, %v3268
  %v3278 = vsel %vm3130, %v3268, %v3270
  %v3279 = vsel %vm3130, %v3272, %v3274
  %v3280 = vsel %vm3130, %v3274, %v3276
  %v3287 = vmax.f32 %v3253, %v3277
  %v3288 = vmax.f32 %v3254, %v3278
  %v3289 = vmax.f32 %v3255, %v3270
  %v3290 = vmax.f32 %v3256, %v3279
  %v3291 = vmax.f32 %v3257, %v3280
  %v3292 = vmax.f32 %v3258, %v3276
  %v3293 = vpack.c.bf16 %v3290, %v3287
  %v3294 = vpack.c.bf16 %v3291, %v3288
  %v3295 = vpack.c.bf16 %v3292, %v3289
  %3296 = vst [vmem:[#allocation4 + $0x30] sm:$0xff] %v3293
  %3297 = vst [vmem:[#allocation4 + $0x38] sm:$0xff] %v3294
  %3298 = vst.msk [vmem:[#allocation4 + $0x40] sm:$0xff] %vm3152, %v3295
  %v3299 = vpack.c.bf16 %v3258, %v3255
  %3300 = vst.msk [vmem:[#allocation4 + $0x40] sm:$0xff] %vm3155, %v3299
  %v3301 = vld [vmem:[#allocation3 + $0x120] sm:$0xff]
  %v3302 = vld [vmem:[#allocation3 + $0x128] sm:$0xff]
  %v3303 = vld [vmem:[#allocation3 + $0x130] sm:$0xff]
  %v3304 = vld [vmem:[#allocation3 + $0x138] sm:$0xff]
  %v3305 = vld [vmem:[#allocation3 + $0x140] sm:$0xff]
  %v3306 = vld [vmem:[#allocation3 + $0x148] sm:$0xff]
  %v3307 = vld [vmem:[#allocation3 + $0x150] sm:$0xff]
  %v3308 = vld [vmem:[#allocation3 + $0x158] sm:$0xff]
  %v3309 = vld [vmem:[#allocation3 + $0x160] sm:$0xff]
  %v3310 = vld [vmem:[#allocation3 + $0x168] sm:$0xff]
  %v3311 = vld [vmem:[#allocation3 + $0x170] sm:$0xff]
  %v3312 = vld [vmem:[#allocation3 + $0x178] sm:$0xff]
  %v3313 = vmax.f32 %v3301, %v3307
  %v3314 = vmax.f32 %v3302, %v3308
  %v3315 = vmax.f32 %v3303, %v3309
  %v3316 = vmax.f32 %v3304, %v3310
  %v3317 = vmax.f32 %v3305, %v3311
  %v3318 = vmax.f32 %v3306, %v3312
  %v3319 = vadd.f32 %v3313, %v3088
  %v3320 = vadd.f32 %v3314, %v3092
  %v3321 = vadd.f32 %v3315, %v3096
  %v3322 = vadd.f32 %v3316, %v3088
  %v3323 = vadd.f32 %v3317, %v3092
  %v3324 = vadd.f32 %v3318, %v3096
  %v3325 = vmax.f32 %v3319, 0.0
  %v3326 = vmax.f32 %v3320, 0.0
  %v3327 = vmax.f32 %v3321, 0.0
  %v3328 = vmax.f32 %v3322, 0.0
  %v3329 = vmax.f32 %v3323, 0.0
  %v3330 = vmax.f32 %v3324, 0.0
  %3337 = vrot.lane.b32.xlu0 %v3325, 118
  %v3338 = vpop.permute.xlu0 %3337
  %3339 = vrot.lane.b32.xlu0 %v3326, 118
  %v3340 = vpop.permute.xlu0 %3339
  %3341 = vrot.lane.b32.xlu0 %v3327, 118
  %v3342 = vpop.permute.xlu0 %3341
  %3343 = vrot.lane.b32.xlu0 %v3328, 118
  %v3344 = vpop.permute.xlu0 %3343
  %3345 = vrot.lane.b32.xlu0 %v3329, 118
  %v3346 = vpop.permute.xlu0 %3345
  %3347 = vrot.lane.b32.xlu0 %v3330, 118
  %v3348 = vpop.permute.xlu0 %3347
  %v3349 = vsel %vm3130, %v3338, %v3340
  %v3350 = vsel %vm3130, %v3340, %v3342
  %v3351 = vsel %vm3130, %v3344, %v3346
  %v3352 = vsel %vm3130, %v3346, %v3348
  %v3359 = vmax.f32 %v3325, %v3349
  %v3360 = vmax.f32 %v3326, %v3350
  %v3361 = vmax.f32 %v3327, %v3342
  %v3362 = vmax.f32 %v3328, %v3351
  %v3363 = vmax.f32 %v3329, %v3352
  %v3364 = vmax.f32 %v3330, %v3348
  %v3365 = vpack.c.bf16 %v3362, %v3359
  %v3366 = vpack.c.bf16 %v3363, %v3360
  %v3367 = vpack.c.bf16 %v3364, %v3361
  %3368 = vst [vmem:[#allocation4 + $0x48] sm:$0xff] %v3365
  %3369 = vst [vmem:[#allocation4 + $0x50] sm:$0xff] %v3366
  %3370 = vst.msk [vmem:[#allocation4 + $0x58] sm:$0xff] %vm3152, %v3367
  %v3371 = vpack.c.bf16 %v3330, %v3327
  %3372 = vst.msk [vmem:[#allocation4 + $0x58] sm:$0xff] %vm3155, %v3371
  %v3373 = vld [vmem:[#allocation3 + $0x180] sm:$0xff]
  %v3374 = vld [vmem:[#allocation3 + $0x188] sm:$0xff]
  %v3375 = vld [vmem:[#allocation3 + $0x190] sm:$0xff]
  %v3376 = vld [vmem:[#allocation3 + $0x198] sm:$0xff]
  %v3377 = vld [vmem:[#allocation3 + $0x1a0] sm:$0xff]
  %v3378 = vld [vmem:[#allocation3 + $0x1a8] sm:$0xff]
  %v3379 = vld [vmem:[#allocation3 + $0x1b0] sm:$0xff]
  %v3380 = vld [vmem:[#allocation3 + $0x1b8] sm:$0xff]
  %v3381 = vld [vmem:[#allocation3 + $0x1c0] sm:$0xff]
  %v3382 = vld [vmem:[#allocation3 + $0x1c8] sm:$0xff]
  %v3383 = vld [vmem:[#allocation3 + $0x1d0] sm:$0xff]
  %v3384 = vld [vmem:[#allocation3 + $0x1d8] sm:$0xff]
  %v3385 = vmax.f32 %v3373, %v3379
  %v3386 = vmax.f32 %v3374, %v3380
  %v3387 = vmax.f32 %v3375, %v3381
  %v3388 = vmax.f32 %v3376, %v3382
  %v3389 = vmax.f32 %v3377, %v3383
  %v3390 = vmax.f32 %v3378, %v3384
  %v3391 = vadd.f32 %v3385, %v3088
  %v3392 = vadd.f32 %v3386, %v3092
  %v3393 = vadd.f32 %v3387, %v3096
  %v3394 = vadd.f32 %v3388, %v3088
  %v3395 = vadd.f32 %v3389, %v3092
  %v3396 = vadd.f32 %v3390, %v3096
  %v3397 = vmax.f32 %v3391, 0.0
  %v3398 = vmax.f32 %v3392, 0.0
  %v3399 = vmax.f32 %v3393, 0.0
  %v3400 = vmax.f32 %v3394, 0.0
  %v3401 = vmax.f32 %v3395, 0.0
  %v3402 = vmax.f32 %v3396, 0.0
  %3409 = vrot.lane.b32.xlu0 %v3397, 118
  %v3410 = vpop.permute.xlu0 %3409
  %3411 = vrot.lane.b32.xlu0 %v3398, 118
  %v3412 = vpop.permute.xlu0 %3411
  %3413 = vrot.lane.b32.xlu0 %v3399, 118
  %v3414 = vpop.permute.xlu0 %3413
  %3415 = vrot.lane.b32.xlu0 %v3400, 118
  %v3416 = vpop.permute.xlu0 %3415
  %3417 = vrot.lane.b32.xlu0 %v3401, 118
  %v3418 = vpop.permute.xlu0 %3417
  %3419 = vrot.lane.b32.xlu0 %v3402, 118
  %v3420 = vpop.permute.xlu0 %3419
  %v3421 = vsel %vm3130, %v3410, %v3412
  %v3422 = vsel %vm3130, %v3412, %v3414
  %v3423 = vsel %vm3130, %v3416, %v3418
  %v3424 = vsel %vm3130, %v3418, %v3420
  %v3431 = vmax.f32 %v3397, %v3421
  %v3432 = vmax.f32 %v3398, %v3422
  %v3433 = vmax.f32 %v3399, %v3414
  %v3434 = vmax.f32 %v3400, %v3423
  %v3435 = vmax.f32 %v3401, %v3424
  %v3436 = vmax.f32 %v3402, %v3420
  %v3437 = vpack.c.bf16 %v3434, %v3431
  %v3438 = vpack.c.bf16 %v3435, %v3432
  %v3439 = vpack.c.bf16 %v3436, %v3433
  %3440 = vst [vmem:[#allocation4 + $0x60] sm:$0xff] %v3437
  %3441 = vst [vmem:[#allocation4 + $0x68] sm:$0xff] %v3438
  %3442 = vst.msk [vmem:[#allocation4 + $0x70] sm:$0xff] %vm3152, %v3439
  %v3443 = vpack.c.bf16 %v3402, %v3399
  %3444 = vst.msk [vmem:[#allocation4 + $0x70] sm:$0xff] %vm3155, %v3443
  %v3445 = vld [vmem:[#allocation3 + $0x1e0] sm:$0xff]
  %v3446 = vld [vmem:[#allocation3 + $0x1e8] sm:$0xff]
  %v3447 = vld [vmem:[#allocation3 + $0x1f0] sm:$0xff]
  %v3448 = vld [vmem:[#allocation3 + $0x1f8] sm:$0xff]
  %v3449 = vld [vmem:[#allocation3 + $0x200] sm:$0xff]
  %v3450 = vld [vmem:[#allocation3 + $0x208] sm:$0xff]
  %v3451 = vld [vmem:[#allocation3 + $0x210] sm:$0xff]
  %v3452 = vld [vmem:[#allocation3 + $0x218] sm:$0xff]
  %v3453 = vld [vmem:[#allocation3 + $0x220] sm:$0xff]
  %v3454 = vld [vmem:[#allocation3 + $0x228] sm:$0xff]
  %v3455 = vld [vmem:[#allocation3 + $0x230] sm:$0xff]
  %v3456 = vld [vmem:[#allocation3 + $0x238] sm:$0xff]
  %v3457 = vmax.f32 %v3445, %v3451
  %v3458 = vmax.f32 %v3446, %v3452
  %v3459 = vmax.f32 %v3447, %v3453
  %v3460 = vmax.f32 %v3448, %v3454
  %v3461 = vmax.f32 %v3449, %v3455
  %v3462 = vmax.f32 %v3450, %v3456
  %v3463 = vadd.f32 %v3457, %v3088
  %v3464 = vadd.f32 %v3458, %v3092
  %v3465 = vadd.f32 %v3459, %v3096
  %v3466 = vadd.f32 %v3460, %v3088
  %v3467 = vadd.f32 %v3461, %v3092
  %v3468 = vadd.f32 %v3462, %v3096
  %v3469 = vmax.f32 %v3463, 0.0
  %v3470 = vmax.f32 %v3464, 0.0
  %v3471 = vmax.f32 %v3465, 0.0
  %v3472 = vmax.f32 %v3466, 0.0
  %v3473 = vmax.f32 %v3467, 0.0
  %v3474 = vmax.f32 %v3468, 0.0
  %3481 = vrot.lane.b32.xlu0 %v3469, 118
  %v3482 = vpop.permute.xlu0 %3481
  %3483 = vrot.lane.b32.xlu0 %v3470, 118
  %v3484 = vpop.permute.xlu0 %3483
  %3485 = vrot.lane.b32.xlu0 %v3471, 118
  %v3486 = vpop.permute.xlu0 %3485
  %3487 = vrot.lane.b32.xlu0 %v3472, 118
  %v3488 = vpop.permute.xlu0 %3487
  %3489 = vrot.lane.b32.xlu0 %v3473, 118
  %v3490 = vpop.permute.xlu0 %3489
  %3491 = vrot.lane.b32.xlu0 %v3474, 118
  %v3492 = vpop.permute.xlu0 %3491
  %v3493 = vsel %vm3130, %v3482, %v3484
  %v3494 = vsel %vm3130, %v3484, %v3486
  %v3495 = vsel %vm3130, %v3488, %v3490
  %v3496 = vsel %vm3130, %v3490, %v3492
  %v3503 = vmax.f32 %v3469, %v3493
  %v3504 = vmax.f32 %v3470, %v3494
  %v3505 = vmax.f32 %v3471, %v3486
  %v3506 = vmax.f32 %v3472, %v3495
  %v3507 = vmax.f32 %v3473, %v3496
  %v3508 = vmax.f32 %v3474, %v3492
  %v3509 = vpack.c.bf16 %v3506, %v3503
  %v3510 = vpack.c.bf16 %v3507, %v3504
  %v3511 = vpack.c.bf16 %v3508, %v3505
  %3512 = vst [vmem:[#allocation4 + $0x78] sm:$0xff] %v3509
  %3513 = vst [vmem:[#allocation4 + $0x80] sm:$0xff] %v3510
  %3514 = vst.msk [vmem:[#allocation4 + $0x88] sm:$0xff] %vm3152, %v3511
  %v3515 = vpack.c.bf16 %v3474, %v3471
  %3516 = vst.msk [vmem:[#allocation4 + $0x88] sm:$0xff] %vm3155, %v3515
  %v3517 = vld [vmem:[#allocation3 + $0x240] sm:$0xff]
  %v3518 = vld [vmem:[#allocation3 + $0x248] sm:$0xff]
  %v3519 = vld [vmem:[#allocation3 + $0x250] sm:$0xff]
  %v3520 = vld [vmem:[#allocation3 + $0x258] sm:$0xff]
  %v3521 = vld [vmem:[#allocation3 + $0x260] sm:$0xff]
  %v3522 = vld [vmem:[#allocation3 + $0x268] sm:$0xff]
  %v3523 = vld [vmem:[#allocation3 + $0x270] sm:$0xff]
  %v3524 = vld [vmem:[#allocation3 + $0x278] sm:$0xff]
  %v3525 = vld [vmem:[#allocation3 + $0x280] sm:$0xff]
  %v3526 = vld [vmem:[#allocation3 + $0x288] sm:$0xff]
  %v3527 = vld [vmem:[#allocation3 + $0x290] sm:$0xff]
  %v3528 = vld [vmem:[#allocation3 + $0x298] sm:$0xff]
  %v3529 = vmax.f32 %v3517, %v3523
  %v3530 = vmax.f32 %v3518, %v3524
  %v3531 = vmax.f32 %v3519, %v3525
  %v3532 = vmax.f32 %v3520, %v3526
  %v3533 = vmax.f32 %v3521, %v3527
  %v3534 = vmax.f32 %v3522, %v3528
  %v3535 = vadd.f32 %v3529, %v3088
  %v3536 = vadd.f32 %v3530, %v3092
  %v3537 = vadd.f32 %v3531, %v3096
  %v3538 = vadd.f32 %v3532, %v3088
  %v3539 = vadd.f32 %v3533, %v3092
  %v3540 = vadd.f32 %v3534, %v3096
  %v3541 = vmax.f32 %v3535, 0.0
  %v3542 = vmax.f32 %v3536, 0.0
  %v3543 = vmax.f32 %v3537, 0.0
  %v3544 = vmax.f32 %v3538, 0.0
  %v3545 = vmax.f32 %v3539, 0.0
  %v3546 = vmax.f32 %v3540, 0.0
  %3553 = vrot.lane.b32.xlu0 %v3541, 118
  %v3554 = vpop.permute.xlu0 %3553
  %3555 = vrot.lane.b32.xlu0 %v3542, 118
  %v3556 = vpop.permute.xlu0 %3555
  %3557 = vrot.lane.b32.xlu0 %v3543, 118
  %v3558 = vpop.permute.xlu0 %3557
  %3559 = vrot.lane.b32.xlu0 %v3544, 118
  %v3560 = vpop.permute.xlu0 %3559
  %3561 = vrot.lane.b32.xlu0 %v3545, 118
  %v3562 = vpop.permute.xlu0 %3561
  %3563 = vrot.lane.b32.xlu0 %v3546, 118
  %v3564 = vpop.permute.xlu0 %3563
  %v3565 = vsel %vm3130, %v3554, %v3556
  %v3566 = vsel %vm3130, %v3556, %v3558
  %v3567 = vsel %vm3130, %v3560, %v3562
  %v3568 = vsel %vm3130, %v3562, %v3564
  %v3575 = vmax.f32 %v3541, %v3565
  %v3576 = vmax.f32 %v3542, %v3566
  %v3577 = vmax.f32 %v3543, %v3558
  %v3578 = vmax.f32 %v3544, %v3567
  %v3579 = vmax.f32 %v3545, %v3568
  %v3580 = vmax.f32 %v3546, %v3564
  %v3581 = vpack.c.bf16 %v3578, %v3575
  %v3582 = vpack.c.bf16 %v3579, %v3576
  %v3583 = vpack.c.bf16 %v3580, %v3577
  %3584 = vst [vmem:[#allocation4 + $0x90] sm:$0xff] %v3581
  %3585 = vst [vmem:[#allocation4 + $0x98] sm:$0xff] %v3582
  %3586 = vst.msk [vmem:[#allocation4 + $0xa0] sm:$0xff] %vm3152, %v3583
  %v3587 = vpack.c.bf16 %v3546, %v3543
  %3588 = vst.msk [vmem:[#allocation4 + $0xa0] sm:$0xff] %vm3155, %v3587
  %v3589 = vld [vmem:[#allocation3 + $0x2a0] sm:$0xff]
  %v3590 = vld [vmem:[#allocation3 + $0x2a8] sm:$0xff]
  %v3591 = vld [vmem:[#allocation3 + $0x2b0] sm:$0xff]
  %v3592 = vld [vmem:[#allocation3 + $0x2b8] sm:$0xff]
  %v3593 = vld [vmem:[#allocation3 + $0x2c0] sm:$0xff]
  %v3594 = vld [vmem:[#allocation3 + $0x2c8] sm:$0xff]
  %v3595 = vld [vmem:[#allocation3 + $0x2d0] sm:$0xff]
  %v3596 = vld [vmem:[#allocation3 + $0x2d8] sm:$0xff]
  %v3597 = vld [vmem:[#allocation3 + $0x2e0] sm:$0xff]
  %v3598 = vld [vmem:[#allocation3 + $0x2e8] sm:$0xff]
  %v3599 = vld [vmem:[#allocation3 + $0x2f0] sm:$0xff]
  %v3600 = vld [vmem:[#allocation3 + $0x2f8] sm:$0xff]
  %v3601 = vmax.f32 %v3589, %v3595
  %v3602 = vmax.f32 %v3590, %v3596
  %v3603 = vmax.f32 %v3591, %v3597
  %v3604 = vmax.f32 %v3592, %v3598
  %v3605 = vmax.f32 %v3593, %v3599
  %v3606 = vmax.f32 %v3594, %v3600
  %v3607 = vadd.f32 %v3601, %v3088
  %v3608 = vadd.f32 %v3602, %v3092
  %v3609 = vadd.f32 %v3603, %v3096
  %v3610 = vadd.f32 %v3604, %v3088
  %v3611 = vadd.f32 %v3605, %v3092
  %v3612 = vadd.f32 %v3606, %v3096
  %v3613 = vmax.f32 %v3607, 0.0
  %v3614 = vmax.f32 %v3608, 0.0
  %v3615 = vmax.f32 %v3609, 0.0
  %v3616 = vmax.f32 %v3610, 0.0
  %v3617 = vmax.f32 %v3611, 0.0
  %v3618 = vmax.f32 %v3612, 0.0
  %3625 = vrot.lane.b32.xlu0 %v3613, 118
  %v3626 = vpop.permute.xlu0 %3625
  %3627 = vrot.lane.b32.xlu0 %v3614, 118
  %v3628 = vpop.permute.xlu0 %3627
  %3629 = vrot.lane.b32.xlu0 %v3615, 118
  %v3630 = vpop.permute.xlu0 %3629
  %3631 = vrot.lane.b32.xlu0 %v3616, 118
  %v3632 = vpop.permute.xlu0 %3631
  %3633 = vrot.lane.b32.xlu0 %v3617, 118
  %v3634 = vpop.permute.xlu0 %3633
  %3635 = vrot.lane.b32.xlu0 %v3618, 118
  %v3636 = vpop.permute.xlu0 %3635
  %v3637 = vsel %vm3130, %v3626, %v3628
  %v3638 = vsel %vm3130, %v3628, %v3630
  %v3639 = vsel %vm3130, %v3632, %v3634
  %v3640 = vsel %vm3130, %v3634, %v3636
  %v3647 = vmax.f32 %v3613, %v3637
  %v3648 = vmax.f32 %v3614, %v3638
  %v3649 = vmax.f32 %v3615, %v3630
  %v3650 = vmax.f32 %v3616, %v3639
  %v3651 = vmax.f32 %v3617, %v3640
  %v3652 = vmax.f32 %v3618, %v3636
  %v3653 = vpack.c.bf16 %v3650, %v3647
  %v3654 = vpack.c.bf16 %v3651, %v3648
  %v3655 = vpack.c.bf16 %v3652, %v3649
  %3656 = vst [vmem:[#allocation4 + $0xa8] sm:$0xff] %v3653
  %3657 = vst [vmem:[#allocation4 + $0xb0] sm:$0xff] %v3654
  %3658 = vst.msk [vmem:[#allocation4 + $0xb8] sm:$0xff] %vm3152, %v3655
  %v3659 = vpack.c.bf16 %v3618, %v3615
  %3660 = vst.msk [vmem:[#allocation4 + $0xb8] sm:$0xff] %vm3155, %v3659
  %v3661 = vld [vmem:[#allocation3 + $0x300] sm:$0xff]
  %v3662 = vld [vmem:[#allocation3 + $0x308] sm:$0xff]
  %v3663 = vld [vmem:[#allocation3 + $0x310] sm:$0xff]
  %v3664 = vld [vmem:[#allocation3 + $0x318] sm:$0xff]
  %v3665 = vld [vmem:[#allocation3 + $0x320] sm:$0xff]
  %v3666 = vld [vmem:[#allocation3 + $0x328] sm:$0xff]
  %v3667 = vld [vmem:[#allocation3 + $0x330] sm:$0xff]
  %v3668 = vld [vmem:[#allocation3 + $0x338] sm:$0xff]
  %v3669 = vld [vmem:[#allocation3 + $0x340] sm:$0xff]
  %v3670 = vld [vmem:[#allocation3 + $0x348] sm:$0xff]
  %v3671 = vld [vmem:[#allocation3 + $0x350] sm:$0xff]
  %v3672 = vld [vmem:[#allocation3 + $0x358] sm:$0xff]
  %v3673 = vmax.f32 %v3661, %v3667
  %v3674 = vmax.f32 %v3662, %v3668
  %v3675 = vmax.f32 %v3663, %v3669
  %v3676 = vmax.f32 %v3664, %v3670
  %v3677 = vmax.f32 %v3665, %v3671
  %v3678 = vmax.f32 %v3666, %v3672
  %v3679 = vadd.f32 %v3673, %v3088
  %v3680 = vadd.f32 %v3674, %v3092
  %v3681 = vadd.f32 %v3675, %v3096
  %v3682 = vadd.f32 %v3676, %v3088
  %v3683 = vadd.f32 %v3677, %v3092
  %v3684 = vadd.f32 %v3678, %v3096
  %v3685 = vmax.f32 %v3679, 0.0
  %v3686 = vmax.f32 %v3680, 0.0
  %v3687 = vmax.f32 %v3681, 0.0
  %v3688 = vmax.f32 %v3682, 0.0
  %v3689 = vmax.f32 %v3683, 0.0
  %v3690 = vmax.f32 %v3684, 0.0
  %3697 = vrot.lane.b32.xlu0 %v3685, 118
  %v3698 = vpop.permute.xlu0 %3697
  %3699 = vrot.lane.b32.xlu0 %v3686, 118
  %v3700 = vpop.permute.xlu0 %3699
  %3701 = vrot.lane.b32.xlu0 %v3687, 118
  %v3702 = vpop.permute.xlu0 %3701
  %3703 = vrot.lane.b32.xlu0 %v3688, 118
  %v3704 = vpop.permute.xlu0 %3703
  %3705 = vrot.lane.b32.xlu0 %v3689, 118
  %v3706 = vpop.permute.xlu0 %3705
  %3707 = vrot.lane.b32.xlu0 %v3690, 118
  %v3708 = vpop.permute.xlu0 %3707
  %v3709 = vsel %vm3130, %v3698, %v3700
  %v3710 = vsel %vm3130, %v3700, %v3702
  %v3711 = vsel %vm3130, %v3704, %v3706
  %v3712 = vsel %vm3130, %v3706, %v3708
  %v3719 = vmax.f32 %v3685, %v3709
  %v3720 = vmax.f32 %v3686, %v3710
  %v3721 = vmax.f32 %v3687, %v3702
  %v3722 = vmax.f32 %v3688, %v3711
  %v3723 = vmax.f32 %v3689, %v3712
  %v3724 = vmax.f32 %v3690, %v3708
  %v3725 = vpack.c.bf16 %v3722, %v3719
  %v3726 = vpack.c.bf16 %v3723, %v3720
  %v3727 = vpack.c.bf16 %v3724, %v3721
  %3728 = vst [vmem:[#allocation4 + $0xc0] sm:$0xff] %v3725
  %3729 = vst [vmem:[#allocation4 + $0xc8] sm:$0xff] %v3726
  %3730 = vst.msk [vmem:[#allocation4 + $0xd0] sm:$0xff] %vm3152, %v3727
  %v3731 = vpack.c.bf16 %v3690, %v3687
  %3732 = vst.msk [vmem:[#allocation4 + $0xd0] sm:$0xff] %vm3155, %v3731
  %v3733 = vld [vmem:[#allocation3 + $0x360] sm:$0xff]
  %v3734 = vld [vmem:[#allocation3 + $0x368] sm:$0xff]
  %v3735 = vld [vmem:[#allocation3 + $0x370] sm:$0xff]
  %v3736 = vld [vmem:[#allocation3 + $0x378] sm:$0xff]
  %v3737 = vld [vmem:[#allocation3 + $0x380] sm:$0xff]
  %v3738 = vld [vmem:[#allocation3 + $0x388] sm:$0xff]
  %v3739 = vld [vmem:[#allocation3 + $0x390] sm:$0xff]
  %v3740 = vld [vmem:[#allocation3 + $0x398] sm:$0xff]
  %v3741 = vld [vmem:[#allocation3 + $0x3a0] sm:$0xff]
  %v3742 = vld [vmem:[#allocation3 + $0x3a8] sm:$0xff]
  %v3743 = vld [vmem:[#allocation3 + $0x3b0] sm:$0xff]
  %v3744 = vld [vmem:[#allocation3 + $0x3b8] sm:$0xff]
  %v3745 = vmax.f32 %v3733, %v3739
  %v3746 = vmax.f32 %v3734, %v3740
  %v3747 = vmax.f32 %v3735, %v3741
  %v3748 = vmax.f32 %v3736, %v3742
  %v3749 = vmax.f32 %v3737, %v3743
  %v3750 = vmax.f32 %v3738, %v3744
  %v3751 = vadd.f32 %v3745, %v3088
  %v3752 = vadd.f32 %v3746, %v3092
  %v3753 = vadd.f32 %v3747, %v3096
  %v3754 = vadd.f32 %v3748, %v3088
  %v3755 = vadd.f32 %v3749, %v3092
  %v3756 = vadd.f32 %v3750, %v3096
  %v3757 = vmax.f32 %v3751, 0.0
  %v3758 = vmax.f32 %v3752, 0.0
  %v3759 = vmax.f32 %v3753, 0.0
  %v3760 = vmax.f32 %v3754, 0.0
  %v3761 = vmax.f32 %v3755, 0.0
  %v3762 = vmax.f32 %v3756, 0.0
  %3769 = vrot.lane.b32.xlu0 %v3757, 118
  %v3770 = vpop.permute.xlu0 %3769
  %3771 = vrot.lane.b32.xlu0 %v3758, 118
  %v3772 = vpop.permute.xlu0 %3771
  %3773 = vrot.lane.b32.xlu0 %v3759, 118
  %v3774 = vpop.permute.xlu0 %3773
  %3775 = vrot.lane.b32.xlu0 %v3760, 118
  %v3776 = vpop.permute.xlu0 %3775
  %3777 = vrot.lane.b32.xlu0 %v3761, 118
  %v3778 = vpop.permute.xlu0 %3777
  %3779 = vrot.lane.b32.xlu0 %v3762, 118
  %v3780 = vpop.permute.xlu0 %3779
  %v3781 = vsel %vm3130, %v3770, %v3772
  %v3782 = vsel %vm3130, %v3772, %v3774
  %v3783 = vsel %vm3130, %v3776, %v3778
  %v3784 = vsel %vm3130, %v3778, %v3780
  %v3791 = vmax.f32 %v3757, %v3781
  %v3792 = vmax.f32 %v3758, %v3782
  %v3793 = vmax.f32 %v3759, %v3774
  %v3794 = vmax.f32 %v3760, %v3783
  %v3795 = vmax.f32 %v3761, %v3784
  %v3796 = vmax.f32 %v3762, %v3780
  %v3797 = vpack.c.bf16 %v3794, %v3791
  %v3798 = vpack.c.bf16 %v3795, %v3792
  %v3799 = vpack.c.bf16 %v3796, %v3793
  %3800 = vst [vmem:[#allocation4 + $0xd8] sm:$0xff] %v3797
  %3801 = vst [vmem:[#allocation4 + $0xe0] sm:$0xff] %v3798
  %3802 = vst.msk [vmem:[#allocation4 + $0xe8] sm:$0xff] %vm3152, %v3799
  %v3803 = vpack.c.bf16 %v3762, %v3759
  %3804 = vst.msk [vmem:[#allocation4 + $0xe8] sm:$0xff] %vm3155, %v3803
  %v3805 = vld [vmem:[#allocation3 + $0x3c0] sm:$0xff]
  %v3806 = vld [vmem:[#allocation3 + $0x3c8] sm:$0xff]
  %v3807 = vld [vmem:[#allocation3 + $0x3d0] sm:$0xff]
  %v3808 = vld [vmem:[#allocation3 + $0x3d8] sm:$0xff]
  %v3809 = vld [vmem:[#allocation3 + $0x3e0] sm:$0xff]
  %v3810 = vld [vmem:[#allocation3 + $0x3e8] sm:$0xff]
  %v3811 = vld [vmem:[#allocation3 + $0x3f0] sm:$0xff]
  %v3812 = vld [vmem:[#allocation3 + $0x3f8] sm:$0xff]
  %v3813 = vld [vmem:[#allocation3 + $0x400] sm:$0xff]
  %v3814 = vld [vmem:[#allocation3 + $0x408] sm:$0xff]
  %v3815 = vld [vmem:[#allocation3 + $0x410] sm:$0xff]
  %v3816 = vld [vmem:[#allocation3 + $0x418] sm:$0xff]
  %v3817 = vmax.f32 %v3805, %v3811
  %v3818 = vmax.f32 %v3806, %v3812
  %v3819 = vmax.f32 %v3807, %v3813
  %v3820 = vmax.f32 %v3808, %v3814
  %v3821 = vmax.f32 %v3809, %v3815
  %v3822 = vmax.f32 %v3810, %v3816
  %v3823 = vadd.f32 %v3817, %v3088
  %v3824 = vadd.f32 %v3818, %v3092
  %v3825 = vadd.f32 %v3819, %v3096
  %v3826 = vadd.f32 %v3820, %v3088
  %v3827 = vadd.f32 %v3821, %v3092
  %v3828 = vadd.f32 %v3822, %v3096
  %v3829 = vmax.f32 %v3823, 0.0
  %v3830 = vmax.f32 %v3824, 0.0
  %v3831 = vmax.f32 %v3825, 0.0
  %v3832 = vmax.f32 %v3826, 0.0
  %v3833 = vmax.f32 %v3827, 0.0
  %v3834 = vmax.f32 %v3828, 0.0
  %3841 = vrot.lane.b32.xlu0 %v3829, 118
  %v3842 = vpop.permute.xlu0 %3841
  %3843 = vrot.lane.b32.xlu0 %v3830, 118
  %v3844 = vpop.permute.xlu0 %3843
  %3845 = vrot.lane.b32.xlu0 %v3831, 118
  %v3846 = vpop.permute.xlu0 %3845
  %3847 = vrot.lane.b32.xlu0 %v3832, 118
  %v3848 = vpop.permute.xlu0 %3847
  %3849 = vrot.lane.b32.xlu0 %v3833, 118
  %v3850 = vpop.permute.xlu0 %3849
  %3851 = vrot.lane.b32.xlu0 %v3834, 118
  %v3852 = vpop.permute.xlu0 %3851
  %v3853 = vsel %vm3130, %v3842, %v3844
  %v3854 = vsel %vm3130, %v3844, %v3846
  %v3855 = vsel %vm3130, %v3848, %v3850
  %v3856 = vsel %vm3130, %v3850, %v3852
  %v3863 = vmax.f32 %v3829, %v3853
  %v3864 = vmax.f32 %v3830, %v3854
  %v3865 = vmax.f32 %v3831, %v3846
  %v3866 = vmax.f32 %v3832, %v3855
  %v3867 = vmax.f32 %v3833, %v3856
  %v3868 = vmax.f32 %v3834, %v3852
  %v3869 = vpack.c.bf16 %v3866, %v3863
  %v3870 = vpack.c.bf16 %v3867, %v3864
  %v3871 = vpack.c.bf16 %v3868, %v3865
  %3872 = vst [vmem:[#allocation4 + $0xf0] sm:$0xff] %v3869
  %3873 = vst [vmem:[#allocation4 + $0xf8] sm:$0xff] %v3870
  %3874 = vst.msk [vmem:[#allocation4 + $0x100] sm:$0xff] %vm3152, %v3871
  %v3875 = vpack.c.bf16 %v3834, %v3831
  %3876 = vst.msk [vmem:[#allocation4 + $0x100] sm:$0xff] %vm3155, %v3875
  %v3877 = vld [vmem:[#allocation3 + $0x420] sm:$0xff]
  %v3878 = vld [vmem:[#allocation3 + $0x428] sm:$0xff]
  %v3879 = vld [vmem:[#allocation3 + $0x430] sm:$0xff]
  %v3880 = vld [vmem:[#allocation3 + $0x438] sm:$0xff]
  %v3881 = vld [vmem:[#allocation3 + $0x440] sm:$0xff]
  %v3882 = vld [vmem:[#allocation3 + $0x448] sm:$0xff]
  %v3883 = vld [vmem:[#allocation3 + $0x450] sm:$0xff]
  %v3884 = vld [vmem:[#allocation3 + $0x458] sm:$0xff]
  %v3885 = vld [vmem:[#allocation3 + $0x460] sm:$0xff]
  %v3886 = vld [vmem:[#allocation3 + $0x468] sm:$0xff]
  %v3887 = vld [vmem:[#allocation3 + $0x470] sm:$0xff]
  %v3888 = vld [vmem:[#allocation3 + $0x478] sm:$0xff]
  %v3889 = vmax.f32 %v3877, %v3883
  %v3890 = vmax.f32 %v3878, %v3884
  %v3891 = vmax.f32 %v3879, %v3885
  %v3892 = vmax.f32 %v3880, %v3886
  %v3893 = vmax.f32 %v3881, %v3887
  %v3894 = vmax.f32 %v3882, %v3888
  %v3895 = vadd.f32 %v3889, %v3088
  %v3896 = vadd.f32 %v3890, %v3092
  %v3897 = vadd.f32 %v3891, %v3096
  %v3898 = vadd.f32 %v3892, %v3088
  %v3899 = vadd.f32 %v3893, %v3092
  %v3900 = vadd.f32 %v3894, %v3096
  %v3901 = vmax.f32 %v3895, 0.0
  %v3902 = vmax.f32 %v3896, 0.0
  %v3903 = vmax.f32 %v3897, 0.0
  %v3904 = vmax.f32 %v3898, 0.0
  %v3905 = vmax.f32 %v3899, 0.0
  %v3906 = vmax.f32 %v3900, 0.0
  %3913 = vrot.lane.b32.xlu0 %v3901, 118
  %v3914 = vpop.permute.xlu0 %3913
  %3915 = vrot.lane.b32.xlu0 %v3902, 118
  %v3916 = vpop.permute.xlu0 %3915
  %3917 = vrot.lane.b32.xlu0 %v3903, 118
  %v3918 = vpop.permute.xlu0 %3917
  %3919 = vrot.lane.b32.xlu0 %v3904, 118
  %v3920 = vpop.permute.xlu0 %3919
  %3921 = vrot.lane.b32.xlu0 %v3905, 118
  %v3922 = vpop.permute.xlu0 %3921
  %3923 = vrot.lane.b32.xlu0 %v3906, 118
  %v3924 = vpop.permute.xlu0 %3923
  %v3925 = vsel %vm3130, %v3914, %v3916
  %v3926 = vsel %vm3130, %v3916, %v3918
  %v3927 = vsel %vm3130, %v3920, %v3922
  %v3928 = vsel %vm3130, %v3922, %v3924
  %v3935 = vmax.f32 %v3901, %v3925
  %v3936 = vmax.f32 %v3902, %v3926
  %v3937 = vmax.f32 %v3903, %v3918
  %v3938 = vmax.f32 %v3904, %v3927
  %v3939 = vmax.f32 %v3905, %v3928
  %v3940 = vmax.f32 %v3906, %v3924
  %v3941 = vpack.c.bf16 %v3938, %v3935
  %v3942 = vpack.c.bf16 %v3939, %v3936
  %v3943 = vpack.c.bf16 %v3940, %v3937
  %3944 = vst [vmem:[#allocation4 + $0x108] sm:$0xff] %v3941
  %3945 = vst [vmem:[#allocation4 + $0x110] sm:$0xff] %v3942
  %3946 = vst.msk [vmem:[#allocation4 + $0x118] sm:$0xff] %vm3152, %v3943
  %v3947 = vpack.c.bf16 %v3906, %v3903
  %3948 = vst.msk [vmem:[#allocation4 + $0x118] sm:$0xff] %vm3155, %v3947
  %v3949 = vld [vmem:[#allocation3 + $0x480] sm:$0xff]
  %v3950 = vld [vmem:[#allocation3 + $0x488] sm:$0xff]
  %v3951 = vld [vmem:[#allocation3 + $0x490] sm:$0xff]
  %v3952 = vld [vmem:[#allocation3 + $0x498] sm:$0xff]
  %v3953 = vld [vmem:[#allocation3 + $0x4a0] sm:$0xff]
  %v3954 = vld [vmem:[#allocation3 + $0x4a8] sm:$0xff]
  %v3955 = vld [vmem:[#allocation3 + $0x4b0] sm:$0xff]
  %v3956 = vld [vmem:[#allocation3 + $0x4b8] sm:$0xff]
  %v3957 = vld [vmem:[#allocation3 + $0x4c0] sm:$0xff]
  %v3958 = vld [vmem:[#allocation3 + $0x4c8] sm:$0xff]
  %v3959 = vld [vmem:[#allocation3 + $0x4d0] sm:$0xff]
  %v3960 = vld [vmem:[#allocation3 + $0x4d8] sm:$0xff]
  %v3961 = vmax.f32 %v3949, %v3955
  %v3962 = vmax.f32 %v3950, %v3956
  %v3963 = vmax.f32 %v3951, %v3957
  %v3964 = vmax.f32 %v3952, %v3958
  %v3965 = vmax.f32 %v3953, %v3959
  %v3966 = vmax.f32 %v3954, %v3960
  %v3967 = vadd.f32 %v3961, %v3088
  %v3968 = vadd.f32 %v3962, %v3092
  %v3969 = vadd.f32 %v3963, %v3096
  %v3970 = vadd.f32 %v3964, %v3088
  %v3971 = vadd.f32 %v3965, %v3092
  %v3972 = vadd.f32 %v3966, %v3096
  %v3973 = vmax.f32 %v3967, 0.0
  %v3974 = vmax.f32 %v3968, 0.0
  %v3975 = vmax.f32 %v3969, 0.0
  %v3976 = vmax.f32 %v3970, 0.0
  %v3977 = vmax.f32 %v3971, 0.0
  %v3978 = vmax.f32 %v3972, 0.0
  %3985 = vrot.lane.b32.xlu0 %v3973, 118
  %v3986 = vpop.permute.xlu0 %3985
  %3987 = vrot.lane.b32.xlu0 %v3974, 118
  %v3988 = vpop.permute.xlu0 %3987
  %3989 = vrot.lane.b32.xlu0 %v3975, 118
  %v3990 = vpop.permute.xlu0 %3989
  %3991 = vrot.lane.b32.xlu0 %v3976, 118
  %v3992 = vpop.permute.xlu0 %3991
  %3993 = vrot.lane.b32.xlu0 %v3977, 118
  %v3994 = vpop.permute.xlu0 %3993
  %3995 = vrot.lane.b32.xlu0 %v3978, 118
  %v3996 = vpop.permute.xlu0 %3995
  %v3997 = vsel %vm3130, %v3986, %v3988
  %v3998 = vsel %vm3130, %v3988, %v3990
  %v3999 = vsel %vm3130, %v3992, %v3994
  %v4000 = vsel %vm3130, %v3994, %v3996
  %v4007 = vmax.f32 %v3973, %v3997
  %v4008 = vmax.f32 %v3974, %v3998
  %v4009 = vmax.f32 %v3975, %v3990
  %v4010 = vmax.f32 %v3976, %v3999
  %v4011 = vmax.f32 %v3977, %v4000
  %v4012 = vmax.f32 %v3978, %v3996
  %v4013 = vpack.c.bf16 %v4010, %v4007
  %v4014 = vpack.c.bf16 %v4011, %v4008
  %v4015 = vpack.c.bf16 %v4012, %v4009
  %4016 = vst [vmem:[#allocation4 + $0x120] sm:$0xff] %v4013
  %4017 = vst [vmem:[#allocation4 + $0x128] sm:$0xff] %v4014
  %4018 = vst.msk [vmem:[#allocation4 + $0x130] sm:$0xff] %vm3152, %v4015
  %v4019 = vpack.c.bf16 %v3978, %v3975
  %4020 = vst.msk [vmem:[#allocation4 + $0x130] sm:$0xff] %vm3155, %v4019
  %v4021 = vld [vmem:[#allocation3 + $0x4e0] sm:$0xff]
  %v4022 = vld [vmem:[#allocation3 + $0x4e8] sm:$0xff]
  %v4023 = vld [vmem:[#allocation3 + $0x4f0] sm:$0xff]
  %v4024 = vld [vmem:[#allocation3 + $0x4f8] sm:$0xff]
  %v4025 = vld [vmem:[#allocation3 + $0x500] sm:$0xff]
  %v4026 = vld [vmem:[#allocation3 + $0x508] sm:$0xff]
  %v4027 = vld [vmem:[#allocation3 + $0x510] sm:$0xff]
  %v4028 = vld [vmem:[#allocation3 + $0x518] sm:$0xff]
  %v4029 = vld [vmem:[#allocation3 + $0x520] sm:$0xff]
  %v4030 = vld [vmem:[#allocation3 + $0x528] sm:$0xff]
  %v4031 = vld [vmem:[#allocation3 + $0x530] sm:$0xff]
  %v4032 = vld [vmem:[#allocation3 + $0x538] sm:$0xff]
  %v4033 = vmax.f32 %v4021, %v4027
  %v4034 = vmax.f32 %v4022, %v4028
  %v4035 = vmax.f32 %v4023, %v4029
  %v4036 = vmax.f32 %v4024, %v4030
  %v4037 = vmax.f32 %v4025, %v4031
  %v4038 = vmax.f32 %v4026, %v4032
  %v4039 = vadd.f32 %v4033, %v3088
  %v4040 = vadd.f32 %v4034, %v3092
  %v4041 = vadd.f32 %v4035, %v3096
  %v4042 = vadd.f32 %v4036, %v3088
  %v4043 = vadd.f32 %v4037, %v3092
  %v4044 = vadd.f32 %v4038, %v3096
  %v4045 = vmax.f32 %v4039, 0.0
  %v4046 = vmax.f32 %v4040, 0.0
  %v4047 = vmax.f32 %v4041, 0.0
  %v4048 = vmax.f32 %v4042, 0.0
  %v4049 = vmax.f32 %v4043, 0.0
  %v4050 = vmax.f32 %v4044, 0.0
  %4057 = vrot.lane.b32.xlu0 %v4045, 118
  %v4058 = vpop.permute.xlu0 %4057
  %4059 = vrot.lane.b32.xlu0 %v4046, 118
  %v4060 = vpop.permute.xlu0 %4059
  %4061 = vrot.lane.b32.xlu0 %v4047, 118
  %v4062 = vpop.permute.xlu0 %4061
  %4063 = vrot.lane.b32.xlu0 %v4048, 118
  %v4064 = vpop.permute.xlu0 %4063
  %4065 = vrot.lane.b32.xlu0 %v4049, 118
  %v4066 = vpop.permute.xlu0 %4065
  %4067 = vrot.lane.b32.xlu0 %v4050, 118
  %v4068 = vpop.permute.xlu0 %4067
  %v4069 = vsel %vm3130, %v4058, %v4060
  %v4070 = vsel %vm3130, %v4060, %v4062
  %v4071 = vsel %vm3130, %v4064, %v4066
  %v4072 = vsel %vm3130, %v4066, %v4068
  %v4079 = vmax.f32 %v4045, %v4069
  %v4080 = vmax.f32 %v4046, %v4070
  %v4081 = vmax.f32 %v4047, %v4062
  %v4082 = vmax.f32 %v4048, %v4071
  %v4083 = vmax.f32 %v4049, %v4072
  %v4084 = vmax.f32 %v4050, %v4068
  %v4085 = vpack.c.bf16 %v4082, %v4079
  %v4086 = vpack.c.bf16 %v4083, %v4080
  %v4087 = vpack.c.bf16 %v4084, %v4081
  %4088 = vst [vmem:[#allocation4 + $0x138] sm:$0xff] %v4085
  %4089 = vst [vmem:[#allocation4 + $0x140] sm:$0xff] %v4086
  %4090 = vst.msk [vmem:[#allocation4 + $0x148] sm:$0xff] %vm3152, %v4087
  %v4091 = vpack.c.bf16 %v4050, %v4047
  %4092 = vst.msk [vmem:[#allocation4 + $0x148] sm:$0xff] %vm3155, %v4091
  %v4093 = vld [vmem:[#allocation4] sm:$0xff]
  %v4094 = vld [vmem:[#allocation4 + $0x8] sm:$0xff]
  %v4095 = vld [vmem:[#allocation4 + $0x10] sm:$0xff]
  %v4096 = vld [vmem:[#allocation4 + $0x18] sm:$0xff]
  %v4097 = vld [vmem:[#allocation4 + $0x20] sm:$0xff]
  %v4098 = vld [vmem:[#allocation4 + $0x28] sm:$0xff]
  %v4099 = vld [vmem:[#allocation4 + $0x30] sm:$0xff]
  %v4100 = vld [vmem:[#allocation4 + $0x38] sm:$0xff]
  %v4101 = vld [vmem:[#allocation4 + $0x40] sm:$0xff]
  %v4102 = vld [vmem:[#allocation4 + $0x48] sm:$0xff]
  %v4103 = vld [vmem:[#allocation4 + $0x50] sm:$0xff]
  %v4104 = vld [vmem:[#allocation4 + $0x58] sm:$0xff]
  %v4105 = vld [vmem:[#allocation4 + $0x60] sm:$0xff]
  %v4106 = vld [vmem:[#allocation4 + $0x68] sm:$0xff]
  %v4107 = vld [vmem:[#allocation4 + $0x70] sm:$0xff]
  %v4108 = vld [vmem:[#allocation4 + $0x78] sm:$0xff]
  %v4109 = vld [vmem:[#allocation4 + $0x80] sm:$0xff]
  %v4110 = vld [vmem:[#allocation4 + $0x88] sm:$0xff]
  %v4111 = vld [vmem:[#allocation4 + $0x90] sm:$0xff]
  %v4112 = vld [vmem:[#allocation4 + $0x98] sm:$0xff]
  %v4113 = vld [vmem:[#allocation4 + $0xa0] sm:$0xff]
  %v4114 = vld [vmem:[#allocation4 + $0xa8] sm:$0xff]
  %v4115 = vld [vmem:[#allocation4 + $0xb0] sm:$0xff]
  %v4116 = vld [vmem:[#allocation4 + $0xb8] sm:$0xff]
  %v4117 = vld [vmem:[#allocation4 + $0xc0] sm:$0xff]
  %v4118 = vld [vmem:[#allocation4 + $0xc8] sm:$0xff]
  %v4119 = vld [vmem:[#allocation4 + $0xd0] sm:$0xff]
  %v4120 = vld [vmem:[#allocation4 + $0xd8] sm:$0xff]
  %v4121 = vld [vmem:[#allocation4 + $0xe0] sm:$0xff]
  %v4122 = vld [vmem:[#allocation4 + $0xe8] sm:$0xff]
  %4123 = vst [vmem:[#allocation5] sm:$0xff] %v4093
  %4124 = vst [vmem:[#allocation5 + $0x8] sm:$0xff] %v4094
  %4125 = vst.msk [vmem:[#allocation5 + $0x10] sm:$0xff] %vm2898, %v4095
  %4126 = vst [vmem:[#allocation5 + $0x58] sm:$0xff] %v4096
  %4127 = vst [vmem:[#allocation5 + $0x60] sm:$0xff] %v4097
  %4128 = vst.msk [vmem:[#allocation5 + $0x68] sm:$0xff] %vm2898, %v4098
  %4129 = vst [vmem:[#allocation5 + $0xb0] sm:$0xff] %v4099
  %4130 = vst [vmem:[#allocation5 + $0xb8] sm:$0xff] %v4100
  %4131 = vst.msk [vmem:[#allocation5 + $0xc0] sm:$0xff] %vm2898, %v4101
  %4132 = vst [vmem:[#allocation5 + $0x108] sm:$0xff] %v4102
  %4133 = vst [vmem:[#allocation5 + $0x110] sm:$0xff] %v4103
  %4134 = vst.msk [vmem:[#allocation5 + $0x118] sm:$0xff] %vm2898, %v4104
  %4135 = vst [vmem:[#allocation5 + $0x160] sm:$0xff] %v4105
  %4136 = vst [vmem:[#allocation5 + $0x168] sm:$0xff] %v4106
  %4137 = vst.msk [vmem:[#allocation5 + $0x170] sm:$0xff] %vm2898, %v4107
  %4138 = vst [vmem:[#allocation5 + $0x1b8] sm:$0xff] %v4108
  %4139 = vst [vmem:[#allocation5 + $0x1c0] sm:$0xff] %v4109
  %4140 = vst.msk [vmem:[#allocation5 + $0x1c8] sm:$0xff] %vm2898, %v4110
  %4141 = vst [vmem:[#allocation5 + $0x210] sm:$0xff] %v4111
  %4142 = vst [vmem:[#allocation5 + $0x218] sm:$0xff] %v4112
  %4143 = vst.msk [vmem:[#allocation5 + $0x220] sm:$0xff] %vm2898, %v4113
  %4144 = vst [vmem:[#allocation5 + $0x268] sm:$0xff] %v4114
  %4145 = vst [vmem:[#allocation5 + $0x270] sm:$0xff] %v4115
  %4146 = vst.msk [vmem:[#allocation5 + $0x278] sm:$0xff] %vm2898, %v4116
  %4147 = vst [vmem:[#allocation5 + $0x2c0] sm:$0xff] %v4117
  %4148 = vst [vmem:[#allocation5 + $0x2c8] sm:$0xff] %v4118
  %4149 = vst.msk [vmem:[#allocation5 + $0x2d0] sm:$0xff] %vm2898, %v4119
  %4150 = vst [vmem:[#allocation5 + $0x318] sm:$0xff] %v4120
  %4151 = vst [vmem:[#allocation5 + $0x320] sm:$0xff] %v4121
  %4152 = vst.msk [vmem:[#allocation5 + $0x328] sm:$0xff] %vm2898, %v4122
  %v4153 = vld [vmem:[#allocation4 + $0x18] sm:$0xff]
  %v4154 = vld [vmem:[#allocation4 + $0x20] sm:$0xff]
  %v4155 = vld [vmem:[#allocation4 + $0x28] sm:$0xff]
  %v4156 = vld [vmem:[#allocation4 + $0x30] sm:$0xff]
  %v4157 = vld [vmem:[#allocation4 + $0x38] sm:$0xff]
  %v4158 = vld [vmem:[#allocation4 + $0x40] sm:$0xff]
  %v4159 = vld [vmem:[#allocation4 + $0x48] sm:$0xff]
  %v4160 = vld [vmem:[#allocation4 + $0x50] sm:$0xff]
  %v4161 = vld [vmem:[#allocation4 + $0x58] sm:$0xff]
  %v4162 = vld [vmem:[#allocation4 + $0x60] sm:$0xff]
  %v4163 = vld [vmem:[#allocation4 + $0x68] sm:$0xff]
  %v4164 = vld [vmem:[#allocation4 + $0x70] sm:$0xff]
  %v4165 = vld [vmem:[#allocation4 + $0x78] sm:$0xff]
  %v4166 = vld [vmem:[#allocation4 + $0x80] sm:$0xff]
  %v4167 = vld [vmem:[#allocation4 + $0x88] sm:$0xff]
  %v4168 = vld [vmem:[#allocation4 + $0x90] sm:$0xff]
  %v4169 = vld [vmem:[#allocation4 + $0x98] sm:$0xff]
  %v4170 = vld [vmem:[#allocation4 + $0xa0] sm:$0xff]
  %v4171 = vld [vmem:[#allocation4 + $0xa8] sm:$0xff]
  %v4172 = vld [vmem:[#allocation4 + $0xb0] sm:$0xff]
  %v4173 = vld [vmem:[#allocation4 + $0xb8] sm:$0xff]
  %v4174 = vld [vmem:[#allocation4 + $0xc0] sm:$0xff]
  %v4175 = vld [vmem:[#allocation4 + $0xc8] sm:$0xff]
  %v4176 = vld [vmem:[#allocation4 + $0xd0] sm:$0xff]
  %v4177 = vld [vmem:[#allocation4 + $0xd8] sm:$0xff]
  %v4178 = vld [vmem:[#allocation4 + $0xe0] sm:$0xff]
  %v4179 = vld [vmem:[#allocation4 + $0xe8] sm:$0xff]
  %v4180 = vld [vmem:[#allocation4 + $0xf0] sm:$0xff]
  %v4181 = vld [vmem:[#allocation4 + $0xf8] sm:$0xff]
  %v4182 = vld [vmem:[#allocation4 + $0x100] sm:$0xff]
  %4213 = vrot.lane.b32.xlu0 %v4153, 24
  %v4214 = vpop.permute.xlu0 %4213
  %4215 = vrot.lane.b32.xlu0 %v4154, 24
  %v4216 = vpop.permute.xlu0 %4215
  %4217 = vrot.lane.b32.xlu0 %v4155, 24
  %v4218 = vpop.permute.xlu0 %4217
  %4219 = vrot.lane.b32.xlu0 %v4156, 24
  %v4220 = vpop.permute.xlu0 %4219
  %4221 = vrot.lane.b32.xlu0 %v4157, 24
  %v4222 = vpop.permute.xlu0 %4221
  %4223 = vrot.lane.b32.xlu0 %v4158, 24
  %v4224 = vpop.permute.xlu0 %4223
  %4225 = vrot.lane.b32.xlu0 %v4159, 24
  %v4226 = vpop.permute.xlu0 %4225
  %4227 = vrot.lane.b32.xlu0 %v4160, 24
  %v4228 = vpop.permute.xlu0 %4227
  %4229 = vrot.lane.b32.xlu0 %v4161, 24
  %v4230 = vpop.permute.xlu0 %4229
  %4231 = vrot.lane.b32.xlu0 %v4162, 24
  %v4232 = vpop.permute.xlu0 %4231
  %4233 = vrot.lane.b32.xlu0 %v4163, 24
  %v4234 = vpop.permute.xlu0 %4233
  %4235 = vrot.lane.b32.xlu0 %v4164, 24
  %v4236 = vpop.permute.xlu0 %4235
  %4237 = vrot.lane.b32.xlu0 %v4165, 24
  %v4238 = vpop.permute.xlu0 %4237
  %4239 = vrot.lane.b32.xlu0 %v4166, 24
  %v4240 = vpop.permute.xlu0 %4239
  %4241 = vrot.lane.b32.xlu0 %v4167, 24
  %v4242 = vpop.permute.xlu0 %4241
  %4243 = vrot.lane.b32.xlu0 %v4168, 24
  %v4244 = vpop.permute.xlu0 %4243
  %4245 = vrot.lane.b32.xlu0 %v4169, 24
  %v4246 = vpop.permute.xlu0 %4245
  %4247 = vrot.lane.b32.xlu0 %v4170, 24
  %v4248 = vpop.permute.xlu0 %4247
  %4249 = vrot.lane.b32.xlu0 %v4171, 24
  %v4250 = vpop.permute.xlu0 %4249
  %4251 = vrot.lane.b32.xlu0 %v4172, 24
  %v4252 = vpop.permute.xlu0 %4251
  %4253 = vrot.lane.b32.xlu0 %v4173, 24
  %v4254 = vpop.permute.xlu0 %4253
  %4255 = vrot.lane.b32.xlu0 %v4174, 24
  %v4256 = vpop.permute.xlu0 %4255
  %4257 = vrot.lane.b32.xlu0 %v4175, 24
  %v4258 = vpop.permute.xlu0 %4257
  %4259 = vrot.lane.b32.xlu0 %v4176, 24
  %v4260 = vpop.permute.xlu0 %4259
  %4261 = vrot.lane.b32.xlu0 %v4177, 24
  %v4262 = vpop.permute.xlu0 %4261
  %4263 = vrot.lane.b32.xlu0 %v4178, 24
  %v4264 = vpop.permute.xlu0 %4263
  %4265 = vrot.lane.b32.xlu0 %v4179, 24
  %v4266 = vpop.permute.xlu0 %4265
  %4267 = vrot.lane.b32.xlu0 %v4180, 24
  %v4268 = vpop.permute.xlu0 %4267
  %4269 = vrot.lane.b32.xlu0 %v4181, 24
  %v4270 = vpop.permute.xlu0 %4269
  %4271 = vrot.lane.b32.xlu0 %v4182, 24
  %v4272 = vpop.permute.xlu0 %4271
  %vm4273 = vcmask 195584
  %v4274 = vsel %vm4273, %v4214, %v4216
  %v4275 = vsel %vm4273, %v4216, %v4218
  %v4276 = vsel %vm4273, %v4220, %v4222
  %v4277 = vsel %vm4273, %v4222, %v4224
  %v4278 = vsel %vm4273, %v4226, %v4228
  %v4279 = vsel %vm4273, %v4228, %v4230
  %v4280 = vsel %vm4273, %v4232, %v4234
  %v4281 = vsel %vm4273, %v4234, %v4236
  %v4282 = vsel %vm4273, %v4238, %v4240
  %v4283 = vsel %vm4273, %v4240, %v4242
  %v4284 = vsel %vm4273, %v4244, %v4246
  %v4285 = vsel %vm4273, %v4246, %v4248
  %v4286 = vsel %vm4273, %v4250, %v4252
  %v4287 = vsel %vm4273, %v4252, %v4254
  %v4288 = vsel %vm4273, %v4256, %v4258
  %v4289 = vsel %vm4273, %v4258, %v4260
  %v4290 = vsel %vm4273, %v4262, %v4264
  %v4291 = vsel %vm4273, %v4264, %v4266
  %v4292 = vsel %vm4273, %v4268, %v4270
  %v4293 = vsel %vm4273, %v4270, %v4272
  %vm4324 = vcmask 1047744
  %4325 = vst.msk [vmem:[#allocation5 + $0x10] sm:$0xff] %vm4324, %v4214
  %4326 = vst [vmem:[#allocation5 + $0x18] sm:$0xff] %v4274
  %vm4327 = vcmask 392192
  %4328 = vst.msk [vmem:[#allocation5 + $0x20] sm:$0xff] %vm4327, %v4275
  %4329 = vst.msk [vmem:[#allocation5 + $0x68] sm:$0xff] %vm4324, %v4220
  %4330 = vst [vmem:[#allocation5 + $0x70] sm:$0xff] %v4276
  %4331 = vst.msk [vmem:[#allocation5 + $0x78] sm:$0xff] %vm4327, %v4277
  %4332 = vst.msk [vmem:[#allocation5 + $0xc0] sm:$0xff] %vm4324, %v4226
  %4333 = vst [vmem:[#allocation5 + $0xc8] sm:$0xff] %v4278
  %4334 = vst.msk [vmem:[#allocation5 + $0xd0] sm:$0xff] %vm4327, %v4279
  %4335 = vst.msk [vmem:[#allocation5 + $0x118] sm:$0xff] %vm4324, %v4232
  %4336 = vst [vmem:[#allocation5 + $0x120] sm:$0xff] %v4280
  %4337 = vst.msk [vmem:[#allocation5 + $0x128] sm:$0xff] %vm4327, %v4281
  %4338 = vst.msk [vmem:[#allocation5 + $0x170] sm:$0xff] %vm4324, %v4238
  %4339 = vst [vmem:[#allocation5 + $0x178] sm:$0xff] %v4282
  %4340 = vst.msk [vmem:[#allocation5 + $0x180] sm:$0xff] %vm4327, %v4283
  %4341 = vst.msk [vmem:[#allocation5 + $0x1c8] sm:$0xff] %vm4324, %v4244
  %4342 = vst [vmem:[#allocation5 + $0x1d0] sm:$0xff] %v4284
  %4343 = vst.msk [vmem:[#allocation5 + $0x1d8] sm:$0xff] %vm4327, %v4285
  %4344 = vst.msk [vmem:[#allocation5 + $0x220] sm:$0xff] %vm4324, %v4250
  %4345 = vst [vmem:[#allocation5 + $0x228] sm:$0xff] %v4286
  %4346 = vst.msk [vmem:[#allocation5 + $0x230] sm:$0xff] %vm4327, %v4287
  %4347 = vst.msk [vmem:[#allocation5 + $0x278] sm:$0xff] %vm4324, %v4256
  %4348 = vst [vmem:[#allocation5 + $0x280] sm:$0xff] %v4288
  %4349 = vst.msk [vmem:[#allocation5 + $0x288] sm:$0xff] %vm4327, %v4289
  %4350 = vst.msk [vmem:[#allocation5 + $0x2d0] sm:$0xff] %vm4324, %v4262
  %4351 = vst [vmem:[#allocation5 + $0x2d8] sm:$0xff] %v4290
  %4352 = vst.msk [vmem:[#allocation5 + $0x2e0] sm:$0xff] %vm4327, %v4291
  %4353 = vst.msk [vmem:[#allocation5 + $0x328] sm:$0xff] %vm4324, %v4268
  %4354 = vst [vmem:[#allocation5 + $0x330] sm:$0xff] %v4292
  %4355 = vst.msk [vmem:[#allocation5 + $0x338] sm:$0xff] %vm4327, %v4293
  %v4356 = vld [vmem:[#allocation4 + $0x30] sm:$0xff]
  %v4357 = vld [vmem:[#allocation4 + $0x38] sm:$0xff]
  %v4358 = vld [vmem:[#allocation4 + $0x40] sm:$0xff]
  %v4359 = vld [vmem:[#allocation4 + $0x48] sm:$0xff]
  %v4360 = vld [vmem:[#allocation4 + $0x50] sm:$0xff]
  %v4361 = vld [vmem:[#allocation4 + $0x58] sm:$0xff]
  %v4362 = vld [vmem:[#allocation4 + $0x60] sm:$0xff]
  %v4363 = vld [vmem:[#allocation4 + $0x68] sm:$0xff]
  %v4364 = vld [vmem:[#allocation4 + $0x70] sm:$0xff]
  %v4365 = vld [vmem:[#allocation4 + $0x78] sm:$0xff]
  %v4366 = vld [vmem:[#allocation4 + $0x80] sm:$0xff]
  %v4367 = vld [vmem:[#allocation4 + $0x88] sm:$0xff]
  %v4368 = vld [vmem:[#allocation4 + $0x90] sm:$0xff]
  %v4369 = vld [vmem:[#allocation4 + $0x98] sm:$0xff]
  %v4370 = vld [vmem:[#allocation4 + $0xa0] sm:$0xff]
  %v4371 = vld [vmem:[#allocation4 + $0xa8] sm:$0xff]
  %v4372 = vld [vmem:[#allocation4 + $0xb0] sm:$0xff]
  %v4373 = vld [vmem:[#allocation4 + $0xb8] sm:$0xff]
  %v4374 = vld [vmem:[#allocation4 + $0xc0] sm:$0xff]
  %v4375 = vld [vmem:[#allocation4 + $0xc8] sm:$0xff]
  %v4376 = vld [vmem:[#allocation4 + $0xd0] sm:$0xff]
  %v4377 = vld [vmem:[#allocation4 + $0xd8] sm:$0xff]
  %v4378 = vld [vmem:[#allocation4 + $0xe0] sm:$0xff]
  %v4379 = vld [vmem:[#allocation4 + $0xe8] sm:$0xff]
  %v4380 = vld [vmem:[#allocation4 + $0xf0] sm:$0xff]
  %v4381 = vld [vmem:[#allocation4 + $0xf8] sm:$0xff]
  %v4382 = vld [vmem:[#allocation4 + $0x100] sm:$0xff]
  %v4383 = vld [vmem:[#allocation4 + $0x108] sm:$0xff]
  %v4384 = vld [vmem:[#allocation4 + $0x110] sm:$0xff]
  %v4385 = vld [vmem:[#allocation4 + $0x118] sm:$0xff]
  %4416 = vrot.lane.b32.xlu0 %v4356, 48
  %v4417 = vpop.permute.xlu0 %4416
  %4418 = vrot.lane.b32.xlu0 %v4357, 48
  %v4419 = vpop.permute.xlu0 %4418
  %4420 = vrot.lane.b32.xlu0 %v4358, 48
  %v4421 = vpop.permute.xlu0 %4420
  %4422 = vrot.lane.b32.xlu0 %v4359, 48
  %v4423 = vpop.permute.xlu0 %4422
  %4424 = vrot.lane.b32.xlu0 %v4360, 48
  %v4425 = vpop.permute.xlu0 %4424
  %4426 = vrot.lane.b32.xlu0 %v4361, 48
  %v4427 = vpop.permute.xlu0 %4426
  %4428 = vrot.lane.b32.xlu0 %v4362, 48
  %v4429 = vpop.permute.xlu0 %4428
  %4430 = vrot.lane.b32.xlu0 %v4363, 48
  %v4431 = vpop.permute.xlu0 %4430
  %4432 = vrot.lane.b32.xlu0 %v4364, 48
  %v4433 = vpop.permute.xlu0 %4432
  %4434 = vrot.lane.b32.xlu0 %v4365, 48
  %v4435 = vpop.permute.xlu0 %4434
  %4436 = vrot.lane.b32.xlu0 %v4366, 48
  %v4437 = vpop.permute.xlu0 %4436
  %4438 = vrot.lane.b32.xlu0 %v4367, 48
  %v4439 = vpop.permute.xlu0 %4438
  %4440 = vrot.lane.b32.xlu0 %v4368, 48
  %v4441 = vpop.permute.xlu0 %4440
  %4442 = vrot.lane.b32.xlu0 %v4369, 48
  %v4443 = vpop.permute.xlu0 %4442
  %4444 = vrot.lane.b32.xlu0 %v4370, 48
  %v4445 = vpop.permute.xlu0 %4444
  %4446 = vrot.lane.b32.xlu0 %v4371, 48
  %v4447 = vpop.permute.xlu0 %4446
  %4448 = vrot.lane.b32.xlu0 %v4372, 48
  %v4449 = vpop.permute.xlu0 %4448
  %4450 = vrot.lane.b32.xlu0 %v4373, 48
  %v4451 = vpop.permute.xlu0 %4450
  %4452 = vrot.lane.b32.xlu0 %v4374, 48
  %v4453 = vpop.permute.xlu0 %4452
  %4454 = vrot.lane.b32.xlu0 %v4375, 48
  %v4455 = vpop.permute.xlu0 %4454
  %4456 = vrot.lane.b32.xlu0 %v4376, 48
  %v4457 = vpop.permute.xlu0 %4456
  %4458 = vrot.lane.b32.xlu0 %v4377, 48
  %v4459 = vpop.permute.xlu0 %4458
  %4460 = vrot.lane.b32.xlu0 %v4378, 48
  %v4461 = vpop.permute.xlu0 %4460
  %4462 = vrot.lane.b32.xlu0 %v4379, 48
  %v4463 = vpop.permute.xlu0 %4462
  %4464 = vrot.lane.b32.xlu0 %v4380, 48
  %v4465 = vpop.permute.xlu0 %4464
  %4466 = vrot.lane.b32.xlu0 %v4381, 48
  %v4467 = vpop.permute.xlu0 %4466
  %4468 = vrot.lane.b32.xlu0 %v4382, 48
  %v4469 = vpop.permute.xlu0 %4468
  %4470 = vrot.lane.b32.xlu0 %v4383, 48
  %v4471 = vpop.permute.xlu0 %4470
  %4472 = vrot.lane.b32.xlu0 %v4384, 48
  %v4473 = vpop.permute.xlu0 %4472
  %4474 = vrot.lane.b32.xlu0 %v4385, 48
  %v4475 = vpop.permute.xlu0 %4474
  %vm4476 = vcmask 392192
  %v4477 = vsel %vm4476, %v4417, %v4419
  %v4478 = vsel %vm4476, %v4419, %v4421
  %v4479 = vsel %vm4476, %v4423, %v4425
  %v4480 = vsel %vm4476, %v4425, %v4427
  %v4481 = vsel %vm4476, %v4429, %v4431
  %v4482 = vsel %vm4476, %v4431, %v4433
  %v4483 = vsel %vm4476, %v4435, %v4437
  %v4484 = vsel %vm4476, %v4437, %v4439
  %v4485 = vsel %vm4476, %v4441, %v4443
  %v4486 = vsel %vm4476, %v4443, %v4445
  %v4487 = vsel %vm4476, %v4447, %v4449
  %v4488 = vsel %vm4476, %v4449, %v4451
  %v4489 = vsel %vm4476, %v4453, %v4455
  %v4490 = vsel %vm4476, %v4455, %v4457
  %v4491 = vsel %vm4476, %v4459, %v4461
  %v4492 = vsel %vm4476, %v4461, %v4463
  %v4493 = vsel %vm4476, %v4465, %v4467
  %v4494 = vsel %vm4476, %v4467, %v4469
  %v4495 = vsel %vm4476, %v4471, %v4473
  %v4496 = vsel %vm4476, %v4473, %v4475
  %vm4527 = vcmask 1047936
  %4528 = vst.msk [vmem:[#allocation5 + $0x20] sm:$0xff] %vm4527, %v4417
  %4529 = vst [vmem:[#allocation5 + $0x28] sm:$0xff] %v4477
  %vm4530 = vcmask 588800
  %4531 = vst.msk [vmem:[#allocation5 + $0x30] sm:$0xff] %vm4530, %v4478
  %4532 = vst.msk [vmem:[#allocation5 + $0x78] sm:$0xff] %vm4527, %v4423
  %4533 = vst [vmem:[#allocation5 + $0x80] sm:$0xff] %v4479
  %4534 = vst.msk [vmem:[#allocation5 + $0x88] sm:$0xff] %vm4530, %v4480
  %4535 = vst.msk [vmem:[#allocation5 + $0xd0] sm:$0xff] %vm4527, %v4429
  %4536 = vst [vmem:[#allocation5 + $0xd8] sm:$0xff] %v4481
  %4537 = vst.msk [vmem:[#allocation5 + $0xe0] sm:$0xff] %vm4530, %v4482
  %4538 = vst.msk [vmem:[#allocation5 + $0x128] sm:$0xff] %vm4527, %v4435
  %4539 = vst [vmem:[#allocation5 + $0x130] sm:$0xff] %v4483
  %4540 = vst.msk [vmem:[#allocation5 + $0x138] sm:$0xff] %vm4530, %v4484
  %4541 = vst.msk [vmem:[#allocation5 + $0x180] sm:$0xff] %vm4527, %v4441
  %4542 = vst [vmem:[#allocation5 + $0x188] sm:$0xff] %v4485
  %4543 = vst.msk [vmem:[#allocation5 + $0x190] sm:$0xff] %vm4530, %v4486
  %4544 = vst.msk [vmem:[#allocation5 + $0x1d8] sm:$0xff] %vm4527, %v4447
  %4545 = vst [vmem:[#allocation5 + $0x1e0] sm:$0xff] %v4487
  %4546 = vst.msk [vmem:[#allocation5 + $0x1e8] sm:$0xff] %vm4530, %v4488
  %4547 = vst.msk [vmem:[#allocation5 + $0x230] sm:$0xff] %vm4527, %v4453
  %4548 = vst [vmem:[#allocation5 + $0x238] sm:$0xff] %v4489
  %4549 = vst.msk [vmem:[#allocation5 + $0x240] sm:$0xff] %vm4530, %v4490
  %4550 = vst.msk [vmem:[#allocation5 + $0x288] sm:$0xff] %vm4527, %v4459
  %4551 = vst [vmem:[#allocation5 + $0x290] sm:$0xff] %v4491
  %4552 = vst.msk [vmem:[#allocation5 + $0x298] sm:$0xff] %vm4530, %v4492
  %4553 = vst.msk [vmem:[#allocation5 + $0x2e0] sm:$0xff] %vm4527, %v4465
  %4554 = vst [vmem:[#allocation5 + $0x2e8] sm:$0xff] %v4493
  %4555 = vst.msk [vmem:[#allocation5 + $0x2f0] sm:$0xff] %vm4530, %v4494
  %4556 = vst.msk [vmem:[#allocation5 + $0x338] sm:$0xff] %vm4527, %v4471
  %4557 = vst [vmem:[#allocation5 + $0x340] sm:$0xff] %v4495
  %4558 = vst.msk [vmem:[#allocation5 + $0x348] sm:$0xff] %vm4530, %v4496
  %v4559 = vld [vmem:[#allocation4 + $0x48] sm:$0xff]
  %v4560 = vld [vmem:[#allocation4 + $0x50] sm:$0xff]
  %v4561 = vld [vmem:[#allocation4 + $0x58] sm:$0xff]
  %v4562 = vld [vmem:[#allocation4 + $0x60] sm:$0xff]
  %v4563 = vld [vmem:[#allocation4 + $0x68] sm:$0xff]
  %v4564 = vld [vmem:[#allocation4 + $0x70] sm:$0xff]
  %v4565 = vld [vmem:[#allocation4 + $0x78] sm:$0xff]
  %v4566 = vld [vmem:[#allocation4 + $0x80] sm:$0xff]
  %v4567 = vld [vmem:[#allocation4 + $0x88] sm:$0xff]
  %v4568 = vld [vmem:[#allocation4 + $0x90] sm:$0xff]
  %v4569 = vld [vmem:[#allocation4 + $0x98] sm:$0xff]
  %v4570 = vld [vmem:[#allocation4 + $0xa0] sm:$0xff]
  %v4571 = vld [vmem:[#allocation4 + $0xa8] sm:$0xff]
  %v4572 = vld [vmem:[#allocation4 + $0xb0] sm:$0xff]
  %v4573 = vld [vmem:[#allocation4 + $0xb8] sm:$0xff]
  %v4574 = vld [vmem:[#allocation4 + $0xc0] sm:$0xff]
  %v4575 = vld [vmem:[#allocation4 + $0xc8] sm:$0xff]
  %v4576 = vld [vmem:[#allocation4 + $0xd0] sm:$0xff]
  %v4577 = vld [vmem:[#allocation4 + $0xd8] sm:$0xff]
  %v4578 = vld [vmem:[#allocation4 + $0xe0] sm:$0xff]
  %v4579 = vld [vmem:[#allocation4 + $0xe8] sm:$0xff]
  %v4580 = vld [vmem:[#allocation4 + $0xf0] sm:$0xff]
  %v4581 = vld [vmem:[#allocation4 + $0xf8] sm:$0xff]
  %v4582 = vld [vmem:[#allocation4 + $0x100] sm:$0xff]
  %v4583 = vld [vmem:[#allocation4 + $0x108] sm:$0xff]
  %v4584 = vld [vmem:[#allocation4 + $0x110] sm:$0xff]
  %v4585 = vld [vmem:[#allocation4 + $0x118] sm:$0xff]
  %v4586 = vld [vmem:[#allocation4 + $0x120] sm:$0xff]
  %v4587 = vld [vmem:[#allocation4 + $0x128] sm:$0xff]
  %v4588 = vld [vmem:[#allocation4 + $0x130] sm:$0xff]
  %4619 = vrot.lane.b32.xlu0 %v4559, 72
  %v4620 = vpop.permute.xlu0 %4619
  %4621 = vrot.lane.b32.xlu0 %v4560, 72
  %v4622 = vpop.permute.xlu0 %4621
  %4623 = vrot.lane.b32.xlu0 %v4561, 72
  %v4624 = vpop.permute.xlu0 %4623
  %4625 = vrot.lane.b32.xlu0 %v4562, 72
  %v4626 = vpop.permute.xlu0 %4625
  %4627 = vrot.lane.b32.xlu0 %v4563, 72
  %v4628 = vpop.permute.xlu0 %4627
  %4629 = vrot.lane.b32.xlu0 %v4564, 72
  %v4630 = vpop.permute.xlu0 %4629
  %4631 = vrot.lane.b32.xlu0 %v4565, 72
  %v4632 = vpop.permute.xlu0 %4631
  %4633 = vrot.lane.b32.xlu0 %v4566, 72
  %v4634 = vpop.permute.xlu0 %4633
  %4635 = vrot.lane.b32.xlu0 %v4567, 72
  %v4636 = vpop.permute.xlu0 %4635
  %4637 = vrot.lane.b32.xlu0 %v4568, 72
  %v4638 = vpop.permute.xlu0 %4637
  %4639 = vrot.lane.b32.xlu0 %v4569, 72
  %v4640 = vpop.permute.xlu0 %4639
  %4641 = vrot.lane.b32.xlu0 %v4570, 72
  %v4642 = vpop.permute.xlu0 %4641
  %4643 = vrot.lane.b32.xlu0 %v4571, 72
  %v4644 = vpop.permute.xlu0 %4643
  %4645 = vrot.lane.b32.xlu0 %v4572, 72
  %v4646 = vpop.permute.xlu0 %4645
  %4647 = vrot.lane.b32.xlu0 %v4573, 72
  %v4648 = vpop.permute.xlu0 %4647
  %4649 = vrot.lane.b32.xlu0 %v4574, 72
  %v4650 = vpop.permute.xlu0 %4649
  %4651 = vrot.lane.b32.xlu0 %v4575, 72
  %v4652 = vpop.permute.xlu0 %4651
  %4653 = vrot.lane.b32.xlu0 %v4576, 72
  %v4654 = vpop.permute.xlu0 %4653
  %4655 = vrot.lane.b32.xlu0 %v4577, 72
  %v4656 = vpop.permute.xlu0 %4655
  %4657 = vrot.lane.b32.xlu0 %v4578, 72
  %v4658 = vpop.permute.xlu0 %4657
  %4659 = vrot.lane.b32.xlu0 %v4579, 72
  %v4660 = vpop.permute.xlu0 %4659
  %4661 = vrot.lane.b32.xlu0 %v4580, 72
  %v4662 = vpop.permute.xlu0 %4661
  %4663 = vrot.lane.b32.xlu0 %v4581, 72
  %v4664 = vpop.permute.xlu0 %4663
  %4665 = vrot.lane.b32.xlu0 %v4582, 72
  %v4666 = vpop.permute.xlu0 %4665
  %4667 = vrot.lane.b32.xlu0 %v4583, 72
  %v4668 = vpop.permute.xlu0 %4667
  %4669 = vrot.lane.b32.xlu0 %v4584, 72
  %v4670 = vpop.permute.xlu0 %4669
  %4671 = vrot.lane.b32.xlu0 %v4585, 72
  %v4672 = vpop.permute.xlu0 %4671
  %4673 = vrot.lane.b32.xlu0 %v4586, 72
  %v4674 = vpop.permute.xlu0 %4673
  %4675 = vrot.lane.b32.xlu0 %v4587, 72
  %v4676 = vpop.permute.xlu0 %4675
  %4677 = vrot.lane.b32.xlu0 %v4588, 72
  %v4678 = vpop.permute.xlu0 %4677
  %vm4679 = vcmask 588800
  %v4680 = vsel %vm4679, %v4620, %v4622
  %v4681 = vsel %vm4679, %v4622, %v4624
  %v4682 = vsel %vm4679, %v4626, %v4628
  %v4683 = vsel %vm4679, %v4628, %v4630
  %v4684 = vsel %vm4679, %v4632, %v4634
  %v4685 = vsel %vm4679, %v4634, %v4636
  %v4686 = vsel %vm4679, %v4638, %v4640
  %v4687 = vsel %vm4679, %v4640, %v4642
  %v4688 = vsel %vm4679, %v4644, %v4646
  %v4689 = vsel %vm4679, %v4646, %v4648
  %v4690 = vsel %vm4679, %v4650, %v4652
  %v4691 = vsel %vm4679, %v4652, %v4654
  %v4692 = vsel %vm4679, %v4656, %v4658
  %v4693 = vsel %vm4679, %v4658, %v4660
  %v4694 = vsel %vm4679, %v4662, %v4664
  %v4695 = vsel %vm4679, %v4664, %v4666
  %v4696 = vsel %vm4679, %v4668, %v4670
  %v4697 = vsel %vm4679, %v4670, %v4672
  %v4698 = vsel %vm4679, %v4674, %v4676
  %v4699 = vsel %vm4679, %v4676, %v4678
  %vm4730 = vcmask 1048128
  %4731 = vst.msk [vmem:[#allocation5 + $0x30] sm:$0xff] %vm4730, %v4620
  %4732 = vst [vmem:[#allocation5 + $0x38] sm:$0xff] %v4680
  %vm4733 = vcmask 785408
  %4734 = vst.msk [vmem:[#allocation5 + $0x40] sm:$0xff] %vm4733, %v4681
  %4735 = vst.msk [vmem:[#allocation5 + $0x88] sm:$0xff] %vm4730, %v4626
  %4736 = vst [vmem:[#allocation5 + $0x90] sm:$0xff] %v4682
  %4737 = vst.msk [vmem:[#allocation5 + $0x98] sm:$0xff] %vm4733, %v4683
  %4738 = vst.msk [vmem:[#allocation5 + $0xe0] sm:$0xff] %vm4730, %v4632
  %4739 = vst [vmem:[#allocation5 + $0xe8] sm:$0xff] %v4684
  %4740 = vst.msk [vmem:[#allocation5 + $0xf0] sm:$0xff] %vm4733, %v4685
  %4741 = vst.msk [vmem:[#allocation5 + $0x138] sm:$0xff] %vm4730, %v4638
  %4742 = vst [vmem:[#allocation5 + $0x140] sm:$0xff] %v4686
  %4743 = vst.msk [vmem:[#allocation5 + $0x148] sm:$0xff] %vm4733, %v4687
  %4744 = vst.msk [vmem:[#allocation5 + $0x190] sm:$0xff] %vm4730, %v4644
  %4745 = vst [vmem:[#allocation5 + $0x198] sm:$0xff] %v4688
  %4746 = vst.msk [vmem:[#allocation5 + $0x1a0] sm:$0xff] %vm4733, %v4689
  %4747 = vst.msk [vmem:[#allocation5 + $0x1e8] sm:$0xff] %vm4730, %v4650
  %4748 = vst [vmem:[#allocation5 + $0x1f0] sm:$0xff] %v4690
  %4749 = vst.msk [vmem:[#allocation5 + $0x1f8] sm:$0xff] %vm4733, %v4691
  %4750 = vst.msk [vmem:[#allocation5 + $0x240] sm:$0xff] %vm4730, %v4656
  %4751 = vst [vmem:[#allocation5 + $0x248] sm:$0xff] %v4692
  %4752 = vst.msk [vmem:[#allocation5 + $0x250] sm:$0xff] %vm4733, %v4693
  %4753 = vst.msk [vmem:[#allocation5 + $0x298] sm:$0xff] %vm4730, %v4662
  %4754 = vst [vmem:[#allocation5 + $0x2a0] sm:$0xff] %v4694
  %4755 = vst.msk [vmem:[#allocation5 + $0x2a8] sm:$0xff] %vm4733, %v4695
  %4756 = vst.msk [vmem:[#allocation5 + $0x2f0] sm:$0xff] %vm4730, %v4668
  %4757 = vst [vmem:[#allocation5 + $0x2f8] sm:$0xff] %v4696
  %4758 = vst.msk [vmem:[#allocation5 + $0x300] sm:$0xff] %vm4733, %v4697
  %4759 = vst.msk [vmem:[#allocation5 + $0x348] sm:$0xff] %vm4730, %v4674
  %4760 = vst [vmem:[#allocation5 + $0x350] sm:$0xff] %v4698
  %4761 = vst.msk [vmem:[#allocation5 + $0x358] sm:$0xff] %vm4733, %v4699
  %v4762 = vld [vmem:[#allocation4 + $0x60] sm:$0xff]
  %v4763 = vld [vmem:[#allocation4 + $0x68] sm:$0xff]
  %v4764 = vld [vmem:[#allocation4 + $0x70] sm:$0xff]
  %v4765 = vld [vmem:[#allocation4 + $0x78] sm:$0xff]
  %v4766 = vld [vmem:[#allocation4 + $0x80] sm:$0xff]
  %v4767 = vld [vmem:[#allocation4 + $0x88] sm:$0xff]
  %v4768 = vld [vmem:[#allocation4 + $0x90] sm:$0xff]
  %v4769 = vld [vmem:[#allocation4 + $0x98] sm:$0xff]
  %v4770 = vld [vmem:[#allocation4 + $0xa0] sm:$0xff]
  %v4771 = vld [vmem:[#allocation4 + $0xa8] sm:$0xff]
  %v4772 = vld [vmem:[#allocation4 + $0xb0] sm:$0xff]
  %v4773 = vld [vmem:[#allocation4 + $0xb8] sm:$0xff]
  %v4774 = vld [vmem:[#allocation4 + $0xc0] sm:$0xff]
  %v4775 = vld [vmem:[#allocation4 + $0xc8] sm:$0xff]
  %v4776 = vld [vmem:[#allocation4 + $0xd0] sm:$0xff]
  %v4777 = vld [vmem:[#allocation4 + $0xd8] sm:$0xff]
  %v4778 = vld [vmem:[#allocation4 + $0xe0] sm:$0xff]
  %v4779 = vld [vmem:[#allocation4 + $0xe8] sm:$0xff]
  %v4780 = vld [vmem:[#allocation4 + $0xf0] sm:$0xff]
  %v4781 = vld [vmem:[#allocation4 + $0xf8] sm:$0xff]
  %v4782 = vld [vmem:[#allocation4 + $0x100] sm:$0xff]
  %v4783 = vld [vmem:[#allocation4 + $0x108] sm:$0xff]
  %v4784 = vld [vmem:[#allocation4 + $0x110] sm:$0xff]
  %v4785 = vld [vmem:[#allocation4 + $0x118] sm:$0xff]
  %v4786 = vld [vmem:[#allocation4 + $0x120] sm:$0xff]
  %v4787 = vld [vmem:[#allocation4 + $0x128] sm:$0xff]
  %v4788 = vld [vmem:[#allocation4 + $0x130] sm:$0xff]
  %v4789 = vld [vmem:[#allocation4 + $0x138] sm:$0xff]
  %v4790 = vld [vmem:[#allocation4 + $0x140] sm:$0xff]
  %v4791 = vld [vmem:[#allocation4 + $0x148] sm:$0xff]
  %4822 = vrot.lane.b32.xlu0 %v4762, 96
  %v4823 = vpop.permute.xlu0 %4822
  %4824 = vrot.lane.b32.xlu0 %v4763, 96
  %v4825 = vpop.permute.xlu0 %4824
  %4826 = vrot.lane.b32.xlu0 %v4764, 96
  %v4827 = vpop.permute.xlu0 %4826
  %4828 = vrot.lane.b32.xlu0 %v4765, 96
  %v4829 = vpop.permute.xlu0 %4828
  %4830 = vrot.lane.b32.xlu0 %v4766, 96
  %v4831 = vpop.permute.xlu0 %4830
  %4832 = vrot.lane.b32.xlu0 %v4767, 96
  %v4833 = vpop.permute.xlu0 %4832
  %4834 = vrot.lane.b32.xlu0 %v4768, 96
  %v4835 = vpop.permute.xlu0 %4834
  %4836 = vrot.lane.b32.xlu0 %v4769, 96
  %v4837 = vpop.permute.xlu0 %4836
  %4838 = vrot.lane.b32.xlu0 %v4770, 96
  %v4839 = vpop.permute.xlu0 %4838
  %4840 = vrot.lane.b32.xlu0 %v4771, 96
  %v4841 = vpop.permute.xlu0 %4840
  %4842 = vrot.lane.b32.xlu0 %v4772, 96
  %v4843 = vpop.permute.xlu0 %4842
  %4844 = vrot.lane.b32.xlu0 %v4773, 96
  %v4845 = vpop.permute.xlu0 %4844
  %4846 = vrot.lane.b32.xlu0 %v4774, 96
  %v4847 = vpop.permute.xlu0 %4846
  %4848 = vrot.lane.b32.xlu0 %v4775, 96
  %v4849 = vpop.permute.xlu0 %4848
  %4850 = vrot.lane.b32.xlu0 %v4776, 96
  %v4851 = vpop.permute.xlu0 %4850
  %4852 = vrot.lane.b32.xlu0 %v4777, 96
  %v4853 = vpop.permute.xlu0 %4852
  %4854 = vrot.lane.b32.xlu0 %v4778, 96
  %v4855 = vpop.permute.xlu0 %4854
  %4856 = vrot.lane.b32.xlu0 %v4779, 96
  %v4857 = vpop.permute.xlu0 %4856
  %4858 = vrot.lane.b32.xlu0 %v4780, 96
  %v4859 = vpop.permute.xlu0 %4858
  %4860 = vrot.lane.b32.xlu0 %v4781, 96
  %v4861 = vpop.permute.xlu0 %4860
  %4862 = vrot.lane.b32.xlu0 %v4782, 96
  %v4863 = vpop.permute.xlu0 %4862
  %4864 = vrot.lane.b32.xlu0 %v4783, 96
  %v4865 = vpop.permute.xlu0 %4864
  %4866 = vrot.lane.b32.xlu0 %v4784, 96
  %v4867 = vpop.permute.xlu0 %4866
  %4868 = vrot.lane.b32.xlu0 %v4785, 96
  %v4869 = vpop.permute.xlu0 %4868
  %4870 = vrot.lane.b32.xlu0 %v4786, 96
  %v4871 = vpop.permute.xlu0 %4870
  %4872 = vrot.lane.b32.xlu0 %v4787, 96
  %v4873 = vpop.permute.xlu0 %4872
  %4874 = vrot.lane.b32.xlu0 %v4788, 96
  %v4875 = vpop.permute.xlu0 %4874
  %4876 = vrot.lane.b32.xlu0 %v4789, 96
  %v4877 = vpop.permute.xlu0 %4876
  %4878 = vrot.lane.b32.xlu0 %v4790, 96
  %v4879 = vpop.permute.xlu0 %4878
  %4880 = vrot.lane.b32.xlu0 %v4791, 96
  %v4881 = vpop.permute.xlu0 %4880
  %vm4882 = vcmask 785408
  %v4883 = vsel %vm4882, %v4823, %v4825
  %v4884 = vsel %vm4882, %v4825, %v4827
  %v4885 = vsel %vm4882, %v4829, %v4831
  %v4886 = vsel %vm4882, %v4831, %v4833
  %v4887 = vsel %vm4882, %v4835, %v4837
  %v4888 = vsel %vm4882, %v4837, %v4839
  %v4889 = vsel %vm4882, %v4841, %v4843
  %v4890 = vsel %vm4882, %v4843, %v4845
  %v4891 = vsel %vm4882, %v4847, %v4849
  %v4892 = vsel %vm4882, %v4849, %v4851
  %v4893 = vsel %vm4882, %v4853, %v4855
  %v4894 = vsel %vm4882, %v4855, %v4857
  %v4895 = vsel %vm4882, %v4859, %v4861
  %v4896 = vsel %vm4882, %v4861, %v4863
  %v4897 = vsel %vm4882, %v4865, %v4867
  %v4898 = vsel %vm4882, %v4867, %v4869
  %v4899 = vsel %vm4882, %v4871, %v4873
  %v4900 = vsel %vm4882, %v4873, %v4875
  %v4901 = vsel %vm4882, %v4877, %v4879
  %v4902 = vsel %vm4882, %v4879, %v4881
  %vm4933 = vcmask 1048320
  %4934 = vst.msk [vmem:[#allocation5 + $0x40] sm:$0xff] %vm4933, %v4823
  %4935 = vst [vmem:[#allocation5 + $0x48] sm:$0xff] %v4883
  %vm4936 = vcmask 982016
  %4937 = vst.msk [vmem:[#allocation5 + $0x50] sm:$0xff] %vm4936, %v4884
  %4938 = vst.msk [vmem:[#allocation5 + $0x98] sm:$0xff] %vm4933, %v4829
  %4939 = vst [vmem:[#allocation5 + $0xa0] sm:$0xff] %v4885
  %4940 = vst.msk [vmem:[#allocation5 + $0xa8] sm:$0xff] %vm4936, %v4886
  %4941 = vst.msk [vmem:[#allocation5 + $0xf0] sm:$0xff] %vm4933, %v4835
  %4942 = vst [vmem:[#allocation5 + $0xf8] sm:$0xff] %v4887
  %4943 = vst.msk [vmem:[#allocation5 + $0x100] sm:$0xff] %vm4936, %v4888
  %4944 = vst.msk [vmem:[#allocation5 + $0x148] sm:$0xff] %vm4933, %v4841
  %4945 = vst [vmem:[#allocation5 + $0x150] sm:$0xff] %v4889
  %4946 = vst.msk [vmem:[#allocation5 + $0x158] sm:$0xff] %vm4936, %v4890
  %4947 = vst.msk [vmem:[#allocation5 + $0x1a0] sm:$0xff] %vm4933, %v4847
  %4948 = vst [vmem:[#allocation5 + $0x1a8] sm:$0xff] %v4891
  %4949 = vst.msk [vmem:[#allocation5 + $0x1b0] sm:$0xff] %vm4936, %v4892
  %4950 = vst.msk [vmem:[#allocation5 + $0x1f8] sm:$0xff] %vm4933, %v4853
  %4951 = vst [vmem:[#allocation5 + $0x200] sm:$0xff] %v4893
  %4952 = vst.msk [vmem:[#allocation5 + $0x208] sm:$0xff] %vm4936, %v4894
  %4953 = vst.msk [vmem:[#allocation5 + $0x250] sm:$0xff] %vm4933, %v4859
  %4954 = vst [vmem:[#allocation5 + $0x258] sm:$0xff] %v4895
  %4955 = vst.msk [vmem:[#allocation5 + $0x260] sm:$0xff] %vm4936, %v4896
  %4956 = vst.msk [vmem:[#allocation5 + $0x2a8] sm:$0xff] %vm4933, %v4865
  %4957 = vst [vmem:[#allocation5 + $0x2b0] sm:$0xff] %v4897
  %4958 = vst.msk [vmem:[#allocation5 + $0x2b8] sm:$0xff] %vm4936, %v4898
  %4959 = vst.msk [vmem:[#allocation5 + $0x300] sm:$0xff] %vm4933, %v4871
  %4960 = vst [vmem:[#allocation5 + $0x308] sm:$0xff] %v4899
  %4961 = vst.msk [vmem:[#allocation5 + $0x310] sm:$0xff] %vm4936, %v4900
  %4962 = vst.msk [vmem:[#allocation5 + $0x358] sm:$0xff] %vm4933, %v4877
  %4963 = vst [vmem:[#allocation5 + $0x360] sm:$0xff] %v4901
  %4964 = vst.msk [vmem:[#allocation5 + $0x368] sm:$0xff] %vm4936, %v4902
  %v4965 = vld [vmem:[#allocation5] sm:$0xff]
  %v4966 = vld [vmem:[#allocation5 + $0x8] sm:$0xff]
  %v4967 = vld [vmem:[#allocation5 + $0x10] sm:$0xff]
  %v4968 = vld [vmem:[#allocation5 + $0x18] sm:$0xff]
  %v4969 = vld [vmem:[#allocation5 + $0x20] sm:$0xff]
  %v4970 = vld [vmem:[#allocation5 + $0x28] sm:$0xff]
  %v4971 = vld [vmem:[#allocation5 + $0x30] sm:$0xff]
  %v4972 = vld [vmem:[#allocation5 + $0x38] sm:$0xff]
  %v4973 = vld [vmem:[#allocation5 + $0x40] sm:$0xff]
  %v4974 = vld [vmem:[#allocation5 + $0x48] sm:$0xff]
  %v4975 = vld [vmem:[#allocation5 + $0x50] sm:$0xff]
  %v4976 = vld [vmem:[#allocation5 + $0x58] sm:$0xff]
  %v4977 = vld [vmem:[#allocation5 + $0x60] sm:$0xff]
  %v4978 = vld [vmem:[#allocation5 + $0x68] sm:$0xff]
  %v4979 = vld [vmem:[#allocation5 + $0x70] sm:$0xff]
  %v4980 = vld [vmem:[#allocation5 + $0x78] sm:$0xff]
  %v4981 = vld [vmem:[#allocation5 + $0x80] sm:$0xff]
  %v4982 = vld [vmem:[#allocation5 + $0x88] sm:$0xff]
  %v4983 = vld [vmem:[#allocation5 + $0x90] sm:$0xff]
  %v4984 = vld [vmem:[#allocation5 + $0x98] sm:$0xff]
  %v4985 = vld [vmem:[#allocation5 + $0xa0] sm:$0xff]
  %v4986 = vld [vmem:[#allocation5 + $0xa8] sm:$0xff]
  %v4987 = vld [vmem:[#allocation5 + $0xb0] sm:$0xff]
  %v4988 = vld [vmem:[#allocation5 + $0xb8] sm:$0xff]
  %v4989 = vld [vmem:[#allocation5 + $0xc0] sm:$0xff]
  %v4990 = vld [vmem:[#allocation5 + $0xc8] sm:$0xff]
  %v4991 = vld [vmem:[#allocation5 + $0xd0] sm:$0xff]
  %v4992 = vld [vmem:[#allocation5 + $0xd8] sm:$0xff]
  %v4993 = vld [vmem:[#allocation5 + $0xe0] sm:$0xff]
  %v4994 = vld [vmem:[#allocation5 + $0xe8] sm:$0xff]
  %v4995 = vld [vmem:[#allocation5 + $0xf0] sm:$0xff]
  %v4996 = vld [vmem:[#allocation5 + $0xf8] sm:$0xff]
  %v4997 = vld [vmem:[#allocation5 + $0x100] sm:$0xff]
  %v4998 = vld [vmem:[#allocation5 + $0x108] sm:$0xff]
  %v4999 = vld [vmem:[#allocation5 + $0x110] sm:$0xff]
  %v5000 = vld [vmem:[#allocation5 + $0x118] sm:$0xff]
  %v5001 = vld [vmem:[#allocation5 + $0x120] sm:$0xff]
  %v5002 = vld [vmem:[#allocation5 + $0x128] sm:$0xff]
  %v5003 = vld [vmem:[#allocation5 + $0x130] sm:$0xff]
  %v5004 = vld [vmem:[#allocation5 + $0x138] sm:$0xff]
  %v5005 = vld [vmem:[#allocation5 + $0x140] sm:$0xff]
  %v5006 = vld [vmem:[#allocation5 + $0x148] sm:$0xff]
  %v5007 = vld [vmem:[#allocation5 + $0x150] sm:$0xff]
  %v5008 = vld [vmem:[#allocation5 + $0x158] sm:$0xff]
  %v5009 = vld [vmem:[#allocation5 + $0x160] sm:$0xff]
  %v5010 = vld [vmem:[#allocation5 + $0x168] sm:$0xff]
  %v5011 = vld [vmem:[#allocation5 + $0x170] sm:$0xff]
  %v5012 = vld [vmem:[#allocation5 + $0x178] sm:$0xff]
  %v5013 = vld [vmem:[#allocation5 + $0x180] sm:$0xff]
  %v5014 = vld [vmem:[#allocation5 + $0x188] sm:$0xff]
  %v5015 = vld [vmem:[#allocation5 + $0x190] sm:$0xff]
  %v5016 = vld [vmem:[#allocation5 + $0x198] sm:$0xff]
  %v5017 = vld [vmem:[#allocation5 + $0x1a0] sm:$0xff]
  %v5018 = vld [vmem:[#allocation5 + $0x1a8] sm:$0xff]
  %v5019 = vld [vmem:[#allocation5 + $0x1b0] sm:$0xff]
  %v5020 = vld [vmem:[#allocation5 + $0x1b8] sm:$0xff]
  %v5021 = vld [vmem:[#allocation5 + $0x1c0] sm:$0xff]
  %v5022 = vld [vmem:[#allocation5 + $0x1c8] sm:$0xff]
  %v5023 = vld [vmem:[#allocation5 + $0x1d0] sm:$0xff]
  %v5024 = vld [vmem:[#allocation5 + $0x1d8] sm:$0xff]
  %v5025 = vld [vmem:[#allocation5 + $0x1e0] sm:$0xff]
  %v5026 = vld [vmem:[#allocation5 + $0x1e8] sm:$0xff]
  %v5027 = vld [vmem:[#allocation5 + $0x1f0] sm:$0xff]
  %v5028 = vld [vmem:[#allocation5 + $0x1f8] sm:$0xff]
  %v5029 = vld [vmem:[#allocation5 + $0x200] sm:$0xff]
  %v5030 = vld [vmem:[#allocation5 + $0x208] sm:$0xff]
  %v5031 = vld [vmem:[#allocation5 + $0x210] sm:$0xff]
  %v5032 = vld [vmem:[#allocation5 + $0x218] sm:$0xff]
  %v5033 = vld [vmem:[#allocation5 + $0x220] sm:$0xff]
  %v5034 = vld [vmem:[#allocation5 + $0x228] sm:$0xff]
  %v5035 = vld [vmem:[#allocation5 + $0x230] sm:$0xff]
  %v5036 = vld [vmem:[#allocation5 + $0x238] sm:$0xff]
  %v5037 = vld [vmem:[#allocation5 + $0x240] sm:$0xff]
  %v5038 = vld [vmem:[#allocation5 + $0x248] sm:$0xff]
  %v5039 = vld [vmem:[#allocation5 + $0x250] sm:$0xff]
  %v5040 = vld [vmem:[#allocation5 + $0x258] sm:$0xff]
  %v5041 = vld [vmem:[#allocation5 + $0x260] sm:$0xff]
  %v5042 = vld [vmem:[#allocation5 + $0x268] sm:$0xff]
  %v5043 = vld [vmem:[#allocation5 + $0x270] sm:$0xff]
  %v5044 = vld [vmem:[#allocation5 + $0x278] sm:$0xff]
  %v5045 = vld [vmem:[#allocation5 + $0x280] sm:$0xff]
  %v5046 = vld [vmem:[#allocation5 + $0x288] sm:$0xff]
  %v5047 = vld [vmem:[#allocation5 + $0x290] sm:$0xff]
  %v5048 = vld [vmem:[#allocation5 + $0x298] sm:$0xff]
  %v5049 = vld [vmem:[#allocation5 + $0x2a0] sm:$0xff]
  %v5050 = vld [vmem:[#allocation5 + $0x2a8] sm:$0xff]
  %v5051 = vld [vmem:[#allocation5 + $0x2b0] sm:$0xff]
  %v5052 = vld [vmem:[#allocation5 + $0x2b8] sm:$0xff]
  %v5053 = vld [vmem:[#allocation5 + $0x2c0] sm:$0xff]
  %v5054 = vld [vmem:[#allocation5 + $0x2c8] sm:$0xff]
  %v5055 = vld [vmem:[#allocation5 + $0x2d0] sm:$0xff]
  %v5056 = vld [vmem:[#allocation5 + $0x2d8] sm:$0xff]
  %v5057 = vld [vmem:[#allocation5 + $0x2e0] sm:$0xff]
  %v5058 = vld [vmem:[#allocation5 + $0x2e8] sm:$0xff]
  %v5059 = vld [vmem:[#allocation5 + $0x2f0] sm:$0xff]
  %v5060 = vld [vmem:[#allocation5 + $0x2f8] sm:$0xff]
  %v5061 = vld [vmem:[#allocation5 + $0x300] sm:$0xff]
  %v5062 = vld [vmem:[#allocation5 + $0x308] sm:$0xff]
  %v5063 = vld [vmem:[#allocation5 + $0x310] sm:$0xff]
  %v5064 = vld [vmem:[#allocation5 + $0x318] sm:$0xff]
  %v5065 = vld [vmem:[#allocation5 + $0x320] sm:$0xff]
  %v5066 = vld [vmem:[#allocation5 + $0x328] sm:$0xff]
  %v5067 = vld [vmem:[#allocation5 + $0x330] sm:$0xff]
  %v5068 = vld [vmem:[#allocation5 + $0x338] sm:$0xff]
  %v5069 = vld [vmem:[#allocation5 + $0x340] sm:$0xff]
  %v5070 = vld [vmem:[#allocation5 + $0x348] sm:$0xff]
  %v5071 = vld [vmem:[#allocation5 + $0x350] sm:$0xff]
  %v5072 = vld [vmem:[#allocation5 + $0x358] sm:$0xff]
  %v5073 = vld [vmem:[#allocation5 + $0x360] sm:$0xff]
  %v5074 = vld [vmem:[#allocation5 + $0x368] sm:$0xff]
  %v5075 = vld [vmem:[%s3] sm:$0xff]
  %v5076 = vld [vmem:[%s3 + $0x8] sm:$0xff]
  %v5077 = vld [vmem:[%s3 + $0x10] sm:$0xff]
  %v5078 = vld [vmem:[%s3 + $0x18] sm:$0xff]
  %v5079 = vld [vmem:[%s3 + $0x20] sm:$0xff]
  %v5080 = vld [vmem:[%s3 + $0x28] sm:$0xff]
  %v5081 = vld [vmem:[%s3 + $0x30] sm:$0xff]
  %v5082 = vld [vmem:[%s3 + $0x38] sm:$0xff]
  %v5083 = vld [vmem:[%s3 + $0x40] sm:$0xff]
  %v5084 = vld [vmem:[%s3 + $0x48] sm:$0xff]
  %v5085 = vld [vmem:[%s3 + $0x50] sm:$0xff]
  %v5086 = vld [vmem:[%s3 + $0x58] sm:$0xff]
  %v5087 = vld [vmem:[%s3 + $0x60] sm:$0xff]
  %v5088 = vld [vmem:[%s3 + $0x68] sm:$0xff]
  %v5089 = vld [vmem:[%s3 + $0x70] sm:$0xff]
  %v5090 = vld [vmem:[%s3 + $0x78] sm:$0xff]
  %v5091 = vld [vmem:[%s3 + $0x80] sm:$0xff]
  %v5092 = vld [vmem:[%s3 + $0x88] sm:$0xff]
  %v5093 = vld [vmem:[%s3 + $0x90] sm:$0xff]
  %v5094 = vld [vmem:[%s3 + $0x98] sm:$0xff]
  %v5095 = vld [vmem:[%s3 + $0xa0] sm:$0xff]
  %v5096 = vld [vmem:[%s3 + $0xa8] sm:$0xff]
  %v5097 = vld [vmem:[%s3 + $0xb0] sm:$0xff]
  %v5098 = vld [vmem:[%s3 + $0xb8] sm:$0xff]
  %v5099 = vld [vmem:[%s3 + $0xc0] sm:$0xff]
  %v5100 = vld [vmem:[%s3 + $0xc8] sm:$0xff]
  %v5101 = vld [vmem:[%s3 + $0xd0] sm:$0xff]
  %v5102 = vld [vmem:[%s3 + $0xd8] sm:$0xff]
  %v5103 = vld [vmem:[%s3 + $0xe0] sm:$0xff]
  %v5104 = vld [vmem:[%s3 + $0xe8] sm:$0xff]
  %v5105 = vld [vmem:[%s3 + $0xf0] sm:$0xff]
  %v5106 = vld [vmem:[%s3 + $0xf8] sm:$0xff]
  %v5107 = vld [vmem:[%s3 + $0x100] sm:$0xff]
  %v5108 = vld [vmem:[%s3 + $0x108] sm:$0xff]
  %v5109 = vld [vmem:[%s3 + $0x110] sm:$0xff]
  %v5110 = vld [vmem:[%s3 + $0x118] sm:$0xff]
  %v5111 = vld [vmem:[%s3 + $0x120] sm:$0xff]
  %v5112 = vld [vmem:[%s3 + $0x128] sm:$0xff]
  %v5113 = vld [vmem:[%s3 + $0x130] sm:$0xff]
  %v5114 = vld [vmem:[%s3 + $0x138] sm:$0xff]
  %v5115 = vld [vmem:[%s3 + $0x140] sm:$0xff]
  %v5116 = vld [vmem:[%s3 + $0x148] sm:$0xff]
  %v5117 = vld [vmem:[%s3 + $0x150] sm:$0xff]
  %v5118 = vld [vmem:[%s3 + $0x158] sm:$0xff]
  %v5119 = vld [vmem:[%s3 + $0x160] sm:$0xff]
  %v5120 = vld [vmem:[%s3 + $0x168] sm:$0xff]
  %v5121 = vld [vmem:[%s3 + $0x170] sm:$0xff]
  %v5122 = vld [vmem:[%s3 + $0x178] sm:$0xff]
  %v5123 = vld [vmem:[%s3 + $0x180] sm:$0xff]
  %v5124 = vld [vmem:[%s3 + $0x188] sm:$0xff]
  %v5125 = vld [vmem:[%s3 + $0x190] sm:$0xff]
  %v5126 = vld [vmem:[%s3 + $0x198] sm:$0xff]
  %v5127 = vld [vmem:[%s3 + $0x1a0] sm:$0xff]
  %v5128 = vld [vmem:[%s3 + $0x1a8] sm:$0xff]
  %v5129 = vld [vmem:[%s3 + $0x1b0] sm:$0xff]
  %v5130 = vld [vmem:[%s3 + $0x1b8] sm:$0xff]
  %v5131 = vld [vmem:[%s3 + $0x1c0] sm:$0xff]
  %v5132 = vld [vmem:[%s3 + $0x1c8] sm:$0xff]
  %v5133 = vld [vmem:[%s3 + $0x1d0] sm:$0xff]
  %v5134 = vld [vmem:[%s3 + $0x1d8] sm:$0xff]
  %v5135 = vld [vmem:[%s3 + $0x1e0] sm:$0xff]
  %v5136 = vld [vmem:[%s3 + $0x1e8] sm:$0xff]
  %v5137 = vld [vmem:[%s3 + $0x1f0] sm:$0xff]
  %v5138 = vld [vmem:[%s3 + $0x1f8] sm:$0xff]
  %v5139 = vld [vmem:[%s3 + $0x200] sm:$0xff]
  %v5140 = vld [vmem:[%s3 + $0x208] sm:$0xff]
  %v5141 = vld [vmem:[%s3 + $0x210] sm:$0xff]
  %v5142 = vld [vmem:[%s3 + $0x218] sm:$0xff]
  %v5143 = vld [vmem:[%s3 + $0x220] sm:$0xff]
  %v5144 = vld [vmem:[%s3 + $0x228] sm:$0xff]
  %v5145 = vld [vmem:[%s3 + $0x230] sm:$0xff]
  %v5146 = vld [vmem:[%s3 + $0x238] sm:$0xff]
  %v5147 = vld [vmem:[%s3 + $0x240] sm:$0xff]
  %v5148 = vld [vmem:[%s3 + $0x248] sm:$0xff]
  %v5149 = vld [vmem:[%s3 + $0x250] sm:$0xff]
  %v5150 = vld [vmem:[%s3 + $0x258] sm:$0xff]
  %v5151 = vld [vmem:[%s3 + $0x260] sm:$0xff]
  %v5152 = vld [vmem:[%s3 + $0x268] sm:$0xff]
  %v5153 = vld [vmem:[%s3 + $0x270] sm:$0xff]
  %v5154 = vld [vmem:[%s3 + $0x278] sm:$0xff]
  %v5155 = vld [vmem:[%s3 + $0x280] sm:$0xff]
  %v5156 = vld [vmem:[%s3 + $0x288] sm:$0xff]
  %v5157 = vld [vmem:[%s3 + $0x290] sm:$0xff]
  %v5158 = vld [vmem:[%s3 + $0x298] sm:$0xff]
  %v5159 = vld [vmem:[%s3 + $0x2a0] sm:$0xff]
  %v5160 = vld [vmem:[%s3 + $0x2a8] sm:$0xff]
  %v5161 = vld [vmem:[%s3 + $0x2b0] sm:$0xff]
  %v5162 = vld [vmem:[%s3 + $0x2b8] sm:$0xff]
  %v5163 = vld [vmem:[%s3 + $0x2c0] sm:$0xff]
  %v5164 = vld [vmem:[%s3 + $0x2c8] sm:$0xff]
  %v5165 = vld [vmem:[%s3 + $0x2d0] sm:$0xff]
  %v5166 = vld [vmem:[%s3 + $0x2d8] sm:$0xff]
  %v5167 = vld [vmem:[%s3 + $0x2e0] sm:$0xff]
  %v5168 = vld [vmem:[%s3 + $0x2e8] sm:$0xff]
  %v5169 = vld [vmem:[%s3 + $0x2f0] sm:$0xff]
  %v5170 = vld [vmem:[%s3 + $0x2f8] sm:$0xff]
  %v5171 = vld [vmem:[%s3 + $0x300] sm:$0xff]
  %v5172 = vld [vmem:[%s3 + $0x308] sm:$0xff]
  %v5173 = vld [vmem:[%s3 + $0x310] sm:$0xff]
  %v5174 = vld [vmem:[%s3 + $0x318] sm:$0xff]
  %v5175 = vld [vmem:[%s3 + $0x320] sm:$0xff]
  %v5176 = vld [vmem:[%s3 + $0x328] sm:$0xff]
  %v5177 = vld [vmem:[%s3 + $0x330] sm:$0xff]
  %v5178 = vld [vmem:[%s3 + $0x338] sm:$0xff]
  %v5179 = vld [vmem:[%s3 + $0x340] sm:$0xff]
  %v5180 = vld [vmem:[%s3 + $0x348] sm:$0xff]
  %v5181 = vld [vmem:[%s3 + $0x350] sm:$0xff]
  %v5182 = vld [vmem:[%s3 + $0x358] sm:$0xff]
  %v5183 = vld [vmem:[%s3 + $0x360] sm:$0xff]
  %v5184 = vld [vmem:[%s3 + $0x368] sm:$0xff]
  %v5185 = vld [vmem:[%s3 + $0x370] sm:$0xff]
  %v5186 = vld [vmem:[%s3 + $0x378] sm:$0xff]
  %v5187 = vld [vmem:[%s3 + $0x380] sm:$0xff]
  %v5188 = vld [vmem:[%s3 + $0x388] sm:$0xff]
  %v5189 = vld [vmem:[%s3 + $0x390] sm:$0xff]
  %v5190 = vld [vmem:[%s3 + $0x398] sm:$0xff]
  %v5191 = vld [vmem:[%s3 + $0x3a0] sm:$0xff]
  %v5192 = vld [vmem:[%s3 + $0x3a8] sm:$0xff]
  %v5193 = vld [vmem:[%s3 + $0x3b0] sm:$0xff]
  %v5194 = vld [vmem:[%s3 + $0x3b8] sm:$0xff]
  %v5195 = vld [vmem:[%s3 + $0x3c0] sm:$0xff]
  %v5196 = vld [vmem:[%s3 + $0x3c8] sm:$0xff]
  %v5197 = vld [vmem:[%s3 + $0x3d0] sm:$0xff]
  %v5198 = vld [vmem:[%s3 + $0x3d8] sm:$0xff]
  %v5199 = vld [vmem:[%s3 + $0x3e0] sm:$0xff]
  %v5200 = vld [vmem:[%s3 + $0x3e8] sm:$0xff]
  %v5201 = vld [vmem:[%s3 + $0x3f0] sm:$0xff]
  %v5202 = vld [vmem:[%s3 + $0x3f8] sm:$0xff]
  %v5203 = vld [vmem:[%s3 + $0x400] sm:$0xff]
  %v5204 = vld [vmem:[%s3 + $0x408] sm:$0xff]
  %v5205 = vld [vmem:[%s3 + $0x410] sm:$0xff]
  %v5206 = vld [vmem:[%s3 + $0x418] sm:$0xff]
  %v5207 = vld [vmem:[%s3 + $0x420] sm:$0xff]
  %v5208 = vld [vmem:[%s3 + $0x428] sm:$0xff]
  %v5209 = vld [vmem:[%s3 + $0x430] sm:$0xff]
  %v5210 = vld [vmem:[%s3 + $0x438] sm:$0xff]
  %v5211 = vld [vmem:[%s3 + $0x440] sm:$0xff]
  %v5212 = vld [vmem:[%s3 + $0x448] sm:$0xff]
  %v5213 = vld [vmem:[%s3 + $0x450] sm:$0xff]
  %v5214 = vld [vmem:[%s3 + $0x458] sm:$0xff]
  %v5215 = vld [vmem:[%s3 + $0x460] sm:$0xff]
  %v5216 = vld [vmem:[%s3 + $0x468] sm:$0xff]
  %v5217 = vld [vmem:[%s3 + $0x470] sm:$0xff]
  %v5218 = vld [vmem:[%s3 + $0x478] sm:$0xff]
  %v5219 = vld [vmem:[%s3 + $0x480] sm:$0xff]
  %v5220 = vld [vmem:[%s3 + $0x488] sm:$0xff]
  %v5221 = vld [vmem:[%s3 + $0x490] sm:$0xff]
  %v5222 = vld [vmem:[%s3 + $0x498] sm:$0xff]
  %v5223 = vld [vmem:[%s3 + $0x4a0] sm:$0xff]
  %v5224 = vld [vmem:[%s3 + $0x4a8] sm:$0xff]
  %v5225 = vld [vmem:[%s3 + $0x4b0] sm:$0xff]
  %v5226 = vld [vmem:[%s3 + $0x4b8] sm:$0xff]
  %v5227 = vld [vmem:[%s3 + $0x4c0] sm:$0xff]
  %v5228 = vld [vmem:[%s3 + $0x4c8] sm:$0xff]
  %v5229 = vld [vmem:[%s3 + $0x4d0] sm:$0xff]
  %v5230 = vld [vmem:[%s3 + $0x4d8] sm:$0xff]
  %v5231 = vld [vmem:[%s3 + $0x4e0] sm:$0xff]
  %v5232 = vld [vmem:[%s3 + $0x4e8] sm:$0xff]
  %v5233 = vld [vmem:[%s3 + $0x4f0] sm:$0xff]
  %v5234 = vld [vmem:[%s3 + $0x4f8] sm:$0xff]
  %v5235 = vld [vmem:[%s3 + $0x500] sm:$0xff]
  %v5236 = vld [vmem:[%s3 + $0x508] sm:$0xff]
  %v5237 = vld [vmem:[%s3 + $0x510] sm:$0xff]
  %v5238 = vld [vmem:[%s3 + $0x518] sm:$0xff]
  %v5239 = vld [vmem:[%s3 + $0x520] sm:$0xff]
  %v5240 = vld [vmem:[%s3 + $0x528] sm:$0xff]
  %v5241 = vld [vmem:[%s3 + $0x530] sm:$0xff]
  %v5242 = vld [vmem:[%s3 + $0x538] sm:$0xff]
  %v5243 = vld [vmem:[%s3 + $0x540] sm:$0xff]
  %v5244 = vld [vmem:[%s3 + $0x548] sm:$0xff]
  %v5245 = vld [vmem:[%s3 + $0x550] sm:$0xff]
  %v5246 = vld [vmem:[%s3 + $0x558] sm:$0xff]
  %v5247 = vld [vmem:[%s3 + $0x560] sm:$0xff]
  %v5248 = vld [vmem:[%s3 + $0x568] sm:$0xff]
  %v5249 = vld [vmem:[%s3 + $0x570] sm:$0xff]
  %v5425 = vunpack.c.l.b16 %v5075
  %v5426 = vunpack.c.h.b16 %v5075
  %v5427 = vunpack.c.l.b16 %v5076
  %v5428 = vunpack.c.h.b16 %v5076
  %v5429 = vunpack.c.l.b16 %v5077
  %v5430 = vunpack.c.h.b16 %v5077
  %v5431 = vunpack.c.l.b16 %v5078
  %v5432 = vunpack.c.h.b16 %v5078
  %v5433 = vunpack.c.l.b16 %v5079
  %v5434 = vunpack.c.h.b16 %v5079
  %v5435 = vunpack.c.l.b16 %v5080
  %v5436 = vunpack.c.h.b16 %v5080
  %v5437 = vunpack.c.l.b16 %v5081
  %v5438 = vunpack.c.h.b16 %v5081
  %v5439 = vunpack.c.l.b16 %v5082
  %v5440 = vunpack.c.h.b16 %v5082
  %v5441 = vunpack.c.l.b16 %v5083
  %v5442 = vunpack.c.h.b16 %v5083
  %v5443 = vunpack.c.l.b16 %v5084
  %v5444 = vunpack.c.h.b16 %v5084
  %v5445 = vunpack.c.l.b16 %v5085
  %v5446 = vunpack.c.h.b16 %v5085
  %v5447 = vunpack.c.l.b16 %v5086
  %v5448 = vunpack.c.h.b16 %v5086
  %v5449 = vunpack.c.l.b16 %v5087
  %v5450 = vunpack.c.h.b16 %v5087
  %v5451 = vunpack.c.l.b16 %v5088
  %v5452 = vunpack.c.h.b16 %v5088
  %v5453 = vunpack.c.l.b16 %v5089
  %v5454 = vunpack.c.h.b16 %v5089
  %v5455 = vunpack.c.l.b16 %v5090
  %v5456 = vunpack.c.h.b16 %v5090
  %v5457 = vunpack.c.l.b16 %v5091
  %v5458 = vunpack.c.h.b16 %v5091
  %v5459 = vunpack.c.l.b16 %v5092
  %v5460 = vunpack.c.h.b16 %v5092
  %v5461 = vunpack.c.l.b16 %v5093
  %v5462 = vunpack.c.h.b16 %v5093
  %v5463 = vunpack.c.l.b16 %v5094
  %v5464 = vunpack.c.h.b16 %v5094
  %v5465 = vunpack.c.l.b16 %v5095
  %v5466 = vunpack.c.h.b16 %v5095
  %v5467 = vunpack.c.l.b16 %v5096
  %v5468 = vunpack.c.h.b16 %v5096
  %v5469 = vunpack.c.l.b16 %v5097
  %v5470 = vunpack.c.h.b16 %v5097
  %v5471 = vunpack.c.l.b16 %v5098
  %v5472 = vunpack.c.h.b16 %v5098
  %v5473 = vunpack.c.l.b16 %v5099
  %v5474 = vunpack.c.h.b16 %v5099
  %v5475 = vunpack.c.l.b16 %v5100
  %v5476 = vunpack.c.h.b16 %v5100
  %v5477 = vunpack.c.l.b16 %v5101
  %v5478 = vunpack.c.h.b16 %v5101
  %v5479 = vunpack.c.l.b16 %v5102
  %v5480 = vunpack.c.h.b16 %v5102
  %v5481 = vunpack.c.l.b16 %v5103
  %v5482 = vunpack.c.h.b16 %v5103
  %v5483 = vunpack.c.l.b16 %v5104
  %v5484 = vunpack.c.h.b16 %v5104
  %v5485 = vunpack.c.l.b16 %v5105
  %v5486 = vunpack.c.h.b16 %v5105
  %v5487 = vunpack.c.l.b16 %v5106
  %v5488 = vunpack.c.h.b16 %v5106
  %v5489 = vunpack.c.l.b16 %v5107
  %v5490 = vunpack.c.h.b16 %v5107
  %v5491 = vunpack.c.l.b16 %v5108
  %v5492 = vunpack.c.h.b16 %v5108
  %v5493 = vunpack.c.l.b16 %v5109
  %v5494 = vunpack.c.h.b16 %v5109
  %v5495 = vunpack.c.l.b16 %v5110
  %v5496 = vunpack.c.h.b16 %v5110
  %v5497 = vunpack.c.l.b16 %v5111
  %v5498 = vunpack.c.h.b16 %v5111
  %v5499 = vunpack.c.l.b16 %v5112
  %v5500 = vunpack.c.h.b16 %v5112
  %v5501 = vunpack.c.l.b16 %v5113
  %v5502 = vunpack.c.h.b16 %v5113
  %v5503 = vunpack.c.l.b16 %v5114
  %v5504 = vunpack.c.h.b16 %v5114
  %v5505 = vunpack.c.l.b16 %v5115
  %v5506 = vunpack.c.h.b16 %v5115
  %v5507 = vunpack.c.l.b16 %v5116
  %v5508 = vunpack.c.h.b16 %v5116
  %v5509 = vunpack.c.l.b16 %v5117
  %v5510 = vunpack.c.h.b16 %v5117
  %v5511 = vunpack.c.l.b16 %v5118
  %v5512 = vunpack.c.h.b16 %v5118
  %v5513 = vunpack.c.l.b16 %v5119
  %v5514 = vunpack.c.h.b16 %v5119
  %v5515 = vunpack.c.l.b16 %v5120
  %v5516 = vunpack.c.h.b16 %v5120
  %v5517 = vunpack.c.l.b16 %v5121
  %v5518 = vunpack.c.h.b16 %v5121
  %v5519 = vunpack.c.l.b16 %v5122
  %v5520 = vunpack.c.h.b16 %v5122
  %v5521 = vunpack.c.l.b16 %v5123
  %v5522 = vunpack.c.h.b16 %v5123
  %v5523 = vunpack.c.l.b16 %v5124
  %v5524 = vunpack.c.h.b16 %v5124
  %v5525 = vunpack.c.l.b16 %v5125
  %v5526 = vunpack.c.h.b16 %v5125
  %v5527 = vunpack.c.l.b16 %v5126
  %v5528 = vunpack.c.h.b16 %v5126
  %v5529 = vunpack.c.l.b16 %v5127
  %v5530 = vunpack.c.h.b16 %v5127
  %v5531 = vunpack.c.l.b16 %v5128
  %v5532 = vunpack.c.h.b16 %v5128
  %v5533 = vunpack.c.l.b16 %v5129
  %v5534 = vunpack.c.h.b16 %v5129
  %v5535 = vunpack.c.l.b16 %v5130
  %v5536 = vunpack.c.h.b16 %v5130
  %v5537 = vunpack.c.l.b16 %v5131
  %v5538 = vunpack.c.h.b16 %v5131
  %v5539 = vunpack.c.l.b16 %v5132
  %v5540 = vunpack.c.h.b16 %v5132
  %v5541 = vunpack.c.l.b16 %v5133
  %v5542 = vunpack.c.h.b16 %v5133
  %v5543 = vunpack.c.l.b16 %v5134
  %v5544 = vunpack.c.h.b16 %v5134
  %v5545 = vunpack.c.l.b16 %v5135
  %v5546 = vunpack.c.h.b16 %v5135
  %v5547 = vunpack.c.l.b16 %v5136
  %v5548 = vunpack.c.h.b16 %v5136
  %v5549 = vunpack.c.l.b16 %v5137
  %v5550 = vunpack.c.h.b16 %v5137
  %v5551 = vunpack.c.l.b16 %v5138
  %v5552 = vunpack.c.h.b16 %v5138
  %v5553 = vunpack.c.l.b16 %v5139
  %v5554 = vunpack.c.h.b16 %v5139
  %v5555 = vunpack.c.l.b16 %v5140
  %v5556 = vunpack.c.h.b16 %v5140
  %v5557 = vunpack.c.l.b16 %v5141
  %v5558 = vunpack.c.h.b16 %v5141
  %v5559 = vunpack.c.l.b16 %v5142
  %v5560 = vunpack.c.h.b16 %v5142
  %v5561 = vunpack.c.l.b16 %v5143
  %v5562 = vunpack.c.h.b16 %v5143
  %v5563 = vunpack.c.l.b16 %v5144
  %v5564 = vunpack.c.h.b16 %v5144
  %v5565 = vunpack.c.l.b16 %v5145
  %v5566 = vunpack.c.h.b16 %v5145
  %v5567 = vunpack.c.l.b16 %v5146
  %v5568 = vunpack.c.h.b16 %v5146
  %v5569 = vunpack.c.l.b16 %v5147
  %v5570 = vunpack.c.h.b16 %v5147
  %v5571 = vunpack.c.l.b16 %v5148
  %v5572 = vunpack.c.h.b16 %v5148
  %v5573 = vunpack.c.l.b16 %v5149
  %v5574 = vunpack.c.h.b16 %v5149
  %v5575 = vunpack.c.l.b16 %v5150
  %v5576 = vunpack.c.h.b16 %v5150
  %v5577 = vunpack.c.l.b16 %v5151
  %v5578 = vunpack.c.h.b16 %v5151
  %v5579 = vunpack.c.l.b16 %v5152
  %v5580 = vunpack.c.h.b16 %v5152
  %v5581 = vunpack.c.l.b16 %v5153
  %v5582 = vunpack.c.h.b16 %v5153
  %v5583 = vunpack.c.l.b16 %v5154
  %v5584 = vunpack.c.h.b16 %v5154
  %v5585 = vunpack.c.l.b16 %v5155
  %v5586 = vunpack.c.h.b16 %v5155
  %v5587 = vunpack.c.l.b16 %v5156
  %v5588 = vunpack.c.h.b16 %v5156
  %v5589 = vunpack.c.l.b16 %v5157
  %v5590 = vunpack.c.h.b16 %v5157
  %v5591 = vunpack.c.l.b16 %v5158
  %v5592 = vunpack.c.h.b16 %v5158
  %v5593 = vunpack.c.l.b16 %v5159
  %v5594 = vunpack.c.h.b16 %v5159
  %v5595 = vunpack.c.l.b16 %v5160
  %v5596 = vunpack.c.h.b16 %v5160
  %v5597 = vunpack.c.l.b16 %v5161
  %v5598 = vunpack.c.h.b16 %v5161
  %v5599 = vunpack.c.l.b16 %v5162
  %v5600 = vunpack.c.h.b16 %v5162
  %v5601 = vunpack.c.l.b16 %v5163
  %v5602 = vunpack.c.h.b16 %v5163
  %v5603 = vunpack.c.l.b16 %v5164
  %v5604 = vunpack.c.h.b16 %v5164
  %v5605 = vunpack.c.l.b16 %v5165
  %v5606 = vunpack.c.h.b16 %v5165
  %v5607 = vunpack.c.l.b16 %v5166
  %v5608 = vunpack.c.h.b16 %v5166
  %v5609 = vunpack.c.l.b16 %v5167
  %v5610 = vunpack.c.h.b16 %v5167
  %v5611 = vunpack.c.l.b16 %v5168
  %v5612 = vunpack.c.h.b16 %v5168
  %v5613 = vunpack.c.l.b16 %v5169
  %v5614 = vunpack.c.h.b16 %v5169
  %v5615 = vunpack.c.l.b16 %v5170
  %v5616 = vunpack.c.h.b16 %v5170
  %v5617 = vunpack.c.l.b16 %v5171
  %v5618 = vunpack.c.h.b16 %v5171
  %v5619 = vunpack.c.l.b16 %v5172
  %v5620 = vunpack.c.h.b16 %v5172
  %v5621 = vunpack.c.l.b16 %v5173
  %v5622 = vunpack.c.h.b16 %v5173
  %v5623 = vunpack.c.l.b16 %v5174
  %v5624 = vunpack.c.h.b16 %v5174
  %v5625 = vunpack.c.l.b16 %v5175
  %v5626 = vunpack.c.h.b16 %v5175
  %v5627 = vunpack.c.l.b16 %v5176
  %v5628 = vunpack.c.h.b16 %v5176
  %v5629 = vunpack.c.l.b16 %v5177
  %v5630 = vunpack.c.h.b16 %v5177
  %v5631 = vunpack.c.l.b16 %v5178
  %v5632 = vunpack.c.h.b16 %v5178
  %v5633 = vunpack.c.l.b16 %v5179
  %v5634 = vunpack.c.h.b16 %v5179
  %v5635 = vunpack.c.l.b16 %v5180
  %v5636 = vunpack.c.h.b16 %v5180
  %v5637 = vunpack.c.l.b16 %v5181
  %v5638 = vunpack.c.h.b16 %v5181
  %v5639 = vunpack.c.l.b16 %v5182
  %v5640 = vunpack.c.h.b16 %v5182
  %v5641 = vunpack.c.l.b16 %v5183
  %v5642 = vunpack.c.h.b16 %v5183
  %v5643 = vunpack.c.l.b16 %v5184
  %v5644 = vunpack.c.h.b16 %v5184
  %v5645 = vunpack.c.l.b16 %v5185
  %v5646 = vunpack.c.h.b16 %v5185
  %v5647 = vunpack.c.l.b16 %v5186
  %v5648 = vunpack.c.h.b16 %v5186
  %v5649 = vunpack.c.l.b16 %v5187
  %v5650 = vunpack.c.h.b16 %v5187
  %v5651 = vunpack.c.l.b16 %v5188
  %v5652 = vunpack.c.h.b16 %v5188
  %v5653 = vunpack.c.l.b16 %v5189
  %v5654 = vunpack.c.h.b16 %v5189
  %v5655 = vunpack.c.l.b16 %v5190
  %v5656 = vunpack.c.h.b16 %v5190
  %v5657 = vunpack.c.l.b16 %v5191
  %v5658 = vunpack.c.h.b16 %v5191
  %v5659 = vunpack.c.l.b16 %v5192
  %v5660 = vunpack.c.h.b16 %v5192
  %v5661 = vunpack.c.l.b16 %v5193
  %v5662 = vunpack.c.h.b16 %v5193
  %v5663 = vunpack.c.l.b16 %v5194
  %v5664 = vunpack.c.h.b16 %v5194
  %v5665 = vunpack.c.l.b16 %v5195
  %v5666 = vunpack.c.h.b16 %v5195
  %v5667 = vunpack.c.l.b16 %v5196
  %v5668 = vunpack.c.h.b16 %v5196
  %v5669 = vunpack.c.l.b16 %v5197
  %v5670 = vunpack.c.h.b16 %v5197
  %v5671 = vunpack.c.l.b16 %v5198
  %v5672 = vunpack.c.h.b16 %v5198
  %v5673 = vunpack.c.l.b16 %v5199
  %v5674 = vunpack.c.h.b16 %v5199
  %v5675 = vunpack.c.l.b16 %v5200
  %v5676 = vunpack.c.h.b16 %v5200
  %v5677 = vunpack.c.l.b16 %v5201
  %v5678 = vunpack.c.h.b16 %v5201
  %v5679 = vunpack.c.l.b16 %v5202
  %v5680 = vunpack.c.h.b16 %v5202
  %v5681 = vunpack.c.l.b16 %v5203
  %v5682 = vunpack.c.h.b16 %v5203
  %v5683 = vunpack.c.l.b16 %v5204
  %v5684 = vunpack.c.h.b16 %v5204
  %v5685 = vunpack.c.l.b16 %v5205
  %v5686 = vunpack.c.h.b16 %v5205
  %v5687 = vunpack.c.l.b16 %v5206
  %v5688 = vunpack.c.h.b16 %v5206
  %v5689 = vunpack.c.l.b16 %v5207
  %v5690 = vunpack.c.h.b16 %v5207
  %v5691 = vunpack.c.l.b16 %v5208
  %v5692 = vunpack.c.h.b16 %v5208
  %v5693 = vunpack.c.l.b16 %v5209
  %v5694 = vunpack.c.h.b16 %v5209
  %v5695 = vunpack.c.l.b16 %v5210
  %v5696 = vunpack.c.h.b16 %v5210
  %v5697 = vunpack.c.l.b16 %v5211
  %v5698 = vunpack.c.h.b16 %v5211
  %v5699 = vunpack.c.l.b16 %v5212
  %v5700 = vunpack.c.h.b16 %v5212
  %v5701 = vunpack.c.l.b16 %v5213
  %v5702 = vunpack.c.h.b16 %v5213
  %v5703 = vunpack.c.l.b16 %v5214
  %v5704 = vunpack.c.h.b16 %v5214
  %v5705 = vunpack.c.l.b16 %v5215
  %v5706 = vunpack.c.h.b16 %v5215
  %v5707 = vunpack.c.l.b16 %v5216
  %v5708 = vunpack.c.h.b16 %v5216
  %v5709 = vunpack.c.l.b16 %v5217
  %v5710 = vunpack.c.h.b16 %v5217
  %v5711 = vunpack.c.l.b16 %v5218
  %v5712 = vunpack.c.h.b16 %v5218
  %v5713 = vunpack.c.l.b16 %v5219
  %v5714 = vunpack.c.h.b16 %v5219
  %v5715 = vunpack.c.l.b16 %v5220
  %v5716 = vunpack.c.h.b16 %v5220
  %v5717 = vunpack.c.l.b16 %v5221
  %v5718 = vunpack.c.h.b16 %v5221
  %v5719 = vunpack.c.l.b16 %v5222
  %v5720 = vunpack.c.h.b16 %v5222
  %v5721 = vunpack.c.l.b16 %v5223
  %v5722 = vunpack.c.h.b16 %v5223
  %v5723 = vunpack.c.l.b16 %v5224
  %v5724 = vunpack.c.h.b16 %v5224
  %v5725 = vunpack.c.l.b16 %v5225
  %v5726 = vunpack.c.h.b16 %v5225
  %v5727 = vunpack.c.l.b16 %v5226
  %v5728 = vunpack.c.h.b16 %v5226
  %v5729 = vunpack.c.l.b16 %v5227
  %v5730 = vunpack.c.h.b16 %v5227
  %v5731 = vunpack.c.l.b16 %v5228
  %v5732 = vunpack.c.h.b16 %v5228
  %v5733 = vunpack.c.l.b16 %v5229
  %v5734 = vunpack.c.h.b16 %v5229
  %v5735 = vunpack.c.l.b16 %v5230
  %v5736 = vunpack.c.h.b16 %v5230
  %v5737 = vunpack.c.l.b16 %v5231
  %v5738 = vunpack.c.h.b16 %v5231
  %v5739 = vunpack.c.l.b16 %v5232
  %v5740 = vunpack.c.h.b16 %v5232
  %v5741 = vunpack.c.l.b16 %v5233
  %v5742 = vunpack.c.h.b16 %v5233
  %v5743 = vunpack.c.l.b16 %v5234
  %v5744 = vunpack.c.h.b16 %v5234
  %v5745 = vunpack.c.l.b16 %v5235
  %v5746 = vunpack.c.h.b16 %v5235
  %v5747 = vunpack.c.l.b16 %v5236
  %v5748 = vunpack.c.h.b16 %v5236
  %v5749 = vunpack.c.l.b16 %v5237
  %v5750 = vunpack.c.h.b16 %v5237
  %v5751 = vunpack.c.l.b16 %v5238
  %v5752 = vunpack.c.h.b16 %v5238
  %v5753 = vunpack.c.l.b16 %v5239
  %v5754 = vunpack.c.h.b16 %v5239
  %v5755 = vunpack.c.l.b16 %v5240
  %v5756 = vunpack.c.h.b16 %v5240
  %v5757 = vunpack.c.l.b16 %v5241
  %v5758 = vunpack.c.h.b16 %v5241
  %v5759 = vunpack.c.l.b16 %v5242
  %v5760 = vunpack.c.h.b16 %v5242
  %v5761 = vunpack.c.l.b16 %v5243
  %v5762 = vunpack.c.h.b16 %v5243
  %v5763 = vunpack.c.l.b16 %v5244
  %v5764 = vunpack.c.h.b16 %v5244
  %v5765 = vunpack.c.l.b16 %v5245
  %v5766 = vunpack.c.h.b16 %v5245
  %v5767 = vunpack.c.l.b16 %v5246
  %v5768 = vunpack.c.h.b16 %v5246
  %v5769 = vunpack.c.l.b16 %v5247
  %v5770 = vunpack.c.h.b16 %v5247
  %v5771 = vunpack.c.l.b16 %v5248
  %v5772 = vunpack.c.h.b16 %v5248
  %v5773 = vunpack.c.l.b16 %v5249
  %v5774 = vunpack.c.h.b16 %v5249
  %v5775 = vpack.c.b16 %v5427, %v5425
  %v5776 = vpack.c.b16 %v5428, %v5426
  %v5777 = vpack.c.b16 %v5431, %v5429
  %v5778 = vpack.c.b16 %v5432, %v5430
  %v5779 = vpack.c.b16 %v5435, %v5433
  %v5780 = vpack.c.b16 %v5436, %v5434
  %v5781 = vpack.c.b16 %v5439, %v5437
  %v5782 = vpack.c.b16 %v5440, %v5438
  %v5783 = vpack.c.b16 %v5443, %v5441
  %v5784 = vpack.c.b16 %v5444, %v5442
  %v5785 = vpack.c.b16 %v5447, %v5445
  %v5786 = vpack.c.b16 %v5448, %v5446
  %v5787 = vpack.c.b16 %v5451, %v5449
  %v5788 = vpack.c.b16 %v5452, %v5450
  %v5789 = vpack.c.b16 %v5455, %v5453
  %v5790 = vpack.c.b16 %v5456, %v5454
  %v5791 = vpack.c.b16 %v5459, %v5457
  %v5792 = vpack.c.b16 %v5460, %v5458
  %v5793 = vpack.c.b16 %v5463, %v5461
  %v5794 = vpack.c.b16 %v5464, %v5462
  %v5795 = vpack.c.b16 %v5467, %v5465
  %v5796 = vpack.c.b16 %v5468, %v5466
  %v5797 = vpack.c.b16 %v5471, %v5469
  %v5798 = vpack.c.b16 %v5472, %v5470
  %v5799 = vpack.c.b16 %v5475, %v5473
  %v5800 = vpack.c.b16 %v5476, %v5474
  %v5801 = vpack.c.b16 %v5479, %v5477
  %v5802 = vpack.c.b16 %v5480, %v5478
  %v5803 = vpack.c.b16 %v5483, %v5481
  %v5804 = vpack.c.b16 %v5484, %v5482
  %v5805 = vpack.c.b16 %v5487, %v5485
  %v5806 = vpack.c.b16 %v5488, %v5486
  %v5807 = vpack.c.b16 %v5491, %v5489
  %v5808 = vpack.c.b16 %v5492, %v5490
  %v5809 = vpack.c.b16 %v5495, %v5493
  %v5810 = vpack.c.b16 %v5496, %v5494
  %v5811 = vpack.c.b16 %v5499, %v5497
  %v5812 = vpack.c.b16 %v5500, %v5498
  %v5813 = vpack.c.b16 %v5503, %v5501
  %v5814 = vpack.c.b16 %v5504, %v5502
  %v5815 = vpack.c.b16 %v5507, %v5505
  %v5816 = vpack.c.b16 %v5508, %v5506
  %v5817 = vpack.c.b16 %v5511, %v5509
  %v5818 = vpack.c.b16 %v5512, %v5510
  %v5819 = vpack.c.b16 %v5515, %v5513
  %v5820 = vpack.c.b16 %v5516, %v5514
  %v5821 = vpack.c.b16 %v5519, %v5517
  %v5822 = vpack.c.b16 %v5520, %v5518
  %v5823 = vpack.c.b16 %v5523, %v5521
  %v5824 = vpack.c.b16 %v5524, %v5522
  %v5825 = vpack.c.b16 %v5527, %v5525
  %v5826 = vpack.c.b16 %v5528, %v5526
  %v5827 = vpack.c.b16 %v5531, %v5529
  %v5828 = vpack.c.b16 %v5532, %v5530
  %v5829 = vpack.c.b16 %v5535, %v5533
  %v5830 = vpack.c.b16 %v5536, %v5534
  %v5831 = vpack.c.b16 %v5539, %v5537
  %v5832 = vpack.c.b16 %v5540, %v5538
  %v5833 = vpack.c.b16 %v5543, %v5541
  %v5834 = vpack.c.b16 %v5544, %v5542
  %v5835 = vpack.c.b16 %v5547, %v5545
  %v5836 = vpack.c.b16 %v5548, %v5546
  %v5837 = vpack.c.b16 %v5551, %v5549
  %v5838 = vpack.c.b16 %v5552, %v5550
  %v5839 = vpack.c.b16 %v5555, %v5553
  %v5840 = vpack.c.b16 %v5556, %v5554
  %v5841 = vpack.c.b16 %v5559, %v5557
  %v5842 = vpack.c.b16 %v5560, %v5558
  %v5843 = vpack.c.b16 %v5563, %v5561
  %v5844 = vpack.c.b16 %v5564, %v5562
  %v5845 = vpack.c.b16 %v5567, %v5565
  %v5846 = vpack.c.b16 %v5568, %v5566
  %v5847 = vpack.c.b16 %v5571, %v5569
  %v5848 = vpack.c.b16 %v5572, %v5570
  %v5849 = vpack.c.b16 %v5575, %v5573
  %v5850 = vpack.c.b16 %v5576, %v5574
  %v5851 = vpack.c.b16 %v5579, %v5577
  %v5852 = vpack.c.b16 %v5580, %v5578
  %v5853 = vpack.c.b16 %v5583, %v5581
  %v5854 = vpack.c.b16 %v5584, %v5582
  %v5855 = vpack.c.b16 %v5587, %v5585
  %v5856 = vpack.c.b16 %v5588, %v5586
  %v5857 = vpack.c.b16 %v5591, %v5589
  %v5858 = vpack.c.b16 %v5592, %v5590
  %v5859 = vpack.c.b16 %v5595, %v5593
  %v5860 = vpack.c.b16 %v5596, %v5594
  %v5861 = vpack.c.b16 %v5599, %v5597
  %v5862 = vpack.c.b16 %v5600, %v5598
  %v5863 = vpack.c.b16 %v5603, %v5601
  %v5864 = vpack.c.b16 %v5604, %v5602
  %v5865 = vpack.c.b16 %v5607, %v5605
  %v5866 = vpack.c.b16 %v5608, %v5606
  %v5867 = vpack.c.b16 %v5611, %v5609
  %v5868 = vpack.c.b16 %v5612, %v5610
  %v5869 = vpack.c.b16 %v5615, %v5613
  %v5870 = vpack.c.b16 %v5616, %v5614
  %v5871 = vpack.c.b16 %v5619, %v5617
  %v5872 = vpack.c.b16 %v5620, %v5618
  %v5873 = vpack.c.b16 %v5623, %v5621
  %v5874 = vpack.c.b16 %v5624, %v5622
  %v5875 = vpack.c.b16 %v5627, %v5625
  %v5876 = vpack.c.b16 %v5628, %v5626
  %v5877 = vpack.c.b16 %v5631, %v5629
  %v5878 = vpack.c.b16 %v5632, %v5630
  %v5879 = vpack.c.b16 %v5635, %v5633
  %v5880 = vpack.c.b16 %v5636, %v5634
  %v5881 = vpack.c.b16 %v5639, %v5637
  %v5882 = vpack.c.b16 %v5640, %v5638
  %v5883 = vpack.c.b16 %v5643, %v5641
  %v5884 = vpack.c.b16 %v5644, %v5642
  %v5885 = vpack.c.b16 %v5647, %v5645
  %v5886 = vpack.c.b16 %v5648, %v5646
  %v5887 = vpack.c.b16 %v5651, %v5649
  %v5888 = vpack.c.b16 %v5652, %v5650
  %v5889 = vpack.c.b16 %v5655, %v5653
  %v5890 = vpack.c.b16 %v5656, %v5654
  %v5891 = vpack.c.b16 %v5659, %v5657
  %v5892 = vpack.c.b16 %v5660, %v5658
  %v5893 = vpack.c.b16 %v5663, %v5661
  %v5894 = vpack.c.b16 %v5664, %v5662
  %v5895 = vpack.c.b16 %v5667, %v5665
  %v5896 = vpack.c.b16 %v5668, %v5666
  %v5897 = vpack.c.b16 %v5671, %v5669
  %v5898 = vpack.c.b16 %v5672, %v5670
  %v5899 = vpack.c.b16 %v5675, %v5673
  %v5900 = vpack.c.b16 %v5676, %v5674
  %v5901 = vpack.c.b16 %v5679, %v5677
  %v5902 = vpack.c.b16 %v5680, %v5678
  %v5903 = vpack.c.b16 %v5683, %v5681
  %v5904 = vpack.c.b16 %v5684, %v5682
  %v5905 = vpack.c.b16 %v5687, %v5685
  %v5906 = vpack.c.b16 %v5688, %v5686
  %v5907 = vpack.c.b16 %v5691, %v5689
  %v5908 = vpack.c.b16 %v5692, %v5690
  %v5909 = vpack.c.b16 %v5695, %v5693
  %v5910 = vpack.c.b16 %v5696, %v5694
  %v5911 = vpack.c.b16 %v5699, %v5697
  %v5912 = vpack.c.b16 %v5700, %v5698
  %v5913 = vpack.c.b16 %v5703, %v5701
  %v5914 = vpack.c.b16 %v5704, %v5702
  %v5915 = vpack.c.b16 %v5707, %v5705
  %v5916 = vpack.c.b16 %v5708, %v5706
  %v5917 = vpack.c.b16 %v5711, %v5709
  %v5918 = vpack.c.b16 %v5712, %v5710
  %v5919 = vpack.c.b16 %v5715, %v5713
  %v5920 = vpack.c.b16 %v5716, %v5714
  %v5921 = vpack.c.b16 %v5719, %v5717
  %v5922 = vpack.c.b16 %v5720, %v5718
  %v5923 = vpack.c.b16 %v5723, %v5721
  %v5924 = vpack.c.b16 %v5724, %v5722
  %v5925 = vpack.c.b16 %v5727, %v5725
  %v5926 = vpack.c.b16 %v5728, %v5726
  %v5927 = vpack.c.b16 %v5731, %v5729
  %v5928 = vpack.c.b16 %v5732, %v5730
  %v5929 = vpack.c.b16 %v5735, %v5733
  %v5930 = vpack.c.b16 %v5736, %v5734
  %v5931 = vpack.c.b16 %v5739, %v5737
  %v5932 = vpack.c.b16 %v5740, %v5738
  %v5933 = vpack.c.b16 %v5743, %v5741
  %v5934 = vpack.c.b16 %v5744, %v5742
  %v5935 = vpack.c.b16 %v5747, %v5745
  %v5936 = vpack.c.b16 %v5748, %v5746
  %v5937 = vpack.c.b16 %v5751, %v5749
  %v5938 = vpack.c.b16 %v5752, %v5750
  %v5939 = vpack.c.b16 %v5755, %v5753
  %v5940 = vpack.c.b16 %v5756, %v5754
  %v5941 = vpack.c.b16 %v5759, %v5757
  %v5942 = vpack.c.b16 %v5760, %v5758
  %v5943 = vpack.c.b16 %v5763, %v5761
  %v5944 = vpack.c.b16 %v5764, %v5762
  %v5945 = vpack.c.b16 %v5767, %v5765
  %v5946 = vpack.c.b16 %v5768, %v5766
  %v5947 = vpack.c.b16 %v5771, %v5769
  %v5948 = vpack.c.b16 %v5772, %v5770
  %v5949 = vpack.c.b16 %v5773, %v5773
  %v5950 = vpack.c.b16 %v5774, %v5774
  %v6126 = vsel %vm4936, %v4975, 0
  %v6129 = vsel %vm4936, %v4986, 0
  %v6132 = vsel %vm4936, %v4997, 0
  %v6135 = vsel %vm4936, %v5008, 0
  %v6138 = vsel %vm4936, %v5019, 0
  %v6141 = vsel %vm4936, %v5030, 0
  %v6144 = vsel %vm4936, %v5041, 0
  %v6147 = vsel %vm4936, %v5052, 0
  %v6150 = vsel %vm4936, %v5063, 0
  %v6153 = vsel %vm4936, %v5074, 0
  %vm6155 = vcmask 1043456
  %v6157 = vsel %vm6155, %v5949, 0
  %v6160 = vsel %vm6155, %v5950, 0
  %6162 = vmatprep.subr.bf16.mxu0 %v5776
  %6163 = vmatpush1.bf16.msra.mxu0 %v5775
  %6164 = vmatprep.subr.bf16.mxu0 %v5778
  %6165 = vmatpush1.bf16.msra.mxu0 %v5777
  %6166 = vmatprep.subr.bf16.mxu0 %v5780
  %6167 = vmatpush1.bf16.msra.mxu0 %v5779
  %6168 = vmatprep.subr.bf16.mxu0 %v5782
  %6169 = vmatpush1.bf16.msra.mxu0 %v5781
  %6170 = vmatprep.subr.bf16.mxu0 %v5784
  %6171 = vmatpush1.bf16.msra.mxu0 %v5783
  %6172 = vmatprep.subr.bf16.mxu0 %v5786
  %6173 = vmatpush1.bf16.msra.mxu0 %v5785
  %6174 = vmatprep.subr.bf16.mxu0 %v5788
  %6175 = vmatpush1.bf16.msra.mxu0 %v5787
  %6176 = vmatprep.subr.bf16.mxu0 %v5790
  %6177 = vmatpush1.bf16.msra.mxu0 %v5789
  %6178 = vmatprep.subr.bf16.mxu0 %v5792
  %6179 = vmatpush1.bf16.msra.mxu0 %v5791
  %6180 = vmatprep.subr.bf16.mxu0 %v5794
  %6181 = vmatpush1.bf16.msra.mxu0 %v5793
  %6182 = vmatprep.subr.bf16.mxu0 %v5796
  %6183 = vmatpush1.bf16.msra.mxu0 %v5795
  %6184 = vmatprep.subr.bf16.mxu0 %v5798
  %6185 = vmatpush1.bf16.msra.mxu0 %v5797
  %6186 = vmatprep.subr.bf16.mxu0 %v5800
  %6187 = vmatpush1.bf16.msra.mxu0 %v5799
  %6188 = vmatprep.subr.bf16.mxu0 %v5802
  %6189 = vmatpush1.bf16.msra.mxu0 %v5801
  %6190 = vmatprep.subr.bf16.mxu0 %v5804
  %6191 = vmatpush1.bf16.msra.mxu0 %v5803
  %6192 = vmatprep.subr.bf16.mxu0 %v5806
  %6193 = vmatpush1.bf16.msra.mxu0 %v5805
  %6194 = vmatprep.mubr.bf16.mxu0 %v4966
  %6195 = vmatmul.mubr.bf16.gmra.mrb[0].mxu0 %v4965
  %v6196 = vpop.f32.mrb[0].mxu0
  %v6197 = vadd.f32 0.0, %v6196
  %v6198 = vpop.f32.mrb[0].mxu0
  %v6199 = vadd.f32 0.0, %v6198
  %v6200 = vpop.f32.mrb[0].mxu0
  %v6201 = vadd.f32 0.0, %v6200
  %v6202 = vpop.f32.mrb[0].mxu0
  %v6203 = vadd.f32 0.0, %v6202
  %6204 = vmatprep.mubr.bf16.mxu0 %v4977
  %6205 = vmatmul.mubr.bf16.gmra.mrb[0].mxu0 %v4976
  %v6206 = vpop.f32.mrb[0].mxu0
  %v6207 = vadd.f32 0.0, %v6206
  %v6208 = vpop.f32.mrb[0].mxu0
  %v6209 = vadd.f32 0.0, %v6208
  %v6210 = vpop.f32.mrb[0].mxu0
  %v6211 = vadd.f32 0.0, %v6210
  %v6212 = vpop.f32.mrb[0].mxu0
  %v6213 = vadd.f32 0.0, %v6212
  %6214 = vmatprep.mubr.bf16.mxu0 %v4988
  %6215 = vmatmul.mubr.bf16.gmra.mrb[0].mxu0 %v4987
  %v6216 = vpop.f32.mrb[0].mxu0
  %v6217 = vadd.f32 0.0, %v6216
  %v6218 = vpop.f32.mrb[0].mxu0
  %v6219 = vadd.f32 0.0, %v6218
  %v6220 = vpop.f32.mrb[0].mxu0
  %v6221 = vadd.f32 0.0, %v6220
  %v6222 = vpop.f32.mrb[0].mxu0
  %v6223 = vadd.f32 0.0, %v6222
  %6224 = vmatprep.mubr.bf16.mxu0 %v4999
  %6225 = vmatmul.mubr.bf16.gmra.mrb[0].mxu0 %v4998
  %v6226 = vpop.f32.mrb[0].mxu0
  %v6227 = vadd.f32 0.0, %v6226
  %v6228 = vpop.f32.mrb[0].mxu0
  %v6229 = vadd.f32 0.0, %v6228
  %v6230 = vpop.f32.mrb[0].mxu0
  %v6231 = vadd.f32 0.0, %v6230
  %v6232 = vpop.f32.mrb[0].mxu0
  %v6233 = vadd.f32 0.0, %v6232
  %6234 = vmatprep.mubr.bf16.mxu0 %v5010
  %6235 = vmatmul.mubr.bf16.gmra.mrb[0].mxu0 %v5009
  %v6236 = vpop.f32.mrb[0].mxu0
  %v6237 = vadd.f32 0.0, %v6236
  %v6238 = vpop.f32.mrb[0].mxu0
  %v6239 = vadd.f32 0.0, %v6238
  %v6240 = vpop.f32.mrb[0].mxu0
  %v6241 = vadd.f32 0.0, %v6240
  %v6242 = vpop.f32.mrb[0].mxu0
  %v6243 = vadd.f32 0.0, %v6242
  %6244 = vmatprep.mubr.bf16.mxu0 %v5021
  %6245 = vmatmul.mubr.bf16.gmra.mrb[0].mxu0 %v5020
  %v6246 = vpop.f32.mrb[0].mxu0
  %v6247 = vadd.f32 0.0, %v6246
  %v6248 = vpop.f32.mrb[0].mxu0
  %v6249 = vadd.f32 0.0, %v6248
  %v6250 = vpop.f32.mrb[0].mxu0
  %v6251 = vadd.f32 0.0, %v6250
  %v6252 = vpop.f32.mrb[0].mxu0
  %v6253 = vadd.f32 0.0, %v6252
  %6254 = vmatprep.mubr.bf16.mxu0 %v5032
  %6255 = vmatmul.mubr.bf16.gmra.mrb[0].mxu0 %v5031
  %v6256 = vpop.f32.mrb[0].mxu0
  %v6257 = vadd.f32 0.0, %v6256
  %v6258 = vpop.f32.mrb[0].mxu0
  %v6259 = vadd.f32 0.0, %v6258
  %v6260 = vpop.f32.mrb[0].mxu0
  %v6261 = vadd.f32 0.0, %v6260
  %v6262 = vpop.f32.mrb[0].mxu0
  %v6263 = vadd.f32 0.0, %v6262
  %6264 = vmatprep.mubr.bf16.mxu0 %v5043
  %6265 = vmatmul.mubr.bf16.gmra.mrb[0].mxu0 %v5042
  %v6266 = vpop.f32.mrb[0].mxu0
  %v6267 = vadd.f32 0.0, %v6266
  %v6268 = vpop.f32.mrb[0].mxu0
  %v6269 = vadd.f32 0.0, %v6268
  %v6270 = vpop.f32.mrb[0].mxu0
  %v6271 = vadd.f32 0.0, %v6270
  %v6272 = vpop.f32.mrb[0].mxu0
  %v6273 = vadd.f32 0.0, %v6272
  %6274 = vmatprep.mubr.bf16.mxu0 %v5054
  %6275 = vmatmul.mubr.bf16.gmra.mrb[0].mxu0 %v5053
  %v6276 = vpop.f32.mrb[0].mxu0
  %v6277 = vadd.f32 0.0, %v6276
  %v6278 = vpop.f32.mrb[0].mxu0
  %v6279 = vadd.f32 0.0, %v6278
  %v6280 = vpop.f32.mrb[0].mxu0
  %v6281 = vadd.f32 0.0, %v6280
  %v6282 = vpop.f32.mrb[0].mxu0
  %v6283 = vadd.f32 0.0, %v6282
  %6284 = vmatprep.mubr.bf16.mxu0 %v5065
  %6285 = vmatmul.mubr.bf16.gmra.mrb[0].mxu0 %v5064
  %v6286 = vpop.f32.mrb[0].mxu0
  %v6287 = vadd.f32 0.0, %v6286
  %v6288 = vpop.f32.mrb[0].mxu0
  %v6289 = vadd.f32 0.0, %v6288
  %v6290 = vpop.f32.mrb[0].mxu0
  %v6291 = vadd.f32 0.0, %v6290
  %v6292 = vpop.f32.mrb[0].mxu0
  %v6293 = vadd.f32 0.0, %v6292
  %6294 = vdwg.mxu0
  %6295 = vmatprep.subr.bf16.mxu0 %v5808
  %6296 = vmatpush1.bf16.msra.mxu0 %v5807
  %6297 = vmatprep.subr.bf16.mxu0 %v5810
  %6298 = vmatpush1.bf16.msra.mxu0 %v5809
  %6299 = vmatprep.subr.bf16.mxu0 %v5812
  %6300 = vmatpush1.bf16.msra.mxu0 %v5811
  %6301 = vmatprep.subr.bf16.mxu0 %v5814
  %6302 = vmatpush1.bf16.msra.mxu0 %v5813
  %6303 = vmatprep.subr.bf16.mxu0 %v5816
  %6304 = vmatpush1.bf16.msra.mxu0 %v5815
  %6305 = vmatprep.subr.bf16.mxu0 %v5818
  %6306 = vmatpush1.bf16.msra.mxu0 %v5817
  %6307 = vmatprep.subr.bf16.mxu0 %v5820
  %6308 = vmatpush1.bf16.msra.mxu0 %v5819
  %6309 = vmatprep.subr.bf16.mxu0 %v5822
  %6310 = vmatpush1.bf16.msra.mxu0 %v5821
  %6311 = vmatprep.subr.bf16.mxu0 %v5824
  %6312 = vmatpush1.bf16.msra.mxu0 %v5823
  %6313 = vmatprep.subr.bf16.mxu0 %v5826
  %6314 = vmatpush1.bf16.msra.mxu0 %v5825
  %6315 = vmatprep.subr.bf16.mxu0 %v5828
  %6316 = vmatpush1.bf16.msra.mxu0 %v5827
  %6317 = vmatprep.subr.bf16.mxu0 %v5830
  %6318 = vmatpush1.bf16.msra.mxu0 %v5829
  %6319 = vmatprep.subr.bf16.mxu0 %v5832
  %6320 = vmatpush1.bf16.msra.mxu0 %v5831
  %6321 = vmatprep.subr.bf16.mxu0 %v5834
  %6322 = vmatpush1.bf16.msra.mxu0 %v5833
  %6323 = vmatprep.subr.bf16.mxu0 %v5836
  %6324 = vmatpush1.bf16.msra.mxu0 %v5835
  %6325 = vmatprep.subr.bf16.mxu0 %v5838
  %6326 = vmatpush1.bf16.msra.mxu0 %v5837
  %6327 = vmatprep.mubr.bf16.mxu0 %v4968
  %6328 = vmatmul.mubr.bf16.gmra.mrb[0].mxu0 %v4967
  %v6329 = vpop.f32.mrb[0].mxu0
  %v6330 = vadd.f32 %v6197, %v6329
  %v6331 = vpop.f32.mrb[0].mxu0
  %v6332 = vadd.f32 %v6199, %v6331
  %v6333 = vpop.f32.mrb[0].mxu0
  %v6334 = vadd.f32 %v6201, %v6333
  %v6335 = vpop.f32.mrb[0].mxu0
  %v6336 = vadd.f32 %v6203, %v6335
  %6337 = vmatprep.mubr.bf16.mxu0 %v4979
  %6338 = vmatmul.mubr.bf16.gmra.mrb[0].mxu0 %v4978
  %v6339 = vpop.f32.mrb[0].mxu0
  %v6340 = vadd.f32 %v6207, %v6339
  %v6341 = vpop.f32.mrb[0].mxu0
  %v6342 = vadd.f32 %v6209, %v6341
  %v6343 = vpop.f32.mrb[0].mxu0
  %v6344 = vadd.f32 %v6211, %v6343
  %v6345 = vpop.f32.mrb[0].mxu0
  %v6346 = vadd.f32 %v6213, %v6345
  %6347 = vmatprep.mubr.bf16.mxu0 %v4990
  %6348 = vmatmul.mubr.bf16.gmra.mrb[0].mxu0 %v4989
  %v6349 = vpop.f32.mrb[0].mxu0
  %v6350 = vadd.f32 %v6217, %v6349
  %v6351 = vpop.f32.mrb[0].mxu0
  %v6352 = vadd.f32 %v6219, %v6351
  %v6353 = vpop.f32.mrb[0].mxu0
  %v6354 = vadd.f32 %v6221, %v6353
  %v6355 = vpop.f32.mrb[0].mxu0
  %v6356 = vadd.f32 %v6223, %v6355
  %6357 = vmatprep.mubr.bf16.mxu0 %v5001
  %6358 = vmatmul.mubr.bf16.gmra.mrb[0].mxu0 %v5000
  %v6359 = vpop.f32.mrb[0].mxu0
  %v6360 = vadd.f32 %v6227, %v6359
  %v6361 = vpop.f32.mrb[0].mxu0
  %v6362 = vadd.f32 %v6229, %v6361
  %v6363 = vpop.f32.mrb[0].mxu0
  %v6364 = vadd.f32 %v6231, %v6363
  %v6365 = vpop.f32.mrb[0].mxu0
  %v6366 = vadd.f32 %v6233, %v6365
  %6367 = vmatprep.mubr.bf16.mxu0 %v5012
  %6368 = vmatmul.mubr.bf16.gmra.mrb[0].mxu0 %v5011
  %v6369 = vpop.f32.mrb[0].mxu0
  %v6370 = vadd.f32 %v6237, %v6369
  %v6371 = vpop.f32.mrb[0].mxu0
  %v6372 = vadd.f32 %v6239, %v6371
  %v6373 = vpop.f32.mrb[0].mxu0
  %v6374 = vadd.f32 %v6241, %v6373
  %v6375 = vpop.f32.mrb[0].mxu0
  %v6376 = vadd.f32 %v6243, %v6375
  %6377 = vmatprep.mubr.bf16.mxu0 %v5023
  %6378 = vmatmul.mubr.bf16.gmra.mrb[0].mxu0 %v5022
  %v6379 = vpop.f32.mrb[0].mxu0
  %v6380 = vadd.f32 %v6247, %v6379
  %v6381 = vpop.f32.mrb[0].mxu0
  %v6382 = vadd.f32 %v6249, %v6381
  %v6383 = vpop.f32.mrb[0].mxu0
  %v6384 = vadd.f32 %v6251, %v6383
  %v6385 = vpop.f32.mrb[0].mxu0
  %v6386 = vadd.f32 %v6253, %v6385
  %6387 = vmatprep.mubr.bf16.mxu0 %v5034
  %6388 = vmatmul.mubr.bf16.gmra.mrb[0].mxu0 %v5033
  %v6389 = vpop.f32.mrb[0].mxu0
  %v6390 = vadd.f32 %v6257, %v6389
  %v6391 = vpop.f32.mrb[0].mxu0
  %v6392 = vadd.f32 %v6259, %v6391
  %v6393 = vpop.f32.mrb[0].mxu0
  %v6394 = vadd.f32 %v6261, %v6393
  %v6395 = vpop.f32.mrb[0].mxu0
  %v6396 = vadd.f32 %v6263, %v6395
  %6397 = vmatprep.mubr.bf16.mxu0 %v5045
  %6398 = vmatmul.mubr.bf16.gmra.mrb[0].mxu0 %v5044
  %v6399 = vpop.f32.mrb[0].mxu0
  %v6400 = vadd.f32 %v6267, %v6399
  %v6401 = vpop.f32.mrb[0].mxu0
  %v6402 = vadd.f32 %v6269, %v6401
  %v6403 = vpop.f32.mrb[0].mxu0
  %v6404 = vadd.f32 %v6271, %v6403
  %v6405 = vpop.f32.mrb[0].mxu0
  %v6406 = vadd.f32 %v6273, %v6405
  %6407 = vmatprep.mubr.bf16.mxu0 %v5056
  %6408 = vmatmul.mubr.bf16.gmra.mrb[0].mxu0 %v5055
  %v6409 = vpop.f32.mrb[0].mxu0
  %v6410 = vadd.f32 %v6277, %v6409
  %v6411 = vpop.f32.mrb[0].mxu0
  %v6412 = vadd.f32 %v6279, %v6411
  %v6413 = vpop.f32.mrb[0].mxu0
  %v6414 = vadd.f32 %v6281, %v6413
  %v6415 = vpop.f32.mrb[0].mxu0
  %v6416 = vadd.f32 %v6283, %v6415
  %6417 = vmatprep.mubr.bf16.mxu0 %v5067
  %6418 = vmatmul.mubr.bf16.gmra.mrb[0].mxu0 %v5066
  %v6419 = vpop.f32.mrb[0].mxu0
  %v6420 = vadd.f32 %v6287, %v6419
  %v6421 = vpop.f32.mrb[0].mxu0
  %v6422 = vadd.f32 %v6289, %v6421
  %v6423 = vpop.f32.mrb[0].mxu0
  %v6424 = vadd.f32 %v6291, %v6423
  %v6425 = vpop.f32.mrb[0].mxu0
  %v6426 = vadd.f32 %v6293, %v6425
  %6427 = vdwg.mxu0
  %6428 = vmatprep.subr.bf16.mxu0 %v5840
  %6429 = vmatpush1.bf16.msra.mxu0 %v5839
  %6430 = vmatprep.subr.bf16.mxu0 %v5842
  %6431 = vmatpush1.bf16.msra.mxu0 %v5841
  %6432 = vmatprep.subr.bf16.mxu0 %v5844
  %6433 = vmatpush1.bf16.msra.mxu0 %v5843
  %6434 = vmatprep.subr.bf16.mxu0 %v5846
  %6435 = vmatpush1.bf16.msra.mxu0 %v5845
  %6436 = vmatprep.subr.bf16.mxu0 %v5848
  %6437 = vmatpush1.bf16.msra.mxu0 %v5847
  %6438 = vmatprep.subr.bf16.mxu0 %v5850
  %6439 = vmatpush1.bf16.msra.mxu0 %v5849
  %6440 = vmatprep.subr.bf16.mxu0 %v5852
  %6441 = vmatpush1.bf16.msra.mxu0 %v5851
  %6442 = vmatprep.subr.bf16.mxu0 %v5854
  %6443 = vmatpush1.bf16.msra.mxu0 %v5853
  %6444 = vmatprep.subr.bf16.mxu0 %v5856
  %6445 = vmatpush1.bf16.msra.mxu0 %v5855
  %6446 = vmatprep.subr.bf16.mxu0 %v5858
  %6447 = vmatpush1.bf16.msra.mxu0 %v5857
  %6448 = vmatprep.subr.bf16.mxu0 %v5860
  %6449 = vmatpush1.bf16.msra.mxu0 %v5859
  %6450 = vmatprep.subr.bf16.mxu0 %v5862
  %6451 = vmatpush1.bf16.msra.mxu0 %v5861
  %6452 = vmatprep.subr.bf16.mxu0 %v5864
  %6453 = vmatpush1.bf16.msra.mxu0 %v5863
  %6454 = vmatprep.subr.bf16.mxu0 %v5866
  %6455 = vmatpush1.bf16.msra.mxu0 %v5865
  %6456 = vmatprep.subr.bf16.mxu0 %v5868
  %6457 = vmatpush1.bf16.msra.mxu0 %v5867
  %6458 = vmatprep.subr.bf16.mxu0 %v5870
  %6459 = vmatpush1.bf16.msra.mxu0 %v5869
  %6460 = vmatprep.mubr.bf16.mxu0 %v4970
  %6461 = vmatmul.mubr.bf16.gmra.mrb[0].mxu0 %v4969
  %v6462 = vpop.f32.mrb[0].mxu0
  %v6463 = vadd.f32 %v6330, %v6462
  %v6464 = vpop.f32.mrb[0].mxu0
  %v6465 = vadd.f32 %v6332, %v6464
  %v6466 = vpop.f32.mrb[0].mxu0
  %v6467 = vadd.f32 %v6334, %v6466
  %v6468 = vpop.f32.mrb[0].mxu0
  %v6469 = vadd.f32 %v6336, %v6468
  %6470 = vmatprep.mubr.bf16.mxu0 %v4981
  %6471 = vmatmul.mubr.bf16.gmra.mrb[0].mxu0 %v4980
  %v6472 = vpop.f32.mrb[0].mxu0
  %v6473 = vadd.f32 %v6340, %v6472
  %v6474 = vpop.f32.mrb[0].mxu0
  %v6475 = vadd.f32 %v6342, %v6474
  %v6476 = vpop.f32.mrb[0].mxu0
  %v6477 = vadd.f32 %v6344, %v6476
  %v6478 = vpop.f32.mrb[0].mxu0
  %v6479 = vadd.f32 %v6346, %v6478
  %6480 = vmatprep.mubr.bf16.mxu0 %v4992
  %6481 = vmatmul.mubr.bf16.gmra.mrb[0].mxu0 %v4991
  %v6482 = vpop.f32.mrb[0].mxu0
  %v6483 = vadd.f32 %v6350, %v6482
  %v6484 = vpop.f32.mrb[0].mxu0
  %v6485 = vadd.f32 %v6352, %v6484
  %v6486 = vpop.f32.mrb[0].mxu0
  %v6487 = vadd.f32 %v6354, %v6486
  %v6488 = vpop.f32.mrb[0].mxu0
  %v6489 = vadd.f32 %v6356, %v6488
  %6490 = vmatprep.mubr.bf16.mxu0 %v5003
  %6491 = vmatmul.mubr.bf16.gmra.mrb[0].mxu0 %v5002
  %v6492 = vpop.f32.mrb[0].mxu0
  %v6493 = vadd.f32 %v6360, %v6492
  %v6494 = vpop.f32.mrb[0].mxu0
  %v6495 = vadd.f32 %v6362, %v6494
  %v6496 = vpop.f32.mrb[0].mxu0
  %v6497 = vadd.f32 %v6364, %v6496
  %v6498 = vpop.f32.mrb[0].mxu0
  %v6499 = vadd.f32 %v6366, %v6498
  %6500 = vmatprep.mubr.bf16.mxu0 %v5014
  %6501 = vmatmul.mubr.bf16.gmra.mrb[0].mxu0 %v5013
  %v6502 = vpop.f32.mrb[0].mxu0
  %v6503 = vadd.f32 %v6370, %v6502
  %v6504 = vpop.f32.mrb[0].mxu0
  %v6505 = vadd.f32 %v6372, %v6504
  %v6506 = vpop.f32.mrb[0].mxu0
  %v6507 = vadd.f32 %v6374, %v6506
  %v6508 = vpop.f32.mrb[0].mxu0
  %v6509 = vadd.f32 %v6376, %v6508
  %6510 = vmatprep.mubr.bf16.mxu0 %v5025
  %6511 = vmatmul.mubr.bf16.gmra.mrb[0].mxu0 %v5024
  %v6512 = vpop.f32.mrb[0].mxu0
  %v6513 = vadd.f32 %v6380, %v6512
  %v6514 = vpop.f32.mrb[0].mxu0
  %v6515 = vadd.f32 %v6382, %v6514
  %v6516 = vpop.f32.mrb[0].mxu0
  %v6517 = vadd.f32 %v6384, %v6516
  %v6518 = vpop.f32.mrb[0].mxu0
  %v6519 = vadd.f32 %v6386, %v6518
  %6520 = vmatprep.mubr.bf16.mxu0 %v5036
  %6521 = vmatmul.mubr.bf16.gmra.mrb[0].mxu0 %v5035
  %v6522 = vpop.f32.mrb[0].mxu0
  %v6523 = vadd.f32 %v6390, %v6522
  %v6524 = vpop.f32.mrb[0].mxu0
  %v6525 = vadd.f32 %v6392, %v6524
  %v6526 = vpop.f32.mrb[0].mxu0
  %v6527 = vadd.f32 %v6394, %v6526
  %v6528 = vpop.f32.mrb[0].mxu0
  %v6529 = vadd.f32 %v6396, %v6528
  %6530 = vmatprep.mubr.bf16.mxu0 %v5047
  %6531 = vmatmul.mubr.bf16.gmra.mrb[0].mxu0 %v5046
  %v6532 = vpop.f32.mrb[0].mxu0
  %v6533 = vadd.f32 %v6400, %v6532
  %v6534 = vpop.f32.mrb[0].mxu0
  %v6535 = vadd.f32 %v6402, %v6534
  %v6536 = vpop.f32.mrb[0].mxu0
  %v6537 = vadd.f32 %v6404, %v6536
  %v6538 = vpop.f32.mrb[0].mxu0
  %v6539 = vadd.f32 %v6406, %v6538
  %6540 = vmatprep.mubr.bf16.mxu0 %v5058
  %6541 = vmatmul.mubr.bf16.gmra.mrb[0].mxu0 %v5057
  %v6542 = vpop.f32.mrb[0].mxu0
  %v6543 = vadd.f32 %v6410, %v6542
  %v6544 = vpop.f32.mrb[0].mxu0
  %v6545 = vadd.f32 %v6412, %v6544
  %v6546 = vpop.f32.mrb[0].mxu0
  %v6547 = vadd.f32 %v6414, %v6546
  %v6548 = vpop.f32.mrb[0].mxu0
  %v6549 = vadd.f32 %v6416, %v6548
  %6550 = vmatprep.mubr.bf16.mxu0 %v5069
  %6551 = vmatmul.mubr.bf16.gmra.mrb[0].mxu0 %v5068
  %v6552 = vpop.f32.mrb[0].mxu0
  %v6553 = vadd.f32 %v6420, %v6552
  %v6554 = vpop.f32.mrb[0].mxu0
  %v6555 = vadd.f32 %v6422, %v6554
  %v6556 = vpop.f32.mrb[0].mxu0
  %v6557 = vadd.f32 %v6424, %v6556
  %v6558 = vpop.f32.mrb[0].mxu0
  %v6559 = vadd.f32 %v6426, %v6558
  %6560 = vdwg.mxu0
  %6561 = vmatprep.subr.bf16.mxu0 %v5872
  %6562 = vmatpush1.bf16.msra.mxu0 %v5871
  %6563 = vmatprep.subr.bf16.mxu0 %v5874
  %6564 = vmatpush1.bf16.msra.mxu0 %v5873
  %6565 = vmatprep.subr.bf16.mxu0 %v5876
  %6566 = vmatpush1.bf16.msra.mxu0 %v5875
  %6567 = vmatprep.subr.bf16.mxu0 %v5878
  %6568 = vmatpush1.bf16.msra.mxu0 %v5877
  %6569 = vmatprep.subr.bf16.mxu0 %v5880
  %6570 = vmatpush1.bf16.msra.mxu0 %v5879
  %6571 = vmatprep.subr.bf16.mxu0 %v5882
  %6572 = vmatpush1.bf16.msra.mxu0 %v5881
  %6573 = vmatprep.subr.bf16.mxu0 %v5884
  %6574 = vmatpush1.bf16.msra.mxu0 %v5883
  %6575 = vmatprep.subr.bf16.mxu0 %v5886
  %6576 = vmatpush1.bf16.msra.mxu0 %v5885
  %6577 = vmatprep.subr.bf16.mxu0 %v5888
  %6578 = vmatpush1.bf16.msra.mxu0 %v5887
  %6579 = vmatprep.subr.bf16.mxu0 %v5890
  %6580 = vmatpush1.bf16.msra.mxu0 %v5889
  %6581 = vmatprep.subr.bf16.mxu0 %v5892
  %6582 = vmatpush1.bf16.msra.mxu0 %v5891
  %6583 = vmatprep.subr.bf16.mxu0 %v5894
  %6584 = vmatpush1.bf16.msra.mxu0 %v5893
  %6585 = vmatprep.subr.bf16.mxu0 %v5896
  %6586 = vmatpush1.bf16.msra.mxu0 %v5895
  %6587 = vmatprep.subr.bf16.mxu0 %v5898
  %6588 = vmatpush1.bf16.msra.mxu0 %v5897
  %6589 = vmatprep.subr.bf16.mxu0 %v5900
  %6590 = vmatpush1.bf16.msra.mxu0 %v5899
  %6591 = vmatprep.subr.bf16.mxu0 %v5902
  %6592 = vmatpush1.bf16.msra.mxu0 %v5901
  %6593 = vmatprep.mubr.bf16.mxu0 %v4972
  %6594 = vmatmul.mubr.bf16.gmra.mrb[0].mxu0 %v4971
  %v6595 = vpop.f32.mrb[0].mxu0
  %v6596 = vadd.f32 %v6463, %v6595
  %v6597 = vpop.f32.mrb[0].mxu0
  %v6598 = vadd.f32 %v6465, %v6597
  %v6599 = vpop.f32.mrb[0].mxu0
  %v6600 = vadd.f32 %v6467, %v6599
  %v6601 = vpop.f32.mrb[0].mxu0
  %v6602 = vadd.f32 %v6469, %v6601
  %6603 = vmatprep.mubr.bf16.mxu0 %v4983
  %6604 = vmatmul.mubr.bf16.gmra.mrb[0].mxu0 %v4982
  %v6605 = vpop.f32.mrb[0].mxu0
  %v6606 = vadd.f32 %v6473, %v6605
  %v6607 = vpop.f32.mrb[0].mxu0
  %v6608 = vadd.f32 %v6475, %v6607
  %v6609 = vpop.f32.mrb[0].mxu0
  %v6610 = vadd.f32 %v6477, %v6609
  %v6611 = vpop.f32.mrb[0].mxu0
  %v6612 = vadd.f32 %v6479, %v6611
  %6613 = vmatprep.mubr.bf16.mxu0 %v4994
  %6614 = vmatmul.mubr.bf16.gmra.mrb[0].mxu0 %v4993
  %v6615 = vpop.f32.mrb[0].mxu0
  %v6616 = vadd.f32 %v6483, %v6615
  %v6617 = vpop.f32.mrb[0].mxu0
  %v6618 = vadd.f32 %v6485, %v6617
  %v6619 = vpop.f32.mrb[0].mxu0
  %v6620 = vadd.f32 %v6487, %v6619
  %v6621 = vpop.f32.mrb[0].mxu0
  %v6622 = vadd.f32 %v6489, %v6621
  %6623 = vmatprep.mubr.bf16.mxu0 %v5005
  %6624 = vmatmul.mubr.bf16.gmra.mrb[0].mxu0 %v5004
  %v6625 = vpop.f32.mrb[0].mxu0
  %v6626 = vadd.f32 %v6493, %v6625
  %v6627 = vpop.f32.mrb[0].mxu0
  %v6628 = vadd.f32 %v6495, %v6627
  %v6629 = vpop.f32.mrb[0].mxu0
  %v6630 = vadd.f32 %v6497, %v6629
  %v6631 = vpop.f32.mrb[0].mxu0
  %v6632 = vadd.f32 %v6499, %v6631
  %6633 = vmatprep.mubr.bf16.mxu0 %v5016
  %6634 = vmatmul.mubr.bf16.gmra.mrb[0].mxu0 %v5015
  %v6635 = vpop.f32.mrb[0].mxu0
  %v6636 = vadd.f32 %v6503, %v6635
  %v6637 = vpop.f32.mrb[0].mxu0
  %v6638 = vadd.f32 %v6505, %v6637
  %v6639 = vpop.f32.mrb[0].mxu0
  %v6640 = vadd.f32 %v6507, %v6639
  %v6641 = vpop.f32.mrb[0].mxu0
  %v6642 = vadd.f32 %v6509, %v6641
  %6643 = vmatprep.mubr.bf16.mxu0 %v5027
  %6644 = vmatmul.mubr.bf16.gmra.mrb[0].mxu0 %v5026
  %v6645 = vpop.f32.mrb[0].mxu0
  %v6646 = vadd.f32 %v6513, %v6645
  %v6647 = vpop.f32.mrb[0].mxu0
  %v6648 = vadd.f32 %v6515, %v6647
  %v6649 = vpop.f32.mrb[0].mxu0
  %v6650 = vadd.f32 %v6517, %v6649
  %v6651 = vpop.f32.mrb[0].mxu0
  %v6652 = vadd.f32 %v6519, %v6651
  %6653 = vmatprep.mubr.bf16.mxu0 %v5038
  %6654 = vmatmul.mubr.bf16.gmra.mrb[0].mxu0 %v5037
  %v6655 = vpop.f32.mrb[0].mxu0
  %v6656 = vadd.f32 %v6523, %v6655
  %v6657 = vpop.f32.mrb[0].mxu0
  %v6658 = vadd.f32 %v6525, %v6657
  %v6659 = vpop.f32.mrb[0].mxu0
  %v6660 = vadd.f32 %v6527, %v6659
  %v6661 = vpop.f32.mrb[0].mxu0
  %v6662 = vadd.f32 %v6529, %v6661
  %6663 = vmatprep.mubr.bf16.mxu0 %v5049
  %6664 = vmatmul.mubr.bf16.gmra.mrb[0].mxu0 %v5048
  %v6665 = vpop.f32.mrb[0].mxu0
  %v6666 = vadd.f32 %v6533, %v6665
  %v6667 = vpop.f32.mrb[0].mxu0
  %v6668 = vadd.f32 %v6535, %v6667
  %v6669 = vpop.f32.mrb[0].mxu0
  %v6670 = vadd.f32 %v6537, %v6669
  %v6671 = vpop.f32.mrb[0].mxu0
  %v6672 = vadd.f32 %v6539, %v6671
  %6673 = vmatprep.mubr.bf16.mxu0 %v5060
  %6674 = vmatmul.mubr.bf16.gmra.mrb[0].mxu0 %v5059
  %v6675 = vpop.f32.mrb[0].mxu0
  %v6676 = vadd.f32 %v6543, %v6675
  %v6677 = vpop.f32.mrb[0].mxu0
  %v6678 = vadd.f32 %v6545, %v6677
  %v6679 = vpop.f32.mrb[0].mxu0
  %v6680 = vadd.f32 %v6547, %v6679
  %v6681 = vpop.f32.mrb[0].mxu0
  %v6682 = vadd.f32 %v6549, %v6681
  %6683 = vmatprep.mubr.bf16.mxu0 %v5071
  %6684 = vmatmul.mubr.bf16.gmra.mrb[0].mxu0 %v5070
  %v6685 = vpop.f32.mrb[0].mxu0
  %v6686 = vadd.f32 %v6553, %v6685
  %v6687 = vpop.f32.mrb[0].mxu0
  %v6688 = vadd.f32 %v6555, %v6687
  %v6689 = vpop.f32.mrb[0].mxu0
  %v6690 = vadd.f32 %v6557, %v6689
  %v6691 = vpop.f32.mrb[0].mxu0
  %v6692 = vadd.f32 %v6559, %v6691
  %6693 = vdwg.mxu0
  %6694 = vmatprep.subr.bf16.mxu0 %v5904
  %6695 = vmatpush1.bf16.msra.mxu0 %v5903
  %6696 = vmatprep.subr.bf16.mxu0 %v5906
  %6697 = vmatpush1.bf16.msra.mxu0 %v5905
  %6698 = vmatprep.subr.bf16.mxu0 %v5908
  %6699 = vmatpush1.bf16.msra.mxu0 %v5907
  %6700 = vmatprep.subr.bf16.mxu0 %v5910
  %6701 = vmatpush1.bf16.msra.mxu0 %v5909
  %6702 = vmatprep.subr.bf16.mxu0 %v5912
  %6703 = vmatpush1.bf16.msra.mxu0 %v5911
  %6704 = vmatprep.subr.bf16.mxu0 %v5914
  %6705 = vmatpush1.bf16.msra.mxu0 %v5913
  %6706 = vmatprep.subr.bf16.mxu0 %v5916
  %6707 = vmatpush1.bf16.msra.mxu0 %v5915
  %6708 = vmatprep.subr.bf16.mxu0 %v5918
  %6709 = vmatpush1.bf16.msra.mxu0 %v5917
  %6710 = vmatprep.subr.bf16.mxu0 %v5920
  %6711 = vmatpush1.bf16.msra.mxu0 %v5919
  %6712 = vmatprep.subr.bf16.mxu0 %v5922
  %6713 = vmatpush1.bf16.msra.mxu0 %v5921
  %6714 = vmatprep.subr.bf16.mxu0 %v5924
  %6715 = vmatpush1.bf16.msra.mxu0 %v5923
  %6716 = vmatprep.subr.bf16.mxu0 %v5926
  %6717 = vmatpush1.bf16.msra.mxu0 %v5925
  %6718 = vmatprep.subr.bf16.mxu0 %v5928
  %6719 = vmatpush1.bf16.msra.mxu0 %v5927
  %6720 = vmatprep.subr.bf16.mxu0 %v5930
  %6721 = vmatpush1.bf16.msra.mxu0 %v5929
  %6722 = vmatprep.subr.bf16.mxu0 %v5932
  %6723 = vmatpush1.bf16.msra.mxu0 %v5931
  %6724 = vmatprep.subr.bf16.mxu0 %v5934
  %6725 = vmatpush1.bf16.msra.mxu0 %v5933
  %6726 = vmatprep.mubr.bf16.mxu0 %v4974
  %6727 = vmatmul.mubr.bf16.gmra.mrb[0].mxu0 %v4973
  %v6728 = vpop.f32.mrb[0].mxu0
  %v6729 = vadd.f32 %v6596, %v6728
  %v6730 = vpop.f32.mrb[0].mxu0
  %v6731 = vadd.f32 %v6598, %v6730
  %v6732 = vpop.f32.mrb[0].mxu0
  %v6733 = vadd.f32 %v6600, %v6732
  %v6734 = vpop.f32.mrb[0].mxu0
  %v6735 = vadd.f32 %v6602, %v6734
  %6736 = vmatprep.mubr.bf16.mxu0 %v4985
  %6737 = vmatmul.mubr.bf16.gmra.mrb[0].mxu0 %v4984
  %v6738 = vpop.f32.mrb[0].mxu0
  %v6739 = vadd.f32 %v6606, %v6738
  %v6740 = vpop.f32.mrb[0].mxu0
  %v6741 = vadd.f32 %v6608, %v6740
  %v6742 = vpop.f32.mrb[0].mxu0
  %v6743 = vadd.f32 %v6610, %v6742
  %v6744 = vpop.f32.mrb[0].mxu0
  %v6745 = vadd.f32 %v6612, %v6744
  %6746 = vmatprep.mubr.bf16.mxu0 %v4996
  %6747 = vmatmul.mubr.bf16.gmra.mrb[0].mxu0 %v4995
  %v6748 = vpop.f32.mrb[0].mxu0
  %v6749 = vadd.f32 %v6616, %v6748
  %v6750 = vpop.f32.mrb[0].mxu0
  %v6751 = vadd.f32 %v6618, %v6750
  %v6752 = vpop.f32.mrb[0].mxu0
  %v6753 = vadd.f32 %v6620, %v6752
  %v6754 = vpop.f32.mrb[0].mxu0
  %v6755 = vadd.f32 %v6622, %v6754
  %6756 = vmatprep.mubr.bf16.mxu0 %v5007
  %6757 = vmatmul.mubr.bf16.gmra.mrb[0].mxu0 %v5006
  %v6758 = vpop.f32.mrb[0].mxu0
  %v6759 = vadd.f32 %v6626, %v6758
  %v6760 = vpop.f32.mrb[0].mxu0
  %v6761 = vadd.f32 %v6628, %v6760
  %v6762 = vpop.f32.mrb[0].mxu0
  %v6763 = vadd.f32 %v6630, %v6762
  %v6764 = vpop.f32.mrb[0].mxu0
  %v6765 = vadd.f32 %v6632, %v6764
  %6766 = vmatprep.mubr.bf16.mxu0 %v5018
  %6767 = vmatmul.mubr.bf16.gmra.mrb[0].mxu0 %v5017
  %v6768 = vpop.f32.mrb[0].mxu0
  %v6769 = vadd.f32 %v6636, %v6768
  %v6770 = vpop.f32.mrb[0].mxu0
  %v6771 = vadd.f32 %v6638, %v6770
  %v6772 = vpop.f32.mrb[0].mxu0
  %v6773 = vadd.f32 %v6640, %v6772
  %v6774 = vpop.f32.mrb[0].mxu0
  %v6775 = vadd.f32 %v6642, %v6774
  %6776 = vmatprep.mubr.bf16.mxu0 %v5029
  %6777 = vmatmul.mubr.bf16.gmra.mrb[0].mxu0 %v5028
  %v6778 = vpop.f32.mrb[0].mxu0
  %v6779 = vadd.f32 %v6646, %v6778
  %v6780 = vpop.f32.mrb[0].mxu0
  %v6781 = vadd.f32 %v6648, %v6780
  %v6782 = vpop.f32.mrb[0].mxu0
  %v6783 = vadd.f32 %v6650, %v6782
  %v6784 = vpop.f32.mrb[0].mxu0
  %v6785 = vadd.f32 %v6652, %v6784
  %6786 = vmatprep.mubr.bf16.mxu0 %v5040
  %6787 = vmatmul.mubr.bf16.gmra.mrb[0].mxu0 %v5039
  %v6788 = vpop.f32.mrb[0].mxu0
  %v6789 = vadd.f32 %v6656, %v6788
  %v6790 = vpop.f32.mrb[0].mxu0
  %v6791 = vadd.f32 %v6658, %v6790
  %v6792 = vpop.f32.mrb[0].mxu0
  %v6793 = vadd.f32 %v6660, %v6792
  %v6794 = vpop.f32.mrb[0].mxu0
  %v6795 = vadd.f32 %v6662, %v6794
  %6796 = vmatprep.mubr.bf16.mxu0 %v5051
  %6797 = vmatmul.mubr.bf16.gmra.mrb[0].mxu0 %v5050
  %v6798 = vpop.f32.mrb[0].mxu0
  %v6799 = vadd.f32 %v6666, %v6798
  %v6800 = vpop.f32.mrb[0].mxu0
  %v6801 = vadd.f32 %v6668, %v6800
  %v6802 = vpop.f32.mrb[0].mxu0
  %v6803 = vadd.f32 %v6670, %v6802
  %v6804 = vpop.f32.mrb[0].mxu0
  %v6805 = vadd.f32 %v6672, %v6804
  %6806 = vmatprep.mubr.bf16.mxu0 %v5062
  %6807 = vmatmul.mubr.bf16.gmra.mrb[0].mxu0 %v5061
  %v6808 = vpop.f32.mrb[0].mxu0
  %v6809 = vadd.f32 %v6676, %v6808
  %v6810 = vpop.f32.mrb[0].mxu0
  %v6811 = vadd.f32 %v6678, %v6810
  %v6812 = vpop.f32.mrb[0].mxu0
  %v6813 = vadd.f32 %v6680, %v6812
  %v6814 = vpop.f32.mrb[0].mxu0
  %v6815 = vadd.f32 %v6682, %v6814
  %6816 = vmatprep.mubr.bf16.mxu0 %v5073
  %6817 = vmatmul.mubr.bf16.gmra.mrb[0].mxu0 %v5072
  %v6818 = vpop.f32.mrb[0].mxu0
  %v6819 = vadd.f32 %v6686, %v6818
  %v6820 = vpop.f32.mrb[0].mxu0
  %v6821 = vadd.f32 %v6688, %v6820
  %v6822 = vpop.f32.mrb[0].mxu0
  %v6823 = vadd.f32 %v6690, %v6822
  %v6824 = vpop.f32.mrb[0].mxu0
  %v6825 = vadd.f32 %v6692, %v6824
  %6826 = vdwg.mxu0
  %6827 = vmatprep.subr.bf16.mxu0 %v5936
  %6828 = vmatpush1.bf16.msra.mxu0 %v5935
  %6829 = vmatprep.subr.bf16.mxu0 %v5938
  %6830 = vmatpush1.bf16.msra.mxu0 %v5937
  %6831 = vmatprep.subr.bf16.mxu0 %v5940
  %6832 = vmatpush1.bf16.msra.mxu0 %v5939
  %6833 = vmatprep.subr.bf16.mxu0 %v5942
  %6834 = vmatpush1.bf16.msra.mxu0 %v5941
  %6835 = vmatprep.subr.bf16.mxu0 %v5944
  %6836 = vmatpush1.bf16.msra.mxu0 %v5943
  %6837 = vmatprep.subr.bf16.mxu0 %v5946
  %6838 = vmatpush1.bf16.msra.mxu0 %v5945
  %6839 = vmatprep.subr.bf16.mxu0 %v5948
  %6840 = vmatpush1.bf16.msra.mxu0 %v5947
  %6841 = vmatprep.subr.bf16.mxu0 %v6160
  %6842 = vmatpush1.bf16.msra.mxu0 %v6157
  %6843 = vmatprep.subr.bf16.mxu0 0
  %6844 = vmatpush1.bf16.msra.mxu0 0
  %6845 = vmatprep.subr.bf16.mxu0 0
  %6846 = vmatpush1.bf16.msra.mxu0 0
  %6847 = vmatprep.subr.bf16.mxu0 0
  %6848 = vmatpush1.bf16.msra.mxu0 0
  %6849 = vmatprep.subr.bf16.mxu0 0
  %6850 = vmatpush1.bf16.msra.mxu0 0
  %6851 = vmatprep.subr.bf16.mxu0 0
  %6852 = vmatpush1.bf16.msra.mxu0 0
  %6853 = vmatprep.subr.bf16.mxu0 0
  %6854 = vmatpush1.bf16.msra.mxu0 0
  %6855 = vmatprep.subr.bf16.mxu0 0
  %6856 = vmatpush1.bf16.msra.mxu0 0
  %6857 = vmatprep.subr.bf16.mxu0 0
  %6858 = vmatpush1.bf16.msra.mxu0 0
  %6859 = vmatprep.mubr.bf16.mxu0 0
  %6860 = vmatmul.mubr.bf16.gmra.mrb[0].mxu0 %v6126
  %v6861 = vpop.f32.mrb[0].mxu0
  %v6862 = vadd.f32 %v6729, %v6861
  %v6863 = vpop.f32.mrb[0].mxu0
  %v6864 = vadd.f32 %v6731, %v6863
  %v6865 = vpop.f32.mrb[0].mxu0
  %v6866 = vadd.f32 %v6733, %v6865
  %v6867 = vpop.f32.mrb[0].mxu0
  %v6868 = vadd.f32 %v6735, %v6867
  %6869 = vmatprep.mubr.bf16.mxu0 0
  %6870 = vmatmul.mubr.bf16.gmra.mrb[0].mxu0 %v6129
  %v6871 = vpop.f32.mrb[0].mxu0
  %v6872 = vadd.f32 %v6739, %v6871
  %v6873 = vpop.f32.mrb[0].mxu0
  %v6874 = vadd.f32 %v6741, %v6873
  %v6875 = vpop.f32.mrb[0].mxu0
  %v6876 = vadd.f32 %v6743, %v6875
  %v6877 = vpop.f32.mrb[0].mxu0
  %v6878 = vadd.f32 %v6745, %v6877
  %6879 = vmatprep.mubr.bf16.mxu0 0
  %6880 = vmatmul.mubr.bf16.gmra.mrb[0].mxu0 %v6132
  %v6881 = vpop.f32.mrb[0].mxu0
  %v6882 = vadd.f32 %v6749, %v6881
  %v6883 = vpop.f32.mrb[0].mxu0
  %v6884 = vadd.f32 %v6751, %v6883
  %v6885 = vpop.f32.mrb[0].mxu0
  %v6886 = vadd.f32 %v6753, %v6885
  %v6887 = vpop.f32.mrb[0].mxu0
  %v6888 = vadd.f32 %v6755, %v6887
  %6889 = vmatprep.mubr.bf16.mxu0 0
  %6890 = vmatmul.mubr.bf16.gmra.mrb[0].mxu0 %v6135
  %v6891 = vpop.f32.mrb[0].mxu0
  %v6892 = vadd.f32 %v6759, %v6891
  %v6893 = vpop.f32.mrb[0].mxu0
  %v6894 = vadd.f32 %v6761, %v6893
  %v6895 = vpop.f32.mrb[0].mxu0
  %v6896 = vadd.f32 %v6763, %v6895
  %v6897 = vpop.f32.mrb[0].mxu0
  %v6898 = vadd.f32 %v6765, %v6897
  %6899 = vmatprep.mubr.bf16.mxu0 0
  %6900 = vmatmul.mubr.bf16.gmra.mrb[0].mxu0 %v6138
  %v6901 = vpop.f32.mrb[0].mxu0
  %v6902 = vadd.f32 %v6769, %v6901
  %v6903 = vpop.f32.mrb[0].mxu0
  %v6904 = vadd.f32 %v6771, %v6903
  %v6905 = vpop.f32.mrb[0].mxu0
  %v6906 = vadd.f32 %v6773, %v6905
  %v6907 = vpop.f32.mrb[0].mxu0
  %v6908 = vadd.f32 %v6775, %v6907
  %6909 = vmatprep.mubr.bf16.mxu0 0
  %6910 = vmatmul.mubr.bf16.gmra.mrb[0].mxu0 %v6141
  %v6911 = vpop.f32.mrb[0].mxu0
  %v6912 = vadd.f32 %v6779, %v6911
  %v6913 = vpop.f32.mrb[0].mxu0
  %v6914 = vadd.f32 %v6781, %v6913
  %v6915 = vpop.f32.mrb[0].mxu0
  %v6916 = vadd.f32 %v6783, %v6915
  %v6917 = vpop.f32.mrb[0].mxu0
  %v6918 = vadd.f32 %v6785, %v6917
  %6919 = vmatprep.mubr.bf16.mxu0 0
  %6920 = vmatmul.mubr.bf16.gmra.mrb[0].mxu0 %v6144
  %v6921 = vpop.f32.mrb[0].mxu0
  %v6922 = vadd.f32 %v6789, %v6921
  %v6923 = vpop.f32.mrb[0].mxu0
  %v6924 = vadd.f32 %v6791, %v6923
  %v6925 = vpop.f32.mrb[0].mxu0
  %v6926 = vadd.f32 %v6793, %v6925
  %v6927 = vpop.f32.mrb[0].mxu0
  %v6928 = vadd.f32 %v6795, %v6927
  %6929 = vmatprep.mubr.bf16.mxu0 0
  %6930 = vmatmul.mubr.bf16.gmra.mrb[0].mxu0 %v6147
  %v6931 = vpop.f32.mrb[0].mxu0
  %v6932 = vadd.f32 %v6799, %v6931
  %v6933 = vpop.f32.mrb[0].mxu0
  %v6934 = vadd.f32 %v6801, %v6933
  %v6935 = vpop.f32.mrb[0].mxu0
  %v6936 = vadd.f32 %v6803, %v6935
  %v6937 = vpop.f32.mrb[0].mxu0
  %v6938 = vadd.f32 %v6805, %v6937
  %6939 = vmatprep.mubr.bf16.mxu0 0
  %6940 = vmatmul.mubr.bf16.gmra.mrb[0].mxu0 %v6150
  %v6941 = vpop.f32.mrb[0].mxu0
  %v6942 = vadd.f32 %v6809, %v6941
  %v6943 = vpop.f32.mrb[0].mxu0
  %v6944 = vadd.f32 %v6811, %v6943
  %v6945 = vpop.f32.mrb[0].mxu0
  %v6946 = vadd.f32 %v6813, %v6945
  %v6947 = vpop.f32.mrb[0].mxu0
  %v6948 = vadd.f32 %v6815, %v6947
  %6949 = vmatprep.mubr.bf16.mxu0 0
  %6950 = vmatmul.mubr.bf16.gmra.mrb[0].mxu0 %v6153
  %v6951 = vpop.f32.mrb[0].mxu0
  %v6952 = vadd.f32 %v6819, %v6951
  %v6953 = vpop.f32.mrb[0].mxu0
  %v6954 = vadd.f32 %v6821, %v6953
  %v6955 = vpop.f32.mrb[0].mxu0
  %v6956 = vadd.f32 %v6823, %v6955
  %v6957 = vpop.f32.mrb[0].mxu0
  %v6958 = vadd.f32 %v6825, %v6957
  %6959 = vdwg.mxu0
  %6960 = vst [vmem:[#allocation6] sm:$0xff] %v6862
  %6961 = vst.msk [vmem:[#allocation6 + $0x8] sm:$0xff] %vm4530, %v6864
  %6962 = vst [vmem:[#allocation6 + $0x10] sm:$0xff] %v6866
  %6963 = vst.msk [vmem:[#allocation6 + $0x18] sm:$0xff] %vm4530, %v6868
  %6964 = vst [vmem:[#allocation6 + $0x20] sm:$0xff] %v6872
  %6965 = vst.msk [vmem:[#allocation6 + $0x28] sm:$0xff] %vm4530, %v6874
  %6966 = vst [vmem:[#allocation6 + $0x30] sm:$0xff] %v6876
  %6967 = vst.msk [vmem:[#allocation6 + $0x38] sm:$0xff] %vm4530, %v6878
  %6968 = vst [vmem:[#allocation6 + $0x40] sm:$0xff] %v6882
  %6969 = vst.msk [vmem:[#allocation6 + $0x48] sm:$0xff] %vm4530, %v6884
  %6970 = vst [vmem:[#allocation6 + $0x50] sm:$0xff] %v6886
  %6971 = vst.msk [vmem:[#allocation6 + $0x58] sm:$0xff] %vm4530, %v6888
  %6972 = vst [vmem:[#allocation6 + $0x60] sm:$0xff] %v6892
  %6973 = vst.msk [vmem:[#allocation6 + $0x68] sm:$0xff] %vm4530, %v6894
  %6974 = vst [vmem:[#allocation6 + $0x70] sm:$0xff] %v6896
  %6975 = vst.msk [vmem:[#allocation6 + $0x78] sm:$0xff] %vm4530, %v6898
  %6976 = vst [vmem:[#allocation6 + $0x80] sm:$0xff] %v6902
  %6977 = vst.msk [vmem:[#allocation6 + $0x88] sm:$0xff] %vm4530, %v6904
  %6978 = vst [vmem:[#allocation6 + $0x90] sm:$0xff] %v6906
  %6979 = vst.msk [vmem:[#allocation6 + $0x98] sm:$0xff] %vm4530, %v6908
  %6980 = vst [vmem:[#allocation6 + $0xa0] sm:$0xff] %v6912
  %6981 = vst.msk [vmem:[#allocation6 + $0xa8] sm:$0xff] %vm4530, %v6914
  %6982 = vst [vmem:[#allocation6 + $0xb0] sm:$0xff] %v6916
  %6983 = vst.msk [vmem:[#allocation6 + $0xb8] sm:$0xff] %vm4530, %v6918
  %6984 = vst [vmem:[#allocation6 + $0xc0] sm:$0xff] %v6922
  %6985 = vst.msk [vmem:[#allocation6 + $0xc8] sm:$0xff] %vm4530, %v6924
  %6986 = vst [vmem:[#allocation6 + $0xd0] sm:$0xff] %v6926
  %6987 = vst.msk [vmem:[#allocation6 + $0xd8] sm:$0xff] %vm4530, %v6928
  %6988 = vst [vmem:[#allocation6 + $0xe0] sm:$0xff] %v6932
  %6989 = vst.msk [vmem:[#allocation6 + $0xe8] sm:$0xff] %vm4530, %v6934
  %6990 = vst [vmem:[#allocation6 + $0xf0] sm:$0xff] %v6936
  %6991 = vst.msk [vmem:[#allocation6 + $0xf8] sm:$0xff] %vm4530, %v6938
  %6992 = vst [vmem:[#allocation6 + $0x100] sm:$0xff] %v6942
  %6993 = vst.msk [vmem:[#allocation6 + $0x108] sm:$0xff] %vm4530, %v6944
  %6994 = vst [vmem:[#allocation6 + $0x110] sm:$0xff] %v6946
  %6995 = vst.msk [vmem:[#allocation6 + $0x118] sm:$0xff] %vm4530, %v6948
  %6996 = vst [vmem:[#allocation6 + $0x120] sm:$0xff] %v6952
  %6997 = vst.msk [vmem:[#allocation6 + $0x128] sm:$0xff] %vm4530, %v6954
  %6998 = vst [vmem:[#allocation6 + $0x130] sm:$0xff] %v6956
  %6999 = vst.msk [vmem:[#allocation6 + $0x138] sm:$0xff] %vm4530, %v6958
  %v7000 = vld [vmem:[%s4] sm:$0x3]
  %v7001 = vld [vmem:[#allocation6] sm:$0xff]
  %v7002 = vld [vmem:[#allocation6 + $0x8] sm:$0xff]
  %v7003 = vld [vmem:[#allocation6 + $0x10] sm:$0xff]
  %v7004 = vld [vmem:[#allocation6 + $0x18] sm:$0xff]
  %v7005 = vld [vmem:[#allocation6 + $0x20] sm:$0xff]
  %v7006 = vld [vmem:[#allocation6 + $0x28] sm:$0xff]
  %v7007 = vld [vmem:[#allocation6 + $0x30] sm:$0xff]
  %v7008 = vld [vmem:[#allocation6 + $0x38] sm:$0xff]
  %v7009 = vmax.f32 %v7001, %v7005
  %v7010 = vmax.f32 %v7002, %v7006
  %v7011 = vmax.f32 %v7003, %v7007
  %v7012 = vmax.f32 %v7004, %v7008
  %v7014 = vlaneseq
  %v7015 = vshrl.u32 %v7014, 7
  %v7016 = vsub.s32 0, %v7015
  %v7017 = vrot.slane %v7000, %v7016
  %v7018 = vlaneseq
  %v7019 = vshrl.u32 %v7018, 7
  %v7020 = vsub.s32 1, %v7019
  %v7021 = vrot.slane %v7000, %v7020
  %v7024 = vadd.f32 %v7009, %v7017
  %v7025 = vadd.f32 %v7010, %v7021
  %v7026 = vadd.f32 %v7011, %v7017
  %v7027 = vadd.f32 %v7012, %v7021
  %v7028 = vmax.f32 %v7024, 0.0
  %v7029 = vmax.f32 %v7025, 0.0
  %v7030 = vmax.f32 %v7026, 0.0
  %v7031 = vmax.f32 %v7027, 0.0
  %7036 = vrot.lane.b32.xlu0 %v7028, 108
  %v7037 = vpop.permute.xlu0 %7036
  %7038 = vrot.lane.b32.xlu0 %v7029, 108
  %v7039 = vpop.permute.xlu0 %7038
  %7040 = vrot.lane.b32.xlu0 %v7030, 108
  %v7041 = vpop.permute.xlu0 %7040
  %7042 = vrot.lane.b32.xlu0 %v7031, 108
  %v7043 = vpop.permute.xlu0 %7042
  %vm7044 = vcmask 883712
  %v7045 = vsel %vm7044, %v7037, %v7039
  %v7046 = vsel %vm7044, %v7041, %v7043
  %v7051 = vmax.f32 %v7028, %v7045
  %v7052 = vmax.f32 %v7029, %v7039
  %v7053 = vmax.f32 %v7030, %v7046
  %v7054 = vmax.f32 %v7031, %v7043
  %v7055 = vpack.c.bf16 %v7053, %v7051
  %v7056 = vpack.c.bf16 %v7054, %v7052
  %7057 = vst [vmem:[#allocation7] sm:$0xff] %v7055
  %vm7058 = vcmask 424960
  %7059 = vst.msk [vmem:[#allocation7 + $0x8] sm:$0xff] %vm7058, %v7056
  %v7060 = vpack.c.bf16 %v7031, %v7029
  %vm7061 = vcmask 589216
  %7062 = vst.msk [vmem:[#allocation7 + $0x8] sm:$0xff] %vm7061, %v7060
  %v7063 = vld [vmem:[#allocation6 + $0x40] sm:$0xff]
  %v7064 = vld [vmem:[#allocation6 + $0x48] sm:$0xff]
  %v7065 = vld [vmem:[#allocation6 + $0x50] sm:$0xff]
  %v7066 = vld [vmem:[#allocation6 + $0x58] sm:$0xff]
  %v7067 = vld [vmem:[#allocation6 + $0x60] sm:$0xff]
  %v7068 = vld [vmem:[#allocation6 + $0x68] sm:$0xff]
  %v7069 = vld [vmem:[#allocation6 + $0x70] sm:$0xff]
  %v7070 = vld [vmem:[#allocation6 + $0x78] sm:$0xff]
  %v7071 = vmax.f32 %v7063, %v7067
  %v7072 = vmax.f32 %v7064, %v7068
  %v7073 = vmax.f32 %v7065, %v7069
  %v7074 = vmax.f32 %v7066, %v7070
  %v7075 = vadd.f32 %v7071, %v7017
  %v7076 = vadd.f32 %v7072, %v7021
  %v7077 = vadd.f32 %v7073, %v7017
  %v7078 = vadd.f32 %v7074, %v7021
  %v7079 = vmax.f32 %v7075, 0.0
  %v7080 = vmax.f32 %v7076, 0.0
  %v7081 = vmax.f32 %v7077, 0.0
  %v7082 = vmax.f32 %v7078, 0.0
  %7087 = vrot.lane.b32.xlu0 %v7079, 108
  %v7088 = vpop.permute.xlu0 %7087
  %7089 = vrot.lane.b32.xlu0 %v7080, 108
  %v7090 = vpop.permute.xlu0 %7089
  %7091 = vrot.lane.b32.xlu0 %v7081, 108
  %v7092 = vpop.permute.xlu0 %7091
  %7093 = vrot.lane.b32.xlu0 %v7082, 108
  %v7094 = vpop.permute.xlu0 %7093
  %v7095 = vsel %vm7044, %v7088, %v7090
  %v7096 = vsel %vm7044, %v7092, %v7094
  %v7101 = vmax.f32 %v7079, %v7095
  %v7102 = vmax.f32 %v7080, %v7090
  %v7103 = vmax.f32 %v7081, %v7096
  %v7104 = vmax.f32 %v7082, %v7094
  %v7105 = vpack.c.bf16 %v7103, %v7101
  %v7106 = vpack.c.bf16 %v7104, %v7102
  %7107 = vst [vmem:[#allocation7 + $0x10] sm:$0xff] %v7105
  %7108 = vst.msk [vmem:[#allocation7 + $0x18] sm:$0xff] %vm7058, %v7106
  %v7109 = vpack.c.bf16 %v7082, %v7080
  %7110 = vst.msk [vmem:[#allocation7 + $0x18] sm:$0xff] %vm7061, %v7109
  %v7111 = vld [vmem:[#allocation6 + $0x80] sm:$0xff]
  %v7112 = vld [vmem:[#allocation6 + $0x88] sm:$0xff]
  %v7113 = vld [vmem:[#allocation6 + $0x90] sm:$0xff]
  %v7114 = vld [vmem:[#allocation6 + $0x98] sm:$0xff]
  %v7115 = vld [vmem:[#allocation6 + $0xa0] sm:$0xff]
  %v7116 = vld [vmem:[#allocation6 + $0xa8] sm:$0xff]
  %v7117 = vld [vmem:[#allocation6 + $0xb0] sm:$0xff]
  %v7118 = vld [vmem:[#allocation6 + $0xb8] sm:$0xff]
  %v7119 = vmax.f32 %v7111, %v7115
  %v7120 = vmax.f32 %v7112, %v7116
  %v7121 = vmax.f32 %v7113, %v7117
  %v7122 = vmax.f32 %v7114, %v7118
  %v7123 = vadd.f32 %v7119, %v7017
  %v7124 = vadd.f32 %v7120, %v7021
  %v7125 = vadd.f32 %v7121, %v7017
  %v7126 = vadd.f32 %v7122, %v7021
  %v7127 = vmax.f32 %v7123, 0.0
  %v7128 = vmax.f32 %v7124, 0.0
  %v7129 = vmax.f32 %v7125, 0.0
  %v7130 = vmax.f32 %v7126, 0.0
  %7135 = vrot.lane.b32.xlu0 %v7127, 108
  %v7136 = vpop.permute.xlu0 %7135
  %7137 = vrot.lane.b32.xlu0 %v7128, 108
  %v7138 = vpop.permute.xlu0 %7137
  %7139 = vrot.lane.b32.xlu0 %v7129, 108
  %v7140 = vpop.permute.xlu0 %7139
  %7141 = vrot.lane.b32.xlu0 %v7130, 108
  %v7142 = vpop.permute.xlu0 %7141
  %v7143 = vsel %vm7044, %v7136, %v7138
  %v7144 = vsel %vm7044, %v7140, %v7142
  %v7149 = vmax.f32 %v7127, %v7143
  %v7150 = vmax.f32 %v7128, %v7138
  %v7151 = vmax.f32 %v7129, %v7144
  %v7152 = vmax.f32 %v7130, %v7142
  %v7153 = vpack.c.bf16 %v7151, %v7149
  %v7154 = vpack.c.bf16 %v7152, %v7150
  %7155 = vst [vmem:[#allocation7 + $0x20] sm:$0xff] %v7153
  %7156 = vst.msk [vmem:[#allocation7 + $0x28] sm:$0xff] %vm7058, %v7154
  %v7157 = vpack.c.bf16 %v7130, %v7128
  %7158 = vst.msk [vmem:[#allocation7 + $0x28] sm:$0xff] %vm7061, %v7157
  %v7159 = vld [vmem:[#allocation6 + $0xc0] sm:$0xff]
  %v7160 = vld [vmem:[#allocation6 + $0xc8] sm:$0xff]
  %v7161 = vld [vmem:[#allocation6 + $0xd0] sm:$0xff]
  %v7162 = vld [vmem:[#allocation6 + $0xd8] sm:$0xff]
  %v7163 = vld [vmem:[#allocation6 + $0xe0] sm:$0xff]
  %v7164 = vld [vmem:[#allocation6 + $0xe8] sm:$0xff]
  %v7165 = vld [vmem:[#allocation6 + $0xf0] sm:$0xff]
  %v7166 = vld [vmem:[#allocation6 + $0xf8] sm:$0xff]
  %v7167 = vmax.f32 %v7159, %v7163
  %v7168 = vmax.f32 %v7160, %v7164
  %v7169 = vmax.f32 %v7161, %v7165
  %v7170 = vmax.f32 %v7162, %v7166
  %v7171 = vadd.f32 %v7167, %v7017
  %v7172 = vadd.f32 %v7168, %v7021
  %v7173 = vadd.f32 %v7169, %v7017
  %v7174 = vadd.f32 %v7170, %v7021
  %v7175 = vmax.f32 %v7171, 0.0
  %v7176 = vmax.f32 %v7172, 0.0
  %v7177 = vmax.f32 %v7173, 0.0
  %v7178 = vmax.f32 %v7174, 0.0
  %7183 = vrot.lane.b32.xlu0 %v7175, 108
  %v7184 = vpop.permute.xlu0 %7183
  %7185 = vrot.lane.b32.xlu0 %v7176, 108
  %v7186 = vpop.permute.xlu0 %7185
  %7187 = vrot.lane.b32.xlu0 %v7177, 108
  %v7188 = vpop.permute.xlu0 %7187
  %7189 = vrot.lane.b32.xlu0 %v7178, 108
  %v7190 = vpop.permute.xlu0 %7189
  %v7191 = vsel %vm7044, %v7184, %v7186
  %v7192 = vsel %vm7044, %v7188, %v7190
  %v7197 = vmax.f32 %v7175, %v7191
  %v7198 = vmax.f32 %v7176, %v7186
  %v7199 = vmax.f32 %v7177, %v7192
  %v7200 = vmax.f32 %v7178, %v7190
  %v7201 = vpack.c.bf16 %v7199, %v7197
  %v7202 = vpack.c.bf16 %v7200, %v7198
  %7203 = vst [vmem:[#allocation7 + $0x30] sm:$0xff] %v7201
  %7204 = vst.msk [vmem:[#allocation7 + $0x38] sm:$0xff] %vm7058, %v7202
  %v7205 = vpack.c.bf16 %v7178, %v7176
  %7206 = vst.msk [vmem:[#allocation7 + $0x38] sm:$0xff] %vm7061, %v7205
  %v7207 = vld [vmem:[#allocation6 + $0x100] sm:$0xff]
  %v7208 = vld [vmem:[#allocation6 + $0x108] sm:$0xff]
  %v7209 = vld [vmem:[#allocation6 + $0x110] sm:$0xff]
  %v7210 = vld [vmem:[#allocation6 + $0x118] sm:$0xff]
  %v7211 = vld [vmem:[#allocation6 + $0x120] sm:$0xff]
  %v7212 = vld [vmem:[#allocation6 + $0x128] sm:$0xff]
  %v7213 = vld [vmem:[#allocation6 + $0x130] sm:$0xff]
  %v7214 = vld [vmem:[#allocation6 + $0x138] sm:$0xff]
  %v7215 = vmax.f32 %v7207, %v7211
  %v7216 = vmax.f32 %v7208, %v7212
  %v7217 = vmax.f32 %v7209, %v7213
  %v7218 = vmax.f32 %v7210, %v7214
  %v7219 = vadd.f32 %v7215, %v7017
  %v7220 = vadd.f32 %v7216, %v7021
  %v7221 = vadd.f32 %v7217, %v7017
  %v7222 = vadd.f32 %v7218, %v7021
  %v7223 = vmax.f32 %v7219, 0.0
  %v7224 = vmax.f32 %v7220, 0.0
  %v7225 = vmax.f32 %v7221, 0.0
  %v7226 = vmax.f32 %v7222, 0.0
  %7231 = vrot.lane.b32.xlu0 %v7223, 108
  %v7232 = vpop.permute.xlu0 %7231
  %7233 = vrot.lane.b32.xlu0 %v7224, 108
  %v7234 = vpop.permute.xlu0 %7233
  %7235 = vrot.lane.b32.xlu0 %v7225, 108
  %v7236 = vpop.permute.xlu0 %7235
  %7237 = vrot.lane.b32.xlu0 %v7226, 108
  %v7238 = vpop.permute.xlu0 %7237
  %v7239 = vsel %vm7044, %v7232, %v7234
  %v7240 = vsel %vm7044, %v7236, %v7238
  %v7245 = vmax.f32 %v7223, %v7239
  %v7246 = vmax.f32 %v7224, %v7234
  %v7247 = vmax.f32 %v7225, %v7240
  %v7248 = vmax.f32 %v7226, %v7238
  %v7249 = vpack.c.bf16 %v7247, %v7245
  %v7250 = vpack.c.bf16 %v7248, %v7246
  %7251 = vst [vmem:[#allocation7 + $0x40] sm:$0xff] %v7249
  %7252 = vst.msk [vmem:[#allocation7 + $0x48] sm:$0xff] %vm7058, %v7250
  %v7253 = vpack.c.bf16 %v7226, %v7224
  %7254 = vst.msk [vmem:[#allocation7 + $0x48] sm:$0xff] %vm7061, %v7253
  %v7255 = vld [vmem:[#allocation7] sm:$0xff]
  %v7256 = vld [vmem:[#allocation7 + $0x8] sm:$0xff]
  %7257 = vst [vmem:[#allocation8] sm:$0xff] %v7255
  %7258 = vst.msk [vmem:[#allocation8 + $0x8] sm:$0xff] %vm4530, %v7256
  %v7259 = vld [vmem:[#allocation7 + $0x10] sm:$0xff]
  %v7260 = vld [vmem:[#allocation7 + $0x18] sm:$0xff]
  %7263 = vrot.lane.b32.xlu0 %v7259, 72
  %v7264 = vpop.permute.xlu0 %7263
  %7265 = vrot.lane.b32.xlu0 %v7260, 72
  %v7266 = vpop.permute.xlu0 %7265
  %v7267 = vsel %vm4679, %v7264, %v7266
  %7271 = vst.msk [vmem:[#allocation8 + $0x8] sm:$0xff] %vm4730, %v7264
  %7272 = vst [vmem:[#allocation8 + $0x10] sm:$0xff] %v7267
  %7273 = vst.msk [vmem:[#allocation8 + $0x18] sm:$0xff] %vm512, %v7266
  %v7274 = vld [vmem:[#allocation7 + $0x20] sm:$0xff]
  %v7275 = vld [vmem:[#allocation7 + $0x28] sm:$0xff]
  %7278 = vrot.lane.b32.xlu0 %v7274, 16
  %v7279 = vpop.permute.xlu0 %7278
  %7280 = vrot.lane.b32.xlu0 %v7275, 16
  %v7281 = vpop.permute.xlu0 %7280
  %vm7282 = vcmask 130048
  %v7283 = vsel %vm7282, %v7279, %v7281
  %vm7286 = vcmask 1047680
  %7287 = vst.msk [vmem:[#allocation8 + $0x18] sm:$0xff] %vm7286, %v7279
  %vm7288 = vcmask 719872
  %7289 = vst.msk [vmem:[#allocation8 + $0x20] sm:$0xff] %vm7288, %v7283
  %v7290 = vld [vmem:[#allocation7 + $0x30] sm:$0xff]
  %v7291 = vld [vmem:[#allocation7 + $0x38] sm:$0xff]
  %7294 = vrot.lane.b32.xlu0 %v7290, 88
  %v7295 = vpop.permute.xlu0 %7294
  %7296 = vrot.lane.b32.xlu0 %v7291, 88
  %v7297 = vpop.permute.xlu0 %7296
  %vm7298 = vcmask 719872
  %v7299 = vsel %vm7298, %v7295, %v7297
  %vm7303 = vcmask 1048256
  %7304 = vst.msk [vmem:[#allocation8 + $0x20] sm:$0xff] %vm7303, %v7295
  %7305 = vst [vmem:[#allocation8 + $0x28] sm:$0xff] %v7299
  %7306 = vst.msk [vmem:[#allocation8 + $0x30] sm:$0xff] %vm997, %v7297
  %v7307 = vld [vmem:[#allocation7 + $0x40] sm:$0xff]
  %v7308 = vld [vmem:[#allocation7 + $0x48] sm:$0xff]
  %7311 = vrot.lane.b32.xlu0 %v7307, 32
  %v7312 = vpop.permute.xlu0 %7311
  %7313 = vrot.lane.b32.xlu0 %v7308, 32
  %v7314 = vpop.permute.xlu0 %7313
  %vm7315 = vcmask 261120
  %v7316 = vsel %vm7315, %v7312, %v7314
  %vm7319 = vcmask 1047808
  %7320 = vst.msk [vmem:[#allocation8 + $0x30] sm:$0xff] %vm7319, %v7312
  %vm7321 = vcmask 850944
  %7322 = vst.msk [vmem:[#allocation8 + $0x38] sm:$0xff] %vm7321, %v7316
  %v7323 = vld [vmem:[#allocation8] sm:$0xff]
  %v7324 = vld [vmem:[#allocation8 + $0x8] sm:$0xff]
  %v7325 = vld [vmem:[#allocation8 + $0x10] sm:$0xff]
  %v7326 = vld [vmem:[#allocation8 + $0x18] sm:$0xff]
  %v7327 = vld [vmem:[#allocation8 + $0x20] sm:$0xff]
  %v7328 = vld [vmem:[#allocation8 + $0x28] sm:$0xff]
  %v7329 = vld [vmem:[#allocation8 + $0x30] sm:$0xff]
  %v7330 = vld [vmem:[#allocation8 + $0x38] sm:$0xff]
  %v7331 = vld [vmem:[%s5] sm:$0xf]
  %v7332 = vld [vmem:[%s5 + $0x4] sm:$0xf]
  %v7333 = vld [vmem:[%s5 + $0x8] sm:$0xf]
  %v7334 = vld [vmem:[%s5 + $0xc] sm:$0xf]
  %v7335 = vld [vmem:[%s5 + $0x10] sm:$0xf]
  %v7336 = vld [vmem:[%s5 + $0x14] sm:$0xf]
  %v7337 = vld [vmem:[%s5 + $0x18] sm:$0xf]
  %v7338 = vld [vmem:[%s5 + $0x1c] sm:$0xf]
  %v7339 = vld [vmem:[%s5 + $0x20] sm:$0xf]
  %v7340 = vld [vmem:[%s5 + $0x24] sm:$0xf]
  %v7341 = vld [vmem:[%s5 + $0x28] sm:$0xf]
  %v7342 = vld [vmem:[%s5 + $0x2c] sm:$0xf]
  %v7343 = vld [vmem:[%s5 + $0x30] sm:$0xf]
  %v7344 = vld [vmem:[%s5 + $0x34] sm:$0xf]
  %v7345 = vld [vmem:[%s5 + $0x38] sm:$0xf]
  %v7346 = vld [vmem:[%s5 + $0x3c] sm:$0xf]
  %v7347 = vld [vmem:[%s5 + $0x40] sm:$0xf]
  %v7348 = vld [vmem:[%s5 + $0x44] sm:$0xf]
  %v7349 = vld [vmem:[%s5 + $0x48] sm:$0xf]
  %v7350 = vld [vmem:[%s5 + $0x4c] sm:$0xf]
  %v7351 = vld [vmem:[%s5 + $0x50] sm:$0xf]
  %v7352 = vld [vmem:[%s5 + $0x54] sm:$0xf]
  %v7353 = vld [vmem:[%s5 + $0x58] sm:$0xf]
  %v7354 = vld [vmem:[%s5 + $0x5c] sm:$0xf]
  %v7355 = vld [vmem:[%s5 + $0x60] sm:$0xf]
  %v7356 = vld [vmem:[%s5 + $0x64] sm:$0xf]
  %v7357 = vld [vmem:[%s5 + $0x68] sm:$0xf]
  %v7358 = vld [vmem:[%s5 + $0x6c] sm:$0xf]
  %v7359 = vld [vmem:[%s5 + $0x70] sm:$0xf]
  %v7360 = vld [vmem:[%s5 + $0x74] sm:$0xf]
  %v7361 = vld [vmem:[%s5 + $0x78] sm:$0xf]
  %v7362 = vld [vmem:[%s5 + $0x7c] sm:$0xf]
  %v7363 = vld [vmem:[%s5 + $0x80] sm:$0xf]
  %v7364 = vld [vmem:[%s5 + $0x84] sm:$0xf]
  %v7365 = vld [vmem:[%s5 + $0x88] sm:$0xf]
  %v7366 = vld [vmem:[%s5 + $0x8c] sm:$0xf]
  %v7367 = vld [vmem:[%s5 + $0x90] sm:$0xf]
  %v7368 = vld [vmem:[%s5 + $0x94] sm:$0xf]
  %v7369 = vld [vmem:[%s5 + $0x98] sm:$0xf]
  %v7370 = vld [vmem:[%s5 + $0x9c] sm:$0xf]
  %v7371 = vld [vmem:[%s5 + $0xa0] sm:$0xf]
  %v7372 = vld [vmem:[%s5 + $0xa4] sm:$0xf]
  %v7373 = vld [vmem:[%s5 + $0xa8] sm:$0xf]
  %v7374 = vld [vmem:[%s5 + $0xac] sm:$0xf]
  %v7375 = vld [vmem:[%s5 + $0xb0] sm:$0xf]
  %v7376 = vld [vmem:[%s5 + $0xb4] sm:$0xf]
  %v7377 = vld [vmem:[%s5 + $0xb8] sm:$0xf]
  %v7378 = vld [vmem:[%s5 + $0xbc] sm:$0xf]
  %v7379 = vld [vmem:[%s5 + $0xc0] sm:$0xf]
  %v7380 = vld [vmem:[%s5 + $0xc4] sm:$0xf]
  %v7381 = vld [vmem:[%s5 + $0xc8] sm:$0xf]
  %v7382 = vld [vmem:[%s5 + $0xcc] sm:$0xf]
  %v7383 = vld [vmem:[%s5 + $0xd0] sm:$0xf]
  %v7384 = vld [vmem:[%s5 + $0xd4] sm:$0xf]
  %v7385 = vld [vmem:[%s5 + $0xd8] sm:$0xf]
  %v7386 = vld [vmem:[%s5 + $0xdc] sm:$0xf]
  %v7387 = vld [vmem:[%s5 + $0xe0] sm:$0xf]
  %v7388 = vld [vmem:[%s5 + $0xe4] sm:$0xf]
  %v7389 = vld [vmem:[%s5 + $0xe8] sm:$0xf]
  %v7390 = vld [vmem:[%s5 + $0xec] sm:$0xf]
  %v7391 = vld [vmem:[%s5 + $0xf0] sm:$0xf]
  %v7392 = vld [vmem:[%s5 + $0xf4] sm:$0xf]
  %v7393 = vld [vmem:[%s5 + $0xf8] sm:$0xf]
  %v7394 = vld [vmem:[%s5 + $0xfc] sm:$0xf]
  %v7395 = vld [vmem:[%s5 + $0x100] sm:$0xf]
  %v7396 = vld [vmem:[%s5 + $0x104] sm:$0xf]
  %v7397 = vld [vmem:[%s5 + $0x108] sm:$0xf]
  %v7398 = vld [vmem:[%s5 + $0x10c] sm:$0xf]
  %v7399 = vld [vmem:[%s5 + $0x110] sm:$0xf]
  %v7400 = vld [vmem:[%s5 + $0x114] sm:$0xf]
  %v7401 = vld [vmem:[%s5 + $0x118] sm:$0xf]
  %v7402 = vld [vmem:[%s5 + $0x11c] sm:$0xf]
  %v7403 = vld [vmem:[%s5 + $0x120] sm:$0xf]
  %v7404 = vld [vmem:[%s5 + $0x124] sm:$0xf]
  %v7405 = vld [vmem:[%s5 + $0x128] sm:$0xf]
  %v7406 = vld [vmem:[%s5 + $0x12c] sm:$0xf]
  %v7407 = vld [vmem:[%s5 + $0x130] sm:$0xf]
  %v7408 = vld [vmem:[%s5 + $0x134] sm:$0xf]
  %v7409 = vld [vmem:[%s5 + $0x138] sm:$0xf]
  %v7410 = vld [vmem:[%s5 + $0x13c] sm:$0xf]
  %v7411 = vld [vmem:[%s5 + $0x140] sm:$0xf]
  %v7412 = vld [vmem:[%s5 + $0x144] sm:$0xf]
  %v7413 = vld [vmem:[%s5 + $0x148] sm:$0xf]
  %v7414 = vld [vmem:[%s5 + $0x14c] sm:$0xf]
  %v7415 = vld [vmem:[%s5 + $0x150] sm:$0xf]
  %v7416 = vld [vmem:[%s5 + $0x154] sm:$0xf]
  %v7417 = vld [vmem:[%s5 + $0x158] sm:$0xf]
  %v7418 = vld [vmem:[%s5 + $0x15c] sm:$0xf]
  %v7419 = vld [vmem:[%s5 + $0x160] sm:$0xf]
  %v7420 = vld [vmem:[%s5 + $0x164] sm:$0xf]
  %v7421 = vld [vmem:[%s5 + $0x168] sm:$0xf]
  %v7422 = vld [vmem:[%s5 + $0x16c] sm:$0xf]
  %v7423 = vld [vmem:[%s5 + $0x170] sm:$0xf]
  %v7424 = vld [vmem:[%s5 + $0x174] sm:$0xf]
  %v7425 = vld [vmem:[%s5 + $0x178] sm:$0xf]
  %v7426 = vld [vmem:[%s5 + $0x17c] sm:$0xf]
  %v7427 = vld [vmem:[%s5 + $0x180] sm:$0xf]
  %v7428 = vld [vmem:[%s5 + $0x184] sm:$0xf]
  %v7429 = vld [vmem:[%s5 + $0x188] sm:$0xf]
  %v7430 = vld [vmem:[%s5 + $0x18c] sm:$0xf]
  %v7431 = vld [vmem:[%s5 + $0x190] sm:$0xf]
  %v7432 = vld [vmem:[%s5 + $0x194] sm:$0xf]
  %v7433 = vld [vmem:[%s5 + $0x198] sm:$0xf]
  %v7434 = vld [vmem:[%s5 + $0x19c] sm:$0xf]
  %v7435 = vld [vmem:[%s5 + $0x1a0] sm:$0xf]
  %v7436 = vld [vmem:[%s5 + $0x1a4] sm:$0xf]
  %v7437 = vld [vmem:[%s5 + $0x1a8] sm:$0xf]
  %v7438 = vld [vmem:[%s5 + $0x1ac] sm:$0xf]
  %v7439 = vld [vmem:[%s5 + $0x1b0] sm:$0xf]
  %v7440 = vld [vmem:[%s5 + $0x1b4] sm:$0xf]
  %v7441 = vld [vmem:[%s5 + $0x1b8] sm:$0xf]
  %v7442 = vld [vmem:[%s5 + $0x1bc] sm:$0xf]
  %v7443 = vld [vmem:[%s5 + $0x1c0] sm:$0xf]
  %v7444 = vld [vmem:[%s5 + $0x1c4] sm:$0xf]
  %v7445 = vld [vmem:[%s5 + $0x1c8] sm:$0xf]
  %v7446 = vld [vmem:[%s5 + $0x1cc] sm:$0xf]
  %v7447 = vld [vmem:[%s5 + $0x1d0] sm:$0xf]
  %v7448 = vld [vmem:[%s5 + $0x1d4] sm:$0xf]
  %v7449 = vld [vmem:[%s5 + $0x1d8] sm:$0xf]
  %v7450 = vld [vmem:[%s5 + $0x1dc] sm:$0xf]
  %v7451 = vld [vmem:[%s5 + $0x1e0] sm:$0xf]
  %v7452 = vld [vmem:[%s5 + $0x1e4] sm:$0xf]
  %v7453 = vld [vmem:[%s5 + $0x1e8] sm:$0xf]
  %v7454 = vld [vmem:[%s5 + $0x1ec] sm:$0xf]
  %v7455 = vld [vmem:[%s5 + $0x1f0] sm:$0xf]
  %v7456 = vld [vmem:[%s6] sm:$0x1]
  %v7458 = vlaneseq
  %v7459 = vshrl.u32 %v7458, 7
  %v7460 = vsub.s32 0, %v7459
  %v7461 = vrot.slane %v7456, %v7460
  %v7588 = vunpack.c.l.b16 %v7331
  %v7589 = vunpack.c.l.b16 %v7332
  %v7590 = vunpack.c.l.b16 %v7333
  %v7591 = vunpack.c.l.b16 %v7334
  %v7592 = vunpack.c.l.b16 %v7335
  %v7593 = vunpack.c.l.b16 %v7336
  %v7594 = vunpack.c.l.b16 %v7337
  %v7595 = vunpack.c.l.b16 %v7338
  %v7596 = vunpack.c.l.b16 %v7339
  %v7597 = vunpack.c.l.b16 %v7340
  %v7598 = vunpack.c.l.b16 %v7341
  %v7599 = vunpack.c.l.b16 %v7342
  %v7600 = vunpack.c.l.b16 %v7343
  %v7601 = vunpack.c.l.b16 %v7344
  %v7602 = vunpack.c.l.b16 %v7345
  %v7603 = vunpack.c.l.b16 %v7346
  %v7604 = vunpack.c.l.b16 %v7347
  %v7605 = vunpack.c.l.b16 %v7348
  %v7606 = vunpack.c.l.b16 %v7349
  %v7607 = vunpack.c.l.b16 %v7350
  %v7608 = vunpack.c.l.b16 %v7351
  %v7609 = vunpack.c.l.b16 %v7352
  %v7610 = vunpack.c.l.b16 %v7353
  %v7611 = vunpack.c.l.b16 %v7354
  %v7612 = vunpack.c.l.b16 %v7355
  %v7613 = vunpack.c.l.b16 %v7356
  %v7614 = vunpack.c.l.b16 %v7357
  %v7615 = vunpack.c.l.b16 %v7358
  %v7616 = vunpack.c.l.b16 %v7359
  %v7617 = vunpack.c.l.b16 %v7360
  %v7618 = vunpack.c.l.b16 %v7361
  %v7619 = vunpack.c.l.b16 %v7362
  %v7620 = vunpack.c.l.b16 %v7363
  %v7621 = vunpack.c.l.b16 %v7364
  %v7622 = vunpack.c.l.b16 %v7365
  %v7623 = vunpack.c.l.b16 %v7366
  %v7624 = vunpack.c.l.b16 %v7367
  %v7625 = vunpack.c.l.b16 %v7368
  %v7626 = vunpack.c.l.b16 %v7369
  %v7627 = vunpack.c.l.b16 %v7370
  %v7628 = vunpack.c.l.b16 %v7371
  %v7629 = vunpack.c.l.b16 %v7372
  %v7630 = vunpack.c.l.b16 %v7373
  %v7631 = vunpack.c.l.b16 %v7374
  %v7632 = vunpack.c.l.b16 %v7375
  %v7633 = vunpack.c.l.b16 %v7376
  %v7634 = vunpack.c.l.b16 %v7377
  %v7635 = vunpack.c.l.b16 %v7378
  %v7636 = vunpack.c.l.b16 %v7379
  %v7637 = vunpack.c.l.b16 %v7380
  %v7638 = vunpack.c.l.b16 %v7381
  %v7639 = vunpack.c.l.b16 %v7382
  %v7640 = vunpack.c.l.b16 %v7383
  %v7641 = vunpack.c.l.b16 %v7384
  %v7642 = vunpack.c.l.b16 %v7385
  %v7643 = vunpack.c.l.b16 %v7386
  %v7644 = vunpack.c.l.b16 %v7387
  %v7645 = vunpack.c.l.b16 %v7388
  %v7646 = vunpack.c.l.b16 %v7389
  %v7647 = vunpack.c.l.b16 %v7390
  %v7648 = vunpack.c.l.b16 %v7391
  %v7649 = vunpack.c.l.b16 %v7392
  %v7650 = vunpack.c.l.b16 %v7393
  %v7651 = vunpack.c.l.b16 %v7394
  %v7652 = vunpack.c.l.b16 %v7395
  %v7653 = vunpack.c.l.b16 %v7396
  %v7654 = vunpack.c.l.b16 %v7397
  %v7655 = vunpack.c.l.b16 %v7398
  %v7656 = vunpack.c.l.b16 %v7399
  %v7657 = vunpack.c.l.b16 %v7400
  %v7658 = vunpack.c.l.b16 %v7401
  %v7659 = vunpack.c.l.b16 %v7402
  %v7660 = vunpack.c.l.b16 %v7403
  %v7661 = vunpack.c.l.b16 %v7404
  %v7662 = vunpack.c.l.b16 %v7405
  %v7663 = vunpack.c.l.b16 %v7406
  %v7664 = vunpack.c.l.b16 %v7407
  %v7665 = vunpack.c.l.b16 %v7408
  %v7666 = vunpack.c.l.b16 %v7409
  %v7667 = vunpack.c.l.b16 %v7410
  %v7668 = vunpack.c.l.b16 %v7411
  %v7669 = vunpack.c.l.b16 %v7412
  %v7670 = vunpack.c.l.b16 %v7413
  %v7671 = vunpack.c.l.b16 %v7414
  %v7672 = vunpack.c.l.b16 %v7415
  %v7673 = vunpack.c.l.b16 %v7416
  %v7674 = vunpack.c.l.b16 %v7417
  %v7675 = vunpack.c.l.b16 %v7418
  %v7676 = vunpack.c.l.b16 %v7419
  %v7677 = vunpack.c.l.b16 %v7420
  %v7678 = vunpack.c.l.b16 %v7421
  %v7679 = vunpack.c.l.b16 %v7422
  %v7680 = vunpack.c.l.b16 %v7423
  %v7681 = vunpack.c.l.b16 %v7424
  %v7682 = vunpack.c.l.b16 %v7425
  %v7683 = vunpack.c.l.b16 %v7426
  %v7684 = vunpack.c.l.b16 %v7427
  %v7685 = vunpack.c.l.b16 %v7428
  %v7686 = vunpack.c.l.b16 %v7429
  %v7687 = vunpack.c.l.b16 %v7430
  %v7688 = vunpack.c.l.b16 %v7431
  %v7689 = vunpack.c.l.b16 %v7432
  %v7690 = vunpack.c.l.b16 %v7433
  %v7691 = vunpack.c.l.b16 %v7434
  %v7692 = vunpack.c.l.b16 %v7435
  %v7693 = vunpack.c.l.b16 %v7436
  %v7694 = vunpack.c.l.b16 %v7437
  %v7695 = vunpack.c.l.b16 %v7438
  %v7696 = vunpack.c.l.b16 %v7439
  %v7697 = vunpack.c.l.b16 %v7440
  %v7698 = vunpack.c.l.b16 %v7441
  %v7699 = vunpack.c.l.b16 %v7442
  %v7700 = vunpack.c.l.b16 %v7443
  %v7701 = vunpack.c.l.b16 %v7444
  %v7702 = vunpack.c.l.b16 %v7445
  %v7703 = vunpack.c.l.b16 %v7446
  %v7704 = vunpack.c.l.b16 %v7447
  %v7705 = vunpack.c.l.b16 %v7448
  %v7706 = vunpack.c.l.b16 %v7449
  %v7707 = vunpack.c.l.b16 %v7450
  %v7708 = vunpack.c.l.b16 %v7451
  %v7709 = vunpack.c.l.b16 %v7452
  %v7710 = vunpack.c.l.b16 %v7453
  %v7711 = vunpack.c.l.b16 %v7454
  %v7712 = vunpack.c.l.b16 %v7455
  %v7713 = vpack.c.b16 %v7589, %v7588
  %v7714 = vpack.c.b16 %v7591, %v7590
  %v7715 = vpack.c.b16 %v7593, %v7592
  %v7716 = vpack.c.b16 %v7595, %v7594
  %v7717 = vpack.c.b16 %v7597, %v7596
  %v7718 = vpack.c.b16 %v7599, %v7598
  %v7719 = vpack.c.b16 %v7601, %v7600
  %v7720 = vpack.c.b16 %v7603, %v7602
  %v7721 = vpack.c.b16 %v7605, %v7604
  %v7722 = vpack.c.b16 %v7607, %v7606
  %v7723 = vpack.c.b16 %v7609, %v7608
  %v7724 = vpack.c.b16 %v7611, %v7610
  %v7725 = vpack.c.b16 %v7613, %v7612
  %v7726 = vpack.c.b16 %v7615, %v7614
  %v7727 = vpack.c.b16 %v7617, %v7616
  %v7728 = vpack.c.b16 %v7619, %v7618
  %v7729 = vpack.c.b16 %v7621, %v7620
  %v7730 = vpack.c.b16 %v7623, %v7622
  %v7731 = vpack.c.b16 %v7625, %v7624
  %v7732 = vpack.c.b16 %v7627, %v7626
  %v7733 = vpack.c.b16 %v7629, %v7628
  %v7734 = vpack.c.b16 %v7631, %v7630
  %v7735 = vpack.c.b16 %v7633, %v7632
  %v7736 = vpack.c.b16 %v7635, %v7634
  %v7737 = vpack.c.b16 %v7637, %v7636
  %v7738 = vpack.c.b16 %v7639, %v7638
  %v7739 = vpack.c.b16 %v7641, %v7640
  %v7740 = vpack.c.b16 %v7643, %v7642
  %v7741 = vpack.c.b16 %v7645, %v7644
  %v7742 = vpack.c.b16 %v7647, %v7646
  %v7743 = vpack.c.b16 %v7649, %v7648
  %v7744 = vpack.c.b16 %v7651, %v7650
  %v7745 = vpack.c.b16 %v7653, %v7652
  %v7746 = vpack.c.b16 %v7655, %v7654
  %v7747 = vpack.c.b16 %v7657, %v7656
  %v7748 = vpack.c.b16 %v7659, %v7658
  %v7749 = vpack.c.b16 %v7661, %v7660
  %v7750 = vpack.c.b16 %v7663, %v7662
  %v7751 = vpack.c.b16 %v7665, %v7664
  %v7752 = vpack.c.b16 %v7667, %v7666
  %v7753 = vpack.c.b16 %v7669, %v7668
  %v7754 = vpack.c.b16 %v7671, %v7670
  %v7755 = vpack.c.b16 %v7673, %v7672
  %v7756 = vpack.c.b16 %v7675, %v7674
  %v7757 = vpack.c.b16 %v7677, %v7676
  %v7758 = vpack.c.b16 %v7679, %v7678
  %v7759 = vpack.c.b16 %v7681, %v7680
  %v7760 = vpack.c.b16 %v7683, %v7682
  %v7761 = vpack.c.b16 %v7685, %v7684
  %v7762 = vpack.c.b16 %v7687, %v7686
  %v7763 = vpack.c.b16 %v7689, %v7688
  %v7764 = vpack.c.b16 %v7691, %v7690
  %v7765 = vpack.c.b16 %v7693, %v7692
  %v7766 = vpack.c.b16 %v7695, %v7694
  %v7767 = vpack.c.b16 %v7697, %v7696
  %v7768 = vpack.c.b16 %v7699, %v7698
  %v7769 = vpack.c.b16 %v7701, %v7700
  %v7770 = vpack.c.b16 %v7703, %v7702
  %v7771 = vpack.c.b16 %v7705, %v7704
  %v7772 = vpack.c.b16 %v7707, %v7706
  %v7773 = vpack.c.b16 %v7709, %v7708
  %v7774 = vpack.c.b16 %v7711, %v7710
  %v7775 = vpack.c.b16 %v7712, %v7712
  %v7839 = vsel %vm7321, %v7330, 0
  %v7842 = vsel %vm6155, %v7775, 0
  %7844 = vmatprep.subr.bf16.mxu0 0
  %7845 = vmatpush1.bf16.msra.mxu0 %v7713
  %7846 = vmatprep.subr.bf16.mxu0 0
  %7847 = vmatpush1.bf16.msra.mxu0 %v7714
  %7848 = vmatprep.subr.bf16.mxu0 0
  %7849 = vmatpush1.bf16.msra.mxu0 %v7715
  %7850 = vmatprep.subr.bf16.mxu0 0
  %7851 = vmatpush1.bf16.msra.mxu0 %v7716
  %7852 = vmatprep.subr.bf16.mxu0 0
  %7853 = vmatpush1.bf16.msra.mxu0 %v7717
  %7854 = vmatprep.subr.bf16.mxu0 0
  %7855 = vmatpush1.bf16.msra.mxu0 %v7718
  %7856 = vmatprep.subr.bf16.mxu0 0
  %7857 = vmatpush1.bf16.msra.mxu0 %v7719
  %7858 = vmatprep.subr.bf16.mxu0 0
  %7859 = vmatpush1.bf16.msra.mxu0 %v7720
  %7860 = vmatprep.subr.bf16.mxu0 0
  %7861 = vmatpush1.bf16.msra.mxu0 %v7721
  %7862 = vmatprep.subr.bf16.mxu0 0
  %7863 = vmatpush1.bf16.msra.mxu0 %v7722
  %7864 = vmatprep.subr.bf16.mxu0 0
  %7865 = vmatpush1.bf16.msra.mxu0 %v7723
  %7866 = vmatprep.subr.bf16.mxu0 0
  %7867 = vmatpush1.bf16.msra.mxu0 %v7724
  %7868 = vmatprep.subr.bf16.mxu0 0
  %7869 = vmatpush1.bf16.msra.mxu0 %v7725
  %7870 = vmatprep.subr.bf16.mxu0 0
  %7871 = vmatpush1.bf16.msra.mxu0 %v7726
  %7872 = vmatprep.subr.bf16.mxu0 0
  %7873 = vmatpush1.bf16.msra.mxu0 %v7727
  %7874 = vmatprep.subr.bf16.mxu0 0
  %7875 = vmatpush1.bf16.msra.mxu0 %v7728
  %7876 = vmatprep.mubr.bf16.mxu0 %v7324
  %7877 = vmatmul.mubr.bf16.gmra.mrb[0].mxu0 %v7323
  %v7878 = vpop.f32.mrb[0].mxu0
  %v7879 = vadd.f32 %v7461, %v7878
  %v7880 = vpop.f32.mrb[0].mxu0
  %v7881 = vpop.f32.mrb[0].mxu0
  %v7882 = vadd.f32 %v7461, %v7881
  %v7883 = vpop.f32.mrb[0].mxu0
  %7884 = vdwg.mxu0
  %7885 = vmatprep.subr.bf16.mxu0 0
  %7886 = vmatpush1.bf16.msra.mxu0 %v7729
  %7887 = vmatprep.subr.bf16.mxu0 0
  %7888 = vmatpush1.bf16.msra.mxu0 %v7730
  %7889 = vmatprep.subr.bf16.mxu0 0
  %7890 = vmatpush1.bf16.msra.mxu0 %v7731
  %7891 = vmatprep.subr.bf16.mxu0 0
  %7892 = vmatpush1.bf16.msra.mxu0 %v7732
  %7893 = vmatprep.subr.bf16.mxu0 0
  %7894 = vmatpush1.bf16.msra.mxu0 %v7733
  %7895 = vmatprep.subr.bf16.mxu0 0
  %7896 = vmatpush1.bf16.msra.mxu0 %v7734
  %7897 = vmatprep.subr.bf16.mxu0 0
  %7898 = vmatpush1.bf16.msra.mxu0 %v7735
  %7899 = vmatprep.subr.bf16.mxu0 0
  %7900 = vmatpush1.bf16.msra.mxu0 %v7736
  %7901 = vmatprep.subr.bf16.mxu0 0
  %7902 = vmatpush1.bf16.msra.mxu0 %v7737
  %7903 = vmatprep.subr.bf16.mxu0 0
  %7904 = vmatpush1.bf16.msra.mxu0 %v7738
  %7905 = vmatprep.subr.bf16.mxu0 0
  %7906 = vmatpush1.bf16.msra.mxu0 %v7739
  %7907 = vmatprep.subr.bf16.mxu0 0
  %7908 = vmatpush1.bf16.msra.mxu0 %v7740
  %7909 = vmatprep.subr.bf16.mxu0 0
  %7910 = vmatpush1.bf16.msra.mxu0 %v7741
  %7911 = vmatprep.subr.bf16.mxu0 0
  %7912 = vmatpush1.bf16.msra.mxu0 %v7742
  %7913 = vmatprep.subr.bf16.mxu0 0
  %7914 = vmatpush1.bf16.msra.mxu0 %v7743
  %7915 = vmatprep.subr.bf16.mxu0 0
  %7916 = vmatpush1.bf16.msra.mxu0 %v7744
  %7917 = vmatprep.mubr.bf16.mxu0 %v7326
  %7918 = vmatmul.mubr.bf16.gmra.mrb[0].mxu0 %v7325
  %v7919 = vpop.f32.mrb[0].mxu0
  %v7920 = vadd.f32 %v7879, %v7919
  %v7921 = vpop.f32.mrb[0].mxu0
  %v7922 = vpop.f32.mrb[0].mxu0
  %v7923 = vadd.f32 %v7882, %v7922
  %v7924 = vpop.f32.mrb[0].mxu0
  %7925 = vdwg.mxu0
  %7926 = vmatprep.subr.bf16.mxu0 0
  %7927 = vmatpush1.bf16.msra.mxu0 %v7745
  %7928 = vmatprep.subr.bf16.mxu0 0
  %7929 = vmatpush1.bf16.msra.mxu0 %v7746
  %7930 = vmatprep.subr.bf16.mxu0 0
  %7931 = vmatpush1.bf16.msra.mxu0 %v7747
  %7932 = vmatprep.subr.bf16.mxu0 0
  %7933 = vmatpush1.bf16.msra.mxu0 %v7748
  %7934 = vmatprep.subr.bf16.mxu0 0
  %7935 = vmatpush1.bf16.msra.mxu0 %v7749
  %7936 = vmatprep.subr.bf16.mxu0 0
  %7937 = vmatpush1.bf16.msra.mxu0 %v7750
  %7938 = vmatprep.subr.bf16.mxu0 0
  %7939 = vmatpush1.bf16.msra.mxu0 %v7751
  %7940 = vmatprep.subr.bf16.mxu0 0
  %7941 = vmatpush1.bf16.msra.mxu0 %v7752
  %7942 = vmatprep.subr.bf16.mxu0 0
  %7943 = vmatpush1.bf16.msra.mxu0 %v7753
  %7944 = vmatprep.subr.bf16.mxu0 0
  %7945 = vmatpush1.bf16.msra.mxu0 %v7754
  %7946 = vmatprep.subr.bf16.mxu0 0
  %7947 = vmatpush1.bf16.msra.mxu0 %v7755
  %7948 = vmatprep.subr.bf16.mxu0 0
  %7949 = vmatpush1.bf16.msra.mxu0 %v7756
  %7950 = vmatprep.subr.bf16.mxu0 0
  %7951 = vmatpush1.bf16.msra.mxu0 %v7757
  %7952 = vmatprep.subr.bf16.mxu0 0
  %7953 = vmatpush1.bf16.msra.mxu0 %v7758
  %7954 = vmatprep.subr.bf16.mxu0 0
  %7955 = vmatpush1.bf16.msra.mxu0 %v7759
  %7956 = vmatprep.subr.bf16.mxu0 0
  %7957 = vmatpush1.bf16.msra.mxu0 %v7760
  %7958 = vmatprep.mubr.bf16.mxu0 %v7328
  %7959 = vmatmul.mubr.bf16.gmra.mrb[0].mxu0 %v7327
  %v7960 = vpop.f32.mrb[0].mxu0
  %v7961 = vadd.f32 %v7920, %v7960
  %v7962 = vpop.f32.mrb[0].mxu0
  %v7963 = vpop.f32.mrb[0].mxu0
  %v7964 = vadd.f32 %v7923, %v7963
  %v7965 = vpop.f32.mrb[0].mxu0
  %7966 = vdwg.mxu0
  %7967 = vmatprep.subr.bf16.mxu0 0
  %7968 = vmatpush1.bf16.msra.mxu0 %v7761
  %7969 = vmatprep.subr.bf16.mxu0 0
  %7970 = vmatpush1.bf16.msra.mxu0 %v7762
  %7971 = vmatprep.subr.bf16.mxu0 0
  %7972 = vmatpush1.bf16.msra.mxu0 %v7763
  %7973 = vmatprep.subr.bf16.mxu0 0
  %7974 = vmatpush1.bf16.msra.mxu0 %v7764
  %7975 = vmatprep.subr.bf16.mxu0 0
  %7976 = vmatpush1.bf16.msra.mxu0 %v7765
  %7977 = vmatprep.subr.bf16.mxu0 0
  %7978 = vmatpush1.bf16.msra.mxu0 %v7766
  %7979 = vmatprep.subr.bf16.mxu0 0
  %7980 = vmatpush1.bf16.msra.mxu0 %v7767
  %7981 = vmatprep.subr.bf16.mxu0 0
  %7982 = vmatpush1.bf16.msra.mxu0 %v7768
  %7983 = vmatprep.subr.bf16.mxu0 0
  %7984 = vmatpush1.bf16.msra.mxu0 %v7769
  %7985 = vmatprep.subr.bf16.mxu0 0
  %7986 = vmatpush1.bf16.msra.mxu0 %v7770
  %7987 = vmatprep.subr.bf16.mxu0 0
  %7988 = vmatpush1.bf16.msra.mxu0 %v7771
  %7989 = vmatprep.subr.bf16.mxu0 0
  %7990 = vmatpush1.bf16.msra.mxu0 %v7772
  %7991 = vmatprep.subr.bf16.mxu0 0
  %7992 = vmatpush1.bf16.msra.mxu0 %v7773
  %7993 = vmatprep.subr.bf16.mxu0 0
  %7994 = vmatpush1.bf16.msra.mxu0 %v7774
  %7995 = vmatprep.subr.bf16.mxu0 0
  %7996 = vmatpush1.bf16.msra.mxu0 %v7842
  %7997 = vmatprep.subr.bf16.mxu0 0
  %7998 = vmatpush1.bf16.msra.mxu0 0
  %7999 = vmatprep.mubr.bf16.mxu0 %v7839
  %8000 = vmatmul.mubr.bf16.gmra.mrb[0].mxu0 %v7329
  %v8001 = vpop.f32.mrb[0].mxu0
  %v8002 = vadd.f32 %v7961, %v8001
  %v8003 = vpop.f32.mrb[0].mxu0
  %v8004 = vpop.f32.mrb[0].mxu0
  %v8005 = vadd.f32 %v7964, %v8004
  %v8006 = vpop.f32.mrb[0].mxu0
  %8007 = vdwg.mxu0
  %v8008 = vmax.f32 %v8002, 0.0
  %v8009 = vmax.f32 %v8005, 0.0
  %v8010 = vpack.c.bf16 %v8009, %v8008
  %v8011 = vld [vmem:[%s7] sm:$0xf]
  %v8012 = vld [vmem:[%s7 + $0x4] sm:$0xf]
  %v8013 = vld [vmem:[%s7 + $0x8] sm:$0xf]
  %v8014 = vld [vmem:[%s7 + $0xc] sm:$0xf]
  %v8015 = vld [vmem:[%s7 + $0x10] sm:$0xf]
  %v8016 = vld [vmem:[%s7 + $0x14] sm:$0xf]
  %v8017 = vld [vmem:[%s7 + $0x18] sm:$0xf]
  %v8018 = vld [vmem:[%s7 + $0x1c] sm:$0xf]
  %v8019 = vld [vmem:[%s7 + $0x20] sm:$0xf]
  %v8020 = vld [vmem:[%s7 + $0x24] sm:$0xf]
  %v8021 = vld [vmem:[%s7 + $0x28] sm:$0xf]
  %v8022 = vld [vmem:[%s7 + $0x2c] sm:$0xf]
  %v8023 = vld [vmem:[%s7 + $0x30] sm:$0xf]
  %v8024 = vld [vmem:[%s7 + $0x34] sm:$0xf]
  %v8025 = vld [vmem:[%s7 + $0x38] sm:$0xf]
  %v8026 = vld [vmem:[%s7 + $0x3c] sm:$0xf]
  %v8027 = vld [vmem:[%s8] sm:$0x1]
  %v8029 = vlaneseq
  %v8030 = vshrl.u32 %v8029, 7
  %v8031 = vsub.s32 0, %v8030
  %v8032 = vrot.slane %v8027, %v8031
  %v8050 = vunpack.c.l.b16 %v8011
  %v8051 = vunpack.c.l.b16 %v8012
  %v8052 = vunpack.c.l.b16 %v8013
  %v8053 = vunpack.c.l.b16 %v8014
  %v8054 = vunpack.c.l.b16 %v8015
  %v8055 = vunpack.c.l.b16 %v8016
  %v8056 = vunpack.c.l.b16 %v8017
  %v8057 = vunpack.c.l.b16 %v8018
  %v8058 = vunpack.c.l.b16 %v8019
  %v8059 = vunpack.c.l.b16 %v8020
  %v8060 = vunpack.c.l.b16 %v8021
  %v8061 = vunpack.c.l.b16 %v8022
  %v8062 = vunpack.c.l.b16 %v8023
  %v8063 = vunpack.c.l.b16 %v8024
  %v8064 = vunpack.c.l.b16 %v8025
  %v8065 = vunpack.c.l.b16 %v8026
  %v8066 = vpack.c.b16 %v8051, %v8050
  %v8067 = vpack.c.b16 %v8053, %v8052
  %v8068 = vpack.c.b16 %v8055, %v8054
  %v8069 = vpack.c.b16 %v8057, %v8056
  %v8070 = vpack.c.b16 %v8059, %v8058
  %v8071 = vpack.c.b16 %v8061, %v8060
  %v8072 = vpack.c.b16 %v8063, %v8062
  %v8073 = vpack.c.b16 %v8065, %v8064
  %8082 = vmatprep.subr.bf16.mxu0 0
  %8083 = vmatpush1.bf16.msra.mxu0 %v8066
  %8084 = vmatprep.subr.bf16.mxu0 0
  %8085 = vmatpush1.bf16.msra.mxu0 %v8067
  %8086 = vmatprep.subr.bf16.mxu0 0
  %8087 = vmatpush1.bf16.msra.mxu0 %v8068
  %8088 = vmatprep.subr.bf16.mxu0 0
  %8089 = vmatpush1.bf16.msra.mxu0 %v8069
  %8090 = vmatprep.subr.bf16.mxu0 0
  %8091 = vmatpush1.bf16.msra.mxu0 %v8070
  %8092 = vmatprep.subr.bf16.mxu0 0
  %8093 = vmatpush1.bf16.msra.mxu0 %v8071
  %8094 = vmatprep.subr.bf16.mxu0 0
  %8095 = vmatpush1.bf16.msra.mxu0 %v8072
  %8096 = vmatprep.subr.bf16.mxu0 0
  %8097 = vmatpush1.bf16.msra.mxu0 %v8073
  %8098 = vmatprep.subr.bf16.mxu0 0
  %8099 = vmatpush1.bf16.msra.mxu0 0
  %8100 = vmatprep.subr.bf16.mxu0 0
  %8101 = vmatpush1.bf16.msra.mxu0 0
  %8102 = vmatprep.subr.bf16.mxu0 0
  %8103 = vmatpush1.bf16.msra.mxu0 0
  %8104 = vmatprep.subr.bf16.mxu0 0
  %8105 = vmatpush1.bf16.msra.mxu0 0
  %8106 = vmatprep.subr.bf16.mxu0 0
  %8107 = vmatpush1.bf16.msra.mxu0 0
  %8108 = vmatprep.subr.bf16.mxu0 0
  %8109 = vmatpush1.bf16.msra.mxu0 0
  %8110 = vmatprep.subr.bf16.mxu0 0
  %8111 = vmatpush1.bf16.msra.mxu0 0
  %8112 = vmatprep.subr.bf16.mxu0 0
  %8113 = vmatpush1.bf16.msra.mxu0 0
  %8114 = vmatprep.mubr.bf16.mxu0 0
  %8115 = vmatmul.mubr.bf16.gmra.mrb[0].mxu0 %v8010
  %v8116 = vpop.f32.mrb[0].mxu0
  %v8117 = vadd.f32 %v8032, %v8116
  %v8118 = vpop.f32.mrb[0].mxu0
  %v8119 = vpop.f32.mrb[0].mxu0
  %v8120 = vadd.f32 %v8032, %v8119
  %v8121 = vpop.f32.mrb[0].mxu0
  %8122 = vdwg.mxu0
  %8123 = vst [vmem:[%s9] sm:$0xff] %v8117
  %8124 = vst [vmem:[%s9 + $0x8] sm:$0xff] %v8120
  // Predicated region
  $region38: #{multi_lenet_forward.1} parent=0 // pred_check
    _
  $region39: #{multi_lenet_forward.1} parent=0 // pred_check_branch
    %8126 = sbr.rel (0) target = $region41
  $region40: #{multi_lenet_forward.1} parent=0 // pred_region
    _
  $region41: #{multi_lenet_forward.1} parent=0 // pred_fallthru
    _
  // Predicated region
  $region42: #{multi_lenet_forward.1} parent=0 // pred_check
    _
  $region43: #{multi_lenet_forward.1} parent=0 // pred_check_branch
    %8128 = sbr.rel (0) target = $region45
  $region44: #{multi_lenet_forward.1} parent=0 // pred_region
    _
  $region45: #{multi_lenet_forward.1} parent=0 // pred_fallthru
    _

</llo_original>
